<compile_context>
chip_gen: v7x
topology: tpu7x:2x2x1
jax: 0.10.0
libtpu: 0.0.40
codegen_flags: <defaults>
</compile_context>

<pallas_src>
import jax
import jax.numpy as jnp
from jax import lax
from jax.experimental import pallas as pl
from jax.experimental.pallas import tpu as pltpu

EPS = 1e-5  # nn.InstanceNorm2d default


@jax.jit
def resnet_block_forward(x, w1, b1, w2, b2):
    """x: [N, C, H, W] (NCHW, PyTorch layout). w*: [C, C, 3, 3]. b*: [C] (unused, see below)."""
    N, C, H, W = x.shape
    Hp, Wp = H + 2, W + 2
    Npad = Hp * Wp                     # flattened reflect-padded spatial grid
    M = Npad - 2 * (Wp + 1)            # rows of the padded grid the kernel computes
    inv_hw = 1.0 / float(H * W)

    # ---- glue (cheap, XLA-fused): NCHW -> NHWC, reflect pad, flatten spatial ----
    x_nhwc = jnp.transpose(x, (0, 2, 3, 1))
    xpad = jnp.pad(x_nhwc, ((0, 0), (1, 1), (1, 1), (0, 0)), mode="reflect")
    xflat = xpad.reshape(N, Npad, C).astype(jnp.float32)

    # weights: torch (Cout, Cin, 3, 3) -> (9, Cin, Cout), bf16 for the MXU.
    # b1/b2 are mathematically cancelled by affine-free InstanceNorm -> not used.
    def prep_w(w):
        return jnp.transpose(w, (2, 3, 1, 0)).reshape(9, C, C).astype(jnp.bfloat16)
    w1m, w2m = prep_w(w1), prep_w(w2)

    # interior-pixel mask over the computed flat range [Wp+1, Npad-Wp-1)
    p = jnp.arange(M) + (Wp + 1)
    ip, jp_ = p // Wp, p % Wp
    mask = ((ip >= 1) & (ip <= H) & (jp_ >= 1) & (jp_ <= W))
    mask = mask.astype(jnp.float32).reshape(M, 1)

    def kernel(mask_ref, x_ref, w1_ref, w2_ref, o_ref, h_ref):
        # mask_ref: (M, 1) f32     x_ref: (Npad, C) f32
        # w*_ref:   (9, C, C) bf16 o_ref: (Npad, C) f32   h_ref: VMEM (Npad, C) f32
        m = mask_ref[...]

        def conv3x3(src_ref, w_ref):
            # 9 shifted matmuls over the flat padded layout; f32 accumulation.
            acc = jnp.zeros((M, C), jnp.float32)
            for di in range(3):
                for dj in range(3):
                    lhs = src_ref[pl.ds(di * Wp + dj, M), :].astype(jnp.bfloat16)
                    acc += jnp.dot(lhs, w_ref[3 * di + dj],
                                   preferred_element_type=jnp.float32)
            return acc

        def inst_norm(y):
            # biased variance over the H*W interior pixels only (masked), f32.
            mean = jnp.sum(y * m, axis=0, keepdims=True) * inv_hw
            d = (y - mean) * m
            var = jnp.sum(d * d, axis=0, keepdims=True) * inv_hw
            return (y - mean) * lax.rsqrt(var + EPS)

        # ---- conv1 + InstanceNorm + ReLU -> h (stays in VMEM) ----
        h = jnp.maximum(inst_norm(conv3x3(x_ref, w1_ref)), 0.0)
        h_ref[pl.ds(Wp + 1, M), :] = h

        # ---- reflect-pad h in VMEM (borders of the padded grid) ----
        for i in range(1, Hp - 1):                       # left / right columns
            b = i * Wp
            h_ref[pl.ds(b, 1), :] = h_ref[pl.ds(b + 2, 1), :]
            h_ref[pl.ds(b + Wp - 1, 1), :] = h_ref[pl.ds(b + Wp - 3, 1), :]
        h_ref[pl.ds(0, Wp), :] = h_ref[pl.ds(2 * Wp, Wp), :]                     # top row
        h_ref[pl.ds((Hp - 1) * Wp, Wp), :] = h_ref[pl.ds((Hp - 3) * Wp, Wp), :]  # bottom row

        # ---- conv2 + InstanceNorm + residual add ----
        y2 = inst_norm(conv3x3(h_ref, w2_ref))
        o_ref[pl.ds(Wp + 1, M), :] = y2 + x_ref[pl.ds(Wp + 1, M), :]

    out_flat = pl.pallas_call(
        kernel,
        out_shape=jax.ShapeDtypeStruct((N, Npad, C), jnp.float32),
        grid_spec=pltpu.PrefetchScalarGridSpec(
            num_scalar_prefetch=0,
            grid=(N,),
            in_specs=[
                pl.BlockSpec((M, 1), lambda n: (0, 0)),
                pl.BlockSpec((None, Npad, C), lambda n: (n, 0, 0)),
                pl.BlockSpec((9, C, C), lambda n: (0, 0, 0)),
                pl.BlockSpec((9, C, C), lambda n: (0, 0, 0)),
            ],
            out_specs=pl.BlockSpec((None, Npad, C), lambda n: (n, 0, 0)),
            scratch_shapes=[pltpu.VMEM((Npad, C), jnp.float32)],
        ),
        compiler_params=pltpu.CompilerParams(
            dimension_semantics=("parallel",)),   # batch axis -> both v7x TensorCores
    )(mask, xflat, w1m, w2m)

    # strip the padded border, back to NCHW (model-boundary layout fix)
    out = out_flat.reshape(N, Hp, Wp, C)[:, 1:H + 1, 1:W + 1, :]
    return jnp.transpose(out, (0, 3, 1, 2)).astype(x.dtype)


# -------------------- pure-JAX references (for validation) --------------------
def _inorm_ref(y):
    mean = jnp.mean(y, axis=(2, 3), keepdims=True)
    var = jnp.mean((y - mean) ** 2, axis=(2, 3), keepdims=True)
    return (y - mean) * lax.rsqrt(var + EPS)


def _conv_ref(x, w, b, cast_bf16):
    xp = jnp.pad(x, ((0, 0), (0, 0), (1, 1), (1, 1)), mode="reflect")
    if cast_bf16:  # mimic the kernel's bf16 MXU inputs with f32 accumulation
        xp = xp.astype(jnp.bfloat16)
        w = w.astype(jnp.bfloat16)
    y = lax.conv_general_dilated(
        xp, w, (1, 1), "VALID",
        dimension_numbers=("NCHW", "OIHW", "NCHW"),
        preferred_element_type=jnp.float32)
    return y + b.reshape(1, -1, 1, 1)


def _reference(x, w1, b1, w2, b2, cast_bf16):
    h = jnp.maximum(_inorm_ref(_conv_ref(x, w1, b1, cast_bf16)), 0.0)
    y = _inorm_ref(_conv_ref(h, w2, b2, cast_bf16))
    return x + y


if __name__ == "__main__":
    key = jax.random.PRNGKey(0)
    kx, kw1, kb1, kw2, kb2 = jax.random.split(key, 5)
    N, C, H, W = 2, 32, 16, 16   # batch=2, dim=32, 16x16 feature map

    x = jax.random.normal(kx, (N, C, H, W), dtype=jnp.float32)
    w1 = 0.05 * jax.random.normal(kw1, (C, C, 3, 3), dtype=jnp.float32)
    b1 = 0.05 * jax.random.normal(kb1, (C,), dtype=jnp.float32)
    w2 = 0.05 * jax.random.normal(kw2, (C, C, 3, 3), dtype=jnp.float32)
    b2 = 0.05 * jax.random.normal(kb2, (C,), dtype=jnp.float32)

    out = resnet_block_forward(x, w1, b1, w2, b2)
    jax.block_until_ready(out)
    assert out.shape == (N, C, H, W), out.shape

    # Tight check vs a reference using the same bf16 matmul-input rounding
    # (note: both references include the conv biases; affine-free InstanceNorm
    # cancels them, so the bias-free kernel must still match).
    ref_bf16 = _reference(x, w1, b1, w2, b2, cast_bf16=True)
    assert jnp.max(jnp.abs(out - ref_bf16)) < 5e-3

    # Loose sanity check vs the full-f32 PyTorch-semantics reference
    # (bf16 MXU inputs introduce ~1e-2-scale differences on O(1) activations).
    ref_f32 = _reference(x, w1, b1, w2, b2, cast_bf16=False)
    assert jnp.max(jnp.abs(out - ref_f32)) < 1.5e-1

    print("KERNEL_OK")
</pallas_src>

<mosaic_0001>
module attributes {stable_mosaic.version = 11 : i64} {
  func.func @kernel(%arg0: i32, %arg1: memref<286x1xf32, #tpu.memory_space<vmem>>, %arg2: memref<1x324x32xf32, #tpu.memory_space<vmem>>, %arg3: memref<9x32x32xbf16, #tpu.memory_space<vmem>>, %arg4: memref<9x32x32xbf16, #tpu.memory_space<vmem>>, %arg5: memref<1x324x32xf32, #tpu.memory_space<vmem>>, %arg6: memref<324x32xf32, #tpu.memory_space<vmem>>) attributes {dimension_semantics = [#tpu.dimension_semantics<parallel>], iteration_bounds = array<i64: 2>, scalar_prefetch = 0 : i64, scratch_operands = 1 : i64, tpu.core_type = #tpu.core_type<tc>, window_params = [{pipeline_mode = #tpu.pipeline_mode<synchronous>, transform_indices = @transform_0, window_bounds = array<i64: 286, 1>}, {transform_indices = @transform_1, window_bounds = array<i64: 1, 324, 32>}, {pipeline_mode = #tpu.pipeline_mode<synchronous>, transform_indices = @transform_2, window_bounds = array<i64: 9, 32, 32>}, {pipeline_mode = #tpu.pipeline_mode<synchronous>, transform_indices = @transform_3, window_bounds = array<i64: 9, 32, 32>}, {transform_indices = @transform_4, window_bounds = array<i64: 1, 324, 32>}]} {
    %c0 = arith.constant 0 : index
    %c0_0 = arith.constant 0 : index
    %0 = vector.load %arg1[%c0, %c0_0] : memref<286x1xf32, #tpu.memory_space<vmem>>, vector<286x1xf32>
    %cst = arith.constant 0.000000e+00 : f32
    %1 = vector.broadcast %cst : f32 to vector<286x32xf32>
    %c0_1 = arith.constant 0 : index
    %c0_2 = arith.constant 0 : index
    %c0_3 = arith.constant 0 : index
    %2 = vector.load %arg2[%c0_1, %c0_2, %c0_3] : memref<1x324x32xf32, #tpu.memory_space<vmem>>, vector<1x286x32xf32>
    %3 = vector.shape_cast %2 : vector<1x286x32xf32> to vector<286x32xf32>
    %4 = arith.truncf %3 : vector<286x32xf32> to vector<286x32xbf16>
    %c0_4 = arith.constant 0 : index
    %c0_5 = arith.constant 0 : index
    %c0_6 = arith.constant 0 : index
    %5 = vector.load %arg3[%c0_4, %c0_5, %c0_6] : memref<9x32x32xbf16, #tpu.memory_space<vmem>>, vector<1x32x32xbf16>
    %6 = vector.shape_cast %5 : vector<1x32x32xbf16> to vector<32x32xbf16>
    %cst_7 = arith.constant dense<0.000000e+00> : vector<286x32xf32>
    %7 = tpu.matmul %4, %6, %cst_7 {dimension_numbers = #tpu.dot_dimension_numbers<[1], [0], [0], [1], [0, 0, 1, 1], [], []>} : vector<286x32xbf16>, vector<32x32xbf16>, vector<286x32xf32> -> vector<286x32xf32>
    %8 = arith.addf %1, %7 : vector<286x32xf32>
    %c0_8 = arith.constant 0 : index
    %c1 = arith.constant 1 : index
    %c0_9 = arith.constant 0 : index
    %9 = vector.load %arg2[%c0_8, %c1, %c0_9] : memref<1x324x32xf32, #tpu.memory_space<vmem>>, vector<1x286x32xf32>
    %10 = vector.shape_cast %9 : vector<1x286x32xf32> to vector<286x32xf32>
    %11 = arith.truncf %10 : vector<286x32xf32> to vector<286x32xbf16>
    %c1_10 = arith.constant 1 : index
    %c0_11 = arith.constant 0 : index
    %c0_12 = arith.constant 0 : index
    %12 = vector.load %arg3[%c1_10, %c0_11, %c0_12] : memref<9x32x32xbf16, #tpu.memory_space<vmem>>, vector<1x32x32xbf16>
    %13 = vector.shape_cast %12 : vector<1x32x32xbf16> to vector<32x32xbf16>
    %cst_13 = arith.constant dense<0.000000e+00> : vector<286x32xf32>
    %14 = tpu.matmul %11, %13, %cst_13 {dimension_numbers = #tpu.dot_dimension_numbers<[1], [0], [0], [1], [0, 0, 1, 1], [], []>} : vector<286x32xbf16>, vector<32x32xbf16>, vector<286x32xf32> -> vector<286x32xf32>
    %15 = arith.addf %8, %14 : vector<286x32xf32>
    %c0_14 = arith.constant 0 : index
    %c2 = arith.constant 2 : index
    %c0_15 = arith.constant 0 : index
    %16 = vector.load %arg2[%c0_14, %c2, %c0_15] : memref<1x324x32xf32, #tpu.memory_space<vmem>>, vector<1x286x32xf32>
    %17 = vector.shape_cast %16 : vector<1x286x32xf32> to vector<286x32xf32>
    %18 = arith.truncf %17 : vector<286x32xf32> to vector<286x32xbf16>
    %c2_16 = arith.constant 2 : index
    %c0_17 = arith.constant 0 : index
    %c0_18 = arith.constant 0 : index
    %19 = vector.load %arg3[%c2_16, %c0_17, %c0_18] : memref<9x32x32xbf16, #tpu.memory_space<vmem>>, vector<1x32x32xbf16>
    %20 = vector.shape_cast %19 : vector<1x32x32xbf16> to vector<32x32xbf16>
    %cst_19 = arith.constant dense<0.000000e+00> : vector<286x32xf32>
    %21 = tpu.matmul %18, %20, %cst_19 {dimension_numbers = #tpu.dot_dimension_numbers<[1], [0], [0], [1], [0, 0, 1, 1], [], []>} : vector<286x32xbf16>, vector<32x32xbf16>, vector<286x32xf32> -> vector<286x32xf32>
    %22 = arith.addf %15, %21 : vector<286x32xf32>
    %c0_20 = arith.constant 0 : index
    %c18 = arith.constant 18 : index
    %c0_21 = arith.constant 0 : index
    %23 = vector.load %arg2[%c0_20, %c18, %c0_21] : memref<1x324x32xf32, #tpu.memory_space<vmem>>, vector<1x286x32xf32>
    %24 = vector.shape_cast %23 : vector<1x286x32xf32> to vector<286x32xf32>
    %25 = arith.truncf %24 : vector<286x32xf32> to vector<286x32xbf16>
    %c3 = arith.constant 3 : index
    %c0_22 = arith.constant 0 : index
    %c0_23 = arith.constant 0 : index
    %26 = vector.load %arg3[%c3, %c0_22, %c0_23] : memref<9x32x32xbf16, #tpu.memory_space<vmem>>, vector<1x32x32xbf16>
    %27 = vector.shape_cast %26 : vector<1x32x32xbf16> to vector<32x32xbf16>
    %cst_24 = arith.constant dense<0.000000e+00> : vector<286x32xf32>
    %28 = tpu.matmul %25, %27, %cst_24 {dimension_numbers = #tpu.dot_dimension_numbers<[1], [0], [0], [1], [0, 0, 1, 1], [], []>} : vector<286x32xbf16>, vector<32x32xbf16>, vector<286x32xf32> -> vector<286x32xf32>
    %29 = arith.addf %22, %28 : vector<286x32xf32>
    %c0_25 = arith.constant 0 : index
    %c19 = arith.constant 19 : index
    %c0_26 = arith.constant 0 : index
    %30 = vector.load %arg2[%c0_25, %c19, %c0_26] : memref<1x324x32xf32, #tpu.memory_space<vmem>>, vector<1x286x32xf32>
    %31 = vector.shape_cast %30 : vector<1x286x32xf32> to vector<286x32xf32>
    %32 = arith.truncf %31 : vector<286x32xf32> to vector<286x32xbf16>
    %c4 = arith.constant 4 : index
    %c0_27 = arith.constant 0 : index
    %c0_28 = arith.constant 0 : index
    %33 = vector.load %arg3[%c4, %c0_27, %c0_28] : memref<9x32x32xbf16, #tpu.memory_space<vmem>>, vector<1x32x32xbf16>
    %34 = vector.shape_cast %33 : vector<1x32x32xbf16> to vector<32x32xbf16>
    %cst_29 = arith.constant dense<0.000000e+00> : vector<286x32xf32>
    %35 = tpu.matmul %32, %34, %cst_29 {dimension_numbers = #tpu.dot_dimension_numbers<[1], [0], [0], [1], [0, 0, 1, 1], [], []>} : vector<286x32xbf16>, vector<32x32xbf16>, vector<286x32xf32> -> vector<286x32xf32>
    %36 = arith.addf %29, %35 : vector<286x32xf32>
    %c0_30 = arith.constant 0 : index
    %c20 = arith.constant 20 : index
    %c0_31 = arith.constant 0 : index
    %37 = vector.load %arg2[%c0_30, %c20, %c0_31] : memref<1x324x32xf32, #tpu.memory_space<vmem>>, vector<1x286x32xf32>
    %38 = vector.shape_cast %37 : vector<1x286x32xf32> to vector<286x32xf32>
    %39 = arith.truncf %38 : vector<286x32xf32> to vector<286x32xbf16>
    %c5 = arith.constant 5 : index
    %c0_32 = arith.constant 0 : index
    %c0_33 = arith.constant 0 : index
    %40 = vector.load %arg3[%c5, %c0_32, %c0_33] : memref<9x32x32xbf16, #tpu.memory_space<vmem>>, vector<1x32x32xbf16>
    %41 = vector.shape_cast %40 : vector<1x32x32xbf16> to vector<32x32xbf16>
    %cst_34 = arith.constant dense<0.000000e+00> : vector<286x32xf32>
    %42 = tpu.matmul %39, %41, %cst_34 {dimension_numbers = #tpu.dot_dimension_numbers<[1], [0], [0], [1], [0, 0, 1, 1], [], []>} : vector<286x32xbf16>, vector<32x32xbf16>, vector<286x32xf32> -> vector<286x32xf32>
    %43 = arith.addf %36, %42 : vector<286x32xf32>
    %c0_35 = arith.constant 0 : index
    %c36 = arith.constant 36 : index
    %c0_36 = arith.constant 0 : index
    %44 = vector.load %arg2[%c0_35, %c36, %c0_36] : memref<1x324x32xf32, #tpu.memory_space<vmem>>, vector<1x286x32xf32>
    %45 = vector.shape_cast %44 : vector<1x286x32xf32> to vector<286x32xf32>
    %46 = arith.truncf %45 : vector<286x32xf32> to vector<286x32xbf16>
    %c6 = arith.constant 6 : index
    %c0_37 = arith.constant 0 : index
    %c0_38 = arith.constant 0 : index
    %47 = vector.load %arg3[%c6, %c0_37, %c0_38] : memref<9x32x32xbf16, #tpu.memory_space<vmem>>, vector<1x32x32xbf16>
    %48 = vector.shape_cast %47 : vector<1x32x32xbf16> to vector<32x32xbf16>
    %cst_39 = arith.constant dense<0.000000e+00> : vector<286x32xf32>
    %49 = tpu.matmul %46, %48, %cst_39 {dimension_numbers = #tpu.dot_dimension_numbers<[1], [0], [0], [1], [0, 0, 1, 1], [], []>} : vector<286x32xbf16>, vector<32x32xbf16>, vector<286x32xf32> -> vector<286x32xf32>
    %50 = arith.addf %43, %49 : vector<286x32xf32>
    %c0_40 = arith.constant 0 : index
    %c37 = arith.constant 37 : index
    %c0_41 = arith.constant 0 : index
    %51 = vector.load %arg2[%c0_40, %c37, %c0_41] : memref<1x324x32xf32, #tpu.memory_space<vmem>>, vector<1x286x32xf32>
    %52 = vector.shape_cast %51 : vector<1x286x32xf32> to vector<286x32xf32>
    %53 = arith.truncf %52 : vector<286x32xf32> to vector<286x32xbf16>
    %c7 = arith.constant 7 : index
    %c0_42 = arith.constant 0 : index
    %c0_43 = arith.constant 0 : index
    %54 = vector.load %arg3[%c7, %c0_42, %c0_43] : memref<9x32x32xbf16, #tpu.memory_space<vmem>>, vector<1x32x32xbf16>
    %55 = vector.shape_cast %54 : vector<1x32x32xbf16> to vector<32x32xbf16>
    %cst_44 = arith.constant dense<0.000000e+00> : vector<286x32xf32>
    %56 = tpu.matmul %53, %55, %cst_44 {dimension_numbers = #tpu.dot_dimension_numbers<[1], [0], [0], [1], [0, 0, 1, 1], [], []>} : vector<286x32xbf16>, vector<32x32xbf16>, vector<286x32xf32> -> vector<286x32xf32>
    %57 = arith.addf %50, %56 : vector<286x32xf32>
    %c0_45 = arith.constant 0 : index
    %c38 = arith.constant 38 : index
    %c0_46 = arith.constant 0 : index
    %58 = vector.load %arg2[%c0_45, %c38, %c0_46] : memref<1x324x32xf32, #tpu.memory_space<vmem>>, vector<1x286x32xf32>
    %59 = vector.shape_cast %58 : vector<1x286x32xf32> to vector<286x32xf32>
    %60 = arith.truncf %59 : vector<286x32xf32> to vector<286x32xbf16>
    %c8 = arith.constant 8 : index
    %c0_47 = arith.constant 0 : index
    %c0_48 = arith.constant 0 : index
    %61 = vector.load %arg3[%c8, %c0_47, %c0_48] : memref<9x32x32xbf16, #tpu.memory_space<vmem>>, vector<1x32x32xbf16>
    %62 = vector.shape_cast %61 : vector<1x32x32xbf16> to vector<32x32xbf16>
    %cst_49 = arith.constant dense<0.000000e+00> : vector<286x32xf32>
    %63 = tpu.matmul %60, %62, %cst_49 {dimension_numbers = #tpu.dot_dimension_numbers<[1], [0], [0], [1], [0, 0, 1, 1], [], []>} : vector<286x32xbf16>, vector<32x32xbf16>, vector<286x32xf32> -> vector<286x32xf32>
    %64 = arith.addf %57, %63 : vector<286x32xf32>
    %65 = vector.broadcast %0 : vector<286x1xf32> to vector<286x32xf32>
    %66 = arith.mulf %64, %65 : vector<286x32xf32>
    %cst_50 = arith.constant dense<0.000000e+00> : vector<32xf32>
    %67 = vector.multi_reduction <add>, %66, %cst_50 [0] : vector<286x32xf32> to vector<32xf32>
    %68 = vector.shape_cast %67 : vector<32xf32> to vector<1x32xf32>
    %cst_51 = arith.constant 3.906250e-03 : f32
    %69 = vector.broadcast %cst_51 : f32 to vector<1x32xf32>
    %70 = arith.mulf %68, %69 : vector<1x32xf32>
    %71 = vector.broadcast %70 : vector<1x32xf32> to vector<286x32xf32>
    %72 = arith.subf %64, %71 : vector<286x32xf32>
    %73 = vector.broadcast %0 : vector<286x1xf32> to vector<286x32xf32>
    %74 = arith.mulf %72, %73 : vector<286x32xf32>
    %75 = arith.mulf %74, %74 : vector<286x32xf32>
    %cst_52 = arith.constant dense<0.000000e+00> : vector<32xf32>
    %76 = vector.multi_reduction <add>, %75, %cst_52 [0] : vector<286x32xf32> to vector<32xf32>
    %77 = vector.shape_cast %76 : vector<32xf32> to vector<1x32xf32>
    %cst_53 = arith.constant 3.906250e-03 : f32
    %78 = vector.broadcast %cst_53 : f32 to vector<1x32xf32>
    %79 = arith.mulf %77, %78 : vector<1x32xf32>
    %80 = vector.broadcast %70 : vector<1x32xf32> to vector<286x32xf32>
    %81 = arith.subf %64, %80 : vector<286x32xf32>
    %cst_54 = arith.constant 9.99999974E-6 : f32
    %82 = vector.broadcast %cst_54 : f32 to vector<1x32xf32>
    %83 = arith.addf %79, %82 : vector<1x32xf32>
    %84 = math.rsqrt %83 : vector<1x32xf32>
    %85 = vector.broadcast %84 : vector<1x32xf32> to vector<286x32xf32>
    %86 = arith.mulf %81, %85 : vector<286x32xf32>
    %cst_55 = arith.constant 0.000000e+00 : f32
    %87 = vector.broadcast %cst_55 : f32 to vector<286x32xf32>
    %88 = arith.maximumf %86, %87 : vector<286x32xf32>
    %c19_56 = arith.constant 19 : index
    %c0_57 = arith.constant 0 : index
    %89 = vector.load %arg6[%c19_56, %c0_57] : memref<324x32xf32, #tpu.memory_space<vmem>>, vector<286x32xf32>
    tpu.vector_store %arg6[%c19_56, %c0_57], %88 {strides = array<i32>} : memref<324x32xf32, #tpu.memory_space<vmem>>, vector<286x32xf32>,
    %c20_58 = arith.constant 20 : index
    %c0_59 = arith.constant 0 : index
    %90 = vector.load %arg6[%c20_58, %c0_59] : memref<324x32xf32, #tpu.memory_space<vmem>>, vector<1x32xf32>
    %c18_60 = arith.constant 18 : index
    %c0_61 = arith.constant 0 : index
    %91 = vector.load %arg6[%c18_60, %c0_61] : memref<324x32xf32, #tpu.memory_space<vmem>>, vector<1x32xf32>
    tpu.vector_store %arg6[%c18_60, %c0_61], %90 {strides = array<i32>} : memref<324x32xf32, #tpu.memory_space<vmem>>, vector<1x32xf32>,
    %c33 = arith.constant 33 : index
    %c0_62 = arith.constant 0 : index
    %92 = vector.load %arg6[%c33, %c0_62] : memref<324x32xf32, #tpu.memory_space<vmem>>, vector<1x32xf32>
    %c35 = arith.constant 35 : index
    %c0_63 = arith.constant 0 : index
    %93 = vector.load %arg6[%c35, %c0_63] : memref<324x32xf32, #tpu.memory_space<vmem>>, vector<1x32xf32>
    tpu.vector_store %arg6[%c35, %c0_63], %92 {strides = array<i32>} : memref<324x32xf32, #tpu.memory_space<vmem>>, vector<1x32xf32>,
    %c38_64 = arith.constant 38 : index
    %c0_65 = arith.constant 0 : index
    %94 = vector.load %arg6[%c38_64, %c0_65] : memref<324x32xf32, #tpu.memory_space<vmem>>, vector<1x32xf32>
    %c36_66 = arith.constant 36 : index
    %c0_67 = arith.constant 0 : index
    %95 = vector.load %arg6[%c36_66, %c0_67] : memref<324x32xf32, #tpu.memory_space<vmem>>, vector<1x32xf32>
    tpu.vector_store %arg6[%c36_66, %c0_67], %94 {strides = array<i32>} : memref<324x32xf32, #tpu.memory_space<vmem>>, vector<1x32xf32>,
    %c51 = arith.constant 51 : index
    %c0_68 = arith.constant 0 : index
    %96 = vector.load %arg6[%c51, %c0_68] : memref<324x32xf32, #tpu.memory_space<vmem>>, vector<1x32xf32>
    %c53 = arith.constant 53 : index
    %c0_69 = arith.constant 0 : index
    %97 = vector.load %arg6[%c53, %c0_69] : memref<324x32xf32, #tpu.memory_space<vmem>>, vector<1x32xf32>
    tpu.vector_store %arg6[%c53, %c0_69], %96 {strides = array<i32>} : memref<324x32xf32, #tpu.memory_space<vmem>>, vector<1x32xf32>,
    %c56 = arith.constant 56 : index
    %c0_70 = arith.constant 0 : index
    %98 = vector.load %arg6[%c56, %c0_70] : memref<324x32xf32, #tpu.memory_space<vmem>>, vector<1x32xf32>
    %c54 = arith.constant 54 : index
    %c0_71 = arith.constant 0 : index
    %99 = vector.load %arg6[%c54, %c0_71] : memref<324x32xf32, #tpu.memory_space<vmem>>, vector<1x32xf32>
    tpu.vector_store %arg6[%c54, %c0_71], %98 {strides = array<i32>} : memref<324x32xf32, #tpu.memory_space<vmem>>, vector<1x32xf32>,
    %c69 = arith.constant 69 : index
    %c0_72 = arith.constant 0 : index
    %100 = vector.load %arg6[%c69, %c0_72] : memref<324x32xf32, #tpu.memory_space<vmem>>, vector<1x32xf32>
    %c71 = arith.constant 71 : index
    %c0_73 = arith.constant 0 : index
    %101 = vector.load %arg6[%c71, %c0_73] : memref<324x32xf32, #tpu.memory_space<vmem>>, vector<1x32xf32>
    tpu.vector_store %arg6[%c71, %c0_73], %100 {strides = array<i32>} : memref<324x32xf32, #tpu.memory_space<vmem>>, vector<1x32xf32>,
    %c74 = arith.constant 74 : index
    %c0_74 = arith.constant 0 : index
    %102 = vector.load %arg6[%c74, %c0_74] : memref<324x32xf32, #tpu.memory_space<vmem>>, vector<1x32xf32>
    %c72 = arith.constant 72 : index
    %c0_75 = arith.constant 0 : index
    %103 = vector.load %arg6[%c72, %c0_75] : memref<324x32xf32, #tpu.memory_space<vmem>>, vector<1x32xf32>
    tpu.vector_store %arg6[%c72, %c0_75], %102 {strides = array<i32>} : memref<324x32xf32, #tpu.memory_space<vmem>>, vector<1x32xf32>,
    %c87 = arith.constant 87 : index
    %c0_76 = arith.constant 0 : index
    %104 = vector.load %arg6[%c87, %c0_76] : memref<324x32xf32, #tpu.memory_space<vmem>>, vector<1x32xf32>
    %c89 = arith.constant 89 : index
    %c0_77 = arith.constant 0 : index
    %105 = vector.load %arg6[%c89, %c0_77] : memref<324x32xf32, #tpu.memory_space<vmem>>, vector<1x32xf32>
    tpu.vector_store %arg6[%c89, %c0_77], %104 {strides = array<i32>} : memref<324x32xf32, #tpu.memory_space<vmem>>, vector<1x32xf32>,
    %c92 = arith.constant 92 : index
    %c0_78 = arith.constant 0 : index
    %106 = vector.load %arg6[%c92, %c0_78] : memref<324x32xf32, #tpu.memory_space<vmem>>, vector<1x32xf32>
    %c90 = arith.constant 90 : index
    %c0_79 = arith.constant 0 : index
    %107 = vector.load %arg6[%c90, %c0_79] : memref<324x32xf32, #tpu.memory_space<vmem>>, vector<1x32xf32>
    tpu.vector_store %arg6[%c90, %c0_79], %106 {strides = array<i32>} : memref<324x32xf32, #tpu.memory_space<vmem>>, vector<1x32xf32>,
    %c105 = arith.constant 105 : index
    %c0_80 = arith.constant 0 : index
    %108 = vector.load %arg6[%c105, %c0_80] : memref<324x32xf32, #tpu.memory_space<vmem>>, vector<1x32xf32>
    %c107 = arith.constant 107 : index
    %c0_81 = arith.constant 0 : index
    %109 = vector.load %arg6[%c107, %c0_81] : memref<324x32xf32, #tpu.memory_space<vmem>>, vector<1x32xf32>
    tpu.vector_store %arg6[%c107, %c0_81], %108 {strides = array<i32>} : memref<324x32xf32, #tpu.memory_space<vmem>>, vector<1x32xf32>,
    %c110 = arith.constant 110 : index
    %c0_82 = arith.constant 0 : index
    %110 = vector.load %arg6[%c110, %c0_82] : memref<324x32xf32, #tpu.memory_space<vmem>>, vector<1x32xf32>
    %c108 = arith.constant 108 : index
    %c0_83 = arith.constant 0 : index
    %111 = vector.load %arg6[%c108, %c0_83] : memref<324x32xf32, #tpu.memory_space<vmem>>, vector<1x32xf32>
    tpu.vector_store %arg6[%c108, %c0_83], %110 {strides = array<i32>} : memref<324x32xf32, #tpu.memory_space<vmem>>, vector<1x32xf32>,
    %c123 = arith.constant 123 : index
    %c0_84 = arith.constant 0 : index
    %112 = vector.load %arg6[%c123, %c0_84] : memref<324x32xf32, #tpu.memory_space<vmem>>, vector<1x32xf32>
    %c125 = arith.constant 125 : index
    %c0_85 = arith.constant 0 : index
    %113 = vector.load %arg6[%c125, %c0_85] : memref<324x32xf32, #tpu.memory_space<vmem>>, vector<1x32xf32>
    tpu.vector_store %arg6[%c125, %c0_85], %112 {strides = array<i32>} : memref<324x32xf32, #tpu.memory_space<vmem>>, vector<1x32xf32>,
    %c128 = arith.constant 128 : index
    %c0_86 = arith.constant 0 : index
    %114 = vector.load %arg6[%c128, %c0_86] : memref<324x32xf32, #tpu.memory_space<vmem>>, vector<1x32xf32>
    %c126 = arith.constant 126 : index
    %c0_87 = arith.constant 0 : index
    %115 = vector.load %arg6[%c126, %c0_87] : memref<324x32xf32, #tpu.memory_space<vmem>>, vector<1x32xf32>
    tpu.vector_store %arg6[%c126, %c0_87], %114 {strides = array<i32>} : memref<324x32xf32, #tpu.memory_space<vmem>>, vector<1x32xf32>,
    %c141 = arith.constant 141 : index
    %c0_88 = arith.constant 0 : index
    %116 = vector.load %arg6[%c141, %c0_88] : memref<324x32xf32, #tpu.memory_space<vmem>>, vector<1x32xf32>
    %c143 = arith.constant 143 : index
    %c0_89 = arith.constant 0 : index
    %117 = vector.load %arg6[%c143, %c0_89] : memref<324x32xf32, #tpu.memory_space<vmem>>, vector<1x32xf32>
    tpu.vector_store %arg6[%c143, %c0_89], %116 {strides = array<i32>} : memref<324x32xf32, #tpu.memory_space<vmem>>, vector<1x32xf32>,
    %c146 = arith.constant 146 : index
    %c0_90 = arith.constant 0 : index
    %118 = vector.load %arg6[%c146, %c0_90] : memref<324x32xf32, #tpu.memory_space<vmem>>, vector<1x32xf32>
    %c144 = arith.constant 144 : index
    %c0_91 = arith.constant 0 : index
    %119 = vector.load %arg6[%c144, %c0_91] : memref<324x32xf32, #tpu.memory_space<vmem>>, vector<1x32xf32>
    tpu.vector_store %arg6[%c144, %c0_91], %118 {strides = array<i32>} : memref<324x32xf32, #tpu.memory_space<vmem>>, vector<1x32xf32>,
    %c159 = arith.constant 159 : index
    %c0_92 = arith.constant 0 : index
    %120 = vector.load %arg6[%c159, %c0_92] : memref<324x32xf32, #tpu.memory_space<vmem>>, vector<1x32xf32>
    %c161 = arith.constant 161 : index
    %c0_93 = arith.constant 0 : index
    %121 = vector.load %arg6[%c161, %c0_93] : memref<324x32xf32, #tpu.memory_space<vmem>>, vector<1x32xf32>
    tpu.vector_store %arg6[%c161, %c0_93], %120 {strides = array<i32>} : memref<324x32xf32, #tpu.memory_space<vmem>>, vector<1x32xf32>,
    %c164 = arith.constant 164 : index
    %c0_94 = arith.constant 0 : index
    %122 = vector.load %arg6[%c164, %c0_94] : memref<324x32xf32, #tpu.memory_space<vmem>>, vector<1x32xf32>
    %c162 = arith.constant 162 : index
    %c0_95 = arith.constant 0 : index
    %123 = vector.load %arg6[%c162, %c0_95] : memref<324x32xf32, #tpu.memory_space<vmem>>, vector<1x32xf32>
    tpu.vector_store %arg6[%c162, %c0_95], %122 {strides = array<i32>} : memref<324x32xf32, #tpu.memory_space<vmem>>, vector<1x32xf32>,
    %c177 = arith.constant 177 : index
    %c0_96 = arith.constant 0 : index
    %124 = vector.load %arg6[%c177, %c0_96] : memref<324x32xf32, #tpu.memory_space<vmem>>, vector<1x32xf32>
    %c179 = arith.constant 179 : index
    %c0_97 = arith.constant 0 : index
    %125 = vector.load %arg6[%c179, %c0_97] : memref<324x32xf32, #tpu.memory_space<vmem>>, vector<1x32xf32>
    tpu.vector_store %arg6[%c179, %c0_97], %124 {strides = array<i32>} : memref<324x32xf32, #tpu.memory_space<vmem>>, vector<1x32xf32>,
    %c182 = arith.constant 182 : index
    %c0_98 = arith.constant 0 : index
    %126 = vector.load %arg6[%c182, %c0_98] : memref<324x32xf32, #tpu.memory_space<vmem>>, vector<1x32xf32>
    %c180 = arith.constant 180 : index
    %c0_99 = arith.constant 0 : index
    %127 = vector.load %arg6[%c180, %c0_99] : memref<324x32xf32, #tpu.memory_space<vmem>>, vector<1x32xf32>
    tpu.vector_store %arg6[%c180, %c0_99], %126 {strides = array<i32>} : memref<324x32xf32, #tpu.memory_space<vmem>>, vector<1x32xf32>,
    %c195 = arith.constant 195 : index
    %c0_100 = arith.constant 0 : index
    %128 = vector.load %arg6[%c195, %c0_100] : memref<324x32xf32, #tpu.memory_space<vmem>>, vector<1x32xf32>
    %c197 = arith.constant 197 : index
    %c0_101 = arith.constant 0 : index
    %129 = vector.load %arg6[%c197, %c0_101] : memref<324x32xf32, #tpu.memory_space<vmem>>, vector<1x32xf32>
    tpu.vector_store %arg6[%c197, %c0_101], %128 {strides = array<i32>} : memref<324x32xf32, #tpu.memory_space<vmem>>, vector<1x32xf32>,
    %c200 = arith.constant 200 : index
    %c0_102 = arith.constant 0 : index
    %130 = vector.load %arg6[%c200, %c0_102] : memref<324x32xf32, #tpu.memory_space<vmem>>, vector<1x32xf32>
    %c198 = arith.constant 198 : index
    %c0_103 = arith.constant 0 : index
    %131 = vector.load %arg6[%c198, %c0_103] : memref<324x32xf32, #tpu.memory_space<vmem>>, vector<1x32xf32>
    tpu.vector_store %arg6[%c198, %c0_103], %130 {strides = array<i32>} : memref<324x32xf32, #tpu.memory_space<vmem>>, vector<1x32xf32>,
    %c213 = arith.constant 213 : index
    %c0_104 = arith.constant 0 : index
    %132 = vector.load %arg6[%c213, %c0_104] : memref<324x32xf32, #tpu.memory_space<vmem>>, vector<1x32xf32>
    %c215 = arith.constant 215 : index
    %c0_105 = arith.constant 0 : index
    %133 = vector.load %arg6[%c215, %c0_105] : memref<324x32xf32, #tpu.memory_space<vmem>>, vector<1x32xf32>
    tpu.vector_store %arg6[%c215, %c0_105], %132 {strides = array<i32>} : memref<324x32xf32, #tpu.memory_space<vmem>>, vector<1x32xf32>,
    %c218 = arith.constant 218 : index
    %c0_106 = arith.constant 0 : index
    %134 = vector.load %arg6[%c218, %c0_106] : memref<324x32xf32, #tpu.memory_space<vmem>>, vector<1x32xf32>
    %c216 = arith.constant 216 : index
    %c0_107 = arith.constant 0 : index
    %135 = vector.load %arg6[%c216, %c0_107] : memref<324x32xf32, #tpu.memory_space<vmem>>, vector<1x32xf32>
    tpu.vector_store %arg6[%c216, %c0_107], %134 {strides = array<i32>} : memref<324x32xf32, #tpu.memory_space<vmem>>, vector<1x32xf32>,
    %c231 = arith.constant 231 : index
    %c0_108 = arith.constant 0 : index
    %136 = vector.load %arg6[%c231, %c0_108] : memref<324x32xf32, #tpu.memory_space<vmem>>, vector<1x32xf32>
    %c233 = arith.constant 233 : index
    %c0_109 = arith.constant 0 : index
    %137 = vector.load %arg6[%c233, %c0_109] : memref<324x32xf32, #tpu.memory_space<vmem>>, vector<1x32xf32>
    tpu.vector_store %arg6[%c233, %c0_109], %136 {strides = array<i32>} : memref<324x32xf32, #tpu.memory_space<vmem>>, vector<1x32xf32>,
    %c236 = arith.constant 236 : index
    %c0_110 = arith.constant 0 : index
    %138 = vector.load %arg6[%c236, %c0_110] : memref<324x32xf32, #tpu.memory_space<vmem>>, vector<1x32xf32>
    %c234 = arith.constant 234 : index
    %c0_111 = arith.constant 0 : index
    %139 = vector.load %arg6[%c234, %c0_111] : memref<324x32xf32, #tpu.memory_space<vmem>>, vector<1x32xf32>
    tpu.vector_store %arg6[%c234, %c0_111], %138 {strides = array<i32>} : memref<324x32xf32, #tpu.memory_space<vmem>>, vector<1x32xf32>,
    %c249 = arith.constant 249 : index
    %c0_112 = arith.constant 0 : index
    %140 = vector.load %arg6[%c249, %c0_112] : memref<324x32xf32, #tpu.memory_space<vmem>>, vector<1x32xf32>
    %c251 = arith.constant 251 : index
    %c0_113 = arith.constant 0 : index
    %141 = vector.load %arg6[%c251, %c0_113] : memref<324x32xf32, #tpu.memory_space<vmem>>, vector<1x32xf32>
    tpu.vector_store %arg6[%c251, %c0_113], %140 {strides = array<i32>} : memref<324x32xf32, #tpu.memory_space<vmem>>, vector<1x32xf32>,
    %c254 = arith.constant 254 : index
    %c0_114 = arith.constant 0 : index
    %142 = vector.load %arg6[%c254, %c0_114] : memref<324x32xf32, #tpu.memory_space<vmem>>, vector<1x32xf32>
    %c252 = arith.constant 252 : index
    %c0_115 = arith.constant 0 : index
    %143 = vector.load %arg6[%c252, %c0_115] : memref<324x32xf32, #tpu.memory_space<vmem>>, vector<1x32xf32>
    tpu.vector_store %arg6[%c252, %c0_115], %142 {strides = array<i32>} : memref<324x32xf32, #tpu.memory_space<vmem>>, vector<1x32xf32>,
    %c267 = arith.constant 267 : index
    %c0_116 = arith.constant 0 : index
    %144 = vector.load %arg6[%c267, %c0_116] : memref<324x32xf32, #tpu.memory_space<vmem>>, vector<1x32xf32>
    %c269 = arith.constant 269 : index
    %c0_117 = arith.constant 0 : index
    %145 = vector.load %arg6[%c269, %c0_117] : memref<324x32xf32, #tpu.memory_space<vmem>>, vector<1x32xf32>
    tpu.vector_store %arg6[%c269, %c0_117], %144 {strides = array<i32>} : memref<324x32xf32, #tpu.memory_space<vmem>>, vector<1x32xf32>,
    %c272 = arith.constant 272 : index
    %c0_118 = arith.constant 0 : index
    %146 = vector.load %arg6[%c272, %c0_118] : memref<324x32xf32, #tpu.memory_space<vmem>>, vector<1x32xf32>
    %c270 = arith.constant 270 : index
    %c0_119 = arith.constant 0 : index
    %147 = vector.load %arg6[%c270, %c0_119] : memref<324x32xf32, #tpu.memory_space<vmem>>, vector<1x32xf32>
    tpu.vector_store %arg6[%c270, %c0_119], %146 {strides = array<i32>} : memref<324x32xf32, #tpu.memory_space<vmem>>, vector<1x32xf32>,
    %c285 = arith.constant 285 : index
    %c0_120 = arith.constant 0 : index
    %148 = vector.load %arg6[%c285, %c0_120] : memref<324x32xf32, #tpu.memory_space<vmem>>, vector<1x32xf32>
    %c287 = arith.constant 287 : index
    %c0_121 = arith.constant 0 : index
    %149 = vector.load %arg6[%c287, %c0_121] : memref<324x32xf32, #tpu.memory_space<vmem>>, vector<1x32xf32>
    tpu.vector_store %arg6[%c287, %c0_121], %148 {strides = array<i32>} : memref<324x32xf32, #tpu.memory_space<vmem>>, vector<1x32xf32>,
    %c290 = arith.constant 290 : index
    %c0_122 = arith.constant 0 : index
    %150 = vector.load %arg6[%c290, %c0_122] : memref<324x32xf32, #tpu.memory_space<vmem>>, vector<1x32xf32>
    %c288 = arith.constant 288 : index
    %c0_123 = arith.constant 0 : index
    %151 = vector.load %arg6[%c288, %c0_123] : memref<324x32xf32, #tpu.memory_space<vmem>>, vector<1x32xf32>
    tpu.vector_store %arg6[%c288, %c0_123], %150 {strides = array<i32>} : memref<324x32xf32, #tpu.memory_space<vmem>>, vector<1x32xf32>,
    %c303 = arith.constant 303 : index
    %c0_124 = arith.constant 0 : index
    %152 = vector.load %arg6[%c303, %c0_124] : memref<324x32xf32, #tpu.memory_space<vmem>>, vector<1x32xf32>
    %c305 = arith.constant 305 : index
    %c0_125 = arith.constant 0 : index
    %153 = vector.load %arg6[%c305, %c0_125] : memref<324x32xf32, #tpu.memory_space<vmem>>, vector<1x32xf32>
    tpu.vector_store %arg6[%c305, %c0_125], %152 {strides = array<i32>} : memref<324x32xf32, #tpu.memory_space<vmem>>, vector<1x32xf32>,
    %c36_126 = arith.constant 36 : index
    %c0_127 = arith.constant 0 : index
    %154 = vector.load %arg6[%c36_126, %c0_127] : memref<324x32xf32, #tpu.memory_space<vmem>>, vector<18x32xf32>
    %c0_128 = arith.constant 0 : index
    %c0_129 = arith.constant 0 : index
    %155 = vector.load %arg6[%c0_128, %c0_129] : memref<324x32xf32, #tpu.memory_space<vmem>>, vector<18x32xf32>
    tpu.vector_store %arg6[%c0_128, %c0_129], %154 {strides = array<i32>} : memref<324x32xf32, #tpu.memory_space<vmem>>, vector<18x32xf32>,
    %c270_130 = arith.constant 270 : index
    %c0_131 = arith.constant 0 : index
    %156 = vector.load %arg6[%c270_130, %c0_131] : memref<324x32xf32, #tpu.memory_space<vmem>>, vector<18x32xf32>
    %c306 = arith.constant 306 : index
    %c0_132 = arith.constant 0 : index
    %157 = vector.load %arg6[%c306, %c0_132] : memref<324x32xf32, #tpu.memory_space<vmem>>, vector<18x32xf32>
    tpu.vector_store %arg6[%c306, %c0_132], %156 {strides = array<i32>} : memref<324x32xf32, #tpu.memory_space<vmem>>, vector<18x32xf32>,
    %cst_133 = arith.constant 0.000000e+00 : f32
    %158 = vector.broadcast %cst_133 : f32 to vector<286x32xf32>
    %c0_134 = arith.constant 0 : index
    %c0_135 = arith.constant 0 : index
    %159 = vector.load %arg6[%c0_134, %c0_135] : memref<324x32xf32, #tpu.memory_space<vmem>>, vector<286x32xf32>
    %160 = arith.truncf %159 : vector<286x32xf32> to vector<286x32xbf16>
    %c0_136 = arith.constant 0 : index
    %c0_137 = arith.constant 0 : index
    %c0_138 = arith.constant 0 : index
    %161 = vector.load %arg4[%c0_136, %c0_137, %c0_138] : memref<9x32x32xbf16, #tpu.memory_space<vmem>>, vector<1x32x32xbf16>
    %162 = vector.shape_cast %161 : vector<1x32x32xbf16> to vector<32x32xbf16>
    %cst_139 = arith.constant dense<0.000000e+00> : vector<286x32xf32>
    %163 = tpu.matmul %160, %162, %cst_139 {dimension_numbers = #tpu.dot_dimension_numbers<[1], [0], [0], [1], [0, 0, 1, 1], [], []>} : vector<286x32xbf16>, vector<32x32xbf16>, vector<286x32xf32> -> vector<286x32xf32>
    %164 = arith.addf %158, %163 : vector<286x32xf32>
    %c1_140 = arith.constant 1 : index
    %c0_141 = arith.constant 0 : index
    %165 = vector.load %arg6[%c1_140, %c0_141] : memref<324x32xf32, #tpu.memory_space<vmem>>, vector<286x32xf32>
    %166 = arith.truncf %165 : vector<286x32xf32> to vector<286x32xbf16>
    %c1_142 = arith.constant 1 : index
    %c0_143 = arith.constant 0 : index
    %c0_144 = arith.constant 0 : index
    %167 = vector.load %arg4[%c1_142, %c0_143, %c0_144] : memref<9x32x32xbf16, #tpu.memory_space<vmem>>, vector<1x32x32xbf16>
    %168 = vector.shape_cast %167 : vector<1x32x32xbf16> to vector<32x32xbf16>
    %cst_145 = arith.constant dense<0.000000e+00> : vector<286x32xf32>
    %169 = tpu.matmul %166, %168, %cst_145 {dimension_numbers = #tpu.dot_dimension_numbers<[1], [0], [0], [1], [0, 0, 1, 1], [], []>} : vector<286x32xbf16>, vector<32x32xbf16>, vector<286x32xf32> -> vector<286x32xf32>
    %170 = arith.addf %164, %169 : vector<286x32xf32>
    %c2_146 = arith.constant 2 : index
    %c0_147 = arith.constant 0 : index
    %171 = vector.load %arg6[%c2_146, %c0_147] : memref<324x32xf32, #tpu.memory_space<vmem>>, vector<286x32xf32>
    %172 = arith.truncf %171 : vector<286x32xf32> to vector<286x32xbf16>
    %c2_148 = arith.constant 2 : index
    %c0_149 = arith.constant 0 : index
    %c0_150 = arith.constant 0 : index
    %173 = vector.load %arg4[%c2_148, %c0_149, %c0_150] : memref<9x32x32xbf16, #tpu.memory_space<vmem>>, vector<1x32x32xbf16>
    %174 = vector.shape_cast %173 : vector<1x32x32xbf16> to vector<32x32xbf16>
    %cst_151 = arith.constant dense<0.000000e+00> : vector<286x32xf32>
    %175 = tpu.matmul %172, %174, %cst_151 {dimension_numbers = #tpu.dot_dimension_numbers<[1], [0], [0], [1], [0, 0, 1, 1], [], []>} : vector<286x32xbf16>, vector<32x32xbf16>, vector<286x32xf32> -> vector<286x32xf32>
    %176 = arith.addf %170, %175 : vector<286x32xf32>
    %c18_152 = arith.constant 18 : index
    %c0_153 = arith.constant 0 : index
    %177 = vector.load %arg6[%c18_152, %c0_153] : memref<324x32xf32, #tpu.memory_space<vmem>>, vector<286x32xf32>
    %178 = arith.truncf %177 : vector<286x32xf32> to vector<286x32xbf16>
    %c3_154 = arith.constant 3 : index
    %c0_155 = arith.constant 0 : index
    %c0_156 = arith.constant 0 : index
    %179 = vector.load %arg4[%c3_154, %c0_155, %c0_156] : memref<9x32x32xbf16, #tpu.memory_space<vmem>>, vector<1x32x32xbf16>
    %180 = vector.shape_cast %179 : vector<1x32x32xbf16> to vector<32x32xbf16>
    %cst_157 = arith.constant dense<0.000000e+00> : vector<286x32xf32>
    %181 = tpu.matmul %178, %180, %cst_157 {dimension_numbers = #tpu.dot_dimension_numbers<[1], [0], [0], [1], [0, 0, 1, 1], [], []>} : vector<286x32xbf16>, vector<32x32xbf16>, vector<286x32xf32> -> vector<286x32xf32>
    %182 = arith.addf %176, %181 : vector<286x32xf32>
    %c19_158 = arith.constant 19 : index
    %c0_159 = arith.constant 0 : index
    %183 = vector.load %arg6[%c19_158, %c0_159] : memref<324x32xf32, #tpu.memory_space<vmem>>, vector<286x32xf32>
    %184 = arith.truncf %183 : vector<286x32xf32> to vector<286x32xbf16>
    %c4_160 = arith.constant 4 : index
    %c0_161 = arith.constant 0 : index
    %c0_162 = arith.constant 0 : index
    %185 = vector.load %arg4[%c4_160, %c0_161, %c0_162] : memref<9x32x32xbf16, #tpu.memory_space<vmem>>, vector<1x32x32xbf16>
    %186 = vector.shape_cast %185 : vector<1x32x32xbf16> to vector<32x32xbf16>
    %cst_163 = arith.constant dense<0.000000e+00> : vector<286x32xf32>
    %187 = tpu.matmul %184, %186, %cst_163 {dimension_numbers = #tpu.dot_dimension_numbers<[1], [0], [0], [1], [0, 0, 1, 1], [], []>} : vector<286x32xbf16>, vector<32x32xbf16>, vector<286x32xf32> -> vector<286x32xf32>
    %188 = arith.addf %182, %187 : vector<286x32xf32>
    %c20_164 = arith.constant 20 : index
    %c0_165 = arith.constant 0 : index
    %189 = vector.load %arg6[%c20_164, %c0_165] : memref<324x32xf32, #tpu.memory_space<vmem>>, vector<286x32xf32>
    %190 = arith.truncf %189 : vector<286x32xf32> to vector<286x32xbf16>
    %c5_166 = arith.constant 5 : index
    %c0_167 = arith.constant 0 : index
    %c0_168 = arith.constant 0 : index
    %191 = vector.load %arg4[%c5_166, %c0_167, %c0_168] : memref<9x32x32xbf16, #tpu.memory_space<vmem>>, vector<1x32x32xbf16>
    %192 = vector.shape_cast %191 : vector<1x32x32xbf16> to vector<32x32xbf16>
    %cst_169 = arith.constant dense<0.000000e+00> : vector<286x32xf32>
    %193 = tpu.matmul %190, %192, %cst_169 {dimension_numbers = #tpu.dot_dimension_numbers<[1], [0], [0], [1], [0, 0, 1, 1], [], []>} : vector<286x32xbf16>, vector<32x32xbf16>, vector<286x32xf32> -> vector<286x32xf32>
    %194 = arith.addf %188, %193 : vector<286x32xf32>
    %c36_170 = arith.constant 36 : index
    %c0_171 = arith.constant 0 : index
    %195 = vector.load %arg6[%c36_170, %c0_171] : memref<324x32xf32, #tpu.memory_space<vmem>>, vector<286x32xf32>
    %196 = arith.truncf %195 : vector<286x32xf32> to vector<286x32xbf16>
    %c6_172 = arith.constant 6 : index
    %c0_173 = arith.constant 0 : index
    %c0_174 = arith.constant 0 : index
    %197 = vector.load %arg4[%c6_172, %c0_173, %c0_174] : memref<9x32x32xbf16, #tpu.memory_space<vmem>>, vector<1x32x32xbf16>
    %198 = vector.shape_cast %197 : vector<1x32x32xbf16> to vector<32x32xbf16>
    %cst_175 = arith.constant dense<0.000000e+00> : vector<286x32xf32>
    %199 = tpu.matmul %196, %198, %cst_175 {dimension_numbers = #tpu.dot_dimension_numbers<[1], [0], [0], [1], [0, 0, 1, 1], [], []>} : vector<286x32xbf16>, vector<32x32xbf16>, vector<286x32xf32> -> vector<286x32xf32>
    %200 = arith.addf %194, %199 : vector<286x32xf32>
    %c37_176 = arith.constant 37 : index
    %c0_177 = arith.constant 0 : index
    %201 = vector.load %arg6[%c37_176, %c0_177] : memref<324x32xf32, #tpu.memory_space<vmem>>, vector<286x32xf32>
    %202 = arith.truncf %201 : vector<286x32xf32> to vector<286x32xbf16>
    %c7_178 = arith.constant 7 : index
    %c0_179 = arith.constant 0 : index
    %c0_180 = arith.constant 0 : index
    %203 = vector.load %arg4[%c7_178, %c0_179, %c0_180] : memref<9x32x32xbf16, #tpu.memory_space<vmem>>, vector<1x32x32xbf16>
    %204 = vector.shape_cast %203 : vector<1x32x32xbf16> to vector<32x32xbf16>
    %cst_181 = arith.constant dense<0.000000e+00> : vector<286x32xf32>
    %205 = tpu.matmul %202, %204, %cst_181 {dimension_numbers = #tpu.dot_dimension_numbers<[1], [0], [0], [1], [0, 0, 1, 1], [], []>} : vector<286x32xbf16>, vector<32x32xbf16>, vector<286x32xf32> -> vector<286x32xf32>
    %206 = arith.addf %200, %205 : vector<286x32xf32>
    %c38_182 = arith.constant 38 : index
    %c0_183 = arith.constant 0 : index
    %207 = vector.load %arg6[%c38_182, %c0_183] : memref<324x32xf32, #tpu.memory_space<vmem>>, vector<286x32xf32>
    %208 = arith.truncf %207 : vector<286x32xf32> to vector<286x32xbf16>
    %c8_184 = arith.constant 8 : index
    %c0_185 = arith.constant 0 : index
    %c0_186 = arith.constant 0 : index
    %209 = vector.load %arg4[%c8_184, %c0_185, %c0_186] : memref<9x32x32xbf16, #tpu.memory_space<vmem>>, vector<1x32x32xbf16>
    %210 = vector.shape_cast %209 : vector<1x32x32xbf16> to vector<32x32xbf16>
    %cst_187 = arith.constant dense<0.000000e+00> : vector<286x32xf32>
    %211 = tpu.matmul %208, %210, %cst_187 {dimension_numbers = #tpu.dot_dimension_numbers<[1], [0], [0], [1], [0, 0, 1, 1], [], []>} : vector<286x32xbf16>, vector<32x32xbf16>, vector<286x32xf32> -> vector<286x32xf32>
    %212 = arith.addf %206, %211 : vector<286x32xf32>
    %213 = vector.broadcast %0 : vector<286x1xf32> to vector<286x32xf32>
    %214 = arith.mulf %212, %213 : vector<286x32xf32>
    %cst_188 = arith.constant dense<0.000000e+00> : vector<32xf32>
    %215 = vector.multi_reduction <add>, %214, %cst_188 [0] : vector<286x32xf32> to vector<32xf32>
    %216 = vector.shape_cast %215 : vector<32xf32> to vector<1x32xf32>
    %cst_189 = arith.constant 3.906250e-03 : f32
    %217 = vector.broadcast %cst_189 : f32 to vector<1x32xf32>
    %218 = arith.mulf %216, %217 : vector<1x32xf32>
    %219 = vector.broadcast %218 : vector<1x32xf32> to vector<286x32xf32>
    %220 = arith.subf %212, %219 : vector<286x32xf32>
    %221 = vector.broadcast %0 : vector<286x1xf32> to vector<286x32xf32>
    %222 = arith.mulf %220, %221 : vector<286x32xf32>
    %223 = arith.mulf %222, %222 : vector<286x32xf32>
    %cst_190 = arith.constant dense<0.000000e+00> : vector<32xf32>
    %224 = vector.multi_reduction <add>, %223, %cst_190 [0] : vector<286x32xf32> to vector<32xf32>
    %225 = vector.shape_cast %224 : vector<32xf32> to vector<1x32xf32>
    %cst_191 = arith.constant 3.906250e-03 : f32
    %226 = vector.broadcast %cst_191 : f32 to vector<1x32xf32>
    %227 = arith.mulf %225, %226 : vector<1x32xf32>
    %228 = vector.broadcast %218 : vector<1x32xf32> to vector<286x32xf32>
    %229 = arith.subf %212, %228 : vector<286x32xf32>
    %cst_192 = arith.constant 9.99999974E-6 : f32
    %230 = vector.broadcast %cst_192 : f32 to vector<1x32xf32>
    %231 = arith.addf %227, %230 : vector<1x32xf32>
    %232 = math.rsqrt %231 : vector<1x32xf32>
    %233 = vector.broadcast %232 : vector<1x32xf32> to vector<286x32xf32>
    %234 = arith.mulf %229, %233 : vector<286x32xf32>
    %c0_193 = arith.constant 0 : index
    %c19_194 = arith.constant 19 : index
    %c0_195 = arith.constant 0 : index
    %235 = vector.load %arg2[%c0_193, %c19_194, %c0_195] : memref<1x324x32xf32, #tpu.memory_space<vmem>>, vector<1x286x32xf32>
    %236 = vector.shape_cast %235 : vector<1x286x32xf32> to vector<286x32xf32>
    %237 = arith.addf %234, %236 : vector<286x32xf32>
    %c0_196 = arith.constant 0 : index
    %c19_197 = arith.constant 19 : index
    %c0_198 = arith.constant 0 : index
    %238 = vector.load %arg5[%c0_196, %c19_197, %c0_198] : memref<1x324x32xf32, #tpu.memory_space<vmem>>, vector<1x286x32xf32>
    %239 = vector.shape_cast %238 : vector<1x286x32xf32> to vector<286x32xf32>
    %240 = vector.shape_cast %237 : vector<286x32xf32> to vector<1x286x32xf32>
    tpu.vector_store %arg5[%c0_196, %c19_197, %c0_198], %240 {strides = array<i32>} : memref<1x324x32xf32, #tpu.memory_space<vmem>>, vector<1x286x32xf32>,
    return
  }
  func.func @transform_0(%arg0: i32) -> (i32, i32) {
    %c0_i32 = arith.constant 0 : i32
    %c0_i32_0 = arith.constant 0 : i32
    %c0_i32_1 = arith.constant 0 : i32
    return %c0_i32, %c0_i32_0 : i32, i32
  }
  func.func @transform_1(%arg0: i32) -> (i32, i32, i32) {
    %c0_i32 = arith.constant 0 : i32
    %c0_i32_0 = arith.constant 0 : i32
    %c0_i32_1 = arith.constant 0 : i32
    return %arg0, %c0_i32, %c0_i32_0 : i32, i32, i32
  }
  func.func @transform_2(%arg0: i32) -> (i32, i32, i32) {
    %c0_i32 = arith.constant 0 : i32
    %c0_i32_0 = arith.constant 0 : i32
    %c0_i32_1 = arith.constant 0 : i32
    %c0_i32_2 = arith.constant 0 : i32
    return %c0_i32, %c0_i32_0, %c0_i32_1 : i32, i32, i32
  }
  func.func @transform_3(%arg0: i32) -> (i32, i32, i32) {
    %c0_i32 = arith.constant 0 : i32
    %c0_i32_0 = arith.constant 0 : i32
    %c0_i32_1 = arith.constant 0 : i32
    %c0_i32_2 = arith.constant 0 : i32
    return %c0_i32, %c0_i32_0, %c0_i32_1 : i32, i32, i32
  }
  func.func @transform_4(%arg0: i32) -> (i32, i32, i32) {
    %c0_i32 = arith.constant 0 : i32
    %c0_i32_0 = arith.constant 0 : i32
    %c0_i32_1 = arith.constant 0 : i32
    return %arg0, %c0_i32, %c0_i32_0 : i32, i32, i32
  }
}

</mosaic_0001>

<llo_original>
// kernel: resnet_block_forward.1
$region0: #{resnet_block_forward.1}
  #allocation0 [shape = 'u32[]', space=smem, size = 0x4, offset = 0x4, fixed_abs, tag = 'smem constant byte address 0x4 - core index']
  #allocation1 [shape = 'u32[144,128]{1,0:T(1,128)}', space=vmem, size = 0x12000, scoped, tag = 'internal scratch']
  #allocation2 [shape = 'f32[324,32]{1,0:T(8,128)}', space=vmem, size = 0x29000, scoped, tag = 'scratch operand']
  %s0 = inlined_call_operand.vmem [shape: f32[286,1], index: 0, kind: input, shape index: {}]
  %s1 = inlined_call_operand.vmem [shape: f32[2,324,32], index: 1, kind: input, shape index: {}]
  %s2 = inlined_call_operand.vmem [shape: bf16[9,32,32], index: 2, kind: input, shape index: {}]
  %s3 = inlined_call_operand.vmem [shape: bf16[9,32,32], index: 3, kind: input, shape index: {}]
  %s4 = inlined_call_operand.vmem [shape: f32[2,324,32], index: 4, kind: output, shape index: {}]
  %s5 = sld [smem:[#allocation0]]
  $region49: #{resnet_block_forward.1} parent=0
    _
  %s7 = ssub.s32 1, %s5
  %s8 = scalar_select 0, %s7, %s5
  loop: start=0, step=1, limit=4
  $region2: #{resnet_block_forward.1} parent=0 // loop_pre_header
    _
  $region3: #{resnet_block_forward.1} parent=0 // loop_header
    %s10 = sphi 0, %s14
    %p11 = scmp.ge.s32.totalorder %s10, 4
    %s18 = sphi 0, %s18
    %s20 = sphi 0, %s18
    %s21 = sphi 0, %s20
    %s35 = sphi 0, %s21
    %s41 = sphi 0, %s43
    %s44 = sphi 0, %s41
    %s45 = sphi 0, %s44
    %s61 = sphi 0, %s45
    %s65 = sphi 0, %s65
    %s67 = sphi 0, %s65
    %s68 = sphi 0, %s67
    %s82 = sphi 0, %s68
    %s86 = sphi 0, %s86
    %s88 = sphi 0, %s86
    %s89 = sphi 0, %s88
    %s103 = sphi 0, %s89
    %s109 = sphi 0, %s111
    %s112 = sphi 0, %s109
    %s113 = sphi 0, %s112
    %s129 = sphi 0, %s113
  $region4: #{resnet_block_forward.1} parent=0 // loop_header_branch
    %13 = sbr.rel (%p11) target = $region8
  $region5: #{resnet_block_forward.1} parent=0 // loop_body
    %s15 = ssub.s32 %s10, 1
    %s16 = ssub.s32 %s10, 2
    %s17 = sadd.s32 %s10, 1
    %s19 = sadd.s32 %s18, 1
    %p22 = scmp.eq.s32.totalorder %s10, 1
    %p23 = scmp.ne.s32.totalorder %s18, %s20
    %p24 = scmp.eq.s32.totalorder %s10, 0
    %p25 = por %p23, %p24
    %p26 = scmp.ne.s32.totalorder %s18, %s20
    %p27 = scmp.eq.s32.totalorder %s15, 1
    %p28 = por %p26, %p27
    %p29 = scmp.ne.s32.totalorder %s20, %s21
    %p30 = scmp.eq.s32.totalorder %s15, 0
    %p31 = por %p29, %p30
    %p32 = scmp.ne.s32.totalorder %s20, %s21
    %p33 = scmp.eq.s32.totalorder %s16, 1
    %p34 = por %p32, %p33
    %p36 = scmp.ne.s32.totalorder %s21, %s35
    %p37 = scmp.eq.s32.totalorder %s16, 0
    %p38 = por %p36, %p37
    %s39 = ssub.s32 %s10, %s17
    %p40 = scmp.eq.s32.totalorder %s39, 0
    %s42 = sadd.s32 %s41, 1
    %s43 = scalar_select %p40, %s41, %s42
    %p46 = pneg %p40
    %p47 = scmp.eq.s32.totalorder %s10, 1
    %p48 = por %p46, %p47
    %p49 = scmp.ne.s32.totalorder %s41, %s44
    %p50 = scmp.eq.s32.totalorder %s10, 0
    %p51 = por %p49, %p50
    %p52 = scmp.ne.s32.totalorder %s41, %s44
    %p53 = scmp.eq.s32.totalorder %s15, 1
    %p54 = por %p52, %p53
    %p55 = scmp.ne.s32.totalorder %s44, %s45
    %p56 = scmp.eq.s32.totalorder %s15, 0
    %p57 = por %p55, %p56
    %p58 = scmp.ne.s32.totalorder %s44, %s45
    %p59 = scmp.eq.s32.totalorder %s16, 1
    %p60 = por %p58, %p59
    %p62 = scmp.ne.s32.totalorder %s45, %s61
    %p63 = scmp.eq.s32.totalorder %s16, 0
    %p64 = por %p62, %p63
    %s66 = sadd.s32 %s65, 1
    %p69 = scmp.eq.s32.totalorder %s10, 1
    %p70 = scmp.ne.s32.totalorder %s65, %s67
    %p71 = scmp.eq.s32.totalorder %s10, 0
    %p72 = por %p70, %p71
    %p73 = scmp.ne.s32.totalorder %s65, %s67
    %p74 = scmp.eq.s32.totalorder %s15, 1
    %p75 = por %p73, %p74
    %p76 = scmp.ne.s32.totalorder %s67, %s68
    %p77 = scmp.eq.s32.totalorder %s15, 0
    %p78 = por %p76, %p77
    %p79 = scmp.ne.s32.totalorder %s67, %s68
    %p80 = scmp.eq.s32.totalorder %s16, 1
    %p81 = por %p79, %p80
    %p83 = scmp.ne.s32.totalorder %s68, %s82
    %p84 = scmp.eq.s32.totalorder %s16, 0
    %p85 = por %p83, %p84
    %s87 = sadd.s32 %s86, 1
    %p90 = scmp.eq.s32.totalorder %s10, 1
    %p91 = scmp.ne.s32.totalorder %s86, %s88
    %p92 = scmp.eq.s32.totalorder %s10, 0
    %p93 = por %p91, %p92
    %p94 = scmp.ne.s32.totalorder %s86, %s88
    %p95 = scmp.eq.s32.totalorder %s15, 1
    %p96 = por %p94, %p95
    %p97 = scmp.ne.s32.totalorder %s88, %s89
    %p98 = scmp.eq.s32.totalorder %s15, 0
    %p99 = por %p97, %p98
    %p100 = scmp.ne.s32.totalorder %s88, %s89
    %p101 = scmp.eq.s32.totalorder %s16, 1
    %p102 = por %p100, %p101
    %p104 = scmp.ne.s32.totalorder %s89, %s103
    %p105 = scmp.eq.s32.totalorder %s16, 0
    %p106 = por %p104, %p105
    %s107 = ssub.s32 %s10, %s17
    %p108 = scmp.eq.s32.totalorder %s107, 0
    %s110 = sadd.s32 %s109, 1
    %s111 = scalar_select %p108, %s109, %s110
    %p114 = pneg %p108
    %p115 = scmp.eq.s32.totalorder %s10, 1
    %p116 = por %p114, %p115
    %p117 = scmp.ne.s32.totalorder %s109, %s112
    %p118 = scmp.eq.s32.totalorder %s10, 0
    %p119 = por %p117, %p118
    %p120 = scmp.ne.s32.totalorder %s109, %s112
    %p121 = scmp.eq.s32.totalorder %s15, 1
    %p122 = por %p120, %p121
    %p123 = scmp.ne.s32.totalorder %s112, %s113
    %p124 = scmp.eq.s32.totalorder %s15, 0
    %p125 = por %p123, %p124
    %p126 = scmp.ne.s32.totalorder %s112, %s113
    %p127 = scmp.eq.s32.totalorder %s16, 1
    %p128 = por %p126, %p127
    %p130 = scmp.ne.s32.totalorder %s113, %s129
    %p131 = scmp.eq.s32.totalorder %s16, 0
    %p132 = por %p130, %p131
    %p133 = scmp.le.s32.totalorder 1, %s10
    %p134 = scmp.lt.s32.totalorder %s10, 3
    %p135 = pnand %p133, %p134
    %p136 = pneg %p135
    // Predicated region
    $region9: #{resnet_block_forward.1} parent=5 // pred_check
      _
    $region10: #{resnet_block_forward.1} parent=5 // pred_check_branch
      %138 = sbr.rel (%p135) target = $region12
    $region11: #{resnet_block_forward.1} parent=5 // pred_region
      %s139 = ssub.s32 %s10, 1
      // Predicated region
      $region13: #{resnet_block_forward.1} parent=11 // pred_check
        %p140 = pneg %p31
      $region14: #{resnet_block_forward.1} parent=11 // pred_check_branch
        %142 = sbr.rel (%p140) target = $region16
      $region15: #{resnet_block_forward.1} parent=11 // pred_region
        _
      $region16: #{resnet_block_forward.1} parent=11 // pred_fallthru
        _
      // Predicated region
      $region17: #{resnet_block_forward.1} parent=11 // pred_check
        %p143 = pneg %p78
      $region18: #{resnet_block_forward.1} parent=11 // pred_check_branch
        %145 = sbr.rel (%p143) target = $region20
      $region19: #{resnet_block_forward.1} parent=11 // pred_region
        _
      $region20: #{resnet_block_forward.1} parent=11 // pred_fallthru
        _
      // Predicated region
      $region21: #{resnet_block_forward.1} parent=11 // pred_check
        %p146 = pneg %p99
      $region22: #{resnet_block_forward.1} parent=11 // pred_check_branch
        %148 = sbr.rel (%p146) target = $region24
      $region23: #{resnet_block_forward.1} parent=11 // pred_region
        _
      $region24: #{resnet_block_forward.1} parent=11 // pred_fallthru
        _
    $region12: #{resnet_block_forward.1} parent=5 // pred_fallthru
      _
    %p149 = scmp.lt.s32.totalorder %s10, 2
    // Predicated region
    $region25: #{resnet_block_forward.1} parent=5 // pred_check
      %p150 = pneg %p149
    $region26: #{resnet_block_forward.1} parent=5 // pred_check_branch
      %152 = sbr.rel (%p150) target = $region28
    $region27: #{resnet_block_forward.1} parent=5 // pred_region
      // Predicated region
      $region29: #{resnet_block_forward.1} parent=27 // pred_check
        %p153 = pneg %p51
      $region30: #{resnet_block_forward.1} parent=27 // pred_check_branch
        %155 = sbr.rel (%p153) target = $region32
      $region31: #{resnet_block_forward.1} parent=27 // pred_region
        %p156 = scmp.lt.s32.totalorder %s10, 1
        %s157 = scalar_select %p156, %s10, 1
        %s158 = smul.addr %s157, 41
        %s159 = smul.addr %s158, 8
        %s160 = scalar_lea.vmem %s1, %s159
      $region32: #{resnet_block_forward.1} parent=27 // pred_fallthru
        _
    $region28: #{resnet_block_forward.1} parent=5 // pred_fallthru
      _
    %p161 = scmp.le.s32.totalorder 1, %s10
    %p162 = scmp.lt.s32.totalorder %s10, 3
    %p163 = pnand %p161, %p162
    %p164 = pneg %p163
    // Predicated region
    $region33: #{resnet_block_forward.1} parent=5 // pred_check
      _
    $region34: #{resnet_block_forward.1} parent=5 // pred_check_branch
      %166 = sbr.rel (%p163) target = $region36
    $region35: #{resnet_block_forward.1} parent=5 // pred_region
      %s167 = ssub.s32 %s10, 1
      %p168 = pneg %p31
      %p169 = pneg %p28
      %p170 = scmp.lt.s32.totalorder %s15, 1
      %s171 = scalar_select %p170, %s15, 1
      %s172 = smul.addr %s171, 41
      %s173 = smul.addr %s172, 8
      %s174 = scalar_lea.vmem %s1, %s173
      %p175 = pneg %p57
      %p176 = pneg %p54
      %p177 = pneg %p78
      %p178 = pneg %p75
      %p179 = pneg %p99
      %p180 = pneg %p96
      %p181 = pneg %p125
      %p182 = pneg %p122
      %p183 = scmp.lt.s32.totalorder %s15, 1
      %s184 = scalar_select %p183, %s15, 1
      %s185 = smul.addr %s184, 41
      %s186 = smul.addr %s185, 8
      %s187 = scalar_lea.vmem %s4, %s186
      %p188 = scmp.lt.s32.totalorder %s15, 1
      %s189 = scalar_select %p188, %s15, 1
      %s190 = smul.addr %s189, 41
      %s191 = smul.addr %s190, 8
      %s192 = scalar_lea.vmem %s1, %s191
      %p193 = scmp.lt.s32.totalorder %s15, 1
      %s194 = scalar_select %p193, %s15, 1
      %s195 = smul.addr %s194, 41
      %s196 = smul.addr %s195, 8
      %s197 = scalar_lea.vmem %s4, %s196
      %v199 = vld [vmem:[%s0] sm:$0xff]
      %v200 = vld [vmem:[%s0 + $0x8] sm:$0xff]
      %v201 = vld [vmem:[%s0 + $0x10] sm:$0xff]
      %v202 = vld [vmem:[%s0 + $0x18] sm:$0xff]
      %v203 = vld [vmem:[%s0 + $0x20] sm:$0xff]
      %v204 = vld [vmem:[%s0 + $0x28] sm:$0xff]
      %v205 = vld [vmem:[%s0 + $0x30] sm:$0xff]
      %v206 = vld [vmem:[%s0 + $0x38] sm:$0xff]
      %v207 = vld [vmem:[%s0 + $0x40] sm:$0xff]
      %v208 = vld [vmem:[%s0 + $0x48] sm:$0xff]
      %v209 = vld [vmem:[%s0 + $0x50] sm:$0xff]
      %v210 = vld [vmem:[%s0 + $0x58] sm:$0xff]
      %v211 = vld [vmem:[%s0 + $0x60] sm:$0xff]
      %v212 = vld [vmem:[%s0 + $0x68] sm:$0xff]
      %v213 = vld [vmem:[%s0 + $0x70] sm:$0xff]
      %v214 = vld [vmem:[%s0 + $0x78] sm:$0xff]
      %v215 = vld [vmem:[%s0 + $0x80] sm:$0xff]
      %v216 = vld [vmem:[%s0 + $0x88] sm:$0xff]
      %v217 = vld [vmem:[%s0 + $0x90] sm:$0xff]
      %v218 = vld [vmem:[%s0 + $0x98] sm:$0xff]
      %v219 = vld [vmem:[%s0 + $0xa0] sm:$0xff]
      %v220 = vld [vmem:[%s0 + $0xa8] sm:$0xff]
      %v221 = vld [vmem:[%s0 + $0xb0] sm:$0xff]
      %v222 = vld [vmem:[%s0 + $0xb8] sm:$0xff]
      %v223 = vld [vmem:[%s0 + $0xc0] sm:$0xff]
      %v224 = vld [vmem:[%s0 + $0xc8] sm:$0xff]
      %v225 = vld [vmem:[%s0 + $0xd0] sm:$0xff]
      %v226 = vld [vmem:[%s0 + $0xd8] sm:$0xff]
      %v227 = vld [vmem:[%s0 + $0xe0] sm:$0xff]
      %v228 = vld [vmem:[%s0 + $0xe8] sm:$0xff]
      %v229 = vld [vmem:[%s0 + $0xf0] sm:$0xff]
      %v230 = vld [vmem:[%s0 + $0xf8] sm:$0xff]
      %v231 = vld [vmem:[%s0 + $0x100] sm:$0xff]
      %v232 = vld [vmem:[%s0 + $0x108] sm:$0xff]
      %v233 = vld [vmem:[%s0 + $0x110] sm:$0xff]
      %v234 = vld [vmem:[%s0 + $0x118] sm:$0x3f]
      %v235 = vld [vmem:[%s192] sm:$0xff]
      %v236 = vld [vmem:[%s192 + $0x8] sm:$0xff]
      %v237 = vld [vmem:[%s192 + $0x10] sm:$0xff]
      %v238 = vld [vmem:[%s192 + $0x18] sm:$0xff]
      %v239 = vld [vmem:[%s192 + $0x20] sm:$0xff]
      %v240 = vld [vmem:[%s192 + $0x28] sm:$0xff]
      %v241 = vld [vmem:[%s192 + $0x30] sm:$0xff]
      %v242 = vld [vmem:[%s192 + $0x38] sm:$0xff]
      %v243 = vld [vmem:[%s192 + $0x40] sm:$0xff]
      %v244 = vld [vmem:[%s192 + $0x48] sm:$0xff]
      %v245 = vld [vmem:[%s192 + $0x50] sm:$0xff]
      %v246 = vld [vmem:[%s192 + $0x58] sm:$0xff]
      %v247 = vld [vmem:[%s192 + $0x60] sm:$0xff]
      %v248 = vld [vmem:[%s192 + $0x68] sm:$0xff]
      %v249 = vld [vmem:[%s192 + $0x70] sm:$0xff]
      %v250 = vld [vmem:[%s192 + $0x78] sm:$0xff]
      %v251 = vld [vmem:[%s192 + $0x80] sm:$0xff]
      %v252 = vld [vmem:[%s192 + $0x88] sm:$0xff]
      %v253 = vld [vmem:[%s192 + $0x90] sm:$0xff]
      %v254 = vld [vmem:[%s192 + $0x98] sm:$0xff]
      %v255 = vld [vmem:[%s192 + $0xa0] sm:$0xff]
      %v256 = vld [vmem:[%s192 + $0xa8] sm:$0xff]
      %v257 = vld [vmem:[%s192 + $0xb0] sm:$0xff]
      %v258 = vld [vmem:[%s192 + $0xb8] sm:$0xff]
      %v259 = vld [vmem:[%s192 + $0xc0] sm:$0xff]
      %v260 = vld [vmem:[%s192 + $0xc8] sm:$0xff]
      %v261 = vld [vmem:[%s192 + $0xd0] sm:$0xff]
      %v262 = vld [vmem:[%s192 + $0xd8] sm:$0xff]
      %v263 = vld [vmem:[%s192 + $0xe0] sm:$0xff]
      %v264 = vld [vmem:[%s192 + $0xe8] sm:$0xff]
      %v265 = vld [vmem:[%s192 + $0xf0] sm:$0xff]
      %v266 = vld [vmem:[%s192 + $0xf8] sm:$0xff]
      %v267 = vld [vmem:[%s192 + $0x100] sm:$0xff]
      %v268 = vld [vmem:[%s192 + $0x108] sm:$0xff]
      %v269 = vld [vmem:[%s192 + $0x110] sm:$0xff]
      %v270 = vld [vmem:[%s192 + $0x118] sm:$0x3f]
      %v271 = vpack.c.bf16 %v236, %v235
      %v272 = vpack.c.bf16 %v238, %v237
      %v273 = vpack.c.bf16 %v240, %v239
      %v274 = vpack.c.bf16 %v242, %v241
      %v275 = vpack.c.bf16 %v244, %v243
      %v276 = vpack.c.bf16 %v246, %v245
      %v277 = vpack.c.bf16 %v248, %v247
      %v278 = vpack.c.bf16 %v250, %v249
      %v279 = vpack.c.bf16 %v252, %v251
      %v280 = vpack.c.bf16 %v254, %v253
      %v281 = vpack.c.bf16 %v256, %v255
      %v282 = vpack.c.bf16 %v258, %v257
      %v283 = vpack.c.bf16 %v260, %v259
      %v284 = vpack.c.bf16 %v262, %v261
      %v285 = vpack.c.bf16 %v264, %v263
      %v286 = vpack.c.bf16 %v266, %v265
      %v287 = vpack.c.bf16 %v268, %v267
      %v288 = vpack.c.bf16 %v270, %v269
      %v289 = vld [vmem:[%s2] sm:$0xf]
      %v290 = vld [vmem:[%s2 + $0x4] sm:$0xf]
      %v291 = vld [vmem:[%s2 + $0x8] sm:$0xf]
      %v292 = vld [vmem:[%s2 + $0xc] sm:$0xf]
      %v293 = vld [vmem:[%s192 + $0x1] sm:$0xff]
      %v294 = vld [vmem:[%s192 + $0x9] sm:$0xff]
      %v295 = vld [vmem:[%s192 + $0x11] sm:$0xff]
      %v296 = vld [vmem:[%s192 + $0x19] sm:$0xff]
      %v297 = vld [vmem:[%s192 + $0x21] sm:$0xff]
      %v298 = vld [vmem:[%s192 + $0x29] sm:$0xff]
      %v299 = vld [vmem:[%s192 + $0x31] sm:$0xff]
      %v300 = vld [vmem:[%s192 + $0x39] sm:$0xff]
      %v301 = vld [vmem:[%s192 + $0x41] sm:$0xff]
      %v302 = vld [vmem:[%s192 + $0x49] sm:$0xff]
      %v303 = vld [vmem:[%s192 + $0x51] sm:$0xff]
      %v304 = vld [vmem:[%s192 + $0x59] sm:$0xff]
      %v305 = vld [vmem:[%s192 + $0x61] sm:$0xff]
      %v306 = vld [vmem:[%s192 + $0x69] sm:$0xff]
      %v307 = vld [vmem:[%s192 + $0x71] sm:$0xff]
      %v308 = vld [vmem:[%s192 + $0x79] sm:$0xff]
      %v309 = vld [vmem:[%s192 + $0x81] sm:$0xff]
      %v310 = vld [vmem:[%s192 + $0x89] sm:$0xff]
      %v311 = vld [vmem:[%s192 + $0x91] sm:$0xff]
      %v312 = vld [vmem:[%s192 + $0x99] sm:$0xff]
      %v313 = vld [vmem:[%s192 + $0xa1] sm:$0xff]
      %v314 = vld [vmem:[%s192 + $0xa9] sm:$0xff]
      %v315 = vld [vmem:[%s192 + $0xb1] sm:$0xff]
      %v316 = vld [vmem:[%s192 + $0xb9] sm:$0xff]
      %v317 = vld [vmem:[%s192 + $0xc1] sm:$0xff]
      %v318 = vld [vmem:[%s192 + $0xc9] sm:$0xff]
      %v319 = vld [vmem:[%s192 + $0xd1] sm:$0xff]
      %v320 = vld [vmem:[%s192 + $0xd9] sm:$0xff]
      %v321 = vld [vmem:[%s192 + $0xe1] sm:$0xff]
      %v322 = vld [vmem:[%s192 + $0xe9] sm:$0xff]
      %v323 = vld [vmem:[%s192 + $0xf1] sm:$0xff]
      %v324 = vld [vmem:[%s192 + $0xf9] sm:$0xff]
      %v325 = vld [vmem:[%s192 + $0x101] sm:$0xff]
      %v326 = vld [vmem:[%s192 + $0x109] sm:$0xff]
      %v327 = vld [vmem:[%s192 + $0x111] sm:$0xff]
      %v328 = vld [vmem:[%s192 + $0x119] sm:$0x3f]
      %v329 = vpack.c.bf16 %v294, %v293
      %v330 = vpack.c.bf16 %v296, %v295
      %v331 = vpack.c.bf16 %v298, %v297
      %v332 = vpack.c.bf16 %v300, %v299
      %v333 = vpack.c.bf16 %v302, %v301
      %v334 = vpack.c.bf16 %v304, %v303
      %v335 = vpack.c.bf16 %v306, %v305
      %v336 = vpack.c.bf16 %v308, %v307
      %v337 = vpack.c.bf16 %v310, %v309
      %v338 = vpack.c.bf16 %v312, %v311
      %v339 = vpack.c.bf16 %v314, %v313
      %v340 = vpack.c.bf16 %v316, %v315
      %v341 = vpack.c.bf16 %v318, %v317
      %v342 = vpack.c.bf16 %v320, %v319
      %v343 = vpack.c.bf16 %v322, %v321
      %v344 = vpack.c.bf16 %v324, %v323
      %v345 = vpack.c.bf16 %v326, %v325
      %v346 = vpack.c.bf16 %v328, %v327
      %s347 = scalar_lea.vmem %s2, 16
      %v348 = vld [vmem:[%s347] sm:$0xf]
      %v349 = vld [vmem:[%s347 + $0x4] sm:$0xf]
      %v350 = vld [vmem:[%s347 + $0x8] sm:$0xf]
      %v351 = vld [vmem:[%s347 + $0xc] sm:$0xf]
      %v356 = vunpack.c.l.b16 %v348
      %v357 = vunpack.c.l.b16 %v349
      %v358 = vunpack.c.l.b16 %v350
      %v359 = vunpack.c.l.b16 %v351
      %v360 = vpack.c.b16 %v357, %v356
      %v361 = vpack.c.b16 %v359, %v358
      %vm364 = vcmask 261120
      %v366 = vsel %vm364, %v329, 0
      %v369 = vsel %vm364, %v330, 0
      %v372 = vsel %vm364, %v331, 0
      %v375 = vsel %vm364, %v332, 0
      %v378 = vsel %vm364, %v333, 0
      %v381 = vsel %vm364, %v334, 0
      %v384 = vsel %vm364, %v335, 0
      %v387 = vsel %vm364, %v336, 0
      %v390 = vsel %vm364, %v337, 0
      %v393 = vsel %vm364, %v338, 0
      %v396 = vsel %vm364, %v339, 0
      %v399 = vsel %vm364, %v340, 0
      %v402 = vsel %vm364, %v341, 0
      %v405 = vsel %vm364, %v342, 0
      %v408 = vsel %vm364, %v343, 0
      %v411 = vsel %vm364, %v344, 0
      %v414 = vsel %vm364, %v345, 0
      %v417 = vsel %vm364, %v346, 0
      %419 = vmatprep.subr.bf16.mxu0 0
      %420 = vmatpush1.bf16.msra.mxu0 %v360
      %421 = vmatprep.subr.bf16.mxu0 0
      %422 = vmatpush1.bf16.msra.mxu0 %v361
      %423 = vmatprep.subr.bf16.mxu0 0
      %424 = vmatpush1.bf16.msra.mxu0 0
      %425 = vmatprep.subr.bf16.mxu0 0
      %426 = vmatpush1.bf16.msra.mxu0 0
      %427 = vmatprep.subr.bf16.mxu0 0
      %428 = vmatpush1.bf16.msra.mxu0 0
      %429 = vmatprep.subr.bf16.mxu0 0
      %430 = vmatpush1.bf16.msra.mxu0 0
      %431 = vmatprep.subr.bf16.mxu0 0
      %432 = vmatpush1.bf16.msra.mxu0 0
      %433 = vmatprep.subr.bf16.mxu0 0
      %434 = vmatpush1.bf16.msra.mxu0 0
      %435 = vmatprep.subr.bf16.mxu0 0
      %436 = vmatpush1.bf16.msra.mxu0 0
      %437 = vmatprep.subr.bf16.mxu0 0
      %438 = vmatpush1.bf16.msra.mxu0 0
      %439 = vmatprep.subr.bf16.mxu0 0
      %440 = vmatpush1.bf16.msra.mxu0 0
      %441 = vmatprep.subr.bf16.mxu0 0
      %442 = vmatpush1.bf16.msra.mxu0 0
      %443 = vmatprep.subr.bf16.mxu0 0
      %444 = vmatpush1.bf16.msra.mxu0 0
      %445 = vmatprep.subr.bf16.mxu0 0
      %446 = vmatpush1.bf16.msra.mxu0 0
      %447 = vmatprep.subr.bf16.mxu0 0
      %448 = vmatpush1.bf16.msra.mxu0 0
      %449 = vmatprep.subr.bf16.mxu0 0
      %450 = vmatpush1.bf16.msra.mxu0 0
      %451 = vmatprep.mubr.bf16.mxu0 0
      %452 = vmatmul.mubr.bf16.gmra.mrb[0].mxu0 %v366
      %v453 = vpop.f32.mrb[0].mxu0
      %v454 = vadd.f32 0.0, %v453
      %v455 = vpop.f32.mrb[0].mxu0
      %v456 = vpop.f32.mrb[0].mxu0
      %v457 = vadd.f32 0.0, %v456
      %v458 = vpop.f32.mrb[0].mxu0
      %459 = vmatprep.mubr.bf16.mxu0 0
      %460 = vmatmul.mubr.bf16.gmra.mrb[0].mxu0 %v369
      %v461 = vpop.f32.mrb[0].mxu0
      %v462 = vadd.f32 0.0, %v461
      %v463 = vpop.f32.mrb[0].mxu0
      %v464 = vpop.f32.mrb[0].mxu0
      %v465 = vadd.f32 0.0, %v464
      %v466 = vpop.f32.mrb[0].mxu0
      %467 = vmatprep.mubr.bf16.mxu0 0
      %468 = vmatmul.mubr.bf16.gmra.mrb[0].mxu0 %v372
      %v469 = vpop.f32.mrb[0].mxu0
      %v470 = vadd.f32 0.0, %v469
      %v471 = vpop.f32.mrb[0].mxu0
      %v472 = vpop.f32.mrb[0].mxu0
      %v473 = vadd.f32 0.0, %v472
      %v474 = vpop.f32.mrb[0].mxu0
      %475 = vmatprep.mubr.bf16.mxu0 0
      %476 = vmatmul.mubr.bf16.gmra.mrb[0].mxu0 %v375
      %v477 = vpop.f32.mrb[0].mxu0
      %v478 = vadd.f32 0.0, %v477
      %v479 = vpop.f32.mrb[0].mxu0
      %v480 = vpop.f32.mrb[0].mxu0
      %v481 = vadd.f32 0.0, %v480
      %v482 = vpop.f32.mrb[0].mxu0
      %483 = vmatprep.mubr.bf16.mxu0 0
      %484 = vmatmul.mubr.bf16.gmra.mrb[0].mxu0 %v378
      %v485 = vpop.f32.mrb[0].mxu0
      %v486 = vadd.f32 0.0, %v485
      %v487 = vpop.f32.mrb[0].mxu0
      %v488 = vpop.f32.mrb[0].mxu0
      %v489 = vadd.f32 0.0, %v488
      %v490 = vpop.f32.mrb[0].mxu0
      %491 = vmatprep.mubr.bf16.mxu0 0
      %492 = vmatmul.mubr.bf16.gmra.mrb[0].mxu0 %v381
      %v493 = vpop.f32.mrb[0].mxu0
      %v494 = vadd.f32 0.0, %v493
      %v495 = vpop.f32.mrb[0].mxu0
      %v496 = vpop.f32.mrb[0].mxu0
      %v497 = vadd.f32 0.0, %v496
      %v498 = vpop.f32.mrb[0].mxu0
      %499 = vmatprep.mubr.bf16.mxu0 0
      %500 = vmatmul.mubr.bf16.gmra.mrb[0].mxu0 %v384
      %v501 = vpop.f32.mrb[0].mxu0
      %v502 = vadd.f32 0.0, %v501
      %v503 = vpop.f32.mrb[0].mxu0
      %v504 = vpop.f32.mrb[0].mxu0
      %v505 = vadd.f32 0.0, %v504
      %v506 = vpop.f32.mrb[0].mxu0
      %507 = vmatprep.mubr.bf16.mxu0 0
      %508 = vmatmul.mubr.bf16.gmra.mrb[0].mxu0 %v387
      %v509 = vpop.f32.mrb[0].mxu0
      %v510 = vadd.f32 0.0, %v509
      %v511 = vpop.f32.mrb[0].mxu0
      %v512 = vpop.f32.mrb[0].mxu0
      %v513 = vadd.f32 0.0, %v512
      %v514 = vpop.f32.mrb[0].mxu0
      %515 = vmatprep.mubr.bf16.mxu0 0
      %516 = vmatmul.mubr.bf16.gmra.mrb[0].mxu0 %v390
      %v517 = vpop.f32.mrb[0].mxu0
      %v518 = vadd.f32 0.0, %v517
      %v519 = vpop.f32.mrb[0].mxu0
      %v520 = vpop.f32.mrb[0].mxu0
      %v521 = vadd.f32 0.0, %v520
      %v522 = vpop.f32.mrb[0].mxu0
      %523 = vmatprep.mubr.bf16.mxu0 0
      %524 = vmatmul.mubr.bf16.gmra.mrb[0].mxu0 %v393
      %v525 = vpop.f32.mrb[0].mxu0
      %v526 = vadd.f32 0.0, %v525
      %v527 = vpop.f32.mrb[0].mxu0
      %v528 = vpop.f32.mrb[0].mxu0
      %v529 = vadd.f32 0.0, %v528
      %v530 = vpop.f32.mrb[0].mxu0
      %531 = vmatprep.mubr.bf16.mxu0 0
      %532 = vmatmul.mubr.bf16.gmra.mrb[0].mxu0 %v396
      %v533 = vpop.f32.mrb[0].mxu0
      %v534 = vadd.f32 0.0, %v533
      %v535 = vpop.f32.mrb[0].mxu0
      %v536 = vpop.f32.mrb[0].mxu0
      %v537 = vadd.f32 0.0, %v536
      %v538 = vpop.f32.mrb[0].mxu0
      %539 = vmatprep.mubr.bf16.mxu0 0
      %540 = vmatmul.mubr.bf16.gmra.mrb[0].mxu0 %v399
      %v541 = vpop.f32.mrb[0].mxu0
      %v542 = vadd.f32 0.0, %v541
      %v543 = vpop.f32.mrb[0].mxu0
      %v544 = vpop.f32.mrb[0].mxu0
      %v545 = vadd.f32 0.0, %v544
      %v546 = vpop.f32.mrb[0].mxu0
      %547 = vmatprep.mubr.bf16.mxu0 0
      %548 = vmatmul.mubr.bf16.gmra.mrb[0].mxu0 %v402
      %v549 = vpop.f32.mrb[0].mxu0
      %v550 = vadd.f32 0.0, %v549
      %v551 = vpop.f32.mrb[0].mxu0
      %v552 = vpop.f32.mrb[0].mxu0
      %v553 = vadd.f32 0.0, %v552
      %v554 = vpop.f32.mrb[0].mxu0
      %555 = vmatprep.mubr.bf16.mxu0 0
      %556 = vmatmul.mubr.bf16.gmra.mrb[0].mxu0 %v405
      %v557 = vpop.f32.mrb[0].mxu0
      %v558 = vadd.f32 0.0, %v557
      %v559 = vpop.f32.mrb[0].mxu0
      %v560 = vpop.f32.mrb[0].mxu0
      %v561 = vadd.f32 0.0, %v560
      %v562 = vpop.f32.mrb[0].mxu0
      %563 = vmatprep.mubr.bf16.mxu0 0
      %564 = vmatmul.mubr.bf16.gmra.mrb[0].mxu0 %v408
      %v565 = vpop.f32.mrb[0].mxu0
      %v566 = vadd.f32 0.0, %v565
      %v567 = vpop.f32.mrb[0].mxu0
      %v568 = vpop.f32.mrb[0].mxu0
      %v569 = vadd.f32 0.0, %v568
      %v570 = vpop.f32.mrb[0].mxu0
      %571 = vmatprep.mubr.bf16.mxu0 0
      %572 = vmatmul.mubr.bf16.gmra.mrb[0].mxu0 %v411
      %v573 = vpop.f32.mrb[0].mxu0
      %v574 = vadd.f32 0.0, %v573
      %v575 = vpop.f32.mrb[0].mxu0
      %v576 = vpop.f32.mrb[0].mxu0
      %v577 = vadd.f32 0.0, %v576
      %v578 = vpop.f32.mrb[0].mxu0
      %579 = vmatprep.mubr.bf16.mxu0 0
      %580 = vmatmul.mubr.bf16.gmra.mrb[0].mxu0 %v414
      %v581 = vpop.f32.mrb[0].mxu0
      %v582 = vadd.f32 0.0, %v581
      %v583 = vpop.f32.mrb[0].mxu0
      %v584 = vpop.f32.mrb[0].mxu0
      %v585 = vadd.f32 0.0, %v584
      %v586 = vpop.f32.mrb[0].mxu0
      %587 = vmatprep.mubr.bf16.mxu0 0
      %588 = vmatmul.mubr.bf16.gmra.mrb[0].mxu0 %v417
      %v589 = vpop.f32.mrb[0].mxu0
      %v590 = vadd.f32 0.0, %v589
      %v591 = vpop.f32.mrb[0].mxu0
      %v592 = vpop.f32.mrb[0].mxu0
      %v593 = vadd.f32 0.0, %v592
      %v594 = vpop.f32.mrb[0].mxu0
      %595 = vdwg.mxu0
      %v600 = vunpack.c.l.b16 %v289
      %v601 = vunpack.c.l.b16 %v290
      %v602 = vunpack.c.l.b16 %v291
      %v603 = vunpack.c.l.b16 %v292
      %v604 = vpack.c.b16 %v601, %v600
      %v605 = vpack.c.b16 %v603, %v602
      %v609 = vsel %vm364, %v271, 0
      %v612 = vsel %vm364, %v272, 0
      %v615 = vsel %vm364, %v273, 0
      %v618 = vsel %vm364, %v274, 0
      %v621 = vsel %vm364, %v275, 0
      %v624 = vsel %vm364, %v276, 0
      %v627 = vsel %vm364, %v277, 0
      %v630 = vsel %vm364, %v278, 0
      %v633 = vsel %vm364, %v279, 0
      %v636 = vsel %vm364, %v280, 0
      %v639 = vsel %vm364, %v281, 0
      %v642 = vsel %vm364, %v282, 0
      %v645 = vsel %vm364, %v283, 0
      %v648 = vsel %vm364, %v284, 0
      %v651 = vsel %vm364, %v285, 0
      %v654 = vsel %vm364, %v286, 0
      %v657 = vsel %vm364, %v287, 0
      %v660 = vsel %vm364, %v288, 0
      %662 = vmatprep.subr.bf16.mxu0 0
      %663 = vmatpush1.bf16.msra.mxu0 %v604
      %664 = vmatprep.subr.bf16.mxu0 0
      %665 = vmatpush1.bf16.msra.mxu0 %v605
      %666 = vmatprep.subr.bf16.mxu0 0
      %667 = vmatpush1.bf16.msra.mxu0 0
      %668 = vmatprep.subr.bf16.mxu0 0
      %669 = vmatpush1.bf16.msra.mxu0 0
      %670 = vmatprep.subr.bf16.mxu0 0
      %671 = vmatpush1.bf16.msra.mxu0 0
      %672 = vmatprep.subr.bf16.mxu0 0
      %673 = vmatpush1.bf16.msra.mxu0 0
      %674 = vmatprep.subr.bf16.mxu0 0
      %675 = vmatpush1.bf16.msra.mxu0 0
      %676 = vmatprep.subr.bf16.mxu0 0
      %677 = vmatpush1.bf16.msra.mxu0 0
      %678 = vmatprep.subr.bf16.mxu0 0
      %679 = vmatpush1.bf16.msra.mxu0 0
      %680 = vmatprep.subr.bf16.mxu0 0
      %681 = vmatpush1.bf16.msra.mxu0 0
      %682 = vmatprep.subr.bf16.mxu0 0
      %683 = vmatpush1.bf16.msra.mxu0 0
      %684 = vmatprep.subr.bf16.mxu0 0
      %685 = vmatpush1.bf16.msra.mxu0 0
      %686 = vmatprep.subr.bf16.mxu0 0
      %687 = vmatpush1.bf16.msra.mxu0 0
      %688 = vmatprep.subr.bf16.mxu0 0
      %689 = vmatpush1.bf16.msra.mxu0 0
      %690 = vmatprep.subr.bf16.mxu0 0
      %691 = vmatpush1.bf16.msra.mxu0 0
      %692 = vmatprep.subr.bf16.mxu0 0
      %693 = vmatpush1.bf16.msra.mxu0 0
      %694 = vmatprep.mubr.bf16.mxu0 0
      %695 = vmatmul.mubr.bf16.gmra.mrb[0].mxu0 %v609
      %v696 = vpop.f32.mrb[0].mxu0
      %v697 = vadd.f32 %v454, %v696
      %v698 = vpop.f32.mrb[0].mxu0
      %v699 = vpop.f32.mrb[0].mxu0
      %v700 = vadd.f32 %v457, %v699
      %v701 = vpop.f32.mrb[0].mxu0
      %702 = vmatprep.mubr.bf16.mxu0 0
      %703 = vmatmul.mubr.bf16.gmra.mrb[0].mxu0 %v612
      %v704 = vpop.f32.mrb[0].mxu0
      %v705 = vadd.f32 %v462, %v704
      %v706 = vpop.f32.mrb[0].mxu0
      %v707 = vpop.f32.mrb[0].mxu0
      %v708 = vadd.f32 %v465, %v707
      %v709 = vpop.f32.mrb[0].mxu0
      %710 = vmatprep.mubr.bf16.mxu0 0
      %711 = vmatmul.mubr.bf16.gmra.mrb[0].mxu0 %v615
      %v712 = vpop.f32.mrb[0].mxu0
      %v713 = vadd.f32 %v470, %v712
      %v714 = vpop.f32.mrb[0].mxu0
      %v715 = vpop.f32.mrb[0].mxu0
      %v716 = vadd.f32 %v473, %v715
      %v717 = vpop.f32.mrb[0].mxu0
      %718 = vmatprep.mubr.bf16.mxu0 0
      %719 = vmatmul.mubr.bf16.gmra.mrb[0].mxu0 %v618
      %v720 = vpop.f32.mrb[0].mxu0
      %v721 = vadd.f32 %v478, %v720
      %v722 = vpop.f32.mrb[0].mxu0
      %v723 = vpop.f32.mrb[0].mxu0
      %v724 = vadd.f32 %v481, %v723
      %v725 = vpop.f32.mrb[0].mxu0
      %726 = vmatprep.mubr.bf16.mxu0 0
      %727 = vmatmul.mubr.bf16.gmra.mrb[0].mxu0 %v621
      %v728 = vpop.f32.mrb[0].mxu0
      %v729 = vadd.f32 %v486, %v728
      %v730 = vpop.f32.mrb[0].mxu0
      %v731 = vpop.f32.mrb[0].mxu0
      %v732 = vadd.f32 %v489, %v731
      %v733 = vpop.f32.mrb[0].mxu0
      %734 = vmatprep.mubr.bf16.mxu0 0
      %735 = vmatmul.mubr.bf16.gmra.mrb[0].mxu0 %v624
      %v736 = vpop.f32.mrb[0].mxu0
      %v737 = vadd.f32 %v494, %v736
      %v738 = vpop.f32.mrb[0].mxu0
      %v739 = vpop.f32.mrb[0].mxu0
      %v740 = vadd.f32 %v497, %v739
      %v741 = vpop.f32.mrb[0].mxu0
      %742 = vmatprep.mubr.bf16.mxu0 0
      %743 = vmatmul.mubr.bf16.gmra.mrb[0].mxu0 %v627
      %v744 = vpop.f32.mrb[0].mxu0
      %v745 = vadd.f32 %v502, %v744
      %v746 = vpop.f32.mrb[0].mxu0
      %v747 = vpop.f32.mrb[0].mxu0
      %v748 = vadd.f32 %v505, %v747
      %v749 = vpop.f32.mrb[0].mxu0
      %750 = vmatprep.mubr.bf16.mxu0 0
      %751 = vmatmul.mubr.bf16.gmra.mrb[0].mxu0 %v630
      %v752 = vpop.f32.mrb[0].mxu0
      %v753 = vadd.f32 %v510, %v752
      %v754 = vpop.f32.mrb[0].mxu0
      %v755 = vpop.f32.mrb[0].mxu0
      %v756 = vadd.f32 %v513, %v755
      %v757 = vpop.f32.mrb[0].mxu0
      %758 = vmatprep.mubr.bf16.mxu0 0
      %759 = vmatmul.mubr.bf16.gmra.mrb[0].mxu0 %v633
      %v760 = vpop.f32.mrb[0].mxu0
      %v761 = vadd.f32 %v518, %v760
      %v762 = vpop.f32.mrb[0].mxu0
      %v763 = vpop.f32.mrb[0].mxu0
      %v764 = vadd.f32 %v521, %v763
      %v765 = vpop.f32.mrb[0].mxu0
      %766 = vmatprep.mubr.bf16.mxu0 0
      %767 = vmatmul.mubr.bf16.gmra.mrb[0].mxu0 %v636
      %v768 = vpop.f32.mrb[0].mxu0
      %v769 = vadd.f32 %v526, %v768
      %v770 = vpop.f32.mrb[0].mxu0
      %v771 = vpop.f32.mrb[0].mxu0
      %v772 = vadd.f32 %v529, %v771
      %v773 = vpop.f32.mrb[0].mxu0
      %774 = vmatprep.mubr.bf16.mxu0 0
      %775 = vmatmul.mubr.bf16.gmra.mrb[0].mxu0 %v639
      %v776 = vpop.f32.mrb[0].mxu0
      %v777 = vadd.f32 %v534, %v776
      %v778 = vpop.f32.mrb[0].mxu0
      %v779 = vpop.f32.mrb[0].mxu0
      %v780 = vadd.f32 %v537, %v779
      %v781 = vpop.f32.mrb[0].mxu0
      %782 = vmatprep.mubr.bf16.mxu0 0
      %783 = vmatmul.mubr.bf16.gmra.mrb[0].mxu0 %v642
      %v784 = vpop.f32.mrb[0].mxu0
      %v785 = vadd.f32 %v542, %v784
      %v786 = vpop.f32.mrb[0].mxu0
      %v787 = vpop.f32.mrb[0].mxu0
      %v788 = vadd.f32 %v545, %v787
      %v789 = vpop.f32.mrb[0].mxu0
      %790 = vmatprep.mubr.bf16.mxu0 0
      %791 = vmatmul.mubr.bf16.gmra.mrb[0].mxu0 %v645
      %v792 = vpop.f32.mrb[0].mxu0
      %v793 = vadd.f32 %v550, %v792
      %v794 = vpop.f32.mrb[0].mxu0
      %v795 = vpop.f32.mrb[0].mxu0
      %v796 = vadd.f32 %v553, %v795
      %v797 = vpop.f32.mrb[0].mxu0
      %798 = vmatprep.mubr.bf16.mxu0 0
      %799 = vmatmul.mubr.bf16.gmra.mrb[0].mxu0 %v648
      %v800 = vpop.f32.mrb[0].mxu0
      %v801 = vadd.f32 %v558, %v800
      %v802 = vpop.f32.mrb[0].mxu0
      %v803 = vpop.f32.mrb[0].mxu0
      %v804 = vadd.f32 %v561, %v803
      %v805 = vpop.f32.mrb[0].mxu0
      %806 = vmatprep.mubr.bf16.mxu0 0
      %807 = vmatmul.mubr.bf16.gmra.mrb[0].mxu0 %v651
      %v808 = vpop.f32.mrb[0].mxu0
      %v809 = vadd.f32 %v566, %v808
      %v810 = vpop.f32.mrb[0].mxu0
      %v811 = vpop.f32.mrb[0].mxu0
      %v812 = vadd.f32 %v569, %v811
      %v813 = vpop.f32.mrb[0].mxu0
      %814 = vmatprep.mubr.bf16.mxu0 0
      %815 = vmatmul.mubr.bf16.gmra.mrb[0].mxu0 %v654
      %v816 = vpop.f32.mrb[0].mxu0
      %v817 = vadd.f32 %v574, %v816
      %v818 = vpop.f32.mrb[0].mxu0
      %v819 = vpop.f32.mrb[0].mxu0
      %v820 = vadd.f32 %v577, %v819
      %v821 = vpop.f32.mrb[0].mxu0
      %822 = vmatprep.mubr.bf16.mxu0 0
      %823 = vmatmul.mubr.bf16.gmra.mrb[0].mxu0 %v657
      %v824 = vpop.f32.mrb[0].mxu0
      %v825 = vadd.f32 %v582, %v824
      %v826 = vpop.f32.mrb[0].mxu0
      %v827 = vpop.f32.mrb[0].mxu0
      %v828 = vadd.f32 %v585, %v827
      %v829 = vpop.f32.mrb[0].mxu0
      %830 = vmatprep.mubr.bf16.mxu0 0
      %831 = vmatmul.mubr.bf16.gmra.mrb[0].mxu0 %v660
      %v832 = vpop.f32.mrb[0].mxu0
      %v833 = vadd.f32 %v590, %v832
      %v834 = vpop.f32.mrb[0].mxu0
      %v835 = vpop.f32.mrb[0].mxu0
      %v836 = vadd.f32 %v593, %v835
      %v837 = vpop.f32.mrb[0].mxu0
      %838 = vdwg.mxu0
      %v839 = vld [vmem:[%s192 + $0x2] sm:$0xff]
      %v840 = vld [vmem:[%s192 + $0xa] sm:$0xff]
      %v841 = vld [vmem:[%s192 + $0x12] sm:$0xff]
      %v842 = vld [vmem:[%s192 + $0x1a] sm:$0xff]
      %v843 = vld [vmem:[%s192 + $0x22] sm:$0xff]
      %v844 = vld [vmem:[%s192 + $0x2a] sm:$0xff]
      %v845 = vld [vmem:[%s192 + $0x32] sm:$0xff]
      %v846 = vld [vmem:[%s192 + $0x3a] sm:$0xff]
      %v847 = vld [vmem:[%s192 + $0x42] sm:$0xff]
      %v848 = vld [vmem:[%s192 + $0x4a] sm:$0xff]
      %v849 = vld [vmem:[%s192 + $0x52] sm:$0xff]
      %v850 = vld [vmem:[%s192 + $0x5a] sm:$0xff]
      %v851 = vld [vmem:[%s192 + $0x62] sm:$0xff]
      %v852 = vld [vmem:[%s192 + $0x6a] sm:$0xff]
      %v853 = vld [vmem:[%s192 + $0x72] sm:$0xff]
      %v854 = vld [vmem:[%s192 + $0x7a] sm:$0xff]
      %v855 = vld [vmem:[%s192 + $0x82] sm:$0xff]
      %v856 = vld [vmem:[%s192 + $0x8a] sm:$0xff]
      %v857 = vld [vmem:[%s192 + $0x92] sm:$0xff]
      %v858 = vld [vmem:[%s192 + $0x9a] sm:$0xff]
      %v859 = vld [vmem:[%s192 + $0xa2] sm:$0xff]
      %v860 = vld [vmem:[%s192 + $0xaa] sm:$0xff]
      %v861 = vld [vmem:[%s192 + $0xb2] sm:$0xff]
      %v862 = vld [vmem:[%s192 + $0xba] sm:$0xff]
      %v863 = vld [vmem:[%s192 + $0xc2] sm:$0xff]
      %v864 = vld [vmem:[%s192 + $0xca] sm:$0xff]
      %v865 = vld [vmem:[%s192 + $0xd2] sm:$0xff]
      %v866 = vld [vmem:[%s192 + $0xda] sm:$0xff]
      %v867 = vld [vmem:[%s192 + $0xe2] sm:$0xff]
      %v868 = vld [vmem:[%s192 + $0xea] sm:$0xff]
      %v869 = vld [vmem:[%s192 + $0xf2] sm:$0xff]
      %v870 = vld [vmem:[%s192 + $0xfa] sm:$0xff]
      %v871 = vld [vmem:[%s192 + $0x102] sm:$0xff]
      %v872 = vld [vmem:[%s192 + $0x10a] sm:$0xff]
      %v873 = vld [vmem:[%s192 + $0x112] sm:$0xff]
      %v874 = vld [vmem:[%s192 + $0x11a] sm:$0x3f]
      %v875 = vpack.c.bf16 %v840, %v839
      %v876 = vpack.c.bf16 %v842, %v841
      %v877 = vpack.c.bf16 %v844, %v843
      %v878 = vpack.c.bf16 %v846, %v845
      %v879 = vpack.c.bf16 %v848, %v847
      %v880 = vpack.c.bf16 %v850, %v849
      %v881 = vpack.c.bf16 %v852, %v851
      %v882 = vpack.c.bf16 %v854, %v853
      %v883 = vpack.c.bf16 %v856, %v855
      %v884 = vpack.c.bf16 %v858, %v857
      %v885 = vpack.c.bf16 %v860, %v859
      %v886 = vpack.c.bf16 %v862, %v861
      %v887 = vpack.c.bf16 %v864, %v863
      %v888 = vpack.c.bf16 %v866, %v865
      %v889 = vpack.c.bf16 %v868, %v867
      %v890 = vpack.c.bf16 %v870, %v869
      %v891 = vpack.c.bf16 %v872, %v871
      %v892 = vpack.c.bf16 %v874, %v873
      %s893 = scalar_lea.vmem %s2, 32
      %v894 = vld [vmem:[%s893] sm:$0xf]
      %v895 = vld [vmem:[%s893 + $0x4] sm:$0xf]
      %v896 = vld [vmem:[%s893 + $0x8] sm:$0xf]
      %v897 = vld [vmem:[%s893 + $0xc] sm:$0xf]
      %v902 = vunpack.c.l.b16 %v894
      %v903 = vunpack.c.l.b16 %v895
      %v904 = vunpack.c.l.b16 %v896
      %v905 = vunpack.c.l.b16 %v897
      %v906 = vpack.c.b16 %v903, %v902
      %v907 = vpack.c.b16 %v905, %v904
      %v911 = vsel %vm364, %v875, 0
      %v914 = vsel %vm364, %v876, 0
      %v917 = vsel %vm364, %v877, 0
      %v920 = vsel %vm364, %v878, 0
      %v923 = vsel %vm364, %v879, 0
      %v926 = vsel %vm364, %v880, 0
      %v929 = vsel %vm364, %v881, 0
      %v932 = vsel %vm364, %v882, 0
      %v935 = vsel %vm364, %v883, 0
      %v938 = vsel %vm364, %v884, 0
      %v941 = vsel %vm364, %v885, 0
      %v944 = vsel %vm364, %v886, 0
      %v947 = vsel %vm364, %v887, 0
      %v950 = vsel %vm364, %v888, 0
      %v953 = vsel %vm364, %v889, 0
      %v956 = vsel %vm364, %v890, 0
      %v959 = vsel %vm364, %v891, 0
      %v962 = vsel %vm364, %v892, 0
      %964 = vmatprep.subr.bf16.mxu0 0
      %965 = vmatpush1.bf16.msra.mxu0 %v906
      %966 = vmatprep.subr.bf16.mxu0 0
      %967 = vmatpush1.bf16.msra.mxu0 %v907
      %968 = vmatprep.subr.bf16.mxu0 0
      %969 = vmatpush1.bf16.msra.mxu0 0
      %970 = vmatprep.subr.bf16.mxu0 0
      %971 = vmatpush1.bf16.msra.mxu0 0
      %972 = vmatprep.subr.bf16.mxu0 0
      %973 = vmatpush1.bf16.msra.mxu0 0
      %974 = vmatprep.subr.bf16.mxu0 0
      %975 = vmatpush1.bf16.msra.mxu0 0
      %976 = vmatprep.subr.bf16.mxu0 0
      %977 = vmatpush1.bf16.msra.mxu0 0
      %978 = vmatprep.subr.bf16.mxu0 0
      %979 = vmatpush1.bf16.msra.mxu0 0
      %980 = vmatprep.subr.bf16.mxu0 0
      %981 = vmatpush1.bf16.msra.mxu0 0
      %982 = vmatprep.subr.bf16.mxu0 0
      %983 = vmatpush1.bf16.msra.mxu0 0
      %984 = vmatprep.subr.bf16.mxu0 0
      %985 = vmatpush1.bf16.msra.mxu0 0
      %986 = vmatprep.subr.bf16.mxu0 0
      %987 = vmatpush1.bf16.msra.mxu0 0
      %988 = vmatprep.subr.bf16.mxu0 0
      %989 = vmatpush1.bf16.msra.mxu0 0
      %990 = vmatprep.subr.bf16.mxu0 0
      %991 = vmatpush1.bf16.msra.mxu0 0
      %992 = vmatprep.subr.bf16.mxu0 0
      %993 = vmatpush1.bf16.msra.mxu0 0
      %994 = vmatprep.subr.bf16.mxu0 0
      %995 = vmatpush1.bf16.msra.mxu0 0
      %996 = vmatprep.mubr.bf16.mxu0 0
      %997 = vmatmul.mubr.bf16.gmra.mrb[0].mxu0 %v911
      %v998 = vpop.f32.mrb[0].mxu0
      %v999 = vadd.f32 0.0, %v998
      %v1000 = vpop.f32.mrb[0].mxu0
      %v1001 = vpop.f32.mrb[0].mxu0
      %v1002 = vadd.f32 0.0, %v1001
      %v1003 = vpop.f32.mrb[0].mxu0
      %1004 = vmatprep.mubr.bf16.mxu0 0
      %1005 = vmatmul.mubr.bf16.gmra.mrb[0].mxu0 %v914
      %v1006 = vpop.f32.mrb[0].mxu0
      %v1007 = vadd.f32 0.0, %v1006
      %v1008 = vpop.f32.mrb[0].mxu0
      %v1009 = vpop.f32.mrb[0].mxu0
      %v1010 = vadd.f32 0.0, %v1009
      %v1011 = vpop.f32.mrb[0].mxu0
      %1012 = vmatprep.mubr.bf16.mxu0 0
      %1013 = vmatmul.mubr.bf16.gmra.mrb[0].mxu0 %v917
      %v1014 = vpop.f32.mrb[0].mxu0
      %v1015 = vadd.f32 0.0, %v1014
      %v1016 = vpop.f32.mrb[0].mxu0
      %v1017 = vpop.f32.mrb[0].mxu0
      %v1018 = vadd.f32 0.0, %v1017
      %v1019 = vpop.f32.mrb[0].mxu0
      %1020 = vmatprep.mubr.bf16.mxu0 0
      %1021 = vmatmul.mubr.bf16.gmra.mrb[0].mxu0 %v920
      %v1022 = vpop.f32.mrb[0].mxu0
      %v1023 = vadd.f32 0.0, %v1022
      %v1024 = vpop.f32.mrb[0].mxu0
      %v1025 = vpop.f32.mrb[0].mxu0
      %v1026 = vadd.f32 0.0, %v1025
      %v1027 = vpop.f32.mrb[0].mxu0
      %1028 = vmatprep.mubr.bf16.mxu0 0
      %1029 = vmatmul.mubr.bf16.gmra.mrb[0].mxu0 %v923
      %v1030 = vpop.f32.mrb[0].mxu0
      %v1031 = vadd.f32 0.0, %v1030
      %v1032 = vpop.f32.mrb[0].mxu0
      %v1033 = vpop.f32.mrb[0].mxu0
      %v1034 = vadd.f32 0.0, %v1033
      %v1035 = vpop.f32.mrb[0].mxu0
      %1036 = vmatprep.mubr.bf16.mxu0 0
      %1037 = vmatmul.mubr.bf16.gmra.mrb[0].mxu0 %v926
      %v1038 = vpop.f32.mrb[0].mxu0
      %v1039 = vadd.f32 0.0, %v1038
      %v1040 = vpop.f32.mrb[0].mxu0
      %v1041 = vpop.f32.mrb[0].mxu0
      %v1042 = vadd.f32 0.0, %v1041
      %v1043 = vpop.f32.mrb[0].mxu0
      %1044 = vmatprep.mubr.bf16.mxu0 0
      %1045 = vmatmul.mubr.bf16.gmra.mrb[0].mxu0 %v929
      %v1046 = vpop.f32.mrb[0].mxu0
      %v1047 = vadd.f32 0.0, %v1046
      %v1048 = vpop.f32.mrb[0].mxu0
      %v1049 = vpop.f32.mrb[0].mxu0
      %v1050 = vadd.f32 0.0, %v1049
      %v1051 = vpop.f32.mrb[0].mxu0
      %1052 = vmatprep.mubr.bf16.mxu0 0
      %1053 = vmatmul.mubr.bf16.gmra.mrb[0].mxu0 %v932
      %v1054 = vpop.f32.mrb[0].mxu0
      %v1055 = vadd.f32 0.0, %v1054
      %v1056 = vpop.f32.mrb[0].mxu0
      %v1057 = vpop.f32.mrb[0].mxu0
      %v1058 = vadd.f32 0.0, %v1057
      %v1059 = vpop.f32.mrb[0].mxu0
      %1060 = vmatprep.mubr.bf16.mxu0 0
      %1061 = vmatmul.mubr.bf16.gmra.mrb[0].mxu0 %v935
      %v1062 = vpop.f32.mrb[0].mxu0
      %v1063 = vadd.f32 0.0, %v1062
      %v1064 = vpop.f32.mrb[0].mxu0
      %v1065 = vpop.f32.mrb[0].mxu0
      %v1066 = vadd.f32 0.0, %v1065
      %v1067 = vpop.f32.mrb[0].mxu0
      %1068 = vmatprep.mubr.bf16.mxu0 0
      %1069 = vmatmul.mubr.bf16.gmra.mrb[0].mxu0 %v938
      %v1070 = vpop.f32.mrb[0].mxu0
      %v1071 = vadd.f32 0.0, %v1070
      %v1072 = vpop.f32.mrb[0].mxu0
      %v1073 = vpop.f32.mrb[0].mxu0
      %v1074 = vadd.f32 0.0, %v1073
      %v1075 = vpop.f32.mrb[0].mxu0
      %1076 = vmatprep.mubr.bf16.mxu0 0
      %1077 = vmatmul.mubr.bf16.gmra.mrb[0].mxu0 %v941
      %v1078 = vpop.f32.mrb[0].mxu0
      %v1079 = vadd.f32 0.0, %v1078
      %v1080 = vpop.f32.mrb[0].mxu0
      %v1081 = vpop.f32.mrb[0].mxu0
      %v1082 = vadd.f32 0.0, %v1081
      %v1083 = vpop.f32.mrb[0].mxu0
      %1084 = vmatprep.mubr.bf16.mxu0 0
      %1085 = vmatmul.mubr.bf16.gmra.mrb[0].mxu0 %v944
      %v1086 = vpop.f32.mrb[0].mxu0
      %v1087 = vadd.f32 0.0, %v1086
      %v1088 = vpop.f32.mrb[0].mxu0
      %v1089 = vpop.f32.mrb[0].mxu0
      %v1090 = vadd.f32 0.0, %v1089
      %v1091 = vpop.f32.mrb[0].mxu0
      %1092 = vmatprep.mubr.bf16.mxu0 0
      %1093 = vmatmul.mubr.bf16.gmra.mrb[0].mxu0 %v947
      %v1094 = vpop.f32.mrb[0].mxu0
      %v1095 = vadd.f32 0.0, %v1094
      %v1096 = vpop.f32.mrb[0].mxu0
      %v1097 = vpop.f32.mrb[0].mxu0
      %v1098 = vadd.f32 0.0, %v1097
      %v1099 = vpop.f32.mrb[0].mxu0
      %1100 = vmatprep.mubr.bf16.mxu0 0
      %1101 = vmatmul.mubr.bf16.gmra.mrb[0].mxu0 %v950
      %v1102 = vpop.f32.mrb[0].mxu0
      %v1103 = vadd.f32 0.0, %v1102
      %v1104 = vpop.f32.mrb[0].mxu0
      %v1105 = vpop.f32.mrb[0].mxu0
      %v1106 = vadd.f32 0.0, %v1105
      %v1107 = vpop.f32.mrb[0].mxu0
      %1108 = vmatprep.mubr.bf16.mxu0 0
      %1109 = vmatmul.mubr.bf16.gmra.mrb[0].mxu0 %v953
      %v1110 = vpop.f32.mrb[0].mxu0
      %v1111 = vadd.f32 0.0, %v1110
      %v1112 = vpop.f32.mrb[0].mxu0
      %v1113 = vpop.f32.mrb[0].mxu0
      %v1114 = vadd.f32 0.0, %v1113
      %v1115 = vpop.f32.mrb[0].mxu0
      %1116 = vmatprep.mubr.bf16.mxu0 0
      %1117 = vmatmul.mubr.bf16.gmra.mrb[0].mxu0 %v956
      %v1118 = vpop.f32.mrb[0].mxu0
      %v1119 = vadd.f32 0.0, %v1118
      %v1120 = vpop.f32.mrb[0].mxu0
      %v1121 = vpop.f32.mrb[0].mxu0
      %v1122 = vadd.f32 0.0, %v1121
      %v1123 = vpop.f32.mrb[0].mxu0
      %1124 = vmatprep.mubr.bf16.mxu0 0
      %1125 = vmatmul.mubr.bf16.gmra.mrb[0].mxu0 %v959
      %v1126 = vpop.f32.mrb[0].mxu0
      %v1127 = vadd.f32 0.0, %v1126
      %v1128 = vpop.f32.mrb[0].mxu0
      %v1129 = vpop.f32.mrb[0].mxu0
      %v1130 = vadd.f32 0.0, %v1129
      %v1131 = vpop.f32.mrb[0].mxu0
      %1132 = vmatprep.mubr.bf16.mxu0 0
      %1133 = vmatmul.mubr.bf16.gmra.mrb[0].mxu0 %v962
      %v1134 = vpop.f32.mrb[0].mxu0
      %v1135 = vadd.f32 0.0, %v1134
      %v1136 = vpop.f32.mrb[0].mxu0
      %v1137 = vpop.f32.mrb[0].mxu0
      %v1138 = vadd.f32 0.0, %v1137
      %v1139 = vpop.f32.mrb[0].mxu0
      %1140 = vdwg.mxu0
      %v1141 = vadd.f32 %v697, %v999
      %v1142 = vadd.f32 %v700, %v1002
      %v1143 = vadd.f32 %v705, %v1007
      %v1144 = vadd.f32 %v708, %v1010
      %v1145 = vadd.f32 %v713, %v1015
      %v1146 = vadd.f32 %v716, %v1018
      %v1147 = vadd.f32 %v721, %v1023
      %v1148 = vadd.f32 %v724, %v1026
      %v1149 = vadd.f32 %v729, %v1031
      %v1150 = vadd.f32 %v732, %v1034
      %v1151 = vadd.f32 %v737, %v1039
      %v1152 = vadd.f32 %v740, %v1042
      %v1153 = vadd.f32 %v745, %v1047
      %v1154 = vadd.f32 %v748, %v1050
      %v1155 = vadd.f32 %v753, %v1055
      %v1156 = vadd.f32 %v756, %v1058
      %v1157 = vadd.f32 %v761, %v1063
      %v1158 = vadd.f32 %v764, %v1066
      %v1159 = vadd.f32 %v769, %v1071
      %v1160 = vadd.f32 %v772, %v1074
      %v1161 = vadd.f32 %v777, %v1079
      %v1162 = vadd.f32 %v780, %v1082
      %v1163 = vadd.f32 %v785, %v1087
      %v1164 = vadd.f32 %v788, %v1090
      %v1165 = vadd.f32 %v793, %v1095
      %v1166 = vadd.f32 %v796, %v1098
      %v1167 = vadd.f32 %v801, %v1103
      %v1168 = vadd.f32 %v804, %v1106
      %v1169 = vadd.f32 %v809, %v1111
      %v1170 = vadd.f32 %v812, %v1114
      %v1171 = vadd.f32 %v817, %v1119
      %v1172 = vadd.f32 %v820, %v1122
      %v1173 = vadd.f32 %v825, %v1127
      %v1174 = vadd.f32 %v828, %v1130
      %v1175 = vadd.f32 %v833, %v1135
      %v1176 = vadd.f32 %v836, %v1138
      %v1177 = vld [vmem:[%s192 + $0x12] sm:$0xff]
      %v1178 = vld [vmem:[%s192 + $0x1a] sm:$0xff]
      %v1179 = vld [vmem:[%s192 + $0x22] sm:$0xff]
      %v1180 = vld [vmem:[%s192 + $0x2a] sm:$0xff]
      %v1181 = vld [vmem:[%s192 + $0x32] sm:$0xff]
      %v1182 = vld [vmem:[%s192 + $0x3a] sm:$0xff]
      %v1183 = vld [vmem:[%s192 + $0x42] sm:$0xff]
      %v1184 = vld [vmem:[%s192 + $0x4a] sm:$0xff]
      %v1185 = vld [vmem:[%s192 + $0x52] sm:$0xff]
      %v1186 = vld [vmem:[%s192 + $0x5a] sm:$0xff]
      %v1187 = vld [vmem:[%s192 + $0x62] sm:$0xff]
      %v1188 = vld [vmem:[%s192 + $0x6a] sm:$0xff]
      %v1189 = vld [vmem:[%s192 + $0x72] sm:$0xff]
      %v1190 = vld [vmem:[%s192 + $0x7a] sm:$0xff]
      %v1191 = vld [vmem:[%s192 + $0x82] sm:$0xff]
      %v1192 = vld [vmem:[%s192 + $0x8a] sm:$0xff]
      %v1193 = vld [vmem:[%s192 + $0x92] sm:$0xff]
      %v1194 = vld [vmem:[%s192 + $0x9a] sm:$0xff]
      %v1195 = vld [vmem:[%s192 + $0xa2] sm:$0xff]
      %v1196 = vld [vmem:[%s192 + $0xaa] sm:$0xff]
      %v1197 = vld [vmem:[%s192 + $0xb2] sm:$0xff]
      %v1198 = vld [vmem:[%s192 + $0xba] sm:$0xff]
      %v1199 = vld [vmem:[%s192 + $0xc2] sm:$0xff]
      %v1200 = vld [vmem:[%s192 + $0xca] sm:$0xff]
      %v1201 = vld [vmem:[%s192 + $0xd2] sm:$0xff]
      %v1202 = vld [vmem:[%s192 + $0xda] sm:$0xff]
      %v1203 = vld [vmem:[%s192 + $0xe2] sm:$0xff]
      %v1204 = vld [vmem:[%s192 + $0xea] sm:$0xff]
      %v1205 = vld [vmem:[%s192 + $0xf2] sm:$0xff]
      %v1206 = vld [vmem:[%s192 + $0xfa] sm:$0xff]
      %v1207 = vld [vmem:[%s192 + $0x102] sm:$0xff]
      %v1208 = vld [vmem:[%s192 + $0x10a] sm:$0xff]
      %v1209 = vld [vmem:[%s192 + $0x112] sm:$0xff]
      %v1210 = vld [vmem:[%s192 + $0x11a] sm:$0xff]
      %v1211 = vld [vmem:[%s192 + $0x122] sm:$0xff]
      %v1212 = vld [vmem:[%s192 + $0x12a] sm:$0x3f]
      %v1213 = vpack.c.bf16 %v1178, %v1177
      %v1214 = vpack.c.bf16 %v1180, %v1179
      %v1215 = vpack.c.bf16 %v1182, %v1181
      %v1216 = vpack.c.bf16 %v1184, %v1183
      %v1217 = vpack.c.bf16 %v1186, %v1185
      %v1218 = vpack.c.bf16 %v1188, %v1187
      %v1219 = vpack.c.bf16 %v1190, %v1189
      %v1220 = vpack.c.bf16 %v1192, %v1191
      %v1221 = vpack.c.bf16 %v1194, %v1193
      %v1222 = vpack.c.bf16 %v1196, %v1195
      %v1223 = vpack.c.bf16 %v1198, %v1197
      %v1224 = vpack.c.bf16 %v1200, %v1199
      %v1225 = vpack.c.bf16 %v1202, %v1201
      %v1226 = vpack.c.bf16 %v1204, %v1203
      %v1227 = vpack.c.bf16 %v1206, %v1205
      %v1228 = vpack.c.bf16 %v1208, %v1207
      %v1229 = vpack.c.bf16 %v1210, %v1209
      %v1230 = vpack.c.bf16 %v1212, %v1211
      %s1231 = scalar_lea.vmem %s2, 48
      %v1232 = vld [vmem:[%s1231] sm:$0xf]
      %v1233 = vld [vmem:[%s1231 + $0x4] sm:$0xf]
      %v1234 = vld [vmem:[%s1231 + $0x8] sm:$0xf]
      %v1235 = vld [vmem:[%s1231 + $0xc] sm:$0xf]
      %v1240 = vunpack.c.l.b16 %v1232
      %v1241 = vunpack.c.l.b16 %v1233
      %v1242 = vunpack.c.l.b16 %v1234
      %v1243 = vunpack.c.l.b16 %v1235
      %v1244 = vpack.c.b16 %v1241, %v1240
      %v1245 = vpack.c.b16 %v1243, %v1242
      %v1249 = vsel %vm364, %v1213, 0
      %v1252 = vsel %vm364, %v1214, 0
      %v1255 = vsel %vm364, %v1215, 0
      %v1258 = vsel %vm364, %v1216, 0
      %v1261 = vsel %vm364, %v1217, 0
      %v1264 = vsel %vm364, %v1218, 0
      %v1267 = vsel %vm364, %v1219, 0
      %v1270 = vsel %vm364, %v1220, 0
      %v1273 = vsel %vm364, %v1221, 0
      %v1276 = vsel %vm364, %v1222, 0
      %v1279 = vsel %vm364, %v1223, 0
      %v1282 = vsel %vm364, %v1224, 0
      %v1285 = vsel %vm364, %v1225, 0
      %v1288 = vsel %vm364, %v1226, 0
      %v1291 = vsel %vm364, %v1227, 0
      %v1294 = vsel %vm364, %v1228, 0
      %v1297 = vsel %vm364, %v1229, 0
      %v1300 = vsel %vm364, %v1230, 0
      %1302 = vmatprep.subr.bf16.mxu0 0
      %1303 = vmatpush1.bf16.msra.mxu0 %v1244
      %1304 = vmatprep.subr.bf16.mxu0 0
      %1305 = vmatpush1.bf16.msra.mxu0 %v1245
      %1306 = vmatprep.subr.bf16.mxu0 0
      %1307 = vmatpush1.bf16.msra.mxu0 0
      %1308 = vmatprep.subr.bf16.mxu0 0
      %1309 = vmatpush1.bf16.msra.mxu0 0
      %1310 = vmatprep.subr.bf16.mxu0 0
      %1311 = vmatpush1.bf16.msra.mxu0 0
      %1312 = vmatprep.subr.bf16.mxu0 0
      %1313 = vmatpush1.bf16.msra.mxu0 0
      %1314 = vmatprep.subr.bf16.mxu0 0
      %1315 = vmatpush1.bf16.msra.mxu0 0
      %1316 = vmatprep.subr.bf16.mxu0 0
      %1317 = vmatpush1.bf16.msra.mxu0 0
      %1318 = vmatprep.subr.bf16.mxu0 0
      %1319 = vmatpush1.bf16.msra.mxu0 0
      %1320 = vmatprep.subr.bf16.mxu0 0
      %1321 = vmatpush1.bf16.msra.mxu0 0
      %1322 = vmatprep.subr.bf16.mxu0 0
      %1323 = vmatpush1.bf16.msra.mxu0 0
      %1324 = vmatprep.subr.bf16.mxu0 0
      %1325 = vmatpush1.bf16.msra.mxu0 0
      %1326 = vmatprep.subr.bf16.mxu0 0
      %1327 = vmatpush1.bf16.msra.mxu0 0
      %1328 = vmatprep.subr.bf16.mxu0 0
      %1329 = vmatpush1.bf16.msra.mxu0 0
      %1330 = vmatprep.subr.bf16.mxu0 0
      %1331 = vmatpush1.bf16.msra.mxu0 0
      %1332 = vmatprep.subr.bf16.mxu0 0
      %1333 = vmatpush1.bf16.msra.mxu0 0
      %1334 = vmatprep.mubr.bf16.mxu0 0
      %1335 = vmatmul.mubr.bf16.gmra.mrb[0].mxu0 %v1249
      %v1336 = vpop.f32.mrb[0].mxu0
      %v1337 = vadd.f32 0.0, %v1336
      %v1338 = vpop.f32.mrb[0].mxu0
      %v1339 = vpop.f32.mrb[0].mxu0
      %v1340 = vadd.f32 0.0, %v1339
      %v1341 = vpop.f32.mrb[0].mxu0
      %1342 = vmatprep.mubr.bf16.mxu0 0
      %1343 = vmatmul.mubr.bf16.gmra.mrb[0].mxu0 %v1252
      %v1344 = vpop.f32.mrb[0].mxu0
      %v1345 = vadd.f32 0.0, %v1344
      %v1346 = vpop.f32.mrb[0].mxu0
      %v1347 = vpop.f32.mrb[0].mxu0
      %v1348 = vadd.f32 0.0, %v1347
      %v1349 = vpop.f32.mrb[0].mxu0
      %1350 = vmatprep.mubr.bf16.mxu0 0
      %1351 = vmatmul.mubr.bf16.gmra.mrb[0].mxu0 %v1255
      %v1352 = vpop.f32.mrb[0].mxu0
      %v1353 = vadd.f32 0.0, %v1352
      %v1354 = vpop.f32.mrb[0].mxu0
      %v1355 = vpop.f32.mrb[0].mxu0
      %v1356 = vadd.f32 0.0, %v1355
      %v1357 = vpop.f32.mrb[0].mxu0
      %1358 = vmatprep.mubr.bf16.mxu0 0
      %1359 = vmatmul.mubr.bf16.gmra.mrb[0].mxu0 %v1258
      %v1360 = vpop.f32.mrb[0].mxu0
      %v1361 = vadd.f32 0.0, %v1360
      %v1362 = vpop.f32.mrb[0].mxu0
      %v1363 = vpop.f32.mrb[0].mxu0
      %v1364 = vadd.f32 0.0, %v1363
      %v1365 = vpop.f32.mrb[0].mxu0
      %1366 = vmatprep.mubr.bf16.mxu0 0
      %1367 = vmatmul.mubr.bf16.gmra.mrb[0].mxu0 %v1261
      %v1368 = vpop.f32.mrb[0].mxu0
      %v1369 = vadd.f32 0.0, %v1368
      %v1370 = vpop.f32.mrb[0].mxu0
      %v1371 = vpop.f32.mrb[0].mxu0
      %v1372 = vadd.f32 0.0, %v1371
      %v1373 = vpop.f32.mrb[0].mxu0
      %1374 = vmatprep.mubr.bf16.mxu0 0
      %1375 = vmatmul.mubr.bf16.gmra.mrb[0].mxu0 %v1264
      %v1376 = vpop.f32.mrb[0].mxu0
      %v1377 = vadd.f32 0.0, %v1376
      %v1378 = vpop.f32.mrb[0].mxu0
      %v1379 = vpop.f32.mrb[0].mxu0
      %v1380 = vadd.f32 0.0, %v1379
      %v1381 = vpop.f32.mrb[0].mxu0
      %1382 = vmatprep.mubr.bf16.mxu0 0
      %1383 = vmatmul.mubr.bf16.gmra.mrb[0].mxu0 %v1267
      %v1384 = vpop.f32.mrb[0].mxu0
      %v1385 = vadd.f32 0.0, %v1384
      %v1386 = vpop.f32.mrb[0].mxu0
      %v1387 = vpop.f32.mrb[0].mxu0
      %v1388 = vadd.f32 0.0, %v1387
      %v1389 = vpop.f32.mrb[0].mxu0
      %1390 = vmatprep.mubr.bf16.mxu0 0
      %1391 = vmatmul.mubr.bf16.gmra.mrb[0].mxu0 %v1270
      %v1392 = vpop.f32.mrb[0].mxu0
      %v1393 = vadd.f32 0.0, %v1392
      %v1394 = vpop.f32.mrb[0].mxu0
      %v1395 = vpop.f32.mrb[0].mxu0
      %v1396 = vadd.f32 0.0, %v1395
      %v1397 = vpop.f32.mrb[0].mxu0
      %1398 = vmatprep.mubr.bf16.mxu0 0
      %1399 = vmatmul.mubr.bf16.gmra.mrb[0].mxu0 %v1273
      %v1400 = vpop.f32.mrb[0].mxu0
      %v1401 = vadd.f32 0.0, %v1400
      %v1402 = vpop.f32.mrb[0].mxu0
      %v1403 = vpop.f32.mrb[0].mxu0
      %v1404 = vadd.f32 0.0, %v1403
      %v1405 = vpop.f32.mrb[0].mxu0
      %1406 = vmatprep.mubr.bf16.mxu0 0
      %1407 = vmatmul.mubr.bf16.gmra.mrb[0].mxu0 %v1276
      %v1408 = vpop.f32.mrb[0].mxu0
      %v1409 = vadd.f32 0.0, %v1408
      %v1410 = vpop.f32.mrb[0].mxu0
      %v1411 = vpop.f32.mrb[0].mxu0
      %v1412 = vadd.f32 0.0, %v1411
      %v1413 = vpop.f32.mrb[0].mxu0
      %1414 = vmatprep.mubr.bf16.mxu0 0
      %1415 = vmatmul.mubr.bf16.gmra.mrb[0].mxu0 %v1279
      %v1416 = vpop.f32.mrb[0].mxu0
      %v1417 = vadd.f32 0.0, %v1416
      %v1418 = vpop.f32.mrb[0].mxu0
      %v1419 = vpop.f32.mrb[0].mxu0
      %v1420 = vadd.f32 0.0, %v1419
      %v1421 = vpop.f32.mrb[0].mxu0
      %1422 = vmatprep.mubr.bf16.mxu0 0
      %1423 = vmatmul.mubr.bf16.gmra.mrb[0].mxu0 %v1282
      %v1424 = vpop.f32.mrb[0].mxu0
      %v1425 = vadd.f32 0.0, %v1424
      %v1426 = vpop.f32.mrb[0].mxu0
      %v1427 = vpop.f32.mrb[0].mxu0
      %v1428 = vadd.f32 0.0, %v1427
      %v1429 = vpop.f32.mrb[0].mxu0
      %1430 = vmatprep.mubr.bf16.mxu0 0
      %1431 = vmatmul.mubr.bf16.gmra.mrb[0].mxu0 %v1285
      %v1432 = vpop.f32.mrb[0].mxu0
      %v1433 = vadd.f32 0.0, %v1432
      %v1434 = vpop.f32.mrb[0].mxu0
      %v1435 = vpop.f32.mrb[0].mxu0
      %v1436 = vadd.f32 0.0, %v1435
      %v1437 = vpop.f32.mrb[0].mxu0
      %1438 = vmatprep.mubr.bf16.mxu0 0
      %1439 = vmatmul.mubr.bf16.gmra.mrb[0].mxu0 %v1288
      %v1440 = vpop.f32.mrb[0].mxu0
      %v1441 = vadd.f32 0.0, %v1440
      %v1442 = vpop.f32.mrb[0].mxu0
      %v1443 = vpop.f32.mrb[0].mxu0
      %v1444 = vadd.f32 0.0, %v1443
      %v1445 = vpop.f32.mrb[0].mxu0
      %1446 = vmatprep.mubr.bf16.mxu0 0
      %1447 = vmatmul.mubr.bf16.gmra.mrb[0].mxu0 %v1291
      %v1448 = vpop.f32.mrb[0].mxu0
      %v1449 = vadd.f32 0.0, %v1448
      %v1450 = vpop.f32.mrb[0].mxu0
      %v1451 = vpop.f32.mrb[0].mxu0
      %v1452 = vadd.f32 0.0, %v1451
      %v1453 = vpop.f32.mrb[0].mxu0
      %1454 = vmatprep.mubr.bf16.mxu0 0
      %1455 = vmatmul.mubr.bf16.gmra.mrb[0].mxu0 %v1294
      %v1456 = vpop.f32.mrb[0].mxu0
      %v1457 = vadd.f32 0.0, %v1456
      %v1458 = vpop.f32.mrb[0].mxu0
      %v1459 = vpop.f32.mrb[0].mxu0
      %v1460 = vadd.f32 0.0, %v1459
      %v1461 = vpop.f32.mrb[0].mxu0
      %1462 = vmatprep.mubr.bf16.mxu0 0
      %1463 = vmatmul.mubr.bf16.gmra.mrb[0].mxu0 %v1297
      %v1464 = vpop.f32.mrb[0].mxu0
      %v1465 = vadd.f32 0.0, %v1464
      %v1466 = vpop.f32.mrb[0].mxu0
      %v1467 = vpop.f32.mrb[0].mxu0
      %v1468 = vadd.f32 0.0, %v1467
      %v1469 = vpop.f32.mrb[0].mxu0
      %1470 = vmatprep.mubr.bf16.mxu0 0
      %1471 = vmatmul.mubr.bf16.gmra.mrb[0].mxu0 %v1300
      %v1472 = vpop.f32.mrb[0].mxu0
      %v1473 = vadd.f32 0.0, %v1472
      %v1474 = vpop.f32.mrb[0].mxu0
      %v1475 = vpop.f32.mrb[0].mxu0
      %v1476 = vadd.f32 0.0, %v1475
      %v1477 = vpop.f32.mrb[0].mxu0
      %1478 = vdwg.mxu0
      %v1479 = vadd.f32 %v1141, %v1337
      %v1480 = vadd.f32 %v1142, %v1340
      %v1481 = vadd.f32 %v1143, %v1345
      %v1482 = vadd.f32 %v1144, %v1348
      %v1483 = vadd.f32 %v1145, %v1353
      %v1484 = vadd.f32 %v1146, %v1356
      %v1485 = vadd.f32 %v1147, %v1361
      %v1486 = vadd.f32 %v1148, %v1364
      %v1487 = vadd.f32 %v1149, %v1369
      %v1488 = vadd.f32 %v1150, %v1372
      %v1489 = vadd.f32 %v1151, %v1377
      %v1490 = vadd.f32 %v1152, %v1380
      %v1491 = vadd.f32 %v1153, %v1385
      %v1492 = vadd.f32 %v1154, %v1388
      %v1493 = vadd.f32 %v1155, %v1393
      %v1494 = vadd.f32 %v1156, %v1396
      %v1495 = vadd.f32 %v1157, %v1401
      %v1496 = vadd.f32 %v1158, %v1404
      %v1497 = vadd.f32 %v1159, %v1409
      %v1498 = vadd.f32 %v1160, %v1412
      %v1499 = vadd.f32 %v1161, %v1417
      %v1500 = vadd.f32 %v1162, %v1420
      %v1501 = vadd.f32 %v1163, %v1425
      %v1502 = vadd.f32 %v1164, %v1428
      %v1503 = vadd.f32 %v1165, %v1433
      %v1504 = vadd.f32 %v1166, %v1436
      %v1505 = vadd.f32 %v1167, %v1441
      %v1506 = vadd.f32 %v1168, %v1444
      %v1507 = vadd.f32 %v1169, %v1449
      %v1508 = vadd.f32 %v1170, %v1452
      %v1509 = vadd.f32 %v1171, %v1457
      %v1510 = vadd.f32 %v1172, %v1460
      %v1511 = vadd.f32 %v1173, %v1465
      %v1512 = vadd.f32 %v1174, %v1468
      %v1513 = vadd.f32 %v1175, %v1473
      %v1514 = vadd.f32 %v1176, %v1476
      %v1515 = vld [vmem:[%s192 + $0x13] sm:$0xff]
      %v1516 = vld [vmem:[%s192 + $0x1b] sm:$0xff]
      %v1517 = vld [vmem:[%s192 + $0x23] sm:$0xff]
      %v1518 = vld [vmem:[%s192 + $0x2b] sm:$0xff]
      %v1519 = vld [vmem:[%s192 + $0x33] sm:$0xff]
      %v1520 = vld [vmem:[%s192 + $0x3b] sm:$0xff]
      %v1521 = vld [vmem:[%s192 + $0x43] sm:$0xff]
      %v1522 = vld [vmem:[%s192 + $0x4b] sm:$0xff]
      %v1523 = vld [vmem:[%s192 + $0x53] sm:$0xff]
      %v1524 = vld [vmem:[%s192 + $0x5b] sm:$0xff]
      %v1525 = vld [vmem:[%s192 + $0x63] sm:$0xff]
      %v1526 = vld [vmem:[%s192 + $0x6b] sm:$0xff]
      %v1527 = vld [vmem:[%s192 + $0x73] sm:$0xff]
      %v1528 = vld [vmem:[%s192 + $0x7b] sm:$0xff]
      %v1529 = vld [vmem:[%s192 + $0x83] sm:$0xff]
      %v1530 = vld [vmem:[%s192 + $0x8b] sm:$0xff]
      %v1531 = vld [vmem:[%s192 + $0x93] sm:$0xff]
      %v1532 = vld [vmem:[%s192 + $0x9b] sm:$0xff]
      %v1533 = vld [vmem:[%s192 + $0xa3] sm:$0xff]
      %v1534 = vld [vmem:[%s192 + $0xab] sm:$0xff]
      %v1535 = vld [vmem:[%s192 + $0xb3] sm:$0xff]
      %v1536 = vld [vmem:[%s192 + $0xbb] sm:$0xff]
      %v1537 = vld [vmem:[%s192 + $0xc3] sm:$0xff]
      %v1538 = vld [vmem:[%s192 + $0xcb] sm:$0xff]
      %v1539 = vld [vmem:[%s192 + $0xd3] sm:$0xff]
      %v1540 = vld [vmem:[%s192 + $0xdb] sm:$0xff]
      %v1541 = vld [vmem:[%s192 + $0xe3] sm:$0xff]
      %v1542 = vld [vmem:[%s192 + $0xeb] sm:$0xff]
      %v1543 = vld [vmem:[%s192 + $0xf3] sm:$0xff]
      %v1544 = vld [vmem:[%s192 + $0xfb] sm:$0xff]
      %v1545 = vld [vmem:[%s192 + $0x103] sm:$0xff]
      %v1546 = vld [vmem:[%s192 + $0x10b] sm:$0xff]
      %v1547 = vld [vmem:[%s192 + $0x113] sm:$0xff]
      %v1548 = vld [vmem:[%s192 + $0x11b] sm:$0xff]
      %v1549 = vld [vmem:[%s192 + $0x123] sm:$0xff]
      %v1550 = vld [vmem:[%s192 + $0x12b] sm:$0x3f]
      %v1551 = vpack.c.bf16 %v1516, %v1515
      %v1552 = vpack.c.bf16 %v1518, %v1517
      %v1553 = vpack.c.bf16 %v1520, %v1519
      %v1554 = vpack.c.bf16 %v1522, %v1521
      %v1555 = vpack.c.bf16 %v1524, %v1523
      %v1556 = vpack.c.bf16 %v1526, %v1525
      %v1557 = vpack.c.bf16 %v1528, %v1527
      %v1558 = vpack.c.bf16 %v1530, %v1529
      %v1559 = vpack.c.bf16 %v1532, %v1531
      %v1560 = vpack.c.bf16 %v1534, %v1533
      %v1561 = vpack.c.bf16 %v1536, %v1535
      %v1562 = vpack.c.bf16 %v1538, %v1537
      %v1563 = vpack.c.bf16 %v1540, %v1539
      %v1564 = vpack.c.bf16 %v1542, %v1541
      %v1565 = vpack.c.bf16 %v1544, %v1543
      %v1566 = vpack.c.bf16 %v1546, %v1545
      %v1567 = vpack.c.bf16 %v1548, %v1547
      %v1568 = vpack.c.bf16 %v1550, %v1549
      %s1569 = scalar_lea.vmem %s2, 64
      %v1570 = vld [vmem:[%s1569] sm:$0xf]
      %v1571 = vld [vmem:[%s1569 + $0x4] sm:$0xf]
      %v1572 = vld [vmem:[%s1569 + $0x8] sm:$0xf]
      %v1573 = vld [vmem:[%s1569 + $0xc] sm:$0xf]
      %v1578 = vunpack.c.l.b16 %v1570
      %v1579 = vunpack.c.l.b16 %v1571
      %v1580 = vunpack.c.l.b16 %v1572
      %v1581 = vunpack.c.l.b16 %v1573
      %v1582 = vpack.c.b16 %v1579, %v1578
      %v1583 = vpack.c.b16 %v1581, %v1580
      %v1587 = vsel %vm364, %v1551, 0
      %v1590 = vsel %vm364, %v1552, 0
      %v1593 = vsel %vm364, %v1553, 0
      %v1596 = vsel %vm364, %v1554, 0
      %v1599 = vsel %vm364, %v1555, 0
      %v1602 = vsel %vm364, %v1556, 0
      %v1605 = vsel %vm364, %v1557, 0
      %v1608 = vsel %vm364, %v1558, 0
      %v1611 = vsel %vm364, %v1559, 0
      %v1614 = vsel %vm364, %v1560, 0
      %v1617 = vsel %vm364, %v1561, 0
      %v1620 = vsel %vm364, %v1562, 0
      %v1623 = vsel %vm364, %v1563, 0
      %v1626 = vsel %vm364, %v1564, 0
      %v1629 = vsel %vm364, %v1565, 0
      %v1632 = vsel %vm364, %v1566, 0
      %v1635 = vsel %vm364, %v1567, 0
      %v1638 = vsel %vm364, %v1568, 0
      %1640 = vmatprep.subr.bf16.mxu0 0
      %1641 = vmatpush1.bf16.msra.mxu0 %v1582
      %1642 = vmatprep.subr.bf16.mxu0 0
      %1643 = vmatpush1.bf16.msra.mxu0 %v1583
      %1644 = vmatprep.subr.bf16.mxu0 0
      %1645 = vmatpush1.bf16.msra.mxu0 0
      %1646 = vmatprep.subr.bf16.mxu0 0
      %1647 = vmatpush1.bf16.msra.mxu0 0
      %1648 = vmatprep.subr.bf16.mxu0 0
      %1649 = vmatpush1.bf16.msra.mxu0 0
      %1650 = vmatprep.subr.bf16.mxu0 0
      %1651 = vmatpush1.bf16.msra.mxu0 0
      %1652 = vmatprep.subr.bf16.mxu0 0
      %1653 = vmatpush1.bf16.msra.mxu0 0
      %1654 = vmatprep.subr.bf16.mxu0 0
      %1655 = vmatpush1.bf16.msra.mxu0 0
      %1656 = vmatprep.subr.bf16.mxu0 0
      %1657 = vmatpush1.bf16.msra.mxu0 0
      %1658 = vmatprep.subr.bf16.mxu0 0
      %1659 = vmatpush1.bf16.msra.mxu0 0
      %1660 = vmatprep.subr.bf16.mxu0 0
      %1661 = vmatpush1.bf16.msra.mxu0 0
      %1662 = vmatprep.subr.bf16.mxu0 0
      %1663 = vmatpush1.bf16.msra.mxu0 0
      %1664 = vmatprep.subr.bf16.mxu0 0
      %1665 = vmatpush1.bf16.msra.mxu0 0
      %1666 = vmatprep.subr.bf16.mxu0 0
      %1667 = vmatpush1.bf16.msra.mxu0 0
      %1668 = vmatprep.subr.bf16.mxu0 0
      %1669 = vmatpush1.bf16.msra.mxu0 0
      %1670 = vmatprep.subr.bf16.mxu0 0
      %1671 = vmatpush1.bf16.msra.mxu0 0
      %1672 = vmatprep.mubr.bf16.mxu0 0
      %1673 = vmatmul.mubr.bf16.gmra.mrb[0].mxu0 %v1587
      %v1674 = vpop.f32.mrb[0].mxu0
      %v1675 = vadd.f32 0.0, %v1674
      %v1676 = vpop.f32.mrb[0].mxu0
      %v1677 = vpop.f32.mrb[0].mxu0
      %v1678 = vadd.f32 0.0, %v1677
      %v1679 = vpop.f32.mrb[0].mxu0
      %1680 = vmatprep.mubr.bf16.mxu0 0
      %1681 = vmatmul.mubr.bf16.gmra.mrb[0].mxu0 %v1590
      %v1682 = vpop.f32.mrb[0].mxu0
      %v1683 = vadd.f32 0.0, %v1682
      %v1684 = vpop.f32.mrb[0].mxu0
      %v1685 = vpop.f32.mrb[0].mxu0
      %v1686 = vadd.f32 0.0, %v1685
      %v1687 = vpop.f32.mrb[0].mxu0
      %1688 = vmatprep.mubr.bf16.mxu0 0
      %1689 = vmatmul.mubr.bf16.gmra.mrb[0].mxu0 %v1593
      %v1690 = vpop.f32.mrb[0].mxu0
      %v1691 = vadd.f32 0.0, %v1690
      %v1692 = vpop.f32.mrb[0].mxu0
      %v1693 = vpop.f32.mrb[0].mxu0
      %v1694 = vadd.f32 0.0, %v1693
      %v1695 = vpop.f32.mrb[0].mxu0
      %1696 = vmatprep.mubr.bf16.mxu0 0
      %1697 = vmatmul.mubr.bf16.gmra.mrb[0].mxu0 %v1596
      %v1698 = vpop.f32.mrb[0].mxu0
      %v1699 = vadd.f32 0.0, %v1698
      %v1700 = vpop.f32.mrb[0].mxu0
      %v1701 = vpop.f32.mrb[0].mxu0
      %v1702 = vadd.f32 0.0, %v1701
      %v1703 = vpop.f32.mrb[0].mxu0
      %1704 = vmatprep.mubr.bf16.mxu0 0
      %1705 = vmatmul.mubr.bf16.gmra.mrb[0].mxu0 %v1599
      %v1706 = vpop.f32.mrb[0].mxu0
      %v1707 = vadd.f32 0.0, %v1706
      %v1708 = vpop.f32.mrb[0].mxu0
      %v1709 = vpop.f32.mrb[0].mxu0
      %v1710 = vadd.f32 0.0, %v1709
      %v1711 = vpop.f32.mrb[0].mxu0
      %1712 = vmatprep.mubr.bf16.mxu0 0
      %1713 = vmatmul.mubr.bf16.gmra.mrb[0].mxu0 %v1602
      %v1714 = vpop.f32.mrb[0].mxu0
      %v1715 = vadd.f32 0.0, %v1714
      %v1716 = vpop.f32.mrb[0].mxu0
      %v1717 = vpop.f32.mrb[0].mxu0
      %v1718 = vadd.f32 0.0, %v1717
      %v1719 = vpop.f32.mrb[0].mxu0
      %1720 = vmatprep.mubr.bf16.mxu0 0
      %1721 = vmatmul.mubr.bf16.gmra.mrb[0].mxu0 %v1605
      %v1722 = vpop.f32.mrb[0].mxu0
      %v1723 = vadd.f32 0.0, %v1722
      %v1724 = vpop.f32.mrb[0].mxu0
      %v1725 = vpop.f32.mrb[0].mxu0
      %v1726 = vadd.f32 0.0, %v1725
      %v1727 = vpop.f32.mrb[0].mxu0
      %1728 = vmatprep.mubr.bf16.mxu0 0
      %1729 = vmatmul.mubr.bf16.gmra.mrb[0].mxu0 %v1608
      %v1730 = vpop.f32.mrb[0].mxu0
      %v1731 = vadd.f32 0.0, %v1730
      %v1732 = vpop.f32.mrb[0].mxu0
      %v1733 = vpop.f32.mrb[0].mxu0
      %v1734 = vadd.f32 0.0, %v1733
      %v1735 = vpop.f32.mrb[0].mxu0
      %1736 = vmatprep.mubr.bf16.mxu0 0
      %1737 = vmatmul.mubr.bf16.gmra.mrb[0].mxu0 %v1611
      %v1738 = vpop.f32.mrb[0].mxu0
      %v1739 = vadd.f32 0.0, %v1738
      %v1740 = vpop.f32.mrb[0].mxu0
      %v1741 = vpop.f32.mrb[0].mxu0
      %v1742 = vadd.f32 0.0, %v1741
      %v1743 = vpop.f32.mrb[0].mxu0
      %1744 = vmatprep.mubr.bf16.mxu0 0
      %1745 = vmatmul.mubr.bf16.gmra.mrb[0].mxu0 %v1614
      %v1746 = vpop.f32.mrb[0].mxu0
      %v1747 = vadd.f32 0.0, %v1746
      %v1748 = vpop.f32.mrb[0].mxu0
      %v1749 = vpop.f32.mrb[0].mxu0
      %v1750 = vadd.f32 0.0, %v1749
      %v1751 = vpop.f32.mrb[0].mxu0
      %1752 = vmatprep.mubr.bf16.mxu0 0
      %1753 = vmatmul.mubr.bf16.gmra.mrb[0].mxu0 %v1617
      %v1754 = vpop.f32.mrb[0].mxu0
      %v1755 = vadd.f32 0.0, %v1754
      %v1756 = vpop.f32.mrb[0].mxu0
      %v1757 = vpop.f32.mrb[0].mxu0
      %v1758 = vadd.f32 0.0, %v1757
      %v1759 = vpop.f32.mrb[0].mxu0
      %1760 = vmatprep.mubr.bf16.mxu0 0
      %1761 = vmatmul.mubr.bf16.gmra.mrb[0].mxu0 %v1620
      %v1762 = vpop.f32.mrb[0].mxu0
      %v1763 = vadd.f32 0.0, %v1762
      %v1764 = vpop.f32.mrb[0].mxu0
      %v1765 = vpop.f32.mrb[0].mxu0
      %v1766 = vadd.f32 0.0, %v1765
      %v1767 = vpop.f32.mrb[0].mxu0
      %1768 = vmatprep.mubr.bf16.mxu0 0
      %1769 = vmatmul.mubr.bf16.gmra.mrb[0].mxu0 %v1623
      %v1770 = vpop.f32.mrb[0].mxu0
      %v1771 = vadd.f32 0.0, %v1770
      %v1772 = vpop.f32.mrb[0].mxu0
      %v1773 = vpop.f32.mrb[0].mxu0
      %v1774 = vadd.f32 0.0, %v1773
      %v1775 = vpop.f32.mrb[0].mxu0
      %1776 = vmatprep.mubr.bf16.mxu0 0
      %1777 = vmatmul.mubr.bf16.gmra.mrb[0].mxu0 %v1626
      %v1778 = vpop.f32.mrb[0].mxu0
      %v1779 = vadd.f32 0.0, %v1778
      %v1780 = vpop.f32.mrb[0].mxu0
      %v1781 = vpop.f32.mrb[0].mxu0
      %v1782 = vadd.f32 0.0, %v1781
      %v1783 = vpop.f32.mrb[0].mxu0
      %1784 = vmatprep.mubr.bf16.mxu0 0
      %1785 = vmatmul.mubr.bf16.gmra.mrb[0].mxu0 %v1629
      %v1786 = vpop.f32.mrb[0].mxu0
      %v1787 = vadd.f32 0.0, %v1786
      %v1788 = vpop.f32.mrb[0].mxu0
      %v1789 = vpop.f32.mrb[0].mxu0
      %v1790 = vadd.f32 0.0, %v1789
      %v1791 = vpop.f32.mrb[0].mxu0
      %1792 = vmatprep.mubr.bf16.mxu0 0
      %1793 = vmatmul.mubr.bf16.gmra.mrb[0].mxu0 %v1632
      %v1794 = vpop.f32.mrb[0].mxu0
      %v1795 = vadd.f32 0.0, %v1794
      %v1796 = vpop.f32.mrb[0].mxu0
      %v1797 = vpop.f32.mrb[0].mxu0
      %v1798 = vadd.f32 0.0, %v1797
      %v1799 = vpop.f32.mrb[0].mxu0
      %1800 = vmatprep.mubr.bf16.mxu0 0
      %1801 = vmatmul.mubr.bf16.gmra.mrb[0].mxu0 %v1635
      %v1802 = vpop.f32.mrb[0].mxu0
      %v1803 = vadd.f32 0.0, %v1802
      %v1804 = vpop.f32.mrb[0].mxu0
      %v1805 = vpop.f32.mrb[0].mxu0
      %v1806 = vadd.f32 0.0, %v1805
      %v1807 = vpop.f32.mrb[0].mxu0
      %1808 = vmatprep.mubr.bf16.mxu0 0
      %1809 = vmatmul.mubr.bf16.gmra.mrb[0].mxu0 %v1638
      %v1810 = vpop.f32.mrb[0].mxu0
      %v1811 = vadd.f32 0.0, %v1810
      %v1812 = vpop.f32.mrb[0].mxu0
      %v1813 = vpop.f32.mrb[0].mxu0
      %v1814 = vadd.f32 0.0, %v1813
      %v1815 = vpop.f32.mrb[0].mxu0
      %1816 = vdwg.mxu0
      %v1817 = vadd.f32 %v1479, %v1675
      %v1818 = vadd.f32 %v1480, %v1678
      %v1819 = vadd.f32 %v1481, %v1683
      %v1820 = vadd.f32 %v1482, %v1686
      %v1821 = vadd.f32 %v1483, %v1691
      %v1822 = vadd.f32 %v1484, %v1694
      %v1823 = vadd.f32 %v1485, %v1699
      %v1824 = vadd.f32 %v1486, %v1702
      %v1825 = vadd.f32 %v1487, %v1707
      %v1826 = vadd.f32 %v1488, %v1710
      %v1827 = vadd.f32 %v1489, %v1715
      %v1828 = vadd.f32 %v1490, %v1718
      %v1829 = vadd.f32 %v1491, %v1723
      %v1830 = vadd.f32 %v1492, %v1726
      %v1831 = vadd.f32 %v1493, %v1731
      %v1832 = vadd.f32 %v1494, %v1734
      %v1833 = vadd.f32 %v1495, %v1739
      %v1834 = vadd.f32 %v1496, %v1742
      %v1835 = vadd.f32 %v1497, %v1747
      %v1836 = vadd.f32 %v1498, %v1750
      %v1837 = vadd.f32 %v1499, %v1755
      %v1838 = vadd.f32 %v1500, %v1758
      %v1839 = vadd.f32 %v1501, %v1763
      %v1840 = vadd.f32 %v1502, %v1766
      %v1841 = vadd.f32 %v1503, %v1771
      %v1842 = vadd.f32 %v1504, %v1774
      %v1843 = vadd.f32 %v1505, %v1779
      %v1844 = vadd.f32 %v1506, %v1782
      %v1845 = vadd.f32 %v1507, %v1787
      %v1846 = vadd.f32 %v1508, %v1790
      %v1847 = vadd.f32 %v1509, %v1795
      %v1848 = vadd.f32 %v1510, %v1798
      %v1849 = vadd.f32 %v1511, %v1803
      %v1850 = vadd.f32 %v1512, %v1806
      %v1851 = vadd.f32 %v1513, %v1811
      %v1852 = vadd.f32 %v1514, %v1814
      %v1853 = vld [vmem:[%s192 + $0x14] sm:$0xff]
      %v1854 = vld [vmem:[%s192 + $0x1c] sm:$0xff]
      %v1855 = vld [vmem:[%s192 + $0x24] sm:$0xff]
      %v1856 = vld [vmem:[%s192 + $0x2c] sm:$0xff]
      %v1857 = vld [vmem:[%s192 + $0x34] sm:$0xff]
      %v1858 = vld [vmem:[%s192 + $0x3c] sm:$0xff]
      %v1859 = vld [vmem:[%s192 + $0x44] sm:$0xff]
      %v1860 = vld [vmem:[%s192 + $0x4c] sm:$0xff]
      %v1861 = vld [vmem:[%s192 + $0x54] sm:$0xff]
      %v1862 = vld [vmem:[%s192 + $0x5c] sm:$0xff]
      %v1863 = vld [vmem:[%s192 + $0x64] sm:$0xff]
      %v1864 = vld [vmem:[%s192 + $0x6c] sm:$0xff]
      %v1865 = vld [vmem:[%s192 + $0x74] sm:$0xff]
      %v1866 = vld [vmem:[%s192 + $0x7c] sm:$0xff]
      %v1867 = vld [vmem:[%s192 + $0x84] sm:$0xff]
      %v1868 = vld [vmem:[%s192 + $0x8c] sm:$0xff]
      %v1869 = vld [vmem:[%s192 + $0x94] sm:$0xff]
      %v1870 = vld [vmem:[%s192 + $0x9c] sm:$0xff]
      %v1871 = vld [vmem:[%s192 + $0xa4] sm:$0xff]
      %v1872 = vld [vmem:[%s192 + $0xac] sm:$0xff]
      %v1873 = vld [vmem:[%s192 + $0xb4] sm:$0xff]
      %v1874 = vld [vmem:[%s192 + $0xbc] sm:$0xff]
      %v1875 = vld [vmem:[%s192 + $0xc4] sm:$0xff]
      %v1876 = vld [vmem:[%s192 + $0xcc] sm:$0xff]
      %v1877 = vld [vmem:[%s192 + $0xd4] sm:$0xff]
      %v1878 = vld [vmem:[%s192 + $0xdc] sm:$0xff]
      %v1879 = vld [vmem:[%s192 + $0xe4] sm:$0xff]
      %v1880 = vld [vmem:[%s192 + $0xec] sm:$0xff]
      %v1881 = vld [vmem:[%s192 + $0xf4] sm:$0xff]
      %v1882 = vld [vmem:[%s192 + $0xfc] sm:$0xff]
      %v1883 = vld [vmem:[%s192 + $0x104] sm:$0xff]
      %v1884 = vld [vmem:[%s192 + $0x10c] sm:$0xff]
      %v1885 = vld [vmem:[%s192 + $0x114] sm:$0xff]
      %v1886 = vld [vmem:[%s192 + $0x11c] sm:$0xff]
      %v1887 = vld [vmem:[%s192 + $0x124] sm:$0xff]
      %v1888 = vld [vmem:[%s192 + $0x12c] sm:$0x3f]
      %v1889 = vpack.c.bf16 %v1854, %v1853
      %v1890 = vpack.c.bf16 %v1856, %v1855
      %v1891 = vpack.c.bf16 %v1858, %v1857
      %v1892 = vpack.c.bf16 %v1860, %v1859
      %v1893 = vpack.c.bf16 %v1862, %v1861
      %v1894 = vpack.c.bf16 %v1864, %v1863
      %v1895 = vpack.c.bf16 %v1866, %v1865
      %v1896 = vpack.c.bf16 %v1868, %v1867
      %v1897 = vpack.c.bf16 %v1870, %v1869
      %v1898 = vpack.c.bf16 %v1872, %v1871
      %v1899 = vpack.c.bf16 %v1874, %v1873
      %v1900 = vpack.c.bf16 %v1876, %v1875
      %v1901 = vpack.c.bf16 %v1878, %v1877
      %v1902 = vpack.c.bf16 %v1880, %v1879
      %v1903 = vpack.c.bf16 %v1882, %v1881
      %v1904 = vpack.c.bf16 %v1884, %v1883
      %v1905 = vpack.c.bf16 %v1886, %v1885
      %v1906 = vpack.c.bf16 %v1888, %v1887
      %s1907 = scalar_lea.vmem %s2, 80
      %v1908 = vld [vmem:[%s1907] sm:$0xf]
      %v1909 = vld [vmem:[%s1907 + $0x4] sm:$0xf]
      %v1910 = vld [vmem:[%s1907 + $0x8] sm:$0xf]
      %v1911 = vld [vmem:[%s1907 + $0xc] sm:$0xf]
      %v1916 = vunpack.c.l.b16 %v1908
      %v1917 = vunpack.c.l.b16 %v1909
      %v1918 = vunpack.c.l.b16 %v1910
      %v1919 = vunpack.c.l.b16 %v1911
      %v1920 = vpack.c.b16 %v1917, %v1916
      %v1921 = vpack.c.b16 %v1919, %v1918
      %v1925 = vsel %vm364, %v1889, 0
      %v1928 = vsel %vm364, %v1890, 0
      %v1931 = vsel %vm364, %v1891, 0
      %v1934 = vsel %vm364, %v1892, 0
      %v1937 = vsel %vm364, %v1893, 0
      %v1940 = vsel %vm364, %v1894, 0
      %v1943 = vsel %vm364, %v1895, 0
      %v1946 = vsel %vm364, %v1896, 0
      %v1949 = vsel %vm364, %v1897, 0
      %v1952 = vsel %vm364, %v1898, 0
      %v1955 = vsel %vm364, %v1899, 0
      %v1958 = vsel %vm364, %v1900, 0
      %v1961 = vsel %vm364, %v1901, 0
      %v1964 = vsel %vm364, %v1902, 0
      %v1967 = vsel %vm364, %v1903, 0
      %v1970 = vsel %vm364, %v1904, 0
      %v1973 = vsel %vm364, %v1905, 0
      %v1976 = vsel %vm364, %v1906, 0
      %1978 = vmatprep.subr.bf16.mxu0 0
      %1979 = vmatpush1.bf16.msra.mxu0 %v1920
      %1980 = vmatprep.subr.bf16.mxu0 0
      %1981 = vmatpush1.bf16.msra.mxu0 %v1921
      %1982 = vmatprep.subr.bf16.mxu0 0
      %1983 = vmatpush1.bf16.msra.mxu0 0
      %1984 = vmatprep.subr.bf16.mxu0 0
      %1985 = vmatpush1.bf16.msra.mxu0 0
      %1986 = vmatprep.subr.bf16.mxu0 0
      %1987 = vmatpush1.bf16.msra.mxu0 0
      %1988 = vmatprep.subr.bf16.mxu0 0
      %1989 = vmatpush1.bf16.msra.mxu0 0
      %1990 = vmatprep.subr.bf16.mxu0 0
      %1991 = vmatpush1.bf16.msra.mxu0 0
      %1992 = vmatprep.subr.bf16.mxu0 0
      %1993 = vmatpush1.bf16.msra.mxu0 0
      %1994 = vmatprep.subr.bf16.mxu0 0
      %1995 = vmatpush1.bf16.msra.mxu0 0
      %1996 = vmatprep.subr.bf16.mxu0 0
      %1997 = vmatpush1.bf16.msra.mxu0 0
      %1998 = vmatprep.subr.bf16.mxu0 0
      %1999 = vmatpush1.bf16.msra.mxu0 0
      %2000 = vmatprep.subr.bf16.mxu0 0
      %2001 = vmatpush1.bf16.msra.mxu0 0
      %2002 = vmatprep.subr.bf16.mxu0 0
      %2003 = vmatpush1.bf16.msra.mxu0 0
      %2004 = vmatprep.subr.bf16.mxu0 0
      %2005 = vmatpush1.bf16.msra.mxu0 0
      %2006 = vmatprep.subr.bf16.mxu0 0
      %2007 = vmatpush1.bf16.msra.mxu0 0
      %2008 = vmatprep.subr.bf16.mxu0 0
      %2009 = vmatpush1.bf16.msra.mxu0 0
      %2010 = vmatprep.mubr.bf16.mxu0 0
      %2011 = vmatmul.mubr.bf16.gmra.mrb[0].mxu0 %v1925
      %v2012 = vpop.f32.mrb[0].mxu0
      %v2013 = vadd.f32 0.0, %v2012
      %v2014 = vpop.f32.mrb[0].mxu0
      %v2015 = vpop.f32.mrb[0].mxu0
      %v2016 = vadd.f32 0.0, %v2015
      %v2017 = vpop.f32.mrb[0].mxu0
      %2018 = vmatprep.mubr.bf16.mxu0 0
      %2019 = vmatmul.mubr.bf16.gmra.mrb[0].mxu0 %v1928
      %v2020 = vpop.f32.mrb[0].mxu0
      %v2021 = vadd.f32 0.0, %v2020
      %v2022 = vpop.f32.mrb[0].mxu0
      %v2023 = vpop.f32.mrb[0].mxu0
      %v2024 = vadd.f32 0.0, %v2023
      %v2025 = vpop.f32.mrb[0].mxu0
      %2026 = vmatprep.mubr.bf16.mxu0 0
      %2027 = vmatmul.mubr.bf16.gmra.mrb[0].mxu0 %v1931
      %v2028 = vpop.f32.mrb[0].mxu0
      %v2029 = vadd.f32 0.0, %v2028
      %v2030 = vpop.f32.mrb[0].mxu0
      %v2031 = vpop.f32.mrb[0].mxu0
      %v2032 = vadd.f32 0.0, %v2031
      %v2033 = vpop.f32.mrb[0].mxu0
      %2034 = vmatprep.mubr.bf16.mxu0 0
      %2035 = vmatmul.mubr.bf16.gmra.mrb[0].mxu0 %v1934
      %v2036 = vpop.f32.mrb[0].mxu0
      %v2037 = vadd.f32 0.0, %v2036
      %v2038 = vpop.f32.mrb[0].mxu0
      %v2039 = vpop.f32.mrb[0].mxu0
      %v2040 = vadd.f32 0.0, %v2039
      %v2041 = vpop.f32.mrb[0].mxu0
      %2042 = vmatprep.mubr.bf16.mxu0 0
      %2043 = vmatmul.mubr.bf16.gmra.mrb[0].mxu0 %v1937
      %v2044 = vpop.f32.mrb[0].mxu0
      %v2045 = vadd.f32 0.0, %v2044
      %v2046 = vpop.f32.mrb[0].mxu0
      %v2047 = vpop.f32.mrb[0].mxu0
      %v2048 = vadd.f32 0.0, %v2047
      %v2049 = vpop.f32.mrb[0].mxu0
      %2050 = vmatprep.mubr.bf16.mxu0 0
      %2051 = vmatmul.mubr.bf16.gmra.mrb[0].mxu0 %v1940
      %v2052 = vpop.f32.mrb[0].mxu0
      %v2053 = vadd.f32 0.0, %v2052
      %v2054 = vpop.f32.mrb[0].mxu0
      %v2055 = vpop.f32.mrb[0].mxu0
      %v2056 = vadd.f32 0.0, %v2055
      %v2057 = vpop.f32.mrb[0].mxu0
      %2058 = vmatprep.mubr.bf16.mxu0 0
      %2059 = vmatmul.mubr.bf16.gmra.mrb[0].mxu0 %v1943
      %v2060 = vpop.f32.mrb[0].mxu0
      %v2061 = vadd.f32 0.0, %v2060
      %v2062 = vpop.f32.mrb[0].mxu0
      %v2063 = vpop.f32.mrb[0].mxu0
      %v2064 = vadd.f32 0.0, %v2063
      %v2065 = vpop.f32.mrb[0].mxu0
      %2066 = vmatprep.mubr.bf16.mxu0 0
      %2067 = vmatmul.mubr.bf16.gmra.mrb[0].mxu0 %v1946
      %v2068 = vpop.f32.mrb[0].mxu0
      %v2069 = vadd.f32 0.0, %v2068
      %v2070 = vpop.f32.mrb[0].mxu0
      %v2071 = vpop.f32.mrb[0].mxu0
      %v2072 = vadd.f32 0.0, %v2071
      %v2073 = vpop.f32.mrb[0].mxu0
      %2074 = vmatprep.mubr.bf16.mxu0 0
      %2075 = vmatmul.mubr.bf16.gmra.mrb[0].mxu0 %v1949
      %v2076 = vpop.f32.mrb[0].mxu0
      %v2077 = vadd.f32 0.0, %v2076
      %v2078 = vpop.f32.mrb[0].mxu0
      %v2079 = vpop.f32.mrb[0].mxu0
      %v2080 = vadd.f32 0.0, %v2079
      %v2081 = vpop.f32.mrb[0].mxu0
      %2082 = vmatprep.mubr.bf16.mxu0 0
      %2083 = vmatmul.mubr.bf16.gmra.mrb[0].mxu0 %v1952
      %v2084 = vpop.f32.mrb[0].mxu0
      %v2085 = vadd.f32 0.0, %v2084
      %v2086 = vpop.f32.mrb[0].mxu0
      %v2087 = vpop.f32.mrb[0].mxu0
      %v2088 = vadd.f32 0.0, %v2087
      %v2089 = vpop.f32.mrb[0].mxu0
      %2090 = vmatprep.mubr.bf16.mxu0 0
      %2091 = vmatmul.mubr.bf16.gmra.mrb[0].mxu0 %v1955
      %v2092 = vpop.f32.mrb[0].mxu0
      %v2093 = vadd.f32 0.0, %v2092
      %v2094 = vpop.f32.mrb[0].mxu0
      %v2095 = vpop.f32.mrb[0].mxu0
      %v2096 = vadd.f32 0.0, %v2095
      %v2097 = vpop.f32.mrb[0].mxu0
      %2098 = vmatprep.mubr.bf16.mxu0 0
      %2099 = vmatmul.mubr.bf16.gmra.mrb[0].mxu0 %v1958
      %v2100 = vpop.f32.mrb[0].mxu0
      %v2101 = vadd.f32 0.0, %v2100
      %v2102 = vpop.f32.mrb[0].mxu0
      %v2103 = vpop.f32.mrb[0].mxu0
      %v2104 = vadd.f32 0.0, %v2103
      %v2105 = vpop.f32.mrb[0].mxu0
      %2106 = vmatprep.mubr.bf16.mxu0 0
      %2107 = vmatmul.mubr.bf16.gmra.mrb[0].mxu0 %v1961
      %v2108 = vpop.f32.mrb[0].mxu0
      %v2109 = vadd.f32 0.0, %v2108
      %v2110 = vpop.f32.mrb[0].mxu0
      %v2111 = vpop.f32.mrb[0].mxu0
      %v2112 = vadd.f32 0.0, %v2111
      %v2113 = vpop.f32.mrb[0].mxu0
      %2114 = vmatprep.mubr.bf16.mxu0 0
      %2115 = vmatmul.mubr.bf16.gmra.mrb[0].mxu0 %v1964
      %v2116 = vpop.f32.mrb[0].mxu0
      %v2117 = vadd.f32 0.0, %v2116
      %v2118 = vpop.f32.mrb[0].mxu0
      %v2119 = vpop.f32.mrb[0].mxu0
      %v2120 = vadd.f32 0.0, %v2119
      %v2121 = vpop.f32.mrb[0].mxu0
      %2122 = vmatprep.mubr.bf16.mxu0 0
      %2123 = vmatmul.mubr.bf16.gmra.mrb[0].mxu0 %v1967
      %v2124 = vpop.f32.mrb[0].mxu0
      %v2125 = vadd.f32 0.0, %v2124
      %v2126 = vpop.f32.mrb[0].mxu0
      %v2127 = vpop.f32.mrb[0].mxu0
      %v2128 = vadd.f32 0.0, %v2127
      %v2129 = vpop.f32.mrb[0].mxu0
      %2130 = vmatprep.mubr.bf16.mxu0 0
      %2131 = vmatmul.mubr.bf16.gmra.mrb[0].mxu0 %v1970
      %v2132 = vpop.f32.mrb[0].mxu0
      %v2133 = vadd.f32 0.0, %v2132
      %v2134 = vpop.f32.mrb[0].mxu0
      %v2135 = vpop.f32.mrb[0].mxu0
      %v2136 = vadd.f32 0.0, %v2135
      %v2137 = vpop.f32.mrb[0].mxu0
      %2138 = vmatprep.mubr.bf16.mxu0 0
      %2139 = vmatmul.mubr.bf16.gmra.mrb[0].mxu0 %v1973
      %v2140 = vpop.f32.mrb[0].mxu0
      %v2141 = vadd.f32 0.0, %v2140
      %v2142 = vpop.f32.mrb[0].mxu0
      %v2143 = vpop.f32.mrb[0].mxu0
      %v2144 = vadd.f32 0.0, %v2143
      %v2145 = vpop.f32.mrb[0].mxu0
      %2146 = vmatprep.mubr.bf16.mxu0 0
      %2147 = vmatmul.mubr.bf16.gmra.mrb[0].mxu0 %v1976
      %v2148 = vpop.f32.mrb[0].mxu0
      %v2149 = vadd.f32 0.0, %v2148
      %v2150 = vpop.f32.mrb[0].mxu0
      %v2151 = vpop.f32.mrb[0].mxu0
      %v2152 = vadd.f32 0.0, %v2151
      %v2153 = vpop.f32.mrb[0].mxu0
      %2154 = vdwg.mxu0
      %v2155 = vadd.f32 %v1817, %v2013
      %v2156 = vadd.f32 %v1818, %v2016
      %v2157 = vadd.f32 %v1819, %v2021
      %v2158 = vadd.f32 %v1820, %v2024
      %v2159 = vadd.f32 %v1821, %v2029
      %v2160 = vadd.f32 %v1822, %v2032
      %v2161 = vadd.f32 %v1823, %v2037
      %v2162 = vadd.f32 %v1824, %v2040
      %v2163 = vadd.f32 %v1825, %v2045
      %v2164 = vadd.f32 %v1826, %v2048
      %v2165 = vadd.f32 %v1827, %v2053
      %v2166 = vadd.f32 %v1828, %v2056
      %v2167 = vadd.f32 %v1829, %v2061
      %v2168 = vadd.f32 %v1830, %v2064
      %v2169 = vadd.f32 %v1831, %v2069
      %v2170 = vadd.f32 %v1832, %v2072
      %v2171 = vadd.f32 %v1833, %v2077
      %v2172 = vadd.f32 %v1834, %v2080
      %v2173 = vadd.f32 %v1835, %v2085
      %v2174 = vadd.f32 %v1836, %v2088
      %v2175 = vadd.f32 %v1837, %v2093
      %v2176 = vadd.f32 %v1838, %v2096
      %v2177 = vadd.f32 %v1839, %v2101
      %v2178 = vadd.f32 %v1840, %v2104
      %v2179 = vadd.f32 %v1841, %v2109
      %v2180 = vadd.f32 %v1842, %v2112
      %v2181 = vadd.f32 %v1843, %v2117
      %v2182 = vadd.f32 %v1844, %v2120
      %v2183 = vadd.f32 %v1845, %v2125
      %v2184 = vadd.f32 %v1846, %v2128
      %v2185 = vadd.f32 %v1847, %v2133
      %v2186 = vadd.f32 %v1848, %v2136
      %v2187 = vadd.f32 %v1849, %v2141
      %v2188 = vadd.f32 %v1850, %v2144
      %v2189 = vadd.f32 %v1851, %v2149
      %v2190 = vadd.f32 %v1852, %v2152
      %v2191 = vld [vmem:[%s192 + $0x24] sm:$0xff]
      %v2192 = vld [vmem:[%s192 + $0x2c] sm:$0xff]
      %v2193 = vld [vmem:[%s192 + $0x34] sm:$0xff]
      %v2194 = vld [vmem:[%s192 + $0x3c] sm:$0xff]
      %v2195 = vld [vmem:[%s192 + $0x44] sm:$0xff]
      %v2196 = vld [vmem:[%s192 + $0x4c] sm:$0xff]
      %v2197 = vld [vmem:[%s192 + $0x54] sm:$0xff]
      %v2198 = vld [vmem:[%s192 + $0x5c] sm:$0xff]
      %v2199 = vld [vmem:[%s192 + $0x64] sm:$0xff]
      %v2200 = vld [vmem:[%s192 + $0x6c] sm:$0xff]
      %v2201 = vld [vmem:[%s192 + $0x74] sm:$0xff]
      %v2202 = vld [vmem:[%s192 + $0x7c] sm:$0xff]
      %v2203 = vld [vmem:[%s192 + $0x84] sm:$0xff]
      %v2204 = vld [vmem:[%s192 + $0x8c] sm:$0xff]
      %v2205 = vld [vmem:[%s192 + $0x94] sm:$0xff]
      %v2206 = vld [vmem:[%s192 + $0x9c] sm:$0xff]
      %v2207 = vld [vmem:[%s192 + $0xa4] sm:$0xff]
      %v2208 = vld [vmem:[%s192 + $0xac] sm:$0xff]
      %v2209 = vld [vmem:[%s192 + $0xb4] sm:$0xff]
      %v2210 = vld [vmem:[%s192 + $0xbc] sm:$0xff]
      %v2211 = vld [vmem:[%s192 + $0xc4] sm:$0xff]
      %v2212 = vld [vmem:[%s192 + $0xcc] sm:$0xff]
      %v2213 = vld [vmem:[%s192 + $0xd4] sm:$0xff]
      %v2214 = vld [vmem:[%s192 + $0xdc] sm:$0xff]
      %v2215 = vld [vmem:[%s192 + $0xe4] sm:$0xff]
      %v2216 = vld [vmem:[%s192 + $0xec] sm:$0xff]
      %v2217 = vld [vmem:[%s192 + $0xf4] sm:$0xff]
      %v2218 = vld [vmem:[%s192 + $0xfc] sm:$0xff]
      %v2219 = vld [vmem:[%s192 + $0x104] sm:$0xff]
      %v2220 = vld [vmem:[%s192 + $0x10c] sm:$0xff]
      %v2221 = vld [vmem:[%s192 + $0x114] sm:$0xff]
      %v2222 = vld [vmem:[%s192 + $0x11c] sm:$0xff]
      %v2223 = vld [vmem:[%s192 + $0x124] sm:$0xff]
      %v2224 = vld [vmem:[%s192 + $0x12c] sm:$0xff]
      %v2225 = vld [vmem:[%s192 + $0x134] sm:$0xff]
      %v2226 = vld [vmem:[%s192 + $0x13c] sm:$0x3f]
      %v2227 = vpack.c.bf16 %v2192, %v2191
      %v2228 = vpack.c.bf16 %v2194, %v2193
      %v2229 = vpack.c.bf16 %v2196, %v2195
      %v2230 = vpack.c.bf16 %v2198, %v2197
      %v2231 = vpack.c.bf16 %v2200, %v2199
      %v2232 = vpack.c.bf16 %v2202, %v2201
      %v2233 = vpack.c.bf16 %v2204, %v2203
      %v2234 = vpack.c.bf16 %v2206, %v2205
      %v2235 = vpack.c.bf16 %v2208, %v2207
      %v2236 = vpack.c.bf16 %v2210, %v2209
      %v2237 = vpack.c.bf16 %v2212, %v2211
      %v2238 = vpack.c.bf16 %v2214, %v2213
      %v2239 = vpack.c.bf16 %v2216, %v2215
      %v2240 = vpack.c.bf16 %v2218, %v2217
      %v2241 = vpack.c.bf16 %v2220, %v2219
      %v2242 = vpack.c.bf16 %v2222, %v2221
      %v2243 = vpack.c.bf16 %v2224, %v2223
      %v2244 = vpack.c.bf16 %v2226, %v2225
      %s2245 = scalar_lea.vmem %s2, 96
      %v2246 = vld [vmem:[%s2245] sm:$0xf]
      %v2247 = vld [vmem:[%s2245 + $0x4] sm:$0xf]
      %v2248 = vld [vmem:[%s2245 + $0x8] sm:$0xf]
      %v2249 = vld [vmem:[%s2245 + $0xc] sm:$0xf]
      %v2254 = vunpack.c.l.b16 %v2246
      %v2255 = vunpack.c.l.b16 %v2247
      %v2256 = vunpack.c.l.b16 %v2248
      %v2257 = vunpack.c.l.b16 %v2249
      %v2258 = vpack.c.b16 %v2255, %v2254
      %v2259 = vpack.c.b16 %v2257, %v2256
      %v2263 = vsel %vm364, %v2227, 0
      %v2266 = vsel %vm364, %v2228, 0
      %v2269 = vsel %vm364, %v2229, 0
      %v2272 = vsel %vm364, %v2230, 0
      %v2275 = vsel %vm364, %v2231, 0
      %v2278 = vsel %vm364, %v2232, 0
      %v2281 = vsel %vm364, %v2233, 0
      %v2284 = vsel %vm364, %v2234, 0
      %v2287 = vsel %vm364, %v2235, 0
      %v2290 = vsel %vm364, %v2236, 0
      %v2293 = vsel %vm364, %v2237, 0
      %v2296 = vsel %vm364, %v2238, 0
      %v2299 = vsel %vm364, %v2239, 0
      %v2302 = vsel %vm364, %v2240, 0
      %v2305 = vsel %vm364, %v2241, 0
      %v2308 = vsel %vm364, %v2242, 0
      %v2311 = vsel %vm364, %v2243, 0
      %v2314 = vsel %vm364, %v2244, 0
      %2316 = vmatprep.subr.bf16.mxu0 0
      %2317 = vmatpush1.bf16.msra.mxu0 %v2258
      %2318 = vmatprep.subr.bf16.mxu0 0
      %2319 = vmatpush1.bf16.msra.mxu0 %v2259
      %2320 = vmatprep.subr.bf16.mxu0 0
      %2321 = vmatpush1.bf16.msra.mxu0 0
      %2322 = vmatprep.subr.bf16.mxu0 0
      %2323 = vmatpush1.bf16.msra.mxu0 0
      %2324 = vmatprep.subr.bf16.mxu0 0
      %2325 = vmatpush1.bf16.msra.mxu0 0
      %2326 = vmatprep.subr.bf16.mxu0 0
      %2327 = vmatpush1.bf16.msra.mxu0 0
      %2328 = vmatprep.subr.bf16.mxu0 0
      %2329 = vmatpush1.bf16.msra.mxu0 0
      %2330 = vmatprep.subr.bf16.mxu0 0
      %2331 = vmatpush1.bf16.msra.mxu0 0
      %2332 = vmatprep.subr.bf16.mxu0 0
      %2333 = vmatpush1.bf16.msra.mxu0 0
      %2334 = vmatprep.subr.bf16.mxu0 0
      %2335 = vmatpush1.bf16.msra.mxu0 0
      %2336 = vmatprep.subr.bf16.mxu0 0
      %2337 = vmatpush1.bf16.msra.mxu0 0
      %2338 = vmatprep.subr.bf16.mxu0 0
      %2339 = vmatpush1.bf16.msra.mxu0 0
      %2340 = vmatprep.subr.bf16.mxu0 0
      %2341 = vmatpush1.bf16.msra.mxu0 0
      %2342 = vmatprep.subr.bf16.mxu0 0
      %2343 = vmatpush1.bf16.msra.mxu0 0
      %2344 = vmatprep.subr.bf16.mxu0 0
      %2345 = vmatpush1.bf16.msra.mxu0 0
      %2346 = vmatprep.subr.bf16.mxu0 0
      %2347 = vmatpush1.bf16.msra.mxu0 0
      %2348 = vmatprep.mubr.bf16.mxu0 0
      %2349 = vmatmul.mubr.bf16.gmra.mrb[0].mxu0 %v2263
      %v2350 = vpop.f32.mrb[0].mxu0
      %v2351 = vadd.f32 0.0, %v2350
      %v2352 = vpop.f32.mrb[0].mxu0
      %v2353 = vpop.f32.mrb[0].mxu0
      %v2354 = vadd.f32 0.0, %v2353
      %v2355 = vpop.f32.mrb[0].mxu0
      %2356 = vmatprep.mubr.bf16.mxu0 0
      %2357 = vmatmul.mubr.bf16.gmra.mrb[0].mxu0 %v2266
      %v2358 = vpop.f32.mrb[0].mxu0
      %v2359 = vadd.f32 0.0, %v2358
      %v2360 = vpop.f32.mrb[0].mxu0
      %v2361 = vpop.f32.mrb[0].mxu0
      %v2362 = vadd.f32 0.0, %v2361
      %v2363 = vpop.f32.mrb[0].mxu0
      %2364 = vmatprep.mubr.bf16.mxu0 0
      %2365 = vmatmul.mubr.bf16.gmra.mrb[0].mxu0 %v2269
      %v2366 = vpop.f32.mrb[0].mxu0
      %v2367 = vadd.f32 0.0, %v2366
      %v2368 = vpop.f32.mrb[0].mxu0
      %v2369 = vpop.f32.mrb[0].mxu0
      %v2370 = vadd.f32 0.0, %v2369
      %v2371 = vpop.f32.mrb[0].mxu0
      %2372 = vmatprep.mubr.bf16.mxu0 0
      %2373 = vmatmul.mubr.bf16.gmra.mrb[0].mxu0 %v2272
      %v2374 = vpop.f32.mrb[0].mxu0
      %v2375 = vadd.f32 0.0, %v2374
      %v2376 = vpop.f32.mrb[0].mxu0
      %v2377 = vpop.f32.mrb[0].mxu0
      %v2378 = vadd.f32 0.0, %v2377
      %v2379 = vpop.f32.mrb[0].mxu0
      %2380 = vmatprep.mubr.bf16.mxu0 0
      %2381 = vmatmul.mubr.bf16.gmra.mrb[0].mxu0 %v2275
      %v2382 = vpop.f32.mrb[0].mxu0
      %v2383 = vadd.f32 0.0, %v2382
      %v2384 = vpop.f32.mrb[0].mxu0
      %v2385 = vpop.f32.mrb[0].mxu0
      %v2386 = vadd.f32 0.0, %v2385
      %v2387 = vpop.f32.mrb[0].mxu0
      %2388 = vmatprep.mubr.bf16.mxu0 0
      %2389 = vmatmul.mubr.bf16.gmra.mrb[0].mxu0 %v2278
      %v2390 = vpop.f32.mrb[0].mxu0
      %v2391 = vadd.f32 0.0, %v2390
      %v2392 = vpop.f32.mrb[0].mxu0
      %v2393 = vpop.f32.mrb[0].mxu0
      %v2394 = vadd.f32 0.0, %v2393
      %v2395 = vpop.f32.mrb[0].mxu0
      %2396 = vmatprep.mubr.bf16.mxu0 0
      %2397 = vmatmul.mubr.bf16.gmra.mrb[0].mxu0 %v2281
      %v2398 = vpop.f32.mrb[0].mxu0
      %v2399 = vadd.f32 0.0, %v2398
      %v2400 = vpop.f32.mrb[0].mxu0
      %v2401 = vpop.f32.mrb[0].mxu0
      %v2402 = vadd.f32 0.0, %v2401
      %v2403 = vpop.f32.mrb[0].mxu0
      %2404 = vmatprep.mubr.bf16.mxu0 0
      %2405 = vmatmul.mubr.bf16.gmra.mrb[0].mxu0 %v2284
      %v2406 = vpop.f32.mrb[0].mxu0
      %v2407 = vadd.f32 0.0, %v2406
      %v2408 = vpop.f32.mrb[0].mxu0
      %v2409 = vpop.f32.mrb[0].mxu0
      %v2410 = vadd.f32 0.0, %v2409
      %v2411 = vpop.f32.mrb[0].mxu0
      %2412 = vmatprep.mubr.bf16.mxu0 0
      %2413 = vmatmul.mubr.bf16.gmra.mrb[0].mxu0 %v2287
      %v2414 = vpop.f32.mrb[0].mxu0
      %v2415 = vadd.f32 0.0, %v2414
      %v2416 = vpop.f32.mrb[0].mxu0
      %v2417 = vpop.f32.mrb[0].mxu0
      %v2418 = vadd.f32 0.0, %v2417
      %v2419 = vpop.f32.mrb[0].mxu0
      %2420 = vmatprep.mubr.bf16.mxu0 0
      %2421 = vmatmul.mubr.bf16.gmra.mrb[0].mxu0 %v2290
      %v2422 = vpop.f32.mrb[0].mxu0
      %v2423 = vadd.f32 0.0, %v2422
      %v2424 = vpop.f32.mrb[0].mxu0
      %v2425 = vpop.f32.mrb[0].mxu0
      %v2426 = vadd.f32 0.0, %v2425
      %v2427 = vpop.f32.mrb[0].mxu0
      %2428 = vmatprep.mubr.bf16.mxu0 0
      %2429 = vmatmul.mubr.bf16.gmra.mrb[0].mxu0 %v2293
      %v2430 = vpop.f32.mrb[0].mxu0
      %v2431 = vadd.f32 0.0, %v2430
      %v2432 = vpop.f32.mrb[0].mxu0
      %v2433 = vpop.f32.mrb[0].mxu0
      %v2434 = vadd.f32 0.0, %v2433
      %v2435 = vpop.f32.mrb[0].mxu0
      %2436 = vmatprep.mubr.bf16.mxu0 0
      %2437 = vmatmul.mubr.bf16.gmra.mrb[0].mxu0 %v2296
      %v2438 = vpop.f32.mrb[0].mxu0
      %v2439 = vadd.f32 0.0, %v2438
      %v2440 = vpop.f32.mrb[0].mxu0
      %v2441 = vpop.f32.mrb[0].mxu0
      %v2442 = vadd.f32 0.0, %v2441
      %v2443 = vpop.f32.mrb[0].mxu0
      %2444 = vmatprep.mubr.bf16.mxu0 0
      %2445 = vmatmul.mubr.bf16.gmra.mrb[0].mxu0 %v2299
      %v2446 = vpop.f32.mrb[0].mxu0
      %v2447 = vadd.f32 0.0, %v2446
      %v2448 = vpop.f32.mrb[0].mxu0
      %v2449 = vpop.f32.mrb[0].mxu0
      %v2450 = vadd.f32 0.0, %v2449
      %v2451 = vpop.f32.mrb[0].mxu0
      %2452 = vmatprep.mubr.bf16.mxu0 0
      %2453 = vmatmul.mubr.bf16.gmra.mrb[0].mxu0 %v2302
      %v2454 = vpop.f32.mrb[0].mxu0
      %v2455 = vadd.f32 0.0, %v2454
      %v2456 = vpop.f32.mrb[0].mxu0
      %v2457 = vpop.f32.mrb[0].mxu0
      %v2458 = vadd.f32 0.0, %v2457
      %v2459 = vpop.f32.mrb[0].mxu0
      %2460 = vmatprep.mubr.bf16.mxu0 0
      %2461 = vmatmul.mubr.bf16.gmra.mrb[0].mxu0 %v2305
      %v2462 = vpop.f32.mrb[0].mxu0
      %v2463 = vadd.f32 0.0, %v2462
      %v2464 = vpop.f32.mrb[0].mxu0
      %v2465 = vpop.f32.mrb[0].mxu0
      %v2466 = vadd.f32 0.0, %v2465
      %v2467 = vpop.f32.mrb[0].mxu0
      %2468 = vmatprep.mubr.bf16.mxu0 0
      %2469 = vmatmul.mubr.bf16.gmra.mrb[0].mxu0 %v2308
      %v2470 = vpop.f32.mrb[0].mxu0
      %v2471 = vadd.f32 0.0, %v2470
      %v2472 = vpop.f32.mrb[0].mxu0
      %v2473 = vpop.f32.mrb[0].mxu0
      %v2474 = vadd.f32 0.0, %v2473
      %v2475 = vpop.f32.mrb[0].mxu0
      %2476 = vmatprep.mubr.bf16.mxu0 0
      %2477 = vmatmul.mubr.bf16.gmra.mrb[0].mxu0 %v2311
      %v2478 = vpop.f32.mrb[0].mxu0
      %v2479 = vadd.f32 0.0, %v2478
      %v2480 = vpop.f32.mrb[0].mxu0
      %v2481 = vpop.f32.mrb[0].mxu0
      %v2482 = vadd.f32 0.0, %v2481
      %v2483 = vpop.f32.mrb[0].mxu0
      %2484 = vmatprep.mubr.bf16.mxu0 0
      %2485 = vmatmul.mubr.bf16.gmra.mrb[0].mxu0 %v2314
      %v2486 = vpop.f32.mrb[0].mxu0
      %v2487 = vadd.f32 0.0, %v2486
      %v2488 = vpop.f32.mrb[0].mxu0
      %v2489 = vpop.f32.mrb[0].mxu0
      %v2490 = vadd.f32 0.0, %v2489
      %v2491 = vpop.f32.mrb[0].mxu0
      %2492 = vdwg.mxu0
      %v2493 = vadd.f32 %v2155, %v2351
      %v2494 = vadd.f32 %v2156, %v2354
      %v2495 = vadd.f32 %v2157, %v2359
      %v2496 = vadd.f32 %v2158, %v2362
      %v2497 = vadd.f32 %v2159, %v2367
      %v2498 = vadd.f32 %v2160, %v2370
      %v2499 = vadd.f32 %v2161, %v2375
      %v2500 = vadd.f32 %v2162, %v2378
      %v2501 = vadd.f32 %v2163, %v2383
      %v2502 = vadd.f32 %v2164, %v2386
      %v2503 = vadd.f32 %v2165, %v2391
      %v2504 = vadd.f32 %v2166, %v2394
      %v2505 = vadd.f32 %v2167, %v2399
      %v2506 = vadd.f32 %v2168, %v2402
      %v2507 = vadd.f32 %v2169, %v2407
      %v2508 = vadd.f32 %v2170, %v2410
      %v2509 = vadd.f32 %v2171, %v2415
      %v2510 = vadd.f32 %v2172, %v2418
      %v2511 = vadd.f32 %v2173, %v2423
      %v2512 = vadd.f32 %v2174, %v2426
      %v2513 = vadd.f32 %v2175, %v2431
      %v2514 = vadd.f32 %v2176, %v2434
      %v2515 = vadd.f32 %v2177, %v2439
      %v2516 = vadd.f32 %v2178, %v2442
      %v2517 = vadd.f32 %v2179, %v2447
      %v2518 = vadd.f32 %v2180, %v2450
      %v2519 = vadd.f32 %v2181, %v2455
      %v2520 = vadd.f32 %v2182, %v2458
      %v2521 = vadd.f32 %v2183, %v2463
      %v2522 = vadd.f32 %v2184, %v2466
      %v2523 = vadd.f32 %v2185, %v2471
      %v2524 = vadd.f32 %v2186, %v2474
      %v2525 = vadd.f32 %v2187, %v2479
      %v2526 = vadd.f32 %v2188, %v2482
      %v2527 = vadd.f32 %v2189, %v2487
      %v2528 = vadd.f32 %v2190, %v2490
      %v2529 = vld [vmem:[%s192 + $0x25] sm:$0xff]
      %v2530 = vld [vmem:[%s192 + $0x2d] sm:$0xff]
      %v2531 = vld [vmem:[%s192 + $0x35] sm:$0xff]
      %v2532 = vld [vmem:[%s192 + $0x3d] sm:$0xff]
      %v2533 = vld [vmem:[%s192 + $0x45] sm:$0xff]
      %v2534 = vld [vmem:[%s192 + $0x4d] sm:$0xff]
      %v2535 = vld [vmem:[%s192 + $0x55] sm:$0xff]
      %v2536 = vld [vmem:[%s192 + $0x5d] sm:$0xff]
      %v2537 = vld [vmem:[%s192 + $0x65] sm:$0xff]
      %v2538 = vld [vmem:[%s192 + $0x6d] sm:$0xff]
      %v2539 = vld [vmem:[%s192 + $0x75] sm:$0xff]
      %v2540 = vld [vmem:[%s192 + $0x7d] sm:$0xff]
      %v2541 = vld [vmem:[%s192 + $0x85] sm:$0xff]
      %v2542 = vld [vmem:[%s192 + $0x8d] sm:$0xff]
      %v2543 = vld [vmem:[%s192 + $0x95] sm:$0xff]
      %v2544 = vld [vmem:[%s192 + $0x9d] sm:$0xff]
      %v2545 = vld [vmem:[%s192 + $0xa5] sm:$0xff]
      %v2546 = vld [vmem:[%s192 + $0xad] sm:$0xff]
      %v2547 = vld [vmem:[%s192 + $0xb5] sm:$0xff]
      %v2548 = vld [vmem:[%s192 + $0xbd] sm:$0xff]
      %v2549 = vld [vmem:[%s192 + $0xc5] sm:$0xff]
      %v2550 = vld [vmem:[%s192 + $0xcd] sm:$0xff]
      %v2551 = vld [vmem:[%s192 + $0xd5] sm:$0xff]
      %v2552 = vld [vmem:[%s192 + $0xdd] sm:$0xff]
      %v2553 = vld [vmem:[%s192 + $0xe5] sm:$0xff]
      %v2554 = vld [vmem:[%s192 + $0xed] sm:$0xff]
      %v2555 = vld [vmem:[%s192 + $0xf5] sm:$0xff]
      %v2556 = vld [vmem:[%s192 + $0xfd] sm:$0xff]
      %v2557 = vld [vmem:[%s192 + $0x105] sm:$0xff]
      %v2558 = vld [vmem:[%s192 + $0x10d] sm:$0xff]
      %v2559 = vld [vmem:[%s192 + $0x115] sm:$0xff]
      %v2560 = vld [vmem:[%s192 + $0x11d] sm:$0xff]
      %v2561 = vld [vmem:[%s192 + $0x125] sm:$0xff]
      %v2562 = vld [vmem:[%s192 + $0x12d] sm:$0xff]
      %v2563 = vld [vmem:[%s192 + $0x135] sm:$0xff]
      %v2564 = vld [vmem:[%s192 + $0x13d] sm:$0x3f]
      %v2565 = vpack.c.bf16 %v2530, %v2529
      %v2566 = vpack.c.bf16 %v2532, %v2531
      %v2567 = vpack.c.bf16 %v2534, %v2533
      %v2568 = vpack.c.bf16 %v2536, %v2535
      %v2569 = vpack.c.bf16 %v2538, %v2537
      %v2570 = vpack.c.bf16 %v2540, %v2539
      %v2571 = vpack.c.bf16 %v2542, %v2541
      %v2572 = vpack.c.bf16 %v2544, %v2543
      %v2573 = vpack.c.bf16 %v2546, %v2545
      %v2574 = vpack.c.bf16 %v2548, %v2547
      %v2575 = vpack.c.bf16 %v2550, %v2549
      %v2576 = vpack.c.bf16 %v2552, %v2551
      %v2577 = vpack.c.bf16 %v2554, %v2553
      %v2578 = vpack.c.bf16 %v2556, %v2555
      %v2579 = vpack.c.bf16 %v2558, %v2557
      %v2580 = vpack.c.bf16 %v2560, %v2559
      %v2581 = vpack.c.bf16 %v2562, %v2561
      %v2582 = vpack.c.bf16 %v2564, %v2563
      %s2583 = scalar_lea.vmem %s2, 112
      %v2584 = vld [vmem:[%s2583] sm:$0xf]
      %v2585 = vld [vmem:[%s2583 + $0x4] sm:$0xf]
      %v2586 = vld [vmem:[%s2583 + $0x8] sm:$0xf]
      %v2587 = vld [vmem:[%s2583 + $0xc] sm:$0xf]
      %v2592 = vunpack.c.l.b16 %v2584
      %v2593 = vunpack.c.l.b16 %v2585
      %v2594 = vunpack.c.l.b16 %v2586
      %v2595 = vunpack.c.l.b16 %v2587
      %v2596 = vpack.c.b16 %v2593, %v2592
      %v2597 = vpack.c.b16 %v2595, %v2594
      %v2601 = vsel %vm364, %v2565, 0
      %v2604 = vsel %vm364, %v2566, 0
      %v2607 = vsel %vm364, %v2567, 0
      %v2610 = vsel %vm364, %v2568, 0
      %v2613 = vsel %vm364, %v2569, 0
      %v2616 = vsel %vm364, %v2570, 0
      %v2619 = vsel %vm364, %v2571, 0
      %v2622 = vsel %vm364, %v2572, 0
      %v2625 = vsel %vm364, %v2573, 0
      %v2628 = vsel %vm364, %v2574, 0
      %v2631 = vsel %vm364, %v2575, 0
      %v2634 = vsel %vm364, %v2576, 0
      %v2637 = vsel %vm364, %v2577, 0
      %v2640 = vsel %vm364, %v2578, 0
      %v2643 = vsel %vm364, %v2579, 0
      %v2646 = vsel %vm364, %v2580, 0
      %v2649 = vsel %vm364, %v2581, 0
      %v2652 = vsel %vm364, %v2582, 0
      %2654 = vmatprep.subr.bf16.mxu0 0
      %2655 = vmatpush1.bf16.msra.mxu0 %v2596
      %2656 = vmatprep.subr.bf16.mxu0 0
      %2657 = vmatpush1.bf16.msra.mxu0 %v2597
      %2658 = vmatprep.subr.bf16.mxu0 0
      %2659 = vmatpush1.bf16.msra.mxu0 0
      %2660 = vmatprep.subr.bf16.mxu0 0
      %2661 = vmatpush1.bf16.msra.mxu0 0
      %2662 = vmatprep.subr.bf16.mxu0 0
      %2663 = vmatpush1.bf16.msra.mxu0 0
      %2664 = vmatprep.subr.bf16.mxu0 0
      %2665 = vmatpush1.bf16.msra.mxu0 0
      %2666 = vmatprep.subr.bf16.mxu0 0
      %2667 = vmatpush1.bf16.msra.mxu0 0
      %2668 = vmatprep.subr.bf16.mxu0 0
      %2669 = vmatpush1.bf16.msra.mxu0 0
      %2670 = vmatprep.subr.bf16.mxu0 0
      %2671 = vmatpush1.bf16.msra.mxu0 0
      %2672 = vmatprep.subr.bf16.mxu0 0
      %2673 = vmatpush1.bf16.msra.mxu0 0
      %2674 = vmatprep.subr.bf16.mxu0 0
      %2675 = vmatpush1.bf16.msra.mxu0 0
      %2676 = vmatprep.subr.bf16.mxu0 0
      %2677 = vmatpush1.bf16.msra.mxu0 0
      %2678 = vmatprep.subr.bf16.mxu0 0
      %2679 = vmatpush1.bf16.msra.mxu0 0
      %2680 = vmatprep.subr.bf16.mxu0 0
      %2681 = vmatpush1.bf16.msra.mxu0 0
      %2682 = vmatprep.subr.bf16.mxu0 0
      %2683 = vmatpush1.bf16.msra.mxu0 0
      %2684 = vmatprep.subr.bf16.mxu0 0
      %2685 = vmatpush1.bf16.msra.mxu0 0
      %2686 = vmatprep.mubr.bf16.mxu0 0
      %2687 = vmatmul.mubr.bf16.gmra.mrb[0].mxu0 %v2601
      %v2688 = vpop.f32.mrb[0].mxu0
      %v2689 = vadd.f32 0.0, %v2688
      %v2690 = vpop.f32.mrb[0].mxu0
      %v2691 = vpop.f32.mrb[0].mxu0
      %v2692 = vadd.f32 0.0, %v2691
      %v2693 = vpop.f32.mrb[0].mxu0
      %2694 = vmatprep.mubr.bf16.mxu0 0
      %2695 = vmatmul.mubr.bf16.gmra.mrb[0].mxu0 %v2604
      %v2696 = vpop.f32.mrb[0].mxu0
      %v2697 = vadd.f32 0.0, %v2696
      %v2698 = vpop.f32.mrb[0].mxu0
      %v2699 = vpop.f32.mrb[0].mxu0
      %v2700 = vadd.f32 0.0, %v2699
      %v2701 = vpop.f32.mrb[0].mxu0
      %2702 = vmatprep.mubr.bf16.mxu0 0
      %2703 = vmatmul.mubr.bf16.gmra.mrb[0].mxu0 %v2607
      %v2704 = vpop.f32.mrb[0].mxu0
      %v2705 = vadd.f32 0.0, %v2704
      %v2706 = vpop.f32.mrb[0].mxu0
      %v2707 = vpop.f32.mrb[0].mxu0
      %v2708 = vadd.f32 0.0, %v2707
      %v2709 = vpop.f32.mrb[0].mxu0
      %2710 = vmatprep.mubr.bf16.mxu0 0
      %2711 = vmatmul.mubr.bf16.gmra.mrb[0].mxu0 %v2610
      %v2712 = vpop.f32.mrb[0].mxu0
      %v2713 = vadd.f32 0.0, %v2712
      %v2714 = vpop.f32.mrb[0].mxu0
      %v2715 = vpop.f32.mrb[0].mxu0
      %v2716 = vadd.f32 0.0, %v2715
      %v2717 = vpop.f32.mrb[0].mxu0
      %2718 = vmatprep.mubr.bf16.mxu0 0
      %2719 = vmatmul.mubr.bf16.gmra.mrb[0].mxu0 %v2613
      %v2720 = vpop.f32.mrb[0].mxu0
      %v2721 = vadd.f32 0.0, %v2720
      %v2722 = vpop.f32.mrb[0].mxu0
      %v2723 = vpop.f32.mrb[0].mxu0
      %v2724 = vadd.f32 0.0, %v2723
      %v2725 = vpop.f32.mrb[0].mxu0
      %2726 = vmatprep.mubr.bf16.mxu0 0
      %2727 = vmatmul.mubr.bf16.gmra.mrb[0].mxu0 %v2616
      %v2728 = vpop.f32.mrb[0].mxu0
      %v2729 = vadd.f32 0.0, %v2728
      %v2730 = vpop.f32.mrb[0].mxu0
      %v2731 = vpop.f32.mrb[0].mxu0
      %v2732 = vadd.f32 0.0, %v2731
      %v2733 = vpop.f32.mrb[0].mxu0
      %2734 = vmatprep.mubr.bf16.mxu0 0
      %2735 = vmatmul.mubr.bf16.gmra.mrb[0].mxu0 %v2619
      %v2736 = vpop.f32.mrb[0].mxu0
      %v2737 = vadd.f32 0.0, %v2736
      %v2738 = vpop.f32.mrb[0].mxu0
      %v2739 = vpop.f32.mrb[0].mxu0
      %v2740 = vadd.f32 0.0, %v2739
      %v2741 = vpop.f32.mrb[0].mxu0
      %2742 = vmatprep.mubr.bf16.mxu0 0
      %2743 = vmatmul.mubr.bf16.gmra.mrb[0].mxu0 %v2622
      %v2744 = vpop.f32.mrb[0].mxu0
      %v2745 = vadd.f32 0.0, %v2744
      %v2746 = vpop.f32.mrb[0].mxu0
      %v2747 = vpop.f32.mrb[0].mxu0
      %v2748 = vadd.f32 0.0, %v2747
      %v2749 = vpop.f32.mrb[0].mxu0
      %2750 = vmatprep.mubr.bf16.mxu0 0
      %2751 = vmatmul.mubr.bf16.gmra.mrb[0].mxu0 %v2625
      %v2752 = vpop.f32.mrb[0].mxu0
      %v2753 = vadd.f32 0.0, %v2752
      %v2754 = vpop.f32.mrb[0].mxu0
      %v2755 = vpop.f32.mrb[0].mxu0
      %v2756 = vadd.f32 0.0, %v2755
      %v2757 = vpop.f32.mrb[0].mxu0
      %2758 = vmatprep.mubr.bf16.mxu0 0
      %2759 = vmatmul.mubr.bf16.gmra.mrb[0].mxu0 %v2628
      %v2760 = vpop.f32.mrb[0].mxu0
      %v2761 = vadd.f32 0.0, %v2760
      %v2762 = vpop.f32.mrb[0].mxu0
      %v2763 = vpop.f32.mrb[0].mxu0
      %v2764 = vadd.f32 0.0, %v2763
      %v2765 = vpop.f32.mrb[0].mxu0
      %2766 = vmatprep.mubr.bf16.mxu0 0
      %2767 = vmatmul.mubr.bf16.gmra.mrb[0].mxu0 %v2631
      %v2768 = vpop.f32.mrb[0].mxu0
      %v2769 = vadd.f32 0.0, %v2768
      %v2770 = vpop.f32.mrb[0].mxu0
      %v2771 = vpop.f32.mrb[0].mxu0
      %v2772 = vadd.f32 0.0, %v2771
      %v2773 = vpop.f32.mrb[0].mxu0
      %2774 = vmatprep.mubr.bf16.mxu0 0
      %2775 = vmatmul.mubr.bf16.gmra.mrb[0].mxu0 %v2634
      %v2776 = vpop.f32.mrb[0].mxu0
      %v2777 = vadd.f32 0.0, %v2776
      %v2778 = vpop.f32.mrb[0].mxu0
      %v2779 = vpop.f32.mrb[0].mxu0
      %v2780 = vadd.f32 0.0, %v2779
      %v2781 = vpop.f32.mrb[0].mxu0
      %2782 = vmatprep.mubr.bf16.mxu0 0
      %2783 = vmatmul.mubr.bf16.gmra.mrb[0].mxu0 %v2637
      %v2784 = vpop.f32.mrb[0].mxu0
      %v2785 = vadd.f32 0.0, %v2784
      %v2786 = vpop.f32.mrb[0].mxu0
      %v2787 = vpop.f32.mrb[0].mxu0
      %v2788 = vadd.f32 0.0, %v2787
      %v2789 = vpop.f32.mrb[0].mxu0
      %2790 = vmatprep.mubr.bf16.mxu0 0
      %2791 = vmatmul.mubr.bf16.gmra.mrb[0].mxu0 %v2640
      %v2792 = vpop.f32.mrb[0].mxu0
      %v2793 = vadd.f32 0.0, %v2792
      %v2794 = vpop.f32.mrb[0].mxu0
      %v2795 = vpop.f32.mrb[0].mxu0
      %v2796 = vadd.f32 0.0, %v2795
      %v2797 = vpop.f32.mrb[0].mxu0
      %2798 = vmatprep.mubr.bf16.mxu0 0
      %2799 = vmatmul.mubr.bf16.gmra.mrb[0].mxu0 %v2643
      %v2800 = vpop.f32.mrb[0].mxu0
      %v2801 = vadd.f32 0.0, %v2800
      %v2802 = vpop.f32.mrb[0].mxu0
      %v2803 = vpop.f32.mrb[0].mxu0
      %v2804 = vadd.f32 0.0, %v2803
      %v2805 = vpop.f32.mrb[0].mxu0
      %2806 = vmatprep.mubr.bf16.mxu0 0
      %2807 = vmatmul.mubr.bf16.gmra.mrb[0].mxu0 %v2646
      %v2808 = vpop.f32.mrb[0].mxu0
      %v2809 = vadd.f32 0.0, %v2808
      %v2810 = vpop.f32.mrb[0].mxu0
      %v2811 = vpop.f32.mrb[0].mxu0
      %v2812 = vadd.f32 0.0, %v2811
      %v2813 = vpop.f32.mrb[0].mxu0
      %2814 = vmatprep.mubr.bf16.mxu0 0
      %2815 = vmatmul.mubr.bf16.gmra.mrb[0].mxu0 %v2649
      %v2816 = vpop.f32.mrb[0].mxu0
      %v2817 = vadd.f32 0.0, %v2816
      %v2818 = vpop.f32.mrb[0].mxu0
      %v2819 = vpop.f32.mrb[0].mxu0
      %v2820 = vadd.f32 0.0, %v2819
      %v2821 = vpop.f32.mrb[0].mxu0
      %2822 = vmatprep.mubr.bf16.mxu0 0
      %2823 = vmatmul.mubr.bf16.gmra.mrb[0].mxu0 %v2652
      %v2824 = vpop.f32.mrb[0].mxu0
      %v2825 = vadd.f32 0.0, %v2824
      %v2826 = vpop.f32.mrb[0].mxu0
      %v2827 = vpop.f32.mrb[0].mxu0
      %v2828 = vadd.f32 0.0, %v2827
      %v2829 = vpop.f32.mrb[0].mxu0
      %2830 = vdwg.mxu0
      %v2831 = vadd.f32 %v2493, %v2689
      %v2832 = vadd.f32 %v2494, %v2692
      %v2833 = vadd.f32 %v2495, %v2697
      %v2834 = vadd.f32 %v2496, %v2700
      %v2835 = vadd.f32 %v2497, %v2705
      %v2836 = vadd.f32 %v2498, %v2708
      %v2837 = vadd.f32 %v2499, %v2713
      %v2838 = vadd.f32 %v2500, %v2716
      %v2839 = vadd.f32 %v2501, %v2721
      %v2840 = vadd.f32 %v2502, %v2724
      %v2841 = vadd.f32 %v2503, %v2729
      %v2842 = vadd.f32 %v2504, %v2732
      %v2843 = vadd.f32 %v2505, %v2737
      %v2844 = vadd.f32 %v2506, %v2740
      %v2845 = vadd.f32 %v2507, %v2745
      %v2846 = vadd.f32 %v2508, %v2748
      %v2847 = vadd.f32 %v2509, %v2753
      %v2848 = vadd.f32 %v2510, %v2756
      %v2849 = vadd.f32 %v2511, %v2761
      %v2850 = vadd.f32 %v2512, %v2764
      %v2851 = vadd.f32 %v2513, %v2769
      %v2852 = vadd.f32 %v2514, %v2772
      %v2853 = vadd.f32 %v2515, %v2777
      %v2854 = vadd.f32 %v2516, %v2780
      %v2855 = vadd.f32 %v2517, %v2785
      %v2856 = vadd.f32 %v2518, %v2788
      %v2857 = vadd.f32 %v2519, %v2793
      %v2858 = vadd.f32 %v2520, %v2796
      %v2859 = vadd.f32 %v2521, %v2801
      %v2860 = vadd.f32 %v2522, %v2804
      %v2861 = vadd.f32 %v2523, %v2809
      %v2862 = vadd.f32 %v2524, %v2812
      %v2863 = vadd.f32 %v2525, %v2817
      %v2864 = vadd.f32 %v2526, %v2820
      %v2865 = vadd.f32 %v2527, %v2825
      %v2866 = vadd.f32 %v2528, %v2828
      %v2867 = vld [vmem:[%s192 + $0x26] sm:$0xff]
      %v2868 = vld [vmem:[%s192 + $0x2e] sm:$0xff]
      %v2869 = vld [vmem:[%s192 + $0x36] sm:$0xff]
      %v2870 = vld [vmem:[%s192 + $0x3e] sm:$0xff]
      %v2871 = vld [vmem:[%s192 + $0x46] sm:$0xff]
      %v2872 = vld [vmem:[%s192 + $0x4e] sm:$0xff]
      %v2873 = vld [vmem:[%s192 + $0x56] sm:$0xff]
      %v2874 = vld [vmem:[%s192 + $0x5e] sm:$0xff]
      %v2875 = vld [vmem:[%s192 + $0x66] sm:$0xff]
      %v2876 = vld [vmem:[%s192 + $0x6e] sm:$0xff]
      %v2877 = vld [vmem:[%s192 + $0x76] sm:$0xff]
      %v2878 = vld [vmem:[%s192 + $0x7e] sm:$0xff]
      %v2879 = vld [vmem:[%s192 + $0x86] sm:$0xff]
      %v2880 = vld [vmem:[%s192 + $0x8e] sm:$0xff]
      %v2881 = vld [vmem:[%s192 + $0x96] sm:$0xff]
      %v2882 = vld [vmem:[%s192 + $0x9e] sm:$0xff]
      %v2883 = vld [vmem:[%s192 + $0xa6] sm:$0xff]
      %v2884 = vld [vmem:[%s192 + $0xae] sm:$0xff]
      %v2885 = vld [vmem:[%s192 + $0xb6] sm:$0xff]
      %v2886 = vld [vmem:[%s192 + $0xbe] sm:$0xff]
      %v2887 = vld [vmem:[%s192 + $0xc6] sm:$0xff]
      %v2888 = vld [vmem:[%s192 + $0xce] sm:$0xff]
      %v2889 = vld [vmem:[%s192 + $0xd6] sm:$0xff]
      %v2890 = vld [vmem:[%s192 + $0xde] sm:$0xff]
      %v2891 = vld [vmem:[%s192 + $0xe6] sm:$0xff]
      %v2892 = vld [vmem:[%s192 + $0xee] sm:$0xff]
      %v2893 = vld [vmem:[%s192 + $0xf6] sm:$0xff]
      %v2894 = vld [vmem:[%s192 + $0xfe] sm:$0xff]
      %v2895 = vld [vmem:[%s192 + $0x106] sm:$0xff]
      %v2896 = vld [vmem:[%s192 + $0x10e] sm:$0xff]
      %v2897 = vld [vmem:[%s192 + $0x116] sm:$0xff]
      %v2898 = vld [vmem:[%s192 + $0x11e] sm:$0xff]
      %v2899 = vld [vmem:[%s192 + $0x126] sm:$0xff]
      %v2900 = vld [vmem:[%s192 + $0x12e] sm:$0xff]
      %v2901 = vld [vmem:[%s192 + $0x136] sm:$0xff]
      %v2902 = vld [vmem:[%s192 + $0x13e] sm:$0x3f]
      %v2903 = vpack.c.bf16 %v2868, %v2867
      %v2904 = vpack.c.bf16 %v2870, %v2869
      %v2905 = vpack.c.bf16 %v2872, %v2871
      %v2906 = vpack.c.bf16 %v2874, %v2873
      %v2907 = vpack.c.bf16 %v2876, %v2875
      %v2908 = vpack.c.bf16 %v2878, %v2877
      %v2909 = vpack.c.bf16 %v2880, %v2879
      %v2910 = vpack.c.bf16 %v2882, %v2881
      %v2911 = vpack.c.bf16 %v2884, %v2883
      %v2912 = vpack.c.bf16 %v2886, %v2885
      %v2913 = vpack.c.bf16 %v2888, %v2887
      %v2914 = vpack.c.bf16 %v2890, %v2889
      %v2915 = vpack.c.bf16 %v2892, %v2891
      %v2916 = vpack.c.bf16 %v2894, %v2893
      %v2917 = vpack.c.bf16 %v2896, %v2895
      %v2918 = vpack.c.bf16 %v2898, %v2897
      %v2919 = vpack.c.bf16 %v2900, %v2899
      %v2920 = vpack.c.bf16 %v2902, %v2901
      %s2921 = scalar_lea.vmem %s2, 128
      %v2922 = vld [vmem:[%s2921] sm:$0xf]
      %v2923 = vld [vmem:[%s2921 + $0x4] sm:$0xf]
      %v2924 = vld [vmem:[%s2921 + $0x8] sm:$0xf]
      %v2925 = vld [vmem:[%s2921 + $0xc] sm:$0xf]
      %v2930 = vunpack.c.l.b16 %v2922
      %v2931 = vunpack.c.l.b16 %v2923
      %v2932 = vunpack.c.l.b16 %v2924
      %v2933 = vunpack.c.l.b16 %v2925
      %v2934 = vpack.c.b16 %v2931, %v2930
      %v2935 = vpack.c.b16 %v2933, %v2932
      %v2939 = vsel %vm364, %v2903, 0
      %v2942 = vsel %vm364, %v2904, 0
      %v2945 = vsel %vm364, %v2905, 0
      %v2948 = vsel %vm364, %v2906, 0
      %v2951 = vsel %vm364, %v2907, 0
      %v2954 = vsel %vm364, %v2908, 0
      %v2957 = vsel %vm364, %v2909, 0
      %v2960 = vsel %vm364, %v2910, 0
      %v2963 = vsel %vm364, %v2911, 0
      %v2966 = vsel %vm364, %v2912, 0
      %v2969 = vsel %vm364, %v2913, 0
      %v2972 = vsel %vm364, %v2914, 0
      %v2975 = vsel %vm364, %v2915, 0
      %v2978 = vsel %vm364, %v2916, 0
      %v2981 = vsel %vm364, %v2917, 0
      %v2984 = vsel %vm364, %v2918, 0
      %v2987 = vsel %vm364, %v2919, 0
      %v2990 = vsel %vm364, %v2920, 0
      %2992 = vmatprep.subr.bf16.mxu0 0
      %2993 = vmatpush1.bf16.msra.mxu0 %v2934
      %2994 = vmatprep.subr.bf16.mxu0 0
      %2995 = vmatpush1.bf16.msra.mxu0 %v2935
      %2996 = vmatprep.subr.bf16.mxu0 0
      %2997 = vmatpush1.bf16.msra.mxu0 0
      %2998 = vmatprep.subr.bf16.mxu0 0
      %2999 = vmatpush1.bf16.msra.mxu0 0
      %3000 = vmatprep.subr.bf16.mxu0 0
      %3001 = vmatpush1.bf16.msra.mxu0 0
      %3002 = vmatprep.subr.bf16.mxu0 0
      %3003 = vmatpush1.bf16.msra.mxu0 0
      %3004 = vmatprep.subr.bf16.mxu0 0
      %3005 = vmatpush1.bf16.msra.mxu0 0
      %3006 = vmatprep.subr.bf16.mxu0 0
      %3007 = vmatpush1.bf16.msra.mxu0 0
      %3008 = vmatprep.subr.bf16.mxu0 0
      %3009 = vmatpush1.bf16.msra.mxu0 0
      %3010 = vmatprep.subr.bf16.mxu0 0
      %3011 = vmatpush1.bf16.msra.mxu0 0
      %3012 = vmatprep.subr.bf16.mxu0 0
      %3013 = vmatpush1.bf16.msra.mxu0 0
      %3014 = vmatprep.subr.bf16.mxu0 0
      %3015 = vmatpush1.bf16.msra.mxu0 0
      %3016 = vmatprep.subr.bf16.mxu0 0
      %3017 = vmatpush1.bf16.msra.mxu0 0
      %3018 = vmatprep.subr.bf16.mxu0 0
      %3019 = vmatpush1.bf16.msra.mxu0 0
      %3020 = vmatprep.subr.bf16.mxu0 0
      %3021 = vmatpush1.bf16.msra.mxu0 0
      %3022 = vmatprep.subr.bf16.mxu0 0
      %3023 = vmatpush1.bf16.msra.mxu0 0
      %3024 = vmatprep.mubr.bf16.mxu0 0
      %3025 = vmatmul.mubr.bf16.gmra.mrb[0].mxu0 %v2939
      %v3026 = vpop.f32.mrb[0].mxu0
      %v3027 = vadd.f32 0.0, %v3026
      %v3028 = vpop.f32.mrb[0].mxu0
      %v3029 = vpop.f32.mrb[0].mxu0
      %v3030 = vadd.f32 0.0, %v3029
      %v3031 = vpop.f32.mrb[0].mxu0
      %3032 = vmatprep.mubr.bf16.mxu0 0
      %3033 = vmatmul.mubr.bf16.gmra.mrb[0].mxu0 %v2942
      %v3034 = vpop.f32.mrb[0].mxu0
      %v3035 = vadd.f32 0.0, %v3034
      %v3036 = vpop.f32.mrb[0].mxu0
      %v3037 = vpop.f32.mrb[0].mxu0
      %v3038 = vadd.f32 0.0, %v3037
      %v3039 = vpop.f32.mrb[0].mxu0
      %3040 = vmatprep.mubr.bf16.mxu0 0
      %3041 = vmatmul.mubr.bf16.gmra.mrb[0].mxu0 %v2945
      %v3042 = vpop.f32.mrb[0].mxu0
      %v3043 = vadd.f32 0.0, %v3042
      %v3044 = vpop.f32.mrb[0].mxu0
      %v3045 = vpop.f32.mrb[0].mxu0
      %v3046 = vadd.f32 0.0, %v3045
      %v3047 = vpop.f32.mrb[0].mxu0
      %3048 = vmatprep.mubr.bf16.mxu0 0
      %3049 = vmatmul.mubr.bf16.gmra.mrb[0].mxu0 %v2948
      %v3050 = vpop.f32.mrb[0].mxu0
      %v3051 = vadd.f32 0.0, %v3050
      %v3052 = vpop.f32.mrb[0].mxu0
      %v3053 = vpop.f32.mrb[0].mxu0
      %v3054 = vadd.f32 0.0, %v3053
      %v3055 = vpop.f32.mrb[0].mxu0
      %3056 = vmatprep.mubr.bf16.mxu0 0
      %3057 = vmatmul.mubr.bf16.gmra.mrb[0].mxu0 %v2951
      %v3058 = vpop.f32.mrb[0].mxu0
      %v3059 = vadd.f32 0.0, %v3058
      %v3060 = vpop.f32.mrb[0].mxu0
      %v3061 = vpop.f32.mrb[0].mxu0
      %v3062 = vadd.f32 0.0, %v3061
      %v3063 = vpop.f32.mrb[0].mxu0
      %3064 = vmatprep.mubr.bf16.mxu0 0
      %3065 = vmatmul.mubr.bf16.gmra.mrb[0].mxu0 %v2954
      %v3066 = vpop.f32.mrb[0].mxu0
      %v3067 = vadd.f32 0.0, %v3066
      %v3068 = vpop.f32.mrb[0].mxu0
      %v3069 = vpop.f32.mrb[0].mxu0
      %v3070 = vadd.f32 0.0, %v3069
      %v3071 = vpop.f32.mrb[0].mxu0
      %3072 = vmatprep.mubr.bf16.mxu0 0
      %3073 = vmatmul.mubr.bf16.gmra.mrb[0].mxu0 %v2957
      %v3074 = vpop.f32.mrb[0].mxu0
      %v3075 = vadd.f32 0.0, %v3074
      %v3076 = vpop.f32.mrb[0].mxu0
      %v3077 = vpop.f32.mrb[0].mxu0
      %v3078 = vadd.f32 0.0, %v3077
      %v3079 = vpop.f32.mrb[0].mxu0
      %3080 = vmatprep.mubr.bf16.mxu0 0
      %3081 = vmatmul.mubr.bf16.gmra.mrb[0].mxu0 %v2960
      %v3082 = vpop.f32.mrb[0].mxu0
      %v3083 = vadd.f32 0.0, %v3082
      %v3084 = vpop.f32.mrb[0].mxu0
      %v3085 = vpop.f32.mrb[0].mxu0
      %v3086 = vadd.f32 0.0, %v3085
      %v3087 = vpop.f32.mrb[0].mxu0
      %3088 = vmatprep.mubr.bf16.mxu0 0
      %3089 = vmatmul.mubr.bf16.gmra.mrb[0].mxu0 %v2963
      %v3090 = vpop.f32.mrb[0].mxu0
      %v3091 = vadd.f32 0.0, %v3090
      %v3092 = vpop.f32.mrb[0].mxu0
      %v3093 = vpop.f32.mrb[0].mxu0
      %v3094 = vadd.f32 0.0, %v3093
      %v3095 = vpop.f32.mrb[0].mxu0
      %3096 = vmatprep.mubr.bf16.mxu0 0
      %3097 = vmatmul.mubr.bf16.gmra.mrb[0].mxu0 %v2966
      %v3098 = vpop.f32.mrb[0].mxu0
      %v3099 = vadd.f32 0.0, %v3098
      %v3100 = vpop.f32.mrb[0].mxu0
      %v3101 = vpop.f32.mrb[0].mxu0
      %v3102 = vadd.f32 0.0, %v3101
      %v3103 = vpop.f32.mrb[0].mxu0
      %3104 = vmatprep.mubr.bf16.mxu0 0
      %3105 = vmatmul.mubr.bf16.gmra.mrb[0].mxu0 %v2969
      %v3106 = vpop.f32.mrb[0].mxu0
      %v3107 = vadd.f32 0.0, %v3106
      %v3108 = vpop.f32.mrb[0].mxu0
      %v3109 = vpop.f32.mrb[0].mxu0
      %v3110 = vadd.f32 0.0, %v3109
      %v3111 = vpop.f32.mrb[0].mxu0
      %3112 = vmatprep.mubr.bf16.mxu0 0
      %3113 = vmatmul.mubr.bf16.gmra.mrb[0].mxu0 %v2972
      %v3114 = vpop.f32.mrb[0].mxu0
      %v3115 = vadd.f32 0.0, %v3114
      %v3116 = vpop.f32.mrb[0].mxu0
      %v3117 = vpop.f32.mrb[0].mxu0
      %v3118 = vadd.f32 0.0, %v3117
      %v3119 = vpop.f32.mrb[0].mxu0
      %3120 = vmatprep.mubr.bf16.mxu0 0
      %3121 = vmatmul.mubr.bf16.gmra.mrb[0].mxu0 %v2975
      %v3122 = vpop.f32.mrb[0].mxu0
      %v3123 = vadd.f32 0.0, %v3122
      %v3124 = vpop.f32.mrb[0].mxu0
      %v3125 = vpop.f32.mrb[0].mxu0
      %v3126 = vadd.f32 0.0, %v3125
      %v3127 = vpop.f32.mrb[0].mxu0
      %3128 = vmatprep.mubr.bf16.mxu0 0
      %3129 = vmatmul.mubr.bf16.gmra.mrb[0].mxu0 %v2978
      %v3130 = vpop.f32.mrb[0].mxu0
      %v3131 = vadd.f32 0.0, %v3130
      %v3132 = vpop.f32.mrb[0].mxu0
      %v3133 = vpop.f32.mrb[0].mxu0
      %v3134 = vadd.f32 0.0, %v3133
      %v3135 = vpop.f32.mrb[0].mxu0
      %3136 = vmatprep.mubr.bf16.mxu0 0
      %3137 = vmatmul.mubr.bf16.gmra.mrb[0].mxu0 %v2981
      %v3138 = vpop.f32.mrb[0].mxu0
      %v3139 = vadd.f32 0.0, %v3138
      %v3140 = vpop.f32.mrb[0].mxu0
      %v3141 = vpop.f32.mrb[0].mxu0
      %v3142 = vadd.f32 0.0, %v3141
      %v3143 = vpop.f32.mrb[0].mxu0
      %3144 = vmatprep.mubr.bf16.mxu0 0
      %3145 = vmatmul.mubr.bf16.gmra.mrb[0].mxu0 %v2984
      %v3146 = vpop.f32.mrb[0].mxu0
      %v3147 = vadd.f32 0.0, %v3146
      %v3148 = vpop.f32.mrb[0].mxu0
      %v3149 = vpop.f32.mrb[0].mxu0
      %v3150 = vadd.f32 0.0, %v3149
      %v3151 = vpop.f32.mrb[0].mxu0
      %3152 = vmatprep.mubr.bf16.mxu0 0
      %3153 = vmatmul.mubr.bf16.gmra.mrb[0].mxu0 %v2987
      %v3154 = vpop.f32.mrb[0].mxu0
      %v3155 = vadd.f32 0.0, %v3154
      %v3156 = vpop.f32.mrb[0].mxu0
      %v3157 = vpop.f32.mrb[0].mxu0
      %v3158 = vadd.f32 0.0, %v3157
      %v3159 = vpop.f32.mrb[0].mxu0
      %3160 = vmatprep.mubr.bf16.mxu0 0
      %3161 = vmatmul.mubr.bf16.gmra.mrb[0].mxu0 %v2990
      %v3162 = vpop.f32.mrb[0].mxu0
      %v3163 = vadd.f32 0.0, %v3162
      %v3164 = vpop.f32.mrb[0].mxu0
      %v3165 = vpop.f32.mrb[0].mxu0
      %v3166 = vadd.f32 0.0, %v3165
      %v3167 = vpop.f32.mrb[0].mxu0
      %3168 = vdwg.mxu0
      %v3169 = vadd.f32 %v2831, %v3027
      %v3170 = vadd.f32 %v2832, %v3030
      %v3171 = vadd.f32 %v2833, %v3035
      %v3172 = vadd.f32 %v2834, %v3038
      %v3173 = vadd.f32 %v2835, %v3043
      %v3174 = vadd.f32 %v2836, %v3046
      %v3175 = vadd.f32 %v2837, %v3051
      %v3176 = vadd.f32 %v2838, %v3054
      %v3177 = vadd.f32 %v2839, %v3059
      %v3178 = vadd.f32 %v2840, %v3062
      %v3179 = vadd.f32 %v2841, %v3067
      %v3180 = vadd.f32 %v2842, %v3070
      %v3181 = vadd.f32 %v2843, %v3075
      %v3182 = vadd.f32 %v2844, %v3078
      %v3183 = vadd.f32 %v2845, %v3083
      %v3184 = vadd.f32 %v2846, %v3086
      %v3185 = vadd.f32 %v2847, %v3091
      %v3186 = vadd.f32 %v2848, %v3094
      %v3187 = vadd.f32 %v2849, %v3099
      %v3188 = vadd.f32 %v2850, %v3102
      %v3189 = vadd.f32 %v2851, %v3107
      %v3190 = vadd.f32 %v2852, %v3110
      %v3191 = vadd.f32 %v2853, %v3115
      %v3192 = vadd.f32 %v2854, %v3118
      %v3193 = vadd.f32 %v2855, %v3123
      %v3194 = vadd.f32 %v2856, %v3126
      %v3195 = vadd.f32 %v2857, %v3131
      %v3196 = vadd.f32 %v2858, %v3134
      %v3197 = vadd.f32 %v2859, %v3139
      %v3198 = vadd.f32 %v2860, %v3142
      %v3199 = vadd.f32 %v2861, %v3147
      %v3200 = vadd.f32 %v2862, %v3150
      %v3201 = vadd.f32 %v2863, %v3155
      %v3202 = vadd.f32 %v2864, %v3158
      %v3203 = vadd.f32 %v2865, %v3163
      %v3204 = vadd.f32 %v2866, %v3166
      %3206 = vset.pattern.permute.xlu0 0
      %3207 = vperm.xlu0 %3206, %v199
      %v3208 = vpop.permute.xlu0 %3207
      %3211 = vset.pattern.permute.xlu0 0
      %3212 = vperm.xlu0 %3211, %v200
      %v3213 = vpop.permute.xlu0 %3212
      %3216 = vset.pattern.permute.xlu0 0
      %3217 = vperm.xlu0 %3216, %v201
      %v3218 = vpop.permute.xlu0 %3217
      %3221 = vset.pattern.permute.xlu0 0
      %3222 = vperm.xlu0 %3221, %v202
      %v3223 = vpop.permute.xlu0 %3222
      %3226 = vset.pattern.permute.xlu0 0
      %3227 = vperm.xlu0 %3226, %v203
      %v3228 = vpop.permute.xlu0 %3227
      %3231 = vset.pattern.permute.xlu0 0
      %3232 = vperm.xlu0 %3231, %v204
      %v3233 = vpop.permute.xlu0 %3232
      %3236 = vset.pattern.permute.xlu0 0
      %3237 = vperm.xlu0 %3236, %v205
      %v3238 = vpop.permute.xlu0 %3237
      %3241 = vset.pattern.permute.xlu0 0
      %3242 = vperm.xlu0 %3241, %v206
      %v3243 = vpop.permute.xlu0 %3242
      %3246 = vset.pattern.permute.xlu0 0
      %3247 = vperm.xlu0 %3246, %v207
      %v3248 = vpop.permute.xlu0 %3247
      %3251 = vset.pattern.permute.xlu0 0
      %3252 = vperm.xlu0 %3251, %v208
      %v3253 = vpop.permute.xlu0 %3252
      %3256 = vset.pattern.permute.xlu0 0
      %3257 = vperm.xlu0 %3256, %v209
      %v3258 = vpop.permute.xlu0 %3257
      %3261 = vset.pattern.permute.xlu0 0
      %3262 = vperm.xlu0 %3261, %v210
      %v3263 = vpop.permute.xlu0 %3262
      %3266 = vset.pattern.permute.xlu0 0
      %3267 = vperm.xlu0 %3266, %v211
      %v3268 = vpop.permute.xlu0 %3267
      %3271 = vset.pattern.permute.xlu0 0
      %3272 = vperm.xlu0 %3271, %v212
      %v3273 = vpop.permute.xlu0 %3272
      %3276 = vset.pattern.permute.xlu0 0
      %3277 = vperm.xlu0 %3276, %v213
      %v3278 = vpop.permute.xlu0 %3277
      %3281 = vset.pattern.permute.xlu0 0
      %3282 = vperm.xlu0 %3281, %v214
      %v3283 = vpop.permute.xlu0 %3282
      %3286 = vset.pattern.permute.xlu0 0
      %3287 = vperm.xlu0 %3286, %v215
      %v3288 = vpop.permute.xlu0 %3287
      %3291 = vset.pattern.permute.xlu0 0
      %3292 = vperm.xlu0 %3291, %v216
      %v3293 = vpop.permute.xlu0 %3292
      %3296 = vset.pattern.permute.xlu0 0
      %3297 = vperm.xlu0 %3296, %v217
      %v3298 = vpop.permute.xlu0 %3297
      %3301 = vset.pattern.permute.xlu0 0
      %3302 = vperm.xlu0 %3301, %v218
      %v3303 = vpop.permute.xlu0 %3302
      %3306 = vset.pattern.permute.xlu0 0
      %3307 = vperm.xlu0 %3306, %v219
      %v3308 = vpop.permute.xlu0 %3307
      %3311 = vset.pattern.permute.xlu0 0
      %3312 = vperm.xlu0 %3311, %v220
      %v3313 = vpop.permute.xlu0 %3312
      %3316 = vset.pattern.permute.xlu0 0
      %3317 = vperm.xlu0 %3316, %v221
      %v3318 = vpop.permute.xlu0 %3317
      %3321 = vset.pattern.permute.xlu0 0
      %3322 = vperm.xlu0 %3321, %v222
      %v3323 = vpop.permute.xlu0 %3322
      %3326 = vset.pattern.permute.xlu0 0
      %3327 = vperm.xlu0 %3326, %v223
      %v3328 = vpop.permute.xlu0 %3327
      %3331 = vset.pattern.permute.xlu0 0
      %3332 = vperm.xlu0 %3331, %v224
      %v3333 = vpop.permute.xlu0 %3332
      %3336 = vset.pattern.permute.xlu0 0
      %3337 = vperm.xlu0 %3336, %v225
      %v3338 = vpop.permute.xlu0 %3337
      %3341 = vset.pattern.permute.xlu0 0
      %3342 = vperm.xlu0 %3341, %v226
      %v3343 = vpop.permute.xlu0 %3342
      %3346 = vset.pattern.permute.xlu0 0
      %3347 = vperm.xlu0 %3346, %v227
      %v3348 = vpop.permute.xlu0 %3347
      %3351 = vset.pattern.permute.xlu0 0
      %3352 = vperm.xlu0 %3351, %v228
      %v3353 = vpop.permute.xlu0 %3352
      %3356 = vset.pattern.permute.xlu0 0
      %3357 = vperm.xlu0 %3356, %v229
      %v3358 = vpop.permute.xlu0 %3357
      %3361 = vset.pattern.permute.xlu0 0
      %3362 = vperm.xlu0 %3361, %v230
      %v3363 = vpop.permute.xlu0 %3362
      %3366 = vset.pattern.permute.xlu0 0
      %3367 = vperm.xlu0 %3366, %v231
      %v3368 = vpop.permute.xlu0 %3367
      %3371 = vset.pattern.permute.xlu0 0
      %3372 = vperm.xlu0 %3371, %v232
      %v3373 = vpop.permute.xlu0 %3372
      %3376 = vset.pattern.permute.xlu0 0
      %3377 = vperm.xlu0 %3376, %v233
      %v3378 = vpop.permute.xlu0 %3377
      %3381 = vset.pattern.permute.xlu0 0
      %3382 = vperm.xlu0 %3381, %v234
      %v3383 = vpop.permute.xlu0 %3382
      %v3385 = vmul.f32 %v3169, %v3208
      %v3386 = vmul.f32 %v3170, %v3213
      %v3387 = vmul.f32 %v3171, %v3218
      %v3388 = vmul.f32 %v3172, %v3223
      %v3389 = vmul.f32 %v3173, %v3228
      %v3390 = vmul.f32 %v3174, %v3233
      %v3391 = vmul.f32 %v3175, %v3238
      %v3392 = vmul.f32 %v3176, %v3243
      %v3393 = vmul.f32 %v3177, %v3248
      %v3394 = vmul.f32 %v3178, %v3253
      %v3395 = vmul.f32 %v3179, %v3258
      %v3396 = vmul.f32 %v3180, %v3263
      %v3397 = vmul.f32 %v3181, %v3268
      %v3398 = vmul.f32 %v3182, %v3273
      %v3399 = vmul.f32 %v3183, %v3278
      %v3400 = vmul.f32 %v3184, %v3283
      %v3401 = vmul.f32 %v3185, %v3288
      %v3402 = vmul.f32 %v3186, %v3293
      %v3403 = vmul.f32 %v3187, %v3298
      %v3404 = vmul.f32 %v3188, %v3303
      %v3405 = vmul.f32 %v3189, %v3308
      %v3406 = vmul.f32 %v3190, %v3313
      %v3407 = vmul.f32 %v3191, %v3318
      %v3408 = vmul.f32 %v3192, %v3323
      %v3409 = vmul.f32 %v3193, %v3328
      %v3410 = vmul.f32 %v3194, %v3333
      %v3411 = vmul.f32 %v3195, %v3338
      %v3412 = vmul.f32 %v3196, %v3343
      %v3413 = vmul.f32 %v3197, %v3348
      %v3414 = vmul.f32 %v3198, %v3353
      %v3415 = vmul.f32 %v3199, %v3358
      %v3416 = vmul.f32 %v3200, %v3363
      %v3417 = vmul.f32 %v3201, %v3368
      %v3418 = vmul.f32 %v3202, %v3373
      %v3419 = vmul.f32 %v3203, %v3378
      %v3420 = vmul.f32 %v3204, %v3383
      %v3421 = vsel %vm364, %v3385, 0.0
      %v3422 = vsel %vm364, %v3386, 0.0
      %v3423 = vadd.f32 %v3421, %v3422
      %v3424 = vsel %vm364, %v3387, 0.0
      %v3425 = vadd.f32 %v3423, %v3424
      %v3426 = vsel %vm364, %v3388, 0.0
      %v3427 = vadd.f32 %v3425, %v3426
      %v3428 = vsel %vm364, %v3389, 0.0
      %v3429 = vadd.f32 %v3427, %v3428
      %v3430 = vsel %vm364, %v3390, 0.0
      %v3431 = vadd.f32 %v3429, %v3430
      %v3432 = vsel %vm364, %v3391, 0.0
      %v3433 = vadd.f32 %v3431, %v3432
      %v3434 = vsel %vm364, %v3392, 0.0
      %v3435 = vadd.f32 %v3433, %v3434
      %v3436 = vsel %vm364, %v3393, 0.0
      %v3437 = vadd.f32 %v3435, %v3436
      %v3438 = vsel %vm364, %v3394, 0.0
      %v3439 = vadd.f32 %v3437, %v3438
      %v3440 = vsel %vm364, %v3395, 0.0
      %v3441 = vadd.f32 %v3439, %v3440
      %v3442 = vsel %vm364, %v3396, 0.0
      %v3443 = vadd.f32 %v3441, %v3442
      %v3444 = vsel %vm364, %v3397, 0.0
      %v3445 = vadd.f32 %v3443, %v3444
      %v3446 = vsel %vm364, %v3398, 0.0
      %v3447 = vadd.f32 %v3445, %v3446
      %v3448 = vsel %vm364, %v3399, 0.0
      %v3449 = vadd.f32 %v3447, %v3448
      %v3450 = vsel %vm364, %v3400, 0.0
      %v3451 = vadd.f32 %v3449, %v3450
      %v3452 = vsel %vm364, %v3401, 0.0
      %v3453 = vadd.f32 %v3451, %v3452
      %v3454 = vsel %vm364, %v3402, 0.0
      %v3455 = vadd.f32 %v3453, %v3454
      %v3456 = vsel %vm364, %v3403, 0.0
      %v3457 = vadd.f32 %v3455, %v3456
      %v3458 = vsel %vm364, %v3404, 0.0
      %v3459 = vadd.f32 %v3457, %v3458
      %v3460 = vsel %vm364, %v3405, 0.0
      %v3461 = vadd.f32 %v3459, %v3460
      %v3462 = vsel %vm364, %v3406, 0.0
      %v3463 = vadd.f32 %v3461, %v3462
      %v3464 = vsel %vm364, %v3407, 0.0
      %v3465 = vadd.f32 %v3463, %v3464
      %v3466 = vsel %vm364, %v3408, 0.0
      %v3467 = vadd.f32 %v3465, %v3466
      %v3468 = vsel %vm364, %v3409, 0.0
      %v3469 = vadd.f32 %v3467, %v3468
      %v3470 = vsel %vm364, %v3410, 0.0
      %v3471 = vadd.f32 %v3469, %v3470
      %v3472 = vsel %vm364, %v3411, 0.0
      %v3473 = vadd.f32 %v3471, %v3472
      %v3474 = vsel %vm364, %v3412, 0.0
      %v3475 = vadd.f32 %v3473, %v3474
      %v3476 = vsel %vm364, %v3413, 0.0
      %v3477 = vadd.f32 %v3475, %v3476
      %v3478 = vsel %vm364, %v3414, 0.0
      %v3479 = vadd.f32 %v3477, %v3478
      %v3480 = vsel %vm364, %v3415, 0.0
      %v3481 = vadd.f32 %v3479, %v3480
      %v3482 = vsel %vm364, %v3416, 0.0
      %v3483 = vadd.f32 %v3481, %v3482
      %v3484 = vsel %vm364, %v3417, 0.0
      %v3485 = vadd.f32 %v3483, %v3484
      %v3486 = vsel %vm364, %v3418, 0.0
      %v3487 = vadd.f32 %v3485, %v3486
      %v3488 = vsel %vm364, %v3419, 0.0
      %v3489 = vadd.f32 %v3487, %v3488
      %vm3490 = vcmask 259072
      %v3491 = vsel %vm3490, %v3420, 0.0
      %v3492 = vadd.f32 %v3489, %v3491
      %v3493 = vrot.slane %v3492, 4
      %v3494 = vadd.f32 %v3492, %v3493
      %v3495 = vrot.slane %v3494, 2
      %v3496 = vadd.f32 %v3494, %v3495
      %v3497 = vrot.slane %v3496, 1
      %v3498 = vadd.f32 %v3496, %v3497
      %v3499 = vmul.f32 %v3498, 0.00390625
      %v3500 = vsub.f32 %v3169, %v3499
      %v3501 = vsub.f32 %v3170, %v3499
      %v3502 = vsub.f32 %v3171, %v3499
      %v3503 = vsub.f32 %v3172, %v3499
      %v3504 = vsub.f32 %v3173, %v3499
      %v3505 = vsub.f32 %v3174, %v3499
      %v3506 = vsub.f32 %v3175, %v3499
      %v3507 = vsub.f32 %v3176, %v3499
      %v3508 = vsub.f32 %v3177, %v3499
      %v3509 = vsub.f32 %v3178, %v3499
      %v3510 = vsub.f32 %v3179, %v3499
      %v3511 = vsub.f32 %v3180, %v3499
      %v3512 = vsub.f32 %v3181, %v3499
      %v3513 = vsub.f32 %v3182, %v3499
      %v3514 = vsub.f32 %v3183, %v3499
      %v3515 = vsub.f32 %v3184, %v3499
      %v3516 = vsub.f32 %v3185, %v3499
      %v3517 = vsub.f32 %v3186, %v3499
      %v3518 = vsub.f32 %v3187, %v3499
      %v3519 = vsub.f32 %v3188, %v3499
      %v3520 = vsub.f32 %v3189, %v3499
      %v3521 = vsub.f32 %v3190, %v3499
      %v3522 = vsub.f32 %v3191, %v3499
      %v3523 = vsub.f32 %v3192, %v3499
      %v3524 = vsub.f32 %v3193, %v3499
      %v3525 = vsub.f32 %v3194, %v3499
      %v3526 = vsub.f32 %v3195, %v3499
      %v3527 = vsub.f32 %v3196, %v3499
      %v3528 = vsub.f32 %v3197, %v3499
      %v3529 = vsub.f32 %v3198, %v3499
      %v3530 = vsub.f32 %v3199, %v3499
      %v3531 = vsub.f32 %v3200, %v3499
      %v3532 = vsub.f32 %v3201, %v3499
      %v3533 = vsub.f32 %v3202, %v3499
      %v3534 = vsub.f32 %v3203, %v3499
      %v3535 = vsub.f32 %v3204, %v3499
      %v3536 = vmul.f32 %v3500, %v3208
      %v3537 = vmul.f32 %v3501, %v3213
      %v3538 = vmul.f32 %v3502, %v3218
      %v3539 = vmul.f32 %v3503, %v3223
      %v3540 = vmul.f32 %v3504, %v3228
      %v3541 = vmul.f32 %v3505, %v3233
      %v3542 = vmul.f32 %v3506, %v3238
      %v3543 = vmul.f32 %v3507, %v3243
      %v3544 = vmul.f32 %v3508, %v3248
      %v3545 = vmul.f32 %v3509, %v3253
      %v3546 = vmul.f32 %v3510, %v3258
      %v3547 = vmul.f32 %v3511, %v3263
      %v3548 = vmul.f32 %v3512, %v3268
      %v3549 = vmul.f32 %v3513, %v3273
      %v3550 = vmul.f32 %v3514, %v3278
      %v3551 = vmul.f32 %v3515, %v3283
      %v3552 = vmul.f32 %v3516, %v3288
      %v3553 = vmul.f32 %v3517, %v3293
      %v3554 = vmul.f32 %v3518, %v3298
      %v3555 = vmul.f32 %v3519, %v3303
      %v3556 = vmul.f32 %v3520, %v3308
      %v3557 = vmul.f32 %v3521, %v3313
      %v3558 = vmul.f32 %v3522, %v3318
      %v3559 = vmul.f32 %v3523, %v3323
      %v3560 = vmul.f32 %v3524, %v3328
      %v3561 = vmul.f32 %v3525, %v3333
      %v3562 = vmul.f32 %v3526, %v3338
      %v3563 = vmul.f32 %v3527, %v3343
      %v3564 = vmul.f32 %v3528, %v3348
      %v3565 = vmul.f32 %v3529, %v3353
      %v3566 = vmul.f32 %v3530, %v3358
      %v3567 = vmul.f32 %v3531, %v3363
      %v3568 = vmul.f32 %v3532, %v3368
      %v3569 = vmul.f32 %v3533, %v3373
      %v3570 = vmul.f32 %v3534, %v3378
      %v3571 = vmul.f32 %v3535, %v3383
      %v3572 = vmul.f32 %v3536, %v3536
      %v3573 = vmul.f32 %v3537, %v3537
      %v3574 = vmul.f32 %v3538, %v3538
      %v3575 = vmul.f32 %v3539, %v3539
      %v3576 = vmul.f32 %v3540, %v3540
      %v3577 = vmul.f32 %v3541, %v3541
      %v3578 = vmul.f32 %v3542, %v3542
      %v3579 = vmul.f32 %v3543, %v3543
      %v3580 = vmul.f32 %v3544, %v3544
      %v3581 = vmul.f32 %v3545, %v3545
      %v3582 = vmul.f32 %v3546, %v3546
      %v3583 = vmul.f32 %v3547, %v3547
      %v3584 = vmul.f32 %v3548, %v3548
      %v3585 = vmul.f32 %v3549, %v3549
      %v3586 = vmul.f32 %v3550, %v3550
      %v3587 = vmul.f32 %v3551, %v3551
      %v3588 = vmul.f32 %v3552, %v3552
      %v3589 = vmul.f32 %v3553, %v3553
      %v3590 = vmul.f32 %v3554, %v3554
      %v3591 = vmul.f32 %v3555, %v3555
      %v3592 = vmul.f32 %v3556, %v3556
      %v3593 = vmul.f32 %v3557, %v3557
      %v3594 = vmul.f32 %v3558, %v3558
      %v3595 = vmul.f32 %v3559, %v3559
      %v3596 = vmul.f32 %v3560, %v3560
      %v3597 = vmul.f32 %v3561, %v3561
      %v3598 = vmul.f32 %v3562, %v3562
      %v3599 = vmul.f32 %v3563, %v3563
      %v3600 = vmul.f32 %v3564, %v3564
      %v3601 = vmul.f32 %v3565, %v3565
      %v3602 = vmul.f32 %v3566, %v3566
      %v3603 = vmul.f32 %v3567, %v3567
      %v3604 = vmul.f32 %v3568, %v3568
      %v3605 = vmul.f32 %v3569, %v3569
      %v3606 = vmul.f32 %v3570, %v3570
      %v3607 = vmul.f32 %v3571, %v3571
      %v3608 = vsel %vm364, %v3572, 0.0
      %v3609 = vsel %vm364, %v3573, 0.0
      %v3610 = vadd.f32 %v3608, %v3609
      %v3611 = vsel %vm364, %v3574, 0.0
      %v3612 = vadd.f32 %v3610, %v3611
      %v3613 = vsel %vm364, %v3575, 0.0
      %v3614 = vadd.f32 %v3612, %v3613
      %v3615 = vsel %vm364, %v3576, 0.0
      %v3616 = vadd.f32 %v3614, %v3615
      %v3617 = vsel %vm364, %v3577, 0.0
      %v3618 = vadd.f32 %v3616, %v3617
      %v3619 = vsel %vm364, %v3578, 0.0
      %v3620 = vadd.f32 %v3618, %v3619
      %v3621 = vsel %vm364, %v3579, 0.0
      %v3622 = vadd.f32 %v3620, %v3621
      %v3623 = vsel %vm364, %v3580, 0.0
      %v3624 = vadd.f32 %v3622, %v3623
      %v3625 = vsel %vm364, %v3581, 0.0
      %v3626 = vadd.f32 %v3624, %v3625
      %v3627 = vsel %vm364, %v3582, 0.0
      %v3628 = vadd.f32 %v3626, %v3627
      %v3629 = vsel %vm364, %v3583, 0.0
      %v3630 = vadd.f32 %v3628, %v3629
      %v3631 = vsel %vm364, %v3584, 0.0
      %v3632 = vadd.f32 %v3630, %v3631
      %v3633 = vsel %vm364, %v3585, 0.0
      %v3634 = vadd.f32 %v3632, %v3633
      %v3635 = vsel %vm364, %v3586, 0.0
      %v3636 = vadd.f32 %v3634, %v3635
      %v3637 = vsel %vm364, %v3587, 0.0
      %v3638 = vadd.f32 %v3636, %v3637
      %v3639 = vsel %vm364, %v3588, 0.0
      %v3640 = vadd.f32 %v3638, %v3639
      %v3641 = vsel %vm364, %v3589, 0.0
      %v3642 = vadd.f32 %v3640, %v3641
      %v3643 = vsel %vm364, %v3590, 0.0
      %v3644 = vadd.f32 %v3642, %v3643
      %v3645 = vsel %vm364, %v3591, 0.0
      %v3646 = vadd.f32 %v3644, %v3645
      %v3647 = vsel %vm364, %v3592, 0.0
      %v3648 = vadd.f32 %v3646, %v3647
      %v3649 = vsel %vm364, %v3593, 0.0
      %v3650 = vadd.f32 %v3648, %v3649
      %v3651 = vsel %vm364, %v3594, 0.0
      %v3652 = vadd.f32 %v3650, %v3651
      %v3653 = vsel %vm364, %v3595, 0.0
      %v3654 = vadd.f32 %v3652, %v3653
      %v3655 = vsel %vm364, %v3596, 0.0
      %v3656 = vadd.f32 %v3654, %v3655
      %v3657 = vsel %vm364, %v3597, 0.0
      %v3658 = vadd.f32 %v3656, %v3657
      %v3659 = vsel %vm364, %v3598, 0.0
      %v3660 = vadd.f32 %v3658, %v3659
      %v3661 = vsel %vm364, %v3599, 0.0
      %v3662 = vadd.f32 %v3660, %v3661
      %v3663 = vsel %vm364, %v3600, 0.0
      %v3664 = vadd.f32 %v3662, %v3663
      %v3665 = vsel %vm364, %v3601, 0.0
      %v3666 = vadd.f32 %v3664, %v3665
      %v3667 = vsel %vm364, %v3602, 0.0
      %v3668 = vadd.f32 %v3666, %v3667
      %v3669 = vsel %vm364, %v3603, 0.0
      %v3670 = vadd.f32 %v3668, %v3669
      %v3671 = vsel %vm364, %v3604, 0.0
      %v3672 = vadd.f32 %v3670, %v3671
      %v3673 = vsel %vm364, %v3605, 0.0
      %v3674 = vadd.f32 %v3672, %v3673
      %v3675 = vsel %vm364, %v3606, 0.0
      %v3676 = vadd.f32 %v3674, %v3675
      %v3677 = vsel %vm3490, %v3607, 0.0
      %v3678 = vadd.f32 %v3676, %v3677
      %v3679 = vrot.slane %v3678, 4
      %v3680 = vadd.f32 %v3678, %v3679
      %v3681 = vrot.slane %v3680, 2
      %v3682 = vadd.f32 %v3680, %v3681
      %v3683 = vrot.slane %v3682, 1
      %v3684 = vadd.f32 %v3682, %v3683
      %v3685 = vmul.f32 %v3684, 0.00390625
      %v3686 = vadd.f32 %v3685, 1e-05
      %v3687 = vrsqrt.pop %v3686
      %v3688 = vmul.f32 %v3500, %v3687
      %v3689 = vmul.f32 %v3501, %v3687
      %v3690 = vmul.f32 %v3502, %v3687
      %v3691 = vmul.f32 %v3503, %v3687
      %v3692 = vmul.f32 %v3504, %v3687
      %v3693 = vmul.f32 %v3505, %v3687
      %v3694 = vmul.f32 %v3506, %v3687
      %v3695 = vmul.f32 %v3507, %v3687
      %v3696 = vmul.f32 %v3508, %v3687
      %v3697 = vmul.f32 %v3509, %v3687
      %v3698 = vmul.f32 %v3510, %v3687
      %v3699 = vmul.f32 %v3511, %v3687
      %v3700 = vmul.f32 %v3512, %v3687
      %v3701 = vmul.f32 %v3513, %v3687
      %v3702 = vmul.f32 %v3514, %v3687
      %v3703 = vmul.f32 %v3515, %v3687
      %v3704 = vmul.f32 %v3516, %v3687
      %v3705 = vmul.f32 %v3517, %v3687
      %v3706 = vmul.f32 %v3518, %v3687
      %v3707 = vmul.f32 %v3519, %v3687
      %v3708 = vmul.f32 %v3520, %v3687
      %v3709 = vmul.f32 %v3521, %v3687
      %v3710 = vmul.f32 %v3522, %v3687
      %v3711 = vmul.f32 %v3523, %v3687
      %v3712 = vmul.f32 %v3524, %v3687
      %v3713 = vmul.f32 %v3525, %v3687
      %v3714 = vmul.f32 %v3526, %v3687
      %v3715 = vmul.f32 %v3527, %v3687
      %v3716 = vmul.f32 %v3528, %v3687
      %v3717 = vmul.f32 %v3529, %v3687
      %v3718 = vmul.f32 %v3530, %v3687
      %v3719 = vmul.f32 %v3531, %v3687
      %v3720 = vmul.f32 %v3532, %v3687
      %v3721 = vmul.f32 %v3533, %v3687
      %v3722 = vmul.f32 %v3534, %v3687
      %v3723 = vmul.f32 %v3535, %v3687
      %v3724 = vmax.f32 %v3688, 0.0
      %v3725 = vmax.f32 %v3689, 0.0
      %v3726 = vmax.f32 %v3690, 0.0
      %v3727 = vmax.f32 %v3691, 0.0
      %v3728 = vmax.f32 %v3692, 0.0
      %v3729 = vmax.f32 %v3693, 0.0
      %v3730 = vmax.f32 %v3694, 0.0
      %v3731 = vmax.f32 %v3695, 0.0
      %v3732 = vmax.f32 %v3696, 0.0
      %v3733 = vmax.f32 %v3697, 0.0
      %v3734 = vmax.f32 %v3698, 0.0
      %v3735 = vmax.f32 %v3699, 0.0
      %v3736 = vmax.f32 %v3700, 0.0
      %v3737 = vmax.f32 %v3701, 0.0
      %v3738 = vmax.f32 %v3702, 0.0
      %v3739 = vmax.f32 %v3703, 0.0
      %v3740 = vmax.f32 %v3704, 0.0
      %v3741 = vmax.f32 %v3705, 0.0
      %v3742 = vmax.f32 %v3706, 0.0
      %v3743 = vmax.f32 %v3707, 0.0
      %v3744 = vmax.f32 %v3708, 0.0
      %v3745 = vmax.f32 %v3709, 0.0
      %v3746 = vmax.f32 %v3710, 0.0
      %v3747 = vmax.f32 %v3711, 0.0
      %v3748 = vmax.f32 %v3712, 0.0
      %v3749 = vmax.f32 %v3713, 0.0
      %v3750 = vmax.f32 %v3714, 0.0
      %v3751 = vmax.f32 %v3715, 0.0
      %v3752 = vmax.f32 %v3716, 0.0
      %v3753 = vmax.f32 %v3717, 0.0
      %v3754 = vmax.f32 %v3718, 0.0
      %v3755 = vmax.f32 %v3719, 0.0
      %v3756 = vmax.f32 %v3720, 0.0
      %v3757 = vmax.f32 %v3721, 0.0
      %v3758 = vmax.f32 %v3722, 0.0
      %v3759 = vmax.f32 %v3723, 0.0
      %3760 = vst.msk [vmem:[#allocation2 + $0x13] sm:$0xff] %vm364, %v3724
      %3761 = vst.msk [vmem:[#allocation2 + $0x1b] sm:$0xff] %vm364, %v3725
      %3762 = vst.msk [vmem:[#allocation2 + $0x23] sm:$0xff] %vm364, %v3726
      %3763 = vst.msk [vmem:[#allocation2 + $0x2b] sm:$0xff] %vm364, %v3727
      %3764 = vst.msk [vmem:[#allocation2 + $0x33] sm:$0xff] %vm364, %v3728
      %3765 = vst.msk [vmem:[#allocation2 + $0x3b] sm:$0xff] %vm364, %v3729
      %3766 = vst.msk [vmem:[#allocation2 + $0x43] sm:$0xff] %vm364, %v3730
      %3767 = vst.msk [vmem:[#allocation2 + $0x4b] sm:$0xff] %vm364, %v3731
      %3768 = vst.msk [vmem:[#allocation2 + $0x53] sm:$0xff] %vm364, %v3732
      %3769 = vst.msk [vmem:[#allocation2 + $0x5b] sm:$0xff] %vm364, %v3733
      %3770 = vst.msk [vmem:[#allocation2 + $0x63] sm:$0xff] %vm364, %v3734
      %3771 = vst.msk [vmem:[#allocation2 + $0x6b] sm:$0xff] %vm364, %v3735
      %3772 = vst.msk [vmem:[#allocation2 + $0x73] sm:$0xff] %vm364, %v3736
      %3773 = vst.msk [vmem:[#allocation2 + $0x7b] sm:$0xff] %vm364, %v3737
      %3774 = vst.msk [vmem:[#allocation2 + $0x83] sm:$0xff] %vm364, %v3738
      %3775 = vst.msk [vmem:[#allocation2 + $0x8b] sm:$0xff] %vm364, %v3739
      %3776 = vst.msk [vmem:[#allocation2 + $0x93] sm:$0xff] %vm364, %v3740
      %3777 = vst.msk [vmem:[#allocation2 + $0x9b] sm:$0xff] %vm364, %v3741
      %3778 = vst.msk [vmem:[#allocation2 + $0xa3] sm:$0xff] %vm364, %v3742
      %3779 = vst.msk [vmem:[#allocation2 + $0xab] sm:$0xff] %vm364, %v3743
      %3780 = vst.msk [vmem:[#allocation2 + $0xb3] sm:$0xff] %vm364, %v3744
      %3781 = vst.msk [vmem:[#allocation2 + $0xbb] sm:$0xff] %vm364, %v3745
      %3782 = vst.msk [vmem:[#allocation2 + $0xc3] sm:$0xff] %vm364, %v3746
      %3783 = vst.msk [vmem:[#allocation2 + $0xcb] sm:$0xff] %vm364, %v3747
      %3784 = vst.msk [vmem:[#allocation2 + $0xd3] sm:$0xff] %vm364, %v3748
      %3785 = vst.msk [vmem:[#allocation2 + $0xdb] sm:$0xff] %vm364, %v3749
      %3786 = vst.msk [vmem:[#allocation2 + $0xe3] sm:$0xff] %vm364, %v3750
      %3787 = vst.msk [vmem:[#allocation2 + $0xeb] sm:$0xff] %vm364, %v3751
      %3788 = vst.msk [vmem:[#allocation2 + $0xf3] sm:$0xff] %vm364, %v3752
      %3789 = vst.msk [vmem:[#allocation2 + $0xfb] sm:$0xff] %vm364, %v3753
      %3790 = vst.msk [vmem:[#allocation2 + $0x103] sm:$0xff] %vm364, %v3754
      %3791 = vst.msk [vmem:[#allocation2 + $0x10b] sm:$0xff] %vm364, %v3755
      %3792 = vst.msk [vmem:[#allocation2 + $0x113] sm:$0xff] %vm364, %v3756
      %3793 = vst.msk [vmem:[#allocation2 + $0x11b] sm:$0xff] %vm364, %v3757
      %3794 = vst.msk [vmem:[#allocation2 + $0x123] sm:$0xff] %vm364, %v3758
      %3795 = vst.msk [vmem:[#allocation2 + $0x12b] sm:$0x3f] %vm3490, %v3759
      %v3796 = vld [vmem:[#allocation2 + $0x14] sm:$0x1]
      %vm3797 = vcmask 253952
      %3798 = vst.msk [vmem:[#allocation2 + $0x12] sm:$0x1] %vm3797, %v3796
      %v3799 = vld [vmem:[#allocation2 + $0x21] sm:$0x1]
      %3800 = vst.msk [vmem:[#allocation2 + $0x23] sm:$0x1] %vm3797, %v3799
      %v3801 = vld [vmem:[#allocation2 + $0x26] sm:$0x1]
      %3802 = vst.msk [vmem:[#allocation2 + $0x24] sm:$0x1] %vm3797, %v3801
      %v3803 = vld [vmem:[#allocation2 + $0x33] sm:$0x1]
      %3804 = vst.msk [vmem:[#allocation2 + $0x35] sm:$0x1] %vm3797, %v3803
      %v3805 = vld [vmem:[#allocation2 + $0x38] sm:$0x1]
      %3806 = vst.msk [vmem:[#allocation2 + $0x36] sm:$0x1] %vm3797, %v3805
      %v3807 = vld [vmem:[#allocation2 + $0x45] sm:$0x1]
      %3808 = vst.msk [vmem:[#allocation2 + $0x47] sm:$0x1] %vm3797, %v3807
      %v3809 = vld [vmem:[#allocation2 + $0x4a] sm:$0x1]
      %3810 = vst.msk [vmem:[#allocation2 + $0x48] sm:$0x1] %vm3797, %v3809
      %v3811 = vld [vmem:[#allocation2 + $0x57] sm:$0x1]
      %3812 = vst.msk [vmem:[#allocation2 + $0x59] sm:$0x1] %vm3797, %v3811
      %v3813 = vld [vmem:[#allocation2 + $0x5c] sm:$0x1]
      %3814 = vst.msk [vmem:[#allocation2 + $0x5a] sm:$0x1] %vm3797, %v3813
      %v3815 = vld [vmem:[#allocation2 + $0x69] sm:$0x1]
      %3816 = vst.msk [vmem:[#allocation2 + $0x6b] sm:$0x1] %vm3797, %v3815
      %v3817 = vld [vmem:[#allocation2 + $0x6e] sm:$0x1]
      %3818 = vst.msk [vmem:[#allocation2 + $0x6c] sm:$0x1] %vm3797, %v3817
      %v3819 = vld [vmem:[#allocation2 + $0x7b] sm:$0x1]
      %3820 = vst.msk [vmem:[#allocation2 + $0x7d] sm:$0x1] %vm3797, %v3819
      %v3821 = vld [vmem:[#allocation2 + $0x80] sm:$0x1]
      %3822 = vst.msk [vmem:[#allocation2 + $0x7e] sm:$0x1] %vm3797, %v3821
      %v3823 = vld [vmem:[#allocation2 + $0x8d] sm:$0x1]
      %3824 = vst.msk [vmem:[#allocation2 + $0x8f] sm:$0x1] %vm3797, %v3823
      %v3825 = vld [vmem:[#allocation2 + $0x92] sm:$0x1]
      %3826 = vst.msk [vmem:[#allocation2 + $0x90] sm:$0x1] %vm3797, %v3825
      %v3827 = vld [vmem:[#allocation2 + $0x9f] sm:$0x1]
      %3828 = vst.msk [vmem:[#allocation2 + $0xa1] sm:$0x1] %vm3797, %v3827
      %v3829 = vld [vmem:[#allocation2 + $0xa4] sm:$0x1]
      %3830 = vst.msk [vmem:[#allocation2 + $0xa2] sm:$0x1] %vm3797, %v3829
      %v3831 = vld [vmem:[#allocation2 + $0xb1] sm:$0x1]
      %3832 = vst.msk [vmem:[#allocation2 + $0xb3] sm:$0x1] %vm3797, %v3831
      %v3833 = vld [vmem:[#allocation2 + $0xb6] sm:$0x1]
      %3834 = vst.msk [vmem:[#allocation2 + $0xb4] sm:$0x1] %vm3797, %v3833
      %v3835 = vld [vmem:[#allocation2 + $0xc3] sm:$0x1]
      %3836 = vst.msk [vmem:[#allocation2 + $0xc5] sm:$0x1] %vm3797, %v3835
      %v3837 = vld [vmem:[#allocation2 + $0xc8] sm:$0x1]
      %3838 = vst.msk [vmem:[#allocation2 + $0xc6] sm:$0x1] %vm3797, %v3837
      %v3839 = vld [vmem:[#allocation2 + $0xd5] sm:$0x1]
      %3840 = vst.msk [vmem:[#allocation2 + $0xd7] sm:$0x1] %vm3797, %v3839
      %v3841 = vld [vmem:[#allocation2 + $0xda] sm:$0x1]
      %3842 = vst.msk [vmem:[#allocation2 + $0xd8] sm:$0x1] %vm3797, %v3841
      %v3843 = vld [vmem:[#allocation2 + $0xe7] sm:$0x1]
      %3844 = vst.msk [vmem:[#allocation2 + $0xe9] sm:$0x1] %vm3797, %v3843
      %v3845 = vld [vmem:[#allocation2 + $0xec] sm:$0x1]
      %3846 = vst.msk [vmem:[#allocation2 + $0xea] sm:$0x1] %vm3797, %v3845
      %v3847 = vld [vmem:[#allocation2 + $0xf9] sm:$0x1]
      %3848 = vst.msk [vmem:[#allocation2 + $0xfb] sm:$0x1] %vm3797, %v3847
      %v3849 = vld [vmem:[#allocation2 + $0xfe] sm:$0x1]
      %3850 = vst.msk [vmem:[#allocation2 + $0xfc] sm:$0x1] %vm3797, %v3849
      %v3851 = vld [vmem:[#allocation2 + $0x10b] sm:$0x1]
      %3852 = vst.msk [vmem:[#allocation2 + $0x10d] sm:$0x1] %vm3797, %v3851
      %v3853 = vld [vmem:[#allocation2 + $0x110] sm:$0x1]
      %3854 = vst.msk [vmem:[#allocation2 + $0x10e] sm:$0x1] %vm3797, %v3853
      %v3855 = vld [vmem:[#allocation2 + $0x11d] sm:$0x1]
      %3856 = vst.msk [vmem:[#allocation2 + $0x11f] sm:$0x1] %vm3797, %v3855
      %v3857 = vld [vmem:[#allocation2 + $0x122] sm:$0x1]
      %3858 = vst.msk [vmem:[#allocation2 + $0x120] sm:$0x1] %vm3797, %v3857
      %v3859 = vld [vmem:[#allocation2 + $0x12f] sm:$0x1]
      %3860 = vst.msk [vmem:[#allocation2 + $0x131] sm:$0x1] %vm3797, %v3859
      %v3861 = vld [vmem:[#allocation2 + $0x24] sm:$0xff]
      %v3862 = vld [vmem:[#allocation2 + $0x2c] sm:$0xff]
      %v3863 = vld [vmem:[#allocation2 + $0x34] sm:$0x3]
      %3864 = vst.msk [vmem:[#allocation2] sm:$0xff] %vm364, %v3861
      %3865 = vst.msk [vmem:[#allocation2 + $0x8] sm:$0xff] %vm364, %v3862
      %vm3866 = vcmask 254976
      %3867 = vst.msk [vmem:[#allocation2 + $0x10] sm:$0x3] %vm3866, %v3863
      %v3868 = vld [vmem:[#allocation2 + $0x10e] sm:$0xff]
      %v3869 = vld [vmem:[#allocation2 + $0x116] sm:$0xff]
      %v3870 = vld [vmem:[#allocation2 + $0x11e] sm:$0x3]
      %3871 = vst.msk [vmem:[#allocation2 + $0x132] sm:$0xff] %vm364, %v3868
      %3872 = vst.msk [vmem:[#allocation2 + $0x13a] sm:$0xff] %vm364, %v3869
      %3873 = vst.msk [vmem:[#allocation2 + $0x142] sm:$0x3] %vm3866, %v3870
      %v3874 = vld [vmem:[#allocation2] sm:$0xff]
      %v3875 = vld [vmem:[#allocation2 + $0x8] sm:$0xff]
      %v3876 = vld [vmem:[#allocation2 + $0x10] sm:$0xff]
      %v3877 = vld [vmem:[#allocation2 + $0x18] sm:$0xff]
      %v3878 = vld [vmem:[#allocation2 + $0x20] sm:$0xff]
      %v3879 = vld [vmem:[#allocation2 + $0x28] sm:$0xff]
      %v3880 = vld [vmem:[#allocation2 + $0x30] sm:$0xff]
      %v3881 = vld [vmem:[#allocation2 + $0x38] sm:$0xff]
      %v3882 = vld [vmem:[#allocation2 + $0x40] sm:$0xff]
      %v3883 = vld [vmem:[#allocation2 + $0x48] sm:$0xff]
      %v3884 = vld [vmem:[#allocation2 + $0x50] sm:$0xff]
      %v3885 = vld [vmem:[#allocation2 + $0x58] sm:$0xff]
      %v3886 = vld [vmem:[#allocation2 + $0x60] sm:$0xff]
      %v3887 = vld [vmem:[#allocation2 + $0x68] sm:$0xff]
      %v3888 = vld [vmem:[#allocation2 + $0x70] sm:$0xff]
      %v3889 = vld [vmem:[#allocation2 + $0x78] sm:$0xff]
      %v3890 = vld [vmem:[#allocation2 + $0x80] sm:$0xff]
      %v3891 = vld [vmem:[#allocation2 + $0x88] sm:$0xff]
      %v3892 = vld [vmem:[#allocation2 + $0x90] sm:$0xff]
      %v3893 = vld [vmem:[#allocation2 + $0x98] sm:$0xff]
      %v3894 = vld [vmem:[#allocation2 + $0xa0] sm:$0xff]
      %v3895 = vld [vmem:[#allocation2 + $0xa8] sm:$0xff]
      %v3896 = vld [vmem:[#allocation2 + $0xb0] sm:$0xff]
      %v3897 = vld [vmem:[#allocation2 + $0xb8] sm:$0xff]
      %v3898 = vld [vmem:[#allocation2 + $0xc0] sm:$0xff]
      %v3899 = vld [vmem:[#allocation2 + $0xc8] sm:$0xff]
      %v3900 = vld [vmem:[#allocation2 + $0xd0] sm:$0xff]
      %v3901 = vld [vmem:[#allocation2 + $0xd8] sm:$0xff]
      %v3902 = vld [vmem:[#allocation2 + $0xe0] sm:$0xff]
      %v3903 = vld [vmem:[#allocation2 + $0xe8] sm:$0xff]
      %v3904 = vld [vmem:[#allocation2 + $0xf0] sm:$0xff]
      %v3905 = vld [vmem:[#allocation2 + $0xf8] sm:$0xff]
      %v3906 = vld [vmem:[#allocation2 + $0x100] sm:$0xff]
      %v3907 = vld [vmem:[#allocation2 + $0x108] sm:$0xff]
      %v3908 = vld [vmem:[#allocation2 + $0x110] sm:$0xff]
      %v3909 = vld [vmem:[#allocation2 + $0x118] sm:$0x3f]
      %v3910 = vpack.c.bf16 %v3875, %v3874
      %v3911 = vpack.c.bf16 %v3877, %v3876
      %v3912 = vpack.c.bf16 %v3879, %v3878
      %v3913 = vpack.c.bf16 %v3881, %v3880
      %v3914 = vpack.c.bf16 %v3883, %v3882
      %v3915 = vpack.c.bf16 %v3885, %v3884
      %v3916 = vpack.c.bf16 %v3887, %v3886
      %v3917 = vpack.c.bf16 %v3889, %v3888
      %v3918 = vpack.c.bf16 %v3891, %v3890
      %v3919 = vpack.c.bf16 %v3893, %v3892
      %v3920 = vpack.c.bf16 %v3895, %v3894
      %v3921 = vpack.c.bf16 %v3897, %v3896
      %v3922 = vpack.c.bf16 %v3899, %v3898
      %v3923 = vpack.c.bf16 %v3901, %v3900
      %v3924 = vpack.c.bf16 %v3903, %v3902
      %v3925 = vpack.c.bf16 %v3905, %v3904
      %v3926 = vpack.c.bf16 %v3907, %v3906
      %v3927 = vpack.c.bf16 %v3909, %v3908
      %v3928 = vld [vmem:[%s3] sm:$0xf]
      %v3929 = vld [vmem:[%s3 + $0x4] sm:$0xf]
      %v3930 = vld [vmem:[%s3 + $0x8] sm:$0xf]
      %v3931 = vld [vmem:[%s3 + $0xc] sm:$0xf]
      %v3932 = vld [vmem:[#allocation2 + $0x1] sm:$0xff]
      %v3933 = vld [vmem:[#allocation2 + $0x9] sm:$0xff]
      %v3934 = vld [vmem:[#allocation2 + $0x11] sm:$0xff]
      %v3935 = vld [vmem:[#allocation2 + $0x19] sm:$0xff]
      %v3936 = vld [vmem:[#allocation2 + $0x21] sm:$0xff]
      %v3937 = vld [vmem:[#allocation2 + $0x29] sm:$0xff]
      %v3938 = vld [vmem:[#allocation2 + $0x31] sm:$0xff]
      %v3939 = vld [vmem:[#allocation2 + $0x39] sm:$0xff]
      %v3940 = vld [vmem:[#allocation2 + $0x41] sm:$0xff]
      %v3941 = vld [vmem:[#allocation2 + $0x49] sm:$0xff]
      %v3942 = vld [vmem:[#allocation2 + $0x51] sm:$0xff]
      %v3943 = vld [vmem:[#allocation2 + $0x59] sm:$0xff]
      %v3944 = vld [vmem:[#allocation2 + $0x61] sm:$0xff]
      %v3945 = vld [vmem:[#allocation2 + $0x69] sm:$0xff]
      %v3946 = vld [vmem:[#allocation2 + $0x71] sm:$0xff]
      %v3947 = vld [vmem:[#allocation2 + $0x79] sm:$0xff]
      %v3948 = vld [vmem:[#allocation2 + $0x81] sm:$0xff]
      %v3949 = vld [vmem:[#allocation2 + $0x89] sm:$0xff]
      %v3950 = vld [vmem:[#allocation2 + $0x91] sm:$0xff]
      %v3951 = vld [vmem:[#allocation2 + $0x99] sm:$0xff]
      %v3952 = vld [vmem:[#allocation2 + $0xa1] sm:$0xff]
      %v3953 = vld [vmem:[#allocation2 + $0xa9] sm:$0xff]
      %v3954 = vld [vmem:[#allocation2 + $0xb1] sm:$0xff]
      %v3955 = vld [vmem:[#allocation2 + $0xb9] sm:$0xff]
      %v3956 = vld [vmem:[#allocation2 + $0xc1] sm:$0xff]
      %v3957 = vld [vmem:[#allocation2 + $0xc9] sm:$0xff]
      %v3958 = vld [vmem:[#allocation2 + $0xd1] sm:$0xff]
      %v3959 = vld [vmem:[#allocation2 + $0xd9] sm:$0xff]
      %v3960 = vld [vmem:[#allocation2 + $0xe1] sm:$0xff]
      %v3961 = vld [vmem:[#allocation2 + $0xe9] sm:$0xff]
      %v3962 = vld [vmem:[#allocation2 + $0xf1] sm:$0xff]
      %v3963 = vld [vmem:[#allocation2 + $0xf9] sm:$0xff]
      %v3964 = vld [vmem:[#allocation2 + $0x101] sm:$0xff]
      %v3965 = vld [vmem:[#allocation2 + $0x109] sm:$0xff]
      %v3966 = vld [vmem:[#allocation2 + $0x111] sm:$0xff]
      %v3967 = vld [vmem:[#allocation2 + $0x119] sm:$0x3f]
      %v3968 = vpack.c.bf16 %v3933, %v3932
      %v3969 = vpack.c.bf16 %v3935, %v3934
      %v3970 = vpack.c.bf16 %v3937, %v3936
      %v3971 = vpack.c.bf16 %v3939, %v3938
      %v3972 = vpack.c.bf16 %v3941, %v3940
      %v3973 = vpack.c.bf16 %v3943, %v3942
      %v3974 = vpack.c.bf16 %v3945, %v3944
      %v3975 = vpack.c.bf16 %v3947, %v3946
      %v3976 = vpack.c.bf16 %v3949, %v3948
      %v3977 = vpack.c.bf16 %v3951, %v3950
      %v3978 = vpack.c.bf16 %v3953, %v3952
      %v3979 = vpack.c.bf16 %v3955, %v3954
      %v3980 = vpack.c.bf16 %v3957, %v3956
      %v3981 = vpack.c.bf16 %v3959, %v3958
      %v3982 = vpack.c.bf16 %v3961, %v3960
      %v3983 = vpack.c.bf16 %v3963, %v3962
      %v3984 = vpack.c.bf16 %v3965, %v3964
      %v3985 = vpack.c.bf16 %v3967, %v3966
      %s3986 = scalar_lea.vmem %s3, 16
      %v3987 = vld [vmem:[%s3986] sm:$0xf]
      %v3988 = vld [vmem:[%s3986 + $0x4] sm:$0xf]
      %v3989 = vld [vmem:[%s3986 + $0x8] sm:$0xf]
      %v3990 = vld [vmem:[%s3986 + $0xc] sm:$0xf]
      %v3995 = vunpack.c.l.b16 %v3987
      %v3996 = vunpack.c.l.b16 %v3988
      %v3997 = vunpack.c.l.b16 %v3989
      %v3998 = vunpack.c.l.b16 %v3990
      %v3999 = vpack.c.b16 %v3996, %v3995
      %v4000 = vpack.c.b16 %v3998, %v3997
      %v4004 = vsel %vm364, %v3968, 0
      %v4007 = vsel %vm364, %v3969, 0
      %v4010 = vsel %vm364, %v3970, 0
      %v4013 = vsel %vm364, %v3971, 0
      %v4016 = vsel %vm364, %v3972, 0
      %v4019 = vsel %vm364, %v3973, 0
      %v4022 = vsel %vm364, %v3974, 0
      %v4025 = vsel %vm364, %v3975, 0
      %v4028 = vsel %vm364, %v3976, 0
      %v4031 = vsel %vm364, %v3977, 0
      %v4034 = vsel %vm364, %v3978, 0
      %v4037 = vsel %vm364, %v3979, 0
      %v4040 = vsel %vm364, %v3980, 0
      %v4043 = vsel %vm364, %v3981, 0
      %v4046 = vsel %vm364, %v3982, 0
      %v4049 = vsel %vm364, %v3983, 0
      %v4052 = vsel %vm364, %v3984, 0
      %v4055 = vsel %vm364, %v3985, 0
      %4057 = vmatprep.subr.bf16.mxu0 0
      %4058 = vmatpush1.bf16.msra.mxu0 %v3999
      %4059 = vmatprep.subr.bf16.mxu0 0
      %4060 = vmatpush1.bf16.msra.mxu0 %v4000
      %4061 = vmatprep.subr.bf16.mxu0 0
      %4062 = vmatpush1.bf16.msra.mxu0 0
      %4063 = vmatprep.subr.bf16.mxu0 0
      %4064 = vmatpush1.bf16.msra.mxu0 0
      %4065 = vmatprep.subr.bf16.mxu0 0
      %4066 = vmatpush1.bf16.msra.mxu0 0
      %4067 = vmatprep.subr.bf16.mxu0 0
      %4068 = vmatpush1.bf16.msra.mxu0 0
      %4069 = vmatprep.subr.bf16.mxu0 0
      %4070 = vmatpush1.bf16.msra.mxu0 0
      %4071 = vmatprep.subr.bf16.mxu0 0
      %4072 = vmatpush1.bf16.msra.mxu0 0
      %4073 = vmatprep.subr.bf16.mxu0 0
      %4074 = vmatpush1.bf16.msra.mxu0 0
      %4075 = vmatprep.subr.bf16.mxu0 0
      %4076 = vmatpush1.bf16.msra.mxu0 0
      %4077 = vmatprep.subr.bf16.mxu0 0
      %4078 = vmatpush1.bf16.msra.mxu0 0
      %4079 = vmatprep.subr.bf16.mxu0 0
      %4080 = vmatpush1.bf16.msra.mxu0 0
      %4081 = vmatprep.subr.bf16.mxu0 0
      %4082 = vmatpush1.bf16.msra.mxu0 0
      %4083 = vmatprep.subr.bf16.mxu0 0
      %4084 = vmatpush1.bf16.msra.mxu0 0
      %4085 = vmatprep.subr.bf16.mxu0 0
      %4086 = vmatpush1.bf16.msra.mxu0 0
      %4087 = vmatprep.subr.bf16.mxu0 0
      %4088 = vmatpush1.bf16.msra.mxu0 0
      %4089 = vmatprep.mubr.bf16.mxu0 0
      %4090 = vmatmul.mubr.bf16.gmra.mrb[0].mxu0 %v4004
      %v4091 = vpop.f32.mrb[0].mxu0
      %v4092 = vadd.f32 0.0, %v4091
      %v4093 = vpop.f32.mrb[0].mxu0
      %v4094 = vpop.f32.mrb[0].mxu0
      %v4095 = vadd.f32 0.0, %v4094
      %v4096 = vpop.f32.mrb[0].mxu0
      %4097 = vmatprep.mubr.bf16.mxu0 0
      %4098 = vmatmul.mubr.bf16.gmra.mrb[0].mxu0 %v4007
      %v4099 = vpop.f32.mrb[0].mxu0
      %v4100 = vadd.f32 0.0, %v4099
      %v4101 = vpop.f32.mrb[0].mxu0
      %v4102 = vpop.f32.mrb[0].mxu0
      %v4103 = vadd.f32 0.0, %v4102
      %v4104 = vpop.f32.mrb[0].mxu0
      %4105 = vmatprep.mubr.bf16.mxu0 0
      %4106 = vmatmul.mubr.bf16.gmra.mrb[0].mxu0 %v4010
      %v4107 = vpop.f32.mrb[0].mxu0
      %v4108 = vadd.f32 0.0, %v4107
      %v4109 = vpop.f32.mrb[0].mxu0
      %v4110 = vpop.f32.mrb[0].mxu0
      %v4111 = vadd.f32 0.0, %v4110
      %v4112 = vpop.f32.mrb[0].mxu0
      %4113 = vmatprep.mubr.bf16.mxu0 0
      %4114 = vmatmul.mubr.bf16.gmra.mrb[0].mxu0 %v4013
      %v4115 = vpop.f32.mrb[0].mxu0
      %v4116 = vadd.f32 0.0, %v4115
      %v4117 = vpop.f32.mrb[0].mxu0
      %v4118 = vpop.f32.mrb[0].mxu0
      %v4119 = vadd.f32 0.0, %v4118
      %v4120 = vpop.f32.mrb[0].mxu0
      %4121 = vmatprep.mubr.bf16.mxu0 0
      %4122 = vmatmul.mubr.bf16.gmra.mrb[0].mxu0 %v4016
      %v4123 = vpop.f32.mrb[0].mxu0
      %v4124 = vadd.f32 0.0, %v4123
      %v4125 = vpop.f32.mrb[0].mxu0
      %v4126 = vpop.f32.mrb[0].mxu0
      %v4127 = vadd.f32 0.0, %v4126
      %v4128 = vpop.f32.mrb[0].mxu0
      %4129 = vmatprep.mubr.bf16.mxu0 0
      %4130 = vmatmul.mubr.bf16.gmra.mrb[0].mxu0 %v4019
      %v4131 = vpop.f32.mrb[0].mxu0
      %v4132 = vadd.f32 0.0, %v4131
      %v4133 = vpop.f32.mrb[0].mxu0
      %v4134 = vpop.f32.mrb[0].mxu0
      %v4135 = vadd.f32 0.0, %v4134
      %v4136 = vpop.f32.mrb[0].mxu0
      %4137 = vmatprep.mubr.bf16.mxu0 0
      %4138 = vmatmul.mubr.bf16.gmra.mrb[0].mxu0 %v4022
      %v4139 = vpop.f32.mrb[0].mxu0
      %v4140 = vadd.f32 0.0, %v4139
      %v4141 = vpop.f32.mrb[0].mxu0
      %v4142 = vpop.f32.mrb[0].mxu0
      %v4143 = vadd.f32 0.0, %v4142
      %v4144 = vpop.f32.mrb[0].mxu0
      %4145 = vmatprep.mubr.bf16.mxu0 0
      %4146 = vmatmul.mubr.bf16.gmra.mrb[0].mxu0 %v4025
      %v4147 = vpop.f32.mrb[0].mxu0
      %v4148 = vadd.f32 0.0, %v4147
      %v4149 = vpop.f32.mrb[0].mxu0
      %v4150 = vpop.f32.mrb[0].mxu0
      %v4151 = vadd.f32 0.0, %v4150
      %v4152 = vpop.f32.mrb[0].mxu0
      %4153 = vmatprep.mubr.bf16.mxu0 0
      %4154 = vmatmul.mubr.bf16.gmra.mrb[0].mxu0 %v4028
      %v4155 = vpop.f32.mrb[0].mxu0
      %v4156 = vadd.f32 0.0, %v4155
      %v4157 = vpop.f32.mrb[0].mxu0
      %v4158 = vpop.f32.mrb[0].mxu0
      %v4159 = vadd.f32 0.0, %v4158
      %v4160 = vpop.f32.mrb[0].mxu0
      %4161 = vmatprep.mubr.bf16.mxu0 0
      %4162 = vmatmul.mubr.bf16.gmra.mrb[0].mxu0 %v4031
      %v4163 = vpop.f32.mrb[0].mxu0
      %v4164 = vadd.f32 0.0, %v4163
      %v4165 = vpop.f32.mrb[0].mxu0
      %v4166 = vpop.f32.mrb[0].mxu0
      %v4167 = vadd.f32 0.0, %v4166
      %v4168 = vpop.f32.mrb[0].mxu0
      %4169 = vmatprep.mubr.bf16.mxu0 0
      %4170 = vmatmul.mubr.bf16.gmra.mrb[0].mxu0 %v4034
      %v4171 = vpop.f32.mrb[0].mxu0
      %v4172 = vadd.f32 0.0, %v4171
      %v4173 = vpop.f32.mrb[0].mxu0
      %v4174 = vpop.f32.mrb[0].mxu0
      %v4175 = vadd.f32 0.0, %v4174
      %v4176 = vpop.f32.mrb[0].mxu0
      %4177 = vmatprep.mubr.bf16.mxu0 0
      %4178 = vmatmul.mubr.bf16.gmra.mrb[0].mxu0 %v4037
      %v4179 = vpop.f32.mrb[0].mxu0
      %v4180 = vadd.f32 0.0, %v4179
      %v4181 = vpop.f32.mrb[0].mxu0
      %v4182 = vpop.f32.mrb[0].mxu0
      %v4183 = vadd.f32 0.0, %v4182
      %v4184 = vpop.f32.mrb[0].mxu0
      %4185 = vmatprep.mubr.bf16.mxu0 0
      %4186 = vmatmul.mubr.bf16.gmra.mrb[0].mxu0 %v4040
      %v4187 = vpop.f32.mrb[0].mxu0
      %v4188 = vadd.f32 0.0, %v4187
      %v4189 = vpop.f32.mrb[0].mxu0
      %v4190 = vpop.f32.mrb[0].mxu0
      %v4191 = vadd.f32 0.0, %v4190
      %v4192 = vpop.f32.mrb[0].mxu0
      %4193 = vmatprep.mubr.bf16.mxu0 0
      %4194 = vmatmul.mubr.bf16.gmra.mrb[0].mxu0 %v4043
      %v4195 = vpop.f32.mrb[0].mxu0
      %v4196 = vadd.f32 0.0, %v4195
      %v4197 = vpop.f32.mrb[0].mxu0
      %v4198 = vpop.f32.mrb[0].mxu0
      %v4199 = vadd.f32 0.0, %v4198
      %v4200 = vpop.f32.mrb[0].mxu0
      %4201 = vmatprep.mubr.bf16.mxu0 0
      %4202 = vmatmul.mubr.bf16.gmra.mrb[0].mxu0 %v4046
      %v4203 = vpop.f32.mrb[0].mxu0
      %v4204 = vadd.f32 0.0, %v4203
      %v4205 = vpop.f32.mrb[0].mxu0
      %v4206 = vpop.f32.mrb[0].mxu0
      %v4207 = vadd.f32 0.0, %v4206
      %v4208 = vpop.f32.mrb[0].mxu0
      %4209 = vmatprep.mubr.bf16.mxu0 0
      %4210 = vmatmul.mubr.bf16.gmra.mrb[0].mxu0 %v4049
      %v4211 = vpop.f32.mrb[0].mxu0
      %v4212 = vadd.f32 0.0, %v4211
      %v4213 = vpop.f32.mrb[0].mxu0
      %v4214 = vpop.f32.mrb[0].mxu0
      %v4215 = vadd.f32 0.0, %v4214
      %v4216 = vpop.f32.mrb[0].mxu0
      %4217 = vmatprep.mubr.bf16.mxu0 0
      %4218 = vmatmul.mubr.bf16.gmra.mrb[0].mxu0 %v4052
      %v4219 = vpop.f32.mrb[0].mxu0
      %v4220 = vadd.f32 0.0, %v4219
      %v4221 = vpop.f32.mrb[0].mxu0
      %v4222 = vpop.f32.mrb[0].mxu0
      %v4223 = vadd.f32 0.0, %v4222
      %v4224 = vpop.f32.mrb[0].mxu0
      %4225 = vmatprep.mubr.bf16.mxu0 0
      %4226 = vmatmul.mubr.bf16.gmra.mrb[0].mxu0 %v4055
      %v4227 = vpop.f32.mrb[0].mxu0
      %v4228 = vadd.f32 0.0, %v4227
      %v4229 = vpop.f32.mrb[0].mxu0
      %v4230 = vpop.f32.mrb[0].mxu0
      %v4231 = vadd.f32 0.0, %v4230
      %v4232 = vpop.f32.mrb[0].mxu0
      %4233 = vdwg.mxu0
      %v4238 = vunpack.c.l.b16 %v3928
      %v4239 = vunpack.c.l.b16 %v3929
      %v4240 = vunpack.c.l.b16 %v3930
      %v4241 = vunpack.c.l.b16 %v3931
      %v4242 = vpack.c.b16 %v4239, %v4238
      %v4243 = vpack.c.b16 %v4241, %v4240
      %v4247 = vsel %vm364, %v3910, 0
      %v4250 = vsel %vm364, %v3911, 0
      %v4253 = vsel %vm364, %v3912, 0
      %v4256 = vsel %vm364, %v3913, 0
      %v4259 = vsel %vm364, %v3914, 0
      %v4262 = vsel %vm364, %v3915, 0
      %v4265 = vsel %vm364, %v3916, 0
      %v4268 = vsel %vm364, %v3917, 0
      %v4271 = vsel %vm364, %v3918, 0
      %v4274 = vsel %vm364, %v3919, 0
      %v4277 = vsel %vm364, %v3920, 0
      %v4280 = vsel %vm364, %v3921, 0
      %v4283 = vsel %vm364, %v3922, 0
      %v4286 = vsel %vm364, %v3923, 0
      %v4289 = vsel %vm364, %v3924, 0
      %v4292 = vsel %vm364, %v3925, 0
      %v4295 = vsel %vm364, %v3926, 0
      %v4298 = vsel %vm364, %v3927, 0
      %4300 = vmatprep.subr.bf16.mxu0 0
      %4301 = vmatpush1.bf16.msra.mxu0 %v4242
      %4302 = vmatprep.subr.bf16.mxu0 0
      %4303 = vmatpush1.bf16.msra.mxu0 %v4243
      %4304 = vmatprep.subr.bf16.mxu0 0
      %4305 = vmatpush1.bf16.msra.mxu0 0
      %4306 = vmatprep.subr.bf16.mxu0 0
      %4307 = vmatpush1.bf16.msra.mxu0 0
      %4308 = vmatprep.subr.bf16.mxu0 0
      %4309 = vmatpush1.bf16.msra.mxu0 0
      %4310 = vmatprep.subr.bf16.mxu0 0
      %4311 = vmatpush1.bf16.msra.mxu0 0
      %4312 = vmatprep.subr.bf16.mxu0 0
      %4313 = vmatpush1.bf16.msra.mxu0 0
      %4314 = vmatprep.subr.bf16.mxu0 0
      %4315 = vmatpush1.bf16.msra.mxu0 0
      %4316 = vmatprep.subr.bf16.mxu0 0
      %4317 = vmatpush1.bf16.msra.mxu0 0
      %4318 = vmatprep.subr.bf16.mxu0 0
      %4319 = vmatpush1.bf16.msra.mxu0 0
      %4320 = vmatprep.subr.bf16.mxu0 0
      %4321 = vmatpush1.bf16.msra.mxu0 0
      %4322 = vmatprep.subr.bf16.mxu0 0
      %4323 = vmatpush1.bf16.msra.mxu0 0
      %4324 = vmatprep.subr.bf16.mxu0 0
      %4325 = vmatpush1.bf16.msra.mxu0 0
      %4326 = vmatprep.subr.bf16.mxu0 0
      %4327 = vmatpush1.bf16.msra.mxu0 0
      %4328 = vmatprep.subr.bf16.mxu0 0
      %4329 = vmatpush1.bf16.msra.mxu0 0
      %4330 = vmatprep.subr.bf16.mxu0 0
      %4331 = vmatpush1.bf16.msra.mxu0 0
      %4332 = vmatprep.mubr.bf16.mxu0 0
      %4333 = vmatmul.mubr.bf16.gmra.mrb[0].mxu0 %v4247
      %v4334 = vpop.f32.mrb[0].mxu0
      %v4335 = vadd.f32 %v4092, %v4334
      %v4336 = vpop.f32.mrb[0].mxu0
      %v4337 = vpop.f32.mrb[0].mxu0
      %v4338 = vadd.f32 %v4095, %v4337
      %v4339 = vpop.f32.mrb[0].mxu0
      %4340 = vmatprep.mubr.bf16.mxu0 0
      %4341 = vmatmul.mubr.bf16.gmra.mrb[0].mxu0 %v4250
      %v4342 = vpop.f32.mrb[0].mxu0
      %v4343 = vadd.f32 %v4100, %v4342
      %v4344 = vpop.f32.mrb[0].mxu0
      %v4345 = vpop.f32.mrb[0].mxu0
      %v4346 = vadd.f32 %v4103, %v4345
      %v4347 = vpop.f32.mrb[0].mxu0
      %4348 = vmatprep.mubr.bf16.mxu0 0
      %4349 = vmatmul.mubr.bf16.gmra.mrb[0].mxu0 %v4253
      %v4350 = vpop.f32.mrb[0].mxu0
      %v4351 = vadd.f32 %v4108, %v4350
      %v4352 = vpop.f32.mrb[0].mxu0
      %v4353 = vpop.f32.mrb[0].mxu0
      %v4354 = vadd.f32 %v4111, %v4353
      %v4355 = vpop.f32.mrb[0].mxu0
      %4356 = vmatprep.mubr.bf16.mxu0 0
      %4357 = vmatmul.mubr.bf16.gmra.mrb[0].mxu0 %v4256
      %v4358 = vpop.f32.mrb[0].mxu0
      %v4359 = vadd.f32 %v4116, %v4358
      %v4360 = vpop.f32.mrb[0].mxu0
      %v4361 = vpop.f32.mrb[0].mxu0
      %v4362 = vadd.f32 %v4119, %v4361
      %v4363 = vpop.f32.mrb[0].mxu0
      %4364 = vmatprep.mubr.bf16.mxu0 0
      %4365 = vmatmul.mubr.bf16.gmra.mrb[0].mxu0 %v4259
      %v4366 = vpop.f32.mrb[0].mxu0
      %v4367 = vadd.f32 %v4124, %v4366
      %v4368 = vpop.f32.mrb[0].mxu0
      %v4369 = vpop.f32.mrb[0].mxu0
      %v4370 = vadd.f32 %v4127, %v4369
      %v4371 = vpop.f32.mrb[0].mxu0
      %4372 = vmatprep.mubr.bf16.mxu0 0
      %4373 = vmatmul.mubr.bf16.gmra.mrb[0].mxu0 %v4262
      %v4374 = vpop.f32.mrb[0].mxu0
      %v4375 = vadd.f32 %v4132, %v4374
      %v4376 = vpop.f32.mrb[0].mxu0
      %v4377 = vpop.f32.mrb[0].mxu0
      %v4378 = vadd.f32 %v4135, %v4377
      %v4379 = vpop.f32.mrb[0].mxu0
      %4380 = vmatprep.mubr.bf16.mxu0 0
      %4381 = vmatmul.mubr.bf16.gmra.mrb[0].mxu0 %v4265
      %v4382 = vpop.f32.mrb[0].mxu0
      %v4383 = vadd.f32 %v4140, %v4382
      %v4384 = vpop.f32.mrb[0].mxu0
      %v4385 = vpop.f32.mrb[0].mxu0
      %v4386 = vadd.f32 %v4143, %v4385
      %v4387 = vpop.f32.mrb[0].mxu0
      %4388 = vmatprep.mubr.bf16.mxu0 0
      %4389 = vmatmul.mubr.bf16.gmra.mrb[0].mxu0 %v4268
      %v4390 = vpop.f32.mrb[0].mxu0
      %v4391 = vadd.f32 %v4148, %v4390
      %v4392 = vpop.f32.mrb[0].mxu0
      %v4393 = vpop.f32.mrb[0].mxu0
      %v4394 = vadd.f32 %v4151, %v4393
      %v4395 = vpop.f32.mrb[0].mxu0
      %4396 = vmatprep.mubr.bf16.mxu0 0
      %4397 = vmatmul.mubr.bf16.gmra.mrb[0].mxu0 %v4271
      %v4398 = vpop.f32.mrb[0].mxu0
      %v4399 = vadd.f32 %v4156, %v4398
      %v4400 = vpop.f32.mrb[0].mxu0
      %v4401 = vpop.f32.mrb[0].mxu0
      %v4402 = vadd.f32 %v4159, %v4401
      %v4403 = vpop.f32.mrb[0].mxu0
      %4404 = vmatprep.mubr.bf16.mxu0 0
      %4405 = vmatmul.mubr.bf16.gmra.mrb[0].mxu0 %v4274
      %v4406 = vpop.f32.mrb[0].mxu0
      %v4407 = vadd.f32 %v4164, %v4406
      %v4408 = vpop.f32.mrb[0].mxu0
      %v4409 = vpop.f32.mrb[0].mxu0
      %v4410 = vadd.f32 %v4167, %v4409
      %v4411 = vpop.f32.mrb[0].mxu0
      %4412 = vmatprep.mubr.bf16.mxu0 0
      %4413 = vmatmul.mubr.bf16.gmra.mrb[0].mxu0 %v4277
      %v4414 = vpop.f32.mrb[0].mxu0
      %v4415 = vadd.f32 %v4172, %v4414
      %v4416 = vpop.f32.mrb[0].mxu0
      %v4417 = vpop.f32.mrb[0].mxu0
      %v4418 = vadd.f32 %v4175, %v4417
      %v4419 = vpop.f32.mrb[0].mxu0
      %4420 = vmatprep.mubr.bf16.mxu0 0
      %4421 = vmatmul.mubr.bf16.gmra.mrb[0].mxu0 %v4280
      %v4422 = vpop.f32.mrb[0].mxu0
      %v4423 = vadd.f32 %v4180, %v4422
      %v4424 = vpop.f32.mrb[0].mxu0
      %v4425 = vpop.f32.mrb[0].mxu0
      %v4426 = vadd.f32 %v4183, %v4425
      %v4427 = vpop.f32.mrb[0].mxu0
      %4428 = vmatprep.mubr.bf16.mxu0 0
      %4429 = vmatmul.mubr.bf16.gmra.mrb[0].mxu0 %v4283
      %v4430 = vpop.f32.mrb[0].mxu0
      %v4431 = vadd.f32 %v4188, %v4430
      %v4432 = vpop.f32.mrb[0].mxu0
      %v4433 = vpop.f32.mrb[0].mxu0
      %v4434 = vadd.f32 %v4191, %v4433
      %v4435 = vpop.f32.mrb[0].mxu0
      %4436 = vmatprep.mubr.bf16.mxu0 0
      %4437 = vmatmul.mubr.bf16.gmra.mrb[0].mxu0 %v4286
      %v4438 = vpop.f32.mrb[0].mxu0
      %v4439 = vadd.f32 %v4196, %v4438
      %v4440 = vpop.f32.mrb[0].mxu0
      %v4441 = vpop.f32.mrb[0].mxu0
      %v4442 = vadd.f32 %v4199, %v4441
      %v4443 = vpop.f32.mrb[0].mxu0
      %4444 = vmatprep.mubr.bf16.mxu0 0
      %4445 = vmatmul.mubr.bf16.gmra.mrb[0].mxu0 %v4289
      %v4446 = vpop.f32.mrb[0].mxu0
      %v4447 = vadd.f32 %v4204, %v4446
      %v4448 = vpop.f32.mrb[0].mxu0
      %v4449 = vpop.f32.mrb[0].mxu0
      %v4450 = vadd.f32 %v4207, %v4449
      %v4451 = vpop.f32.mrb[0].mxu0
      %4452 = vmatprep.mubr.bf16.mxu0 0
      %4453 = vmatmul.mubr.bf16.gmra.mrb[0].mxu0 %v4292
      %v4454 = vpop.f32.mrb[0].mxu0
      %v4455 = vadd.f32 %v4212, %v4454
      %v4456 = vpop.f32.mrb[0].mxu0
      %v4457 = vpop.f32.mrb[0].mxu0
      %v4458 = vadd.f32 %v4215, %v4457
      %v4459 = vpop.f32.mrb[0].mxu0
      %4460 = vmatprep.mubr.bf16.mxu0 0
      %4461 = vmatmul.mubr.bf16.gmra.mrb[0].mxu0 %v4295
      %v4462 = vpop.f32.mrb[0].mxu0
      %v4463 = vadd.f32 %v4220, %v4462
      %v4464 = vpop.f32.mrb[0].mxu0
      %v4465 = vpop.f32.mrb[0].mxu0
      %v4466 = vadd.f32 %v4223, %v4465
      %v4467 = vpop.f32.mrb[0].mxu0
      %4468 = vmatprep.mubr.bf16.mxu0 0
      %4469 = vmatmul.mubr.bf16.gmra.mrb[0].mxu0 %v4298
      %v4470 = vpop.f32.mrb[0].mxu0
      %v4471 = vadd.f32 %v4228, %v4470
      %v4472 = vpop.f32.mrb[0].mxu0
      %v4473 = vpop.f32.mrb[0].mxu0
      %v4474 = vadd.f32 %v4231, %v4473
      %v4475 = vpop.f32.mrb[0].mxu0
      %4476 = vdwg.mxu0
      %v4477 = vld [vmem:[#allocation2 + $0x2] sm:$0xff]
      %v4478 = vld [vmem:[#allocation2 + $0xa] sm:$0xff]
      %v4479 = vld [vmem:[#allocation2 + $0x12] sm:$0xff]
      %v4480 = vld [vmem:[#allocation2 + $0x1a] sm:$0xff]
      %v4481 = vld [vmem:[#allocation2 + $0x22] sm:$0xff]
      %v4482 = vld [vmem:[#allocation2 + $0x2a] sm:$0xff]
      %v4483 = vld [vmem:[#allocation2 + $0x32] sm:$0xff]
      %v4484 = vld [vmem:[#allocation2 + $0x3a] sm:$0xff]
      %v4485 = vld [vmem:[#allocation2 + $0x42] sm:$0xff]
      %v4486 = vld [vmem:[#allocation2 + $0x4a] sm:$0xff]
      %v4487 = vld [vmem:[#allocation2 + $0x52] sm:$0xff]
      %v4488 = vld [vmem:[#allocation2 + $0x5a] sm:$0xff]
      %v4489 = vld [vmem:[#allocation2 + $0x62] sm:$0xff]
      %v4490 = vld [vmem:[#allocation2 + $0x6a] sm:$0xff]
      %v4491 = vld [vmem:[#allocation2 + $0x72] sm:$0xff]
      %v4492 = vld [vmem:[#allocation2 + $0x7a] sm:$0xff]
      %v4493 = vld [vmem:[#allocation2 + $0x82] sm:$0xff]
      %v4494 = vld [vmem:[#allocation2 + $0x8a] sm:$0xff]
      %v4495 = vld [vmem:[#allocation2 + $0x92] sm:$0xff]
      %v4496 = vld [vmem:[#allocation2 + $0x9a] sm:$0xff]
      %v4497 = vld [vmem:[#allocation2 + $0xa2] sm:$0xff]
      %v4498 = vld [vmem:[#allocation2 + $0xaa] sm:$0xff]
      %v4499 = vld [vmem:[#allocation2 + $0xb2] sm:$0xff]
      %v4500 = vld [vmem:[#allocation2 + $0xba] sm:$0xff]
      %v4501 = vld [vmem:[#allocation2 + $0xc2] sm:$0xff]
      %v4502 = vld [vmem:[#allocation2 + $0xca] sm:$0xff]
      %v4503 = vld [vmem:[#allocation2 + $0xd2] sm:$0xff]
      %v4504 = vld [vmem:[#allocation2 + $0xda] sm:$0xff]
      %v4505 = vld [vmem:[#allocation2 + $0xe2] sm:$0xff]
      %v4506 = vld [vmem:[#allocation2 + $0xea] sm:$0xff]
      %v4507 = vld [vmem:[#allocation2 + $0xf2] sm:$0xff]
      %v4508 = vld [vmem:[#allocation2 + $0xfa] sm:$0xff]
      %v4509 = vld [vmem:[#allocation2 + $0x102] sm:$0xff]
      %v4510 = vld [vmem:[#allocation2 + $0x10a] sm:$0xff]
      %v4511 = vld [vmem:[#allocation2 + $0x112] sm:$0xff]
      %v4512 = vld [vmem:[#allocation2 + $0x11a] sm:$0x3f]
      %v4513 = vpack.c.bf16 %v4478, %v4477
      %v4514 = vpack.c.bf16 %v4480, %v4479
      %v4515 = vpack.c.bf16 %v4482, %v4481
      %v4516 = vpack.c.bf16 %v4484, %v4483
      %v4517 = vpack.c.bf16 %v4486, %v4485
      %v4518 = vpack.c.bf16 %v4488, %v4487
      %v4519 = vpack.c.bf16 %v4490, %v4489
      %v4520 = vpack.c.bf16 %v4492, %v4491
      %v4521 = vpack.c.bf16 %v4494, %v4493
      %v4522 = vpack.c.bf16 %v4496, %v4495
      %v4523 = vpack.c.bf16 %v4498, %v4497
      %v4524 = vpack.c.bf16 %v4500, %v4499
      %v4525 = vpack.c.bf16 %v4502, %v4501
      %v4526 = vpack.c.bf16 %v4504, %v4503
      %v4527 = vpack.c.bf16 %v4506, %v4505
      %v4528 = vpack.c.bf16 %v4508, %v4507
      %v4529 = vpack.c.bf16 %v4510, %v4509
      %v4530 = vpack.c.bf16 %v4512, %v4511
      %s4531 = scalar_lea.vmem %s3, 32
      %v4532 = vld [vmem:[%s4531] sm:$0xf]
      %v4533 = vld [vmem:[%s4531 + $0x4] sm:$0xf]
      %v4534 = vld [vmem:[%s4531 + $0x8] sm:$0xf]
      %v4535 = vld [vmem:[%s4531 + $0xc] sm:$0xf]
      %v4540 = vunpack.c.l.b16 %v4532
      %v4541 = vunpack.c.l.b16 %v4533
      %v4542 = vunpack.c.l.b16 %v4534
      %v4543 = vunpack.c.l.b16 %v4535
      %v4544 = vpack.c.b16 %v4541, %v4540
      %v4545 = vpack.c.b16 %v4543, %v4542
      %v4549 = vsel %vm364, %v4513, 0
      %v4552 = vsel %vm364, %v4514, 0
      %v4555 = vsel %vm364, %v4515, 0
      %v4558 = vsel %vm364, %v4516, 0
      %v4561 = vsel %vm364, %v4517, 0
      %v4564 = vsel %vm364, %v4518, 0
      %v4567 = vsel %vm364, %v4519, 0
      %v4570 = vsel %vm364, %v4520, 0
      %v4573 = vsel %vm364, %v4521, 0
      %v4576 = vsel %vm364, %v4522, 0
      %v4579 = vsel %vm364, %v4523, 0
      %v4582 = vsel %vm364, %v4524, 0
      %v4585 = vsel %vm364, %v4525, 0
      %v4588 = vsel %vm364, %v4526, 0
      %v4591 = vsel %vm364, %v4527, 0
      %v4594 = vsel %vm364, %v4528, 0
      %v4597 = vsel %vm364, %v4529, 0
      %v4600 = vsel %vm364, %v4530, 0
      %4602 = vmatprep.subr.bf16.mxu0 0
      %4603 = vmatpush1.bf16.msra.mxu0 %v4544
      %4604 = vmatprep.subr.bf16.mxu0 0
      %4605 = vmatpush1.bf16.msra.mxu0 %v4545
      %4606 = vmatprep.subr.bf16.mxu0 0
      %4607 = vmatpush1.bf16.msra.mxu0 0
      %4608 = vmatprep.subr.bf16.mxu0 0
      %4609 = vmatpush1.bf16.msra.mxu0 0
      %4610 = vmatprep.subr.bf16.mxu0 0
      %4611 = vmatpush1.bf16.msra.mxu0 0
      %4612 = vmatprep.subr.bf16.mxu0 0
      %4613 = vmatpush1.bf16.msra.mxu0 0
      %4614 = vmatprep.subr.bf16.mxu0 0
      %4615 = vmatpush1.bf16.msra.mxu0 0
      %4616 = vmatprep.subr.bf16.mxu0 0
      %4617 = vmatpush1.bf16.msra.mxu0 0
      %4618 = vmatprep.subr.bf16.mxu0 0
      %4619 = vmatpush1.bf16.msra.mxu0 0
      %4620 = vmatprep.subr.bf16.mxu0 0
      %4621 = vmatpush1.bf16.msra.mxu0 0
      %4622 = vmatprep.subr.bf16.mxu0 0
      %4623 = vmatpush1.bf16.msra.mxu0 0
      %4624 = vmatprep.subr.bf16.mxu0 0
      %4625 = vmatpush1.bf16.msra.mxu0 0
      %4626 = vmatprep.subr.bf16.mxu0 0
      %4627 = vmatpush1.bf16.msra.mxu0 0
      %4628 = vmatprep.subr.bf16.mxu0 0
      %4629 = vmatpush1.bf16.msra.mxu0 0
      %4630 = vmatprep.subr.bf16.mxu0 0
      %4631 = vmatpush1.bf16.msra.mxu0 0
      %4632 = vmatprep.subr.bf16.mxu0 0
      %4633 = vmatpush1.bf16.msra.mxu0 0
      %4634 = vmatprep.mubr.bf16.mxu0 0
      %4635 = vmatmul.mubr.bf16.gmra.mrb[0].mxu0 %v4549
      %v4636 = vpop.f32.mrb[0].mxu0
      %v4637 = vadd.f32 0.0, %v4636
      %v4638 = vpop.f32.mrb[0].mxu0
      %v4639 = vpop.f32.mrb[0].mxu0
      %v4640 = vadd.f32 0.0, %v4639
      %v4641 = vpop.f32.mrb[0].mxu0
      %4642 = vmatprep.mubr.bf16.mxu0 0
      %4643 = vmatmul.mubr.bf16.gmra.mrb[0].mxu0 %v4552
      %v4644 = vpop.f32.mrb[0].mxu0
      %v4645 = vadd.f32 0.0, %v4644
      %v4646 = vpop.f32.mrb[0].mxu0
      %v4647 = vpop.f32.mrb[0].mxu0
      %v4648 = vadd.f32 0.0, %v4647
      %v4649 = vpop.f32.mrb[0].mxu0
      %4650 = vmatprep.mubr.bf16.mxu0 0
      %4651 = vmatmul.mubr.bf16.gmra.mrb[0].mxu0 %v4555
      %v4652 = vpop.f32.mrb[0].mxu0
      %v4653 = vadd.f32 0.0, %v4652
      %v4654 = vpop.f32.mrb[0].mxu0
      %v4655 = vpop.f32.mrb[0].mxu0
      %v4656 = vadd.f32 0.0, %v4655
      %v4657 = vpop.f32.mrb[0].mxu0
      %4658 = vmatprep.mubr.bf16.mxu0 0
      %4659 = vmatmul.mubr.bf16.gmra.mrb[0].mxu0 %v4558
      %v4660 = vpop.f32.mrb[0].mxu0
      %v4661 = vadd.f32 0.0, %v4660
      %v4662 = vpop.f32.mrb[0].mxu0
      %v4663 = vpop.f32.mrb[0].mxu0
      %v4664 = vadd.f32 0.0, %v4663
      %v4665 = vpop.f32.mrb[0].mxu0
      %4666 = vmatprep.mubr.bf16.mxu0 0
      %4667 = vmatmul.mubr.bf16.gmra.mrb[0].mxu0 %v4561
      %v4668 = vpop.f32.mrb[0].mxu0
      %v4669 = vadd.f32 0.0, %v4668
      %v4670 = vpop.f32.mrb[0].mxu0
      %v4671 = vpop.f32.mrb[0].mxu0
      %v4672 = vadd.f32 0.0, %v4671
      %v4673 = vpop.f32.mrb[0].mxu0
      %4674 = vmatprep.mubr.bf16.mxu0 0
      %4675 = vmatmul.mubr.bf16.gmra.mrb[0].mxu0 %v4564
      %v4676 = vpop.f32.mrb[0].mxu0
      %v4677 = vadd.f32 0.0, %v4676
      %v4678 = vpop.f32.mrb[0].mxu0
      %v4679 = vpop.f32.mrb[0].mxu0
      %v4680 = vadd.f32 0.0, %v4679
      %v4681 = vpop.f32.mrb[0].mxu0
      %4682 = vmatprep.mubr.bf16.mxu0 0
      %4683 = vmatmul.mubr.bf16.gmra.mrb[0].mxu0 %v4567
      %v4684 = vpop.f32.mrb[0].mxu0
      %v4685 = vadd.f32 0.0, %v4684
      %v4686 = vpop.f32.mrb[0].mxu0
      %v4687 = vpop.f32.mrb[0].mxu0
      %v4688 = vadd.f32 0.0, %v4687
      %v4689 = vpop.f32.mrb[0].mxu0
      %4690 = vmatprep.mubr.bf16.mxu0 0
      %4691 = vmatmul.mubr.bf16.gmra.mrb[0].mxu0 %v4570
      %v4692 = vpop.f32.mrb[0].mxu0
      %v4693 = vadd.f32 0.0, %v4692
      %v4694 = vpop.f32.mrb[0].mxu0
      %v4695 = vpop.f32.mrb[0].mxu0
      %v4696 = vadd.f32 0.0, %v4695
      %v4697 = vpop.f32.mrb[0].mxu0
      %4698 = vmatprep.mubr.bf16.mxu0 0
      %4699 = vmatmul.mubr.bf16.gmra.mrb[0].mxu0 %v4573
      %v4700 = vpop.f32.mrb[0].mxu0
      %v4701 = vadd.f32 0.0, %v4700
      %v4702 = vpop.f32.mrb[0].mxu0
      %v4703 = vpop.f32.mrb[0].mxu0
      %v4704 = vadd.f32 0.0, %v4703
      %v4705 = vpop.f32.mrb[0].mxu0
      %4706 = vmatprep.mubr.bf16.mxu0 0
      %4707 = vmatmul.mubr.bf16.gmra.mrb[0].mxu0 %v4576
      %v4708 = vpop.f32.mrb[0].mxu0
      %v4709 = vadd.f32 0.0, %v4708
      %v4710 = vpop.f32.mrb[0].mxu0
      %v4711 = vpop.f32.mrb[0].mxu0
      %v4712 = vadd.f32 0.0, %v4711
      %v4713 = vpop.f32.mrb[0].mxu0
      %4714 = vmatprep.mubr.bf16.mxu0 0
      %4715 = vmatmul.mubr.bf16.gmra.mrb[0].mxu0 %v4579
      %v4716 = vpop.f32.mrb[0].mxu0
      %v4717 = vadd.f32 0.0, %v4716
      %v4718 = vpop.f32.mrb[0].mxu0
      %v4719 = vpop.f32.mrb[0].mxu0
      %v4720 = vadd.f32 0.0, %v4719
      %v4721 = vpop.f32.mrb[0].mxu0
      %4722 = vmatprep.mubr.bf16.mxu0 0
      %4723 = vmatmul.mubr.bf16.gmra.mrb[0].mxu0 %v4582
      %v4724 = vpop.f32.mrb[0].mxu0
      %v4725 = vadd.f32 0.0, %v4724
      %v4726 = vpop.f32.mrb[0].mxu0
      %v4727 = vpop.f32.mrb[0].mxu0
      %v4728 = vadd.f32 0.0, %v4727
      %v4729 = vpop.f32.mrb[0].mxu0
      %4730 = vmatprep.mubr.bf16.mxu0 0
      %4731 = vmatmul.mubr.bf16.gmra.mrb[0].mxu0 %v4585
      %v4732 = vpop.f32.mrb[0].mxu0
      %v4733 = vadd.f32 0.0, %v4732
      %v4734 = vpop.f32.mrb[0].mxu0
      %v4735 = vpop.f32.mrb[0].mxu0
      %v4736 = vadd.f32 0.0, %v4735
      %v4737 = vpop.f32.mrb[0].mxu0
      %4738 = vmatprep.mubr.bf16.mxu0 0
      %4739 = vmatmul.mubr.bf16.gmra.mrb[0].mxu0 %v4588
      %v4740 = vpop.f32.mrb[0].mxu0
      %v4741 = vadd.f32 0.0, %v4740
      %v4742 = vpop.f32.mrb[0].mxu0
      %v4743 = vpop.f32.mrb[0].mxu0
      %v4744 = vadd.f32 0.0, %v4743
      %v4745 = vpop.f32.mrb[0].mxu0
      %4746 = vmatprep.mubr.bf16.mxu0 0
      %4747 = vmatmul.mubr.bf16.gmra.mrb[0].mxu0 %v4591
      %v4748 = vpop.f32.mrb[0].mxu0
      %v4749 = vadd.f32 0.0, %v4748
      %v4750 = vpop.f32.mrb[0].mxu0
      %v4751 = vpop.f32.mrb[0].mxu0
      %v4752 = vadd.f32 0.0, %v4751
      %v4753 = vpop.f32.mrb[0].mxu0
      %4754 = vmatprep.mubr.bf16.mxu0 0
      %4755 = vmatmul.mubr.bf16.gmra.mrb[0].mxu0 %v4594
      %v4756 = vpop.f32.mrb[0].mxu0
      %v4757 = vadd.f32 0.0, %v4756
      %v4758 = vpop.f32.mrb[0].mxu0
      %v4759 = vpop.f32.mrb[0].mxu0
      %v4760 = vadd.f32 0.0, %v4759
      %v4761 = vpop.f32.mrb[0].mxu0
      %4762 = vmatprep.mubr.bf16.mxu0 0
      %4763 = vmatmul.mubr.bf16.gmra.mrb[0].mxu0 %v4597
      %v4764 = vpop.f32.mrb[0].mxu0
      %v4765 = vadd.f32 0.0, %v4764
      %v4766 = vpop.f32.mrb[0].mxu0
      %v4767 = vpop.f32.mrb[0].mxu0
      %v4768 = vadd.f32 0.0, %v4767
      %v4769 = vpop.f32.mrb[0].mxu0
      %4770 = vmatprep.mubr.bf16.mxu0 0
      %4771 = vmatmul.mubr.bf16.gmra.mrb[0].mxu0 %v4600
      %v4772 = vpop.f32.mrb[0].mxu0
      %v4773 = vadd.f32 0.0, %v4772
      %v4774 = vpop.f32.mrb[0].mxu0
      %v4775 = vpop.f32.mrb[0].mxu0
      %v4776 = vadd.f32 0.0, %v4775
      %v4777 = vpop.f32.mrb[0].mxu0
      %4778 = vdwg.mxu0
      %v4779 = vadd.f32 %v4335, %v4637
      %v4780 = vadd.f32 %v4338, %v4640
      %v4781 = vadd.f32 %v4343, %v4645
      %v4782 = vadd.f32 %v4346, %v4648
      %v4783 = vadd.f32 %v4351, %v4653
      %v4784 = vadd.f32 %v4354, %v4656
      %v4785 = vadd.f32 %v4359, %v4661
      %v4786 = vadd.f32 %v4362, %v4664
      %v4787 = vadd.f32 %v4367, %v4669
      %v4788 = vadd.f32 %v4370, %v4672
      %v4789 = vadd.f32 %v4375, %v4677
      %v4790 = vadd.f32 %v4378, %v4680
      %v4791 = vadd.f32 %v4383, %v4685
      %v4792 = vadd.f32 %v4386, %v4688
      %v4793 = vadd.f32 %v4391, %v4693
      %v4794 = vadd.f32 %v4394, %v4696
      %v4795 = vadd.f32 %v4399, %v4701
      %v4796 = vadd.f32 %v4402, %v4704
      %v4797 = vadd.f32 %v4407, %v4709
      %v4798 = vadd.f32 %v4410, %v4712
      %v4799 = vadd.f32 %v4415, %v4717
      %v4800 = vadd.f32 %v4418, %v4720
      %v4801 = vadd.f32 %v4423, %v4725
      %v4802 = vadd.f32 %v4426, %v4728
      %v4803 = vadd.f32 %v4431, %v4733
      %v4804 = vadd.f32 %v4434, %v4736
      %v4805 = vadd.f32 %v4439, %v4741
      %v4806 = vadd.f32 %v4442, %v4744
      %v4807 = vadd.f32 %v4447, %v4749
      %v4808 = vadd.f32 %v4450, %v4752
      %v4809 = vadd.f32 %v4455, %v4757
      %v4810 = vadd.f32 %v4458, %v4760
      %v4811 = vadd.f32 %v4463, %v4765
      %v4812 = vadd.f32 %v4466, %v4768
      %v4813 = vadd.f32 %v4471, %v4773
      %v4814 = vadd.f32 %v4474, %v4776
      %v4815 = vld [vmem:[#allocation2 + $0x12] sm:$0xff]
      %v4816 = vld [vmem:[#allocation2 + $0x1a] sm:$0xff]
      %v4817 = vld [vmem:[#allocation2 + $0x22] sm:$0xff]
      %v4818 = vld [vmem:[#allocation2 + $0x2a] sm:$0xff]
      %v4819 = vld [vmem:[#allocation2 + $0x32] sm:$0xff]
      %v4820 = vld [vmem:[#allocation2 + $0x3a] sm:$0xff]
      %v4821 = vld [vmem:[#allocation2 + $0x42] sm:$0xff]
      %v4822 = vld [vmem:[#allocation2 + $0x4a] sm:$0xff]
      %v4823 = vld [vmem:[#allocation2 + $0x52] sm:$0xff]
      %v4824 = vld [vmem:[#allocation2 + $0x5a] sm:$0xff]
      %v4825 = vld [vmem:[#allocation2 + $0x62] sm:$0xff]
      %v4826 = vld [vmem:[#allocation2 + $0x6a] sm:$0xff]
      %v4827 = vld [vmem:[#allocation2 + $0x72] sm:$0xff]
      %v4828 = vld [vmem:[#allocation2 + $0x7a] sm:$0xff]
      %v4829 = vld [vmem:[#allocation2 + $0x82] sm:$0xff]
      %v4830 = vld [vmem:[#allocation2 + $0x8a] sm:$0xff]
      %v4831 = vld [vmem:[#allocation2 + $0x92] sm:$0xff]
      %v4832 = vld [vmem:[#allocation2 + $0x9a] sm:$0xff]
      %v4833 = vld [vmem:[#allocation2 + $0xa2] sm:$0xff]
      %v4834 = vld [vmem:[#allocation2 + $0xaa] sm:$0xff]
      %v4835 = vld [vmem:[#allocation2 + $0xb2] sm:$0xff]
      %v4836 = vld [vmem:[#allocation2 + $0xba] sm:$0xff]
      %v4837 = vld [vmem:[#allocation2 + $0xc2] sm:$0xff]
      %v4838 = vld [vmem:[#allocation2 + $0xca] sm:$0xff]
      %v4839 = vld [vmem:[#allocation2 + $0xd2] sm:$0xff]
      %v4840 = vld [vmem:[#allocation2 + $0xda] sm:$0xff]
      %v4841 = vld [vmem:[#allocation2 + $0xe2] sm:$0xff]
      %v4842 = vld [vmem:[#allocation2 + $0xea] sm:$0xff]
      %v4843 = vld [vmem:[#allocation2 + $0xf2] sm:$0xff]
      %v4844 = vld [vmem:[#allocation2 + $0xfa] sm:$0xff]
      %v4845 = vld [vmem:[#allocation2 + $0x102] sm:$0xff]
      %v4846 = vld [vmem:[#allocation2 + $0x10a] sm:$0xff]
      %v4847 = vld [vmem:[#allocation2 + $0x112] sm:$0xff]
      %v4848 = vld [vmem:[#allocation2 + $0x11a] sm:$0xff]
      %v4849 = vld [vmem:[#allocation2 + $0x122] sm:$0xff]
      %v4850 = vld [vmem:[#allocation2 + $0x12a] sm:$0x3f]
      %v4851 = vpack.c.bf16 %v4816, %v4815
      %v4852 = vpack.c.bf16 %v4818, %v4817
      %v4853 = vpack.c.bf16 %v4820, %v4819
      %v4854 = vpack.c.bf16 %v4822, %v4821
      %v4855 = vpack.c.bf16 %v4824, %v4823
      %v4856 = vpack.c.bf16 %v4826, %v4825
      %v4857 = vpack.c.bf16 %v4828, %v4827
      %v4858 = vpack.c.bf16 %v4830, %v4829
      %v4859 = vpack.c.bf16 %v4832, %v4831
      %v4860 = vpack.c.bf16 %v4834, %v4833
      %v4861 = vpack.c.bf16 %v4836, %v4835
      %v4862 = vpack.c.bf16 %v4838, %v4837
      %v4863 = vpack.c.bf16 %v4840, %v4839
      %v4864 = vpack.c.bf16 %v4842, %v4841
      %v4865 = vpack.c.bf16 %v4844, %v4843
      %v4866 = vpack.c.bf16 %v4846, %v4845
      %v4867 = vpack.c.bf16 %v4848, %v4847
      %v4868 = vpack.c.bf16 %v4850, %v4849
      %s4869 = scalar_lea.vmem %s3, 48
      %v4870 = vld [vmem:[%s4869] sm:$0xf]
      %v4871 = vld [vmem:[%s4869 + $0x4] sm:$0xf]
      %v4872 = vld [vmem:[%s4869 + $0x8] sm:$0xf]
      %v4873 = vld [vmem:[%s4869 + $0xc] sm:$0xf]
      %v4878 = vunpack.c.l.b16 %v4870
      %v4879 = vunpack.c.l.b16 %v4871
      %v4880 = vunpack.c.l.b16 %v4872
      %v4881 = vunpack.c.l.b16 %v4873
      %v4882 = vpack.c.b16 %v4879, %v4878
      %v4883 = vpack.c.b16 %v4881, %v4880
      %v4887 = vsel %vm364, %v4851, 0
      %v4890 = vsel %vm364, %v4852, 0
      %v4893 = vsel %vm364, %v4853, 0
      %v4896 = vsel %vm364, %v4854, 0
      %v4899 = vsel %vm364, %v4855, 0
      %v4902 = vsel %vm364, %v4856, 0
      %v4905 = vsel %vm364, %v4857, 0
      %v4908 = vsel %vm364, %v4858, 0
      %v4911 = vsel %vm364, %v4859, 0
      %v4914 = vsel %vm364, %v4860, 0
      %v4917 = vsel %vm364, %v4861, 0
      %v4920 = vsel %vm364, %v4862, 0
      %v4923 = vsel %vm364, %v4863, 0
      %v4926 = vsel %vm364, %v4864, 0
      %v4929 = vsel %vm364, %v4865, 0
      %v4932 = vsel %vm364, %v4866, 0
      %v4935 = vsel %vm364, %v4867, 0
      %v4938 = vsel %vm364, %v4868, 0
      %4940 = vmatprep.subr.bf16.mxu0 0
      %4941 = vmatpush1.bf16.msra.mxu0 %v4882
      %4942 = vmatprep.subr.bf16.mxu0 0
      %4943 = vmatpush1.bf16.msra.mxu0 %v4883
      %4944 = vmatprep.subr.bf16.mxu0 0
      %4945 = vmatpush1.bf16.msra.mxu0 0
      %4946 = vmatprep.subr.bf16.mxu0 0
      %4947 = vmatpush1.bf16.msra.mxu0 0
      %4948 = vmatprep.subr.bf16.mxu0 0
      %4949 = vmatpush1.bf16.msra.mxu0 0
      %4950 = vmatprep.subr.bf16.mxu0 0
      %4951 = vmatpush1.bf16.msra.mxu0 0
      %4952 = vmatprep.subr.bf16.mxu0 0
      %4953 = vmatpush1.bf16.msra.mxu0 0
      %4954 = vmatprep.subr.bf16.mxu0 0
      %4955 = vmatpush1.bf16.msra.mxu0 0
      %4956 = vmatprep.subr.bf16.mxu0 0
      %4957 = vmatpush1.bf16.msra.mxu0 0
      %4958 = vmatprep.subr.bf16.mxu0 0
      %4959 = vmatpush1.bf16.msra.mxu0 0
      %4960 = vmatprep.subr.bf16.mxu0 0
      %4961 = vmatpush1.bf16.msra.mxu0 0
      %4962 = vmatprep.subr.bf16.mxu0 0
      %4963 = vmatpush1.bf16.msra.mxu0 0
      %4964 = vmatprep.subr.bf16.mxu0 0
      %4965 = vmatpush1.bf16.msra.mxu0 0
      %4966 = vmatprep.subr.bf16.mxu0 0
      %4967 = vmatpush1.bf16.msra.mxu0 0
      %4968 = vmatprep.subr.bf16.mxu0 0
      %4969 = vmatpush1.bf16.msra.mxu0 0
      %4970 = vmatprep.subr.bf16.mxu0 0
      %4971 = vmatpush1.bf16.msra.mxu0 0
      %4972 = vmatprep.mubr.bf16.mxu0 0
      %4973 = vmatmul.mubr.bf16.gmra.mrb[0].mxu0 %v4887
      %v4974 = vpop.f32.mrb[0].mxu0
      %v4975 = vadd.f32 0.0, %v4974
      %v4976 = vpop.f32.mrb[0].mxu0
      %v4977 = vpop.f32.mrb[0].mxu0
      %v4978 = vadd.f32 0.0, %v4977
      %v4979 = vpop.f32.mrb[0].mxu0
      %4980 = vmatprep.mubr.bf16.mxu0 0
      %4981 = vmatmul.mubr.bf16.gmra.mrb[0].mxu0 %v4890
      %v4982 = vpop.f32.mrb[0].mxu0
      %v4983 = vadd.f32 0.0, %v4982
      %v4984 = vpop.f32.mrb[0].mxu0
      %v4985 = vpop.f32.mrb[0].mxu0
      %v4986 = vadd.f32 0.0, %v4985
      %v4987 = vpop.f32.mrb[0].mxu0
      %4988 = vmatprep.mubr.bf16.mxu0 0
      %4989 = vmatmul.mubr.bf16.gmra.mrb[0].mxu0 %v4893
      %v4990 = vpop.f32.mrb[0].mxu0
      %v4991 = vadd.f32 0.0, %v4990
      %v4992 = vpop.f32.mrb[0].mxu0
      %v4993 = vpop.f32.mrb[0].mxu0
      %v4994 = vadd.f32 0.0, %v4993
      %v4995 = vpop.f32.mrb[0].mxu0
      %4996 = vmatprep.mubr.bf16.mxu0 0
      %4997 = vmatmul.mubr.bf16.gmra.mrb[0].mxu0 %v4896
      %v4998 = vpop.f32.mrb[0].mxu0
      %v4999 = vadd.f32 0.0, %v4998
      %v5000 = vpop.f32.mrb[0].mxu0
      %v5001 = vpop.f32.mrb[0].mxu0
      %v5002 = vadd.f32 0.0, %v5001
      %v5003 = vpop.f32.mrb[0].mxu0
      %5004 = vmatprep.mubr.bf16.mxu0 0
      %5005 = vmatmul.mubr.bf16.gmra.mrb[0].mxu0 %v4899
      %v5006 = vpop.f32.mrb[0].mxu0
      %v5007 = vadd.f32 0.0, %v5006
      %v5008 = vpop.f32.mrb[0].mxu0
      %v5009 = vpop.f32.mrb[0].mxu0
      %v5010 = vadd.f32 0.0, %v5009
      %v5011 = vpop.f32.mrb[0].mxu0
      %5012 = vmatprep.mubr.bf16.mxu0 0
      %5013 = vmatmul.mubr.bf16.gmra.mrb[0].mxu0 %v4902
      %v5014 = vpop.f32.mrb[0].mxu0
      %v5015 = vadd.f32 0.0, %v5014
      %v5016 = vpop.f32.mrb[0].mxu0
      %v5017 = vpop.f32.mrb[0].mxu0
      %v5018 = vadd.f32 0.0, %v5017
      %v5019 = vpop.f32.mrb[0].mxu0
      %5020 = vmatprep.mubr.bf16.mxu0 0
      %5021 = vmatmul.mubr.bf16.gmra.mrb[0].mxu0 %v4905
      %v5022 = vpop.f32.mrb[0].mxu0
      %v5023 = vadd.f32 0.0, %v5022
      %v5024 = vpop.f32.mrb[0].mxu0
      %v5025 = vpop.f32.mrb[0].mxu0
      %v5026 = vadd.f32 0.0, %v5025
      %v5027 = vpop.f32.mrb[0].mxu0
      %5028 = vmatprep.mubr.bf16.mxu0 0
      %5029 = vmatmul.mubr.bf16.gmra.mrb[0].mxu0 %v4908
      %v5030 = vpop.f32.mrb[0].mxu0
      %v5031 = vadd.f32 0.0, %v5030
      %v5032 = vpop.f32.mrb[0].mxu0
      %v5033 = vpop.f32.mrb[0].mxu0
      %v5034 = vadd.f32 0.0, %v5033
      %v5035 = vpop.f32.mrb[0].mxu0
      %5036 = vmatprep.mubr.bf16.mxu0 0
      %5037 = vmatmul.mubr.bf16.gmra.mrb[0].mxu0 %v4911
      %v5038 = vpop.f32.mrb[0].mxu0
      %v5039 = vadd.f32 0.0, %v5038
      %v5040 = vpop.f32.mrb[0].mxu0
      %v5041 = vpop.f32.mrb[0].mxu0
      %v5042 = vadd.f32 0.0, %v5041
      %v5043 = vpop.f32.mrb[0].mxu0
      %5044 = vmatprep.mubr.bf16.mxu0 0
      %5045 = vmatmul.mubr.bf16.gmra.mrb[0].mxu0 %v4914
      %v5046 = vpop.f32.mrb[0].mxu0
      %v5047 = vadd.f32 0.0, %v5046
      %v5048 = vpop.f32.mrb[0].mxu0
      %v5049 = vpop.f32.mrb[0].mxu0
      %v5050 = vadd.f32 0.0, %v5049
      %v5051 = vpop.f32.mrb[0].mxu0
      %5052 = vmatprep.mubr.bf16.mxu0 0
      %5053 = vmatmul.mubr.bf16.gmra.mrb[0].mxu0 %v4917
      %v5054 = vpop.f32.mrb[0].mxu0
      %v5055 = vadd.f32 0.0, %v5054
      %v5056 = vpop.f32.mrb[0].mxu0
      %v5057 = vpop.f32.mrb[0].mxu0
      %v5058 = vadd.f32 0.0, %v5057
      %v5059 = vpop.f32.mrb[0].mxu0
      %5060 = vmatprep.mubr.bf16.mxu0 0
      %5061 = vmatmul.mubr.bf16.gmra.mrb[0].mxu0 %v4920
      %v5062 = vpop.f32.mrb[0].mxu0
      %v5063 = vadd.f32 0.0, %v5062
      %v5064 = vpop.f32.mrb[0].mxu0
      %v5065 = vpop.f32.mrb[0].mxu0
      %v5066 = vadd.f32 0.0, %v5065
      %v5067 = vpop.f32.mrb[0].mxu0
      %5068 = vmatprep.mubr.bf16.mxu0 0
      %5069 = vmatmul.mubr.bf16.gmra.mrb[0].mxu0 %v4923
      %v5070 = vpop.f32.mrb[0].mxu0
      %v5071 = vadd.f32 0.0, %v5070
      %v5072 = vpop.f32.mrb[0].mxu0
      %v5073 = vpop.f32.mrb[0].mxu0
      %v5074 = vadd.f32 0.0, %v5073
      %v5075 = vpop.f32.mrb[0].mxu0
      %5076 = vmatprep.mubr.bf16.mxu0 0
      %5077 = vmatmul.mubr.bf16.gmra.mrb[0].mxu0 %v4926
      %v5078 = vpop.f32.mrb[0].mxu0
      %v5079 = vadd.f32 0.0, %v5078
      %v5080 = vpop.f32.mrb[0].mxu0
      %v5081 = vpop.f32.mrb[0].mxu0
      %v5082 = vadd.f32 0.0, %v5081
      %v5083 = vpop.f32.mrb[0].mxu0
      %5084 = vmatprep.mubr.bf16.mxu0 0
      %5085 = vmatmul.mubr.bf16.gmra.mrb[0].mxu0 %v4929
      %v5086 = vpop.f32.mrb[0].mxu0
      %v5087 = vadd.f32 0.0, %v5086
      %v5088 = vpop.f32.mrb[0].mxu0
      %v5089 = vpop.f32.mrb[0].mxu0
      %v5090 = vadd.f32 0.0, %v5089
      %v5091 = vpop.f32.mrb[0].mxu0
      %5092 = vmatprep.mubr.bf16.mxu0 0
      %5093 = vmatmul.mubr.bf16.gmra.mrb[0].mxu0 %v4932
      %v5094 = vpop.f32.mrb[0].mxu0
      %v5095 = vadd.f32 0.0, %v5094
      %v5096 = vpop.f32.mrb[0].mxu0
      %v5097 = vpop.f32.mrb[0].mxu0
      %v5098 = vadd.f32 0.0, %v5097
      %v5099 = vpop.f32.mrb[0].mxu0
      %5100 = vmatprep.mubr.bf16.mxu0 0
      %5101 = vmatmul.mubr.bf16.gmra.mrb[0].mxu0 %v4935
      %v5102 = vpop.f32.mrb[0].mxu0
      %v5103 = vadd.f32 0.0, %v5102
      %v5104 = vpop.f32.mrb[0].mxu0
      %v5105 = vpop.f32.mrb[0].mxu0
      %v5106 = vadd.f32 0.0, %v5105
      %v5107 = vpop.f32.mrb[0].mxu0
      %5108 = vmatprep.mubr.bf16.mxu0 0
      %5109 = vmatmul.mubr.bf16.gmra.mrb[0].mxu0 %v4938
      %v5110 = vpop.f32.mrb[0].mxu0
      %v5111 = vadd.f32 0.0, %v5110
      %v5112 = vpop.f32.mrb[0].mxu0
      %v5113 = vpop.f32.mrb[0].mxu0
      %v5114 = vadd.f32 0.0, %v5113
      %v5115 = vpop.f32.mrb[0].mxu0
      %5116 = vdwg.mxu0
      %v5117 = vadd.f32 %v4779, %v4975
      %v5118 = vadd.f32 %v4780, %v4978
      %v5119 = vadd.f32 %v4781, %v4983
      %v5120 = vadd.f32 %v4782, %v4986
      %v5121 = vadd.f32 %v4783, %v4991
      %v5122 = vadd.f32 %v4784, %v4994
      %v5123 = vadd.f32 %v4785, %v4999
      %v5124 = vadd.f32 %v4786, %v5002
      %v5125 = vadd.f32 %v4787, %v5007
      %v5126 = vadd.f32 %v4788, %v5010
      %v5127 = vadd.f32 %v4789, %v5015
      %v5128 = vadd.f32 %v4790, %v5018
      %v5129 = vadd.f32 %v4791, %v5023
      %v5130 = vadd.f32 %v4792, %v5026
      %v5131 = vadd.f32 %v4793, %v5031
      %v5132 = vadd.f32 %v4794, %v5034
      %v5133 = vadd.f32 %v4795, %v5039
      %v5134 = vadd.f32 %v4796, %v5042
      %v5135 = vadd.f32 %v4797, %v5047
      %v5136 = vadd.f32 %v4798, %v5050
      %v5137 = vadd.f32 %v4799, %v5055
      %v5138 = vadd.f32 %v4800, %v5058
      %v5139 = vadd.f32 %v4801, %v5063
      %v5140 = vadd.f32 %v4802, %v5066
      %v5141 = vadd.f32 %v4803, %v5071
      %v5142 = vadd.f32 %v4804, %v5074
      %v5143 = vadd.f32 %v4805, %v5079
      %v5144 = vadd.f32 %v4806, %v5082
      %v5145 = vadd.f32 %v4807, %v5087
      %v5146 = vadd.f32 %v4808, %v5090
      %v5147 = vadd.f32 %v4809, %v5095
      %v5148 = vadd.f32 %v4810, %v5098
      %v5149 = vadd.f32 %v4811, %v5103
      %v5150 = vadd.f32 %v4812, %v5106
      %v5151 = vadd.f32 %v4813, %v5111
      %v5152 = vadd.f32 %v4814, %v5114
      %v5153 = vld [vmem:[#allocation2 + $0x13] sm:$0xff]
      %v5154 = vld [vmem:[#allocation2 + $0x1b] sm:$0xff]
      %v5155 = vld [vmem:[#allocation2 + $0x23] sm:$0xff]
      %v5156 = vld [vmem:[#allocation2 + $0x2b] sm:$0xff]
      %v5157 = vld [vmem:[#allocation2 + $0x33] sm:$0xff]
      %v5158 = vld [vmem:[#allocation2 + $0x3b] sm:$0xff]
      %v5159 = vld [vmem:[#allocation2 + $0x43] sm:$0xff]
      %v5160 = vld [vmem:[#allocation2 + $0x4b] sm:$0xff]
      %v5161 = vld [vmem:[#allocation2 + $0x53] sm:$0xff]
      %v5162 = vld [vmem:[#allocation2 + $0x5b] sm:$0xff]
      %v5163 = vld [vmem:[#allocation2 + $0x63] sm:$0xff]
      %v5164 = vld [vmem:[#allocation2 + $0x6b] sm:$0xff]
      %v5165 = vld [vmem:[#allocation2 + $0x73] sm:$0xff]
      %v5166 = vld [vmem:[#allocation2 + $0x7b] sm:$0xff]
      %v5167 = vld [vmem:[#allocation2 + $0x83] sm:$0xff]
      %v5168 = vld [vmem:[#allocation2 + $0x8b] sm:$0xff]
      %v5169 = vld [vmem:[#allocation2 + $0x93] sm:$0xff]
      %v5170 = vld [vmem:[#allocation2 + $0x9b] sm:$0xff]
      %v5171 = vld [vmem:[#allocation2 + $0xa3] sm:$0xff]
      %v5172 = vld [vmem:[#allocation2 + $0xab] sm:$0xff]
      %v5173 = vld [vmem:[#allocation2 + $0xb3] sm:$0xff]
      %v5174 = vld [vmem:[#allocation2 + $0xbb] sm:$0xff]
      %v5175 = vld [vmem:[#allocation2 + $0xc3] sm:$0xff]
      %v5176 = vld [vmem:[#allocation2 + $0xcb] sm:$0xff]
      %v5177 = vld [vmem:[#allocation2 + $0xd3] sm:$0xff]
      %v5178 = vld [vmem:[#allocation2 + $0xdb] sm:$0xff]
      %v5179 = vld [vmem:[#allocation2 + $0xe3] sm:$0xff]
      %v5180 = vld [vmem:[#allocation2 + $0xeb] sm:$0xff]
      %v5181 = vld [vmem:[#allocation2 + $0xf3] sm:$0xff]
      %v5182 = vld [vmem:[#allocation2 + $0xfb] sm:$0xff]
      %v5183 = vld [vmem:[#allocation2 + $0x103] sm:$0xff]
      %v5184 = vld [vmem:[#allocation2 + $0x10b] sm:$0xff]
      %v5185 = vld [vmem:[#allocation2 + $0x113] sm:$0xff]
      %v5186 = vld [vmem:[#allocation2 + $0x11b] sm:$0xff]
      %v5187 = vld [vmem:[#allocation2 + $0x123] sm:$0xff]
      %v5188 = vld [vmem:[#allocation2 + $0x12b] sm:$0x3f]
      %v5189 = vpack.c.bf16 %v5154, %v5153
      %v5190 = vpack.c.bf16 %v5156, %v5155
      %v5191 = vpack.c.bf16 %v5158, %v5157
      %v5192 = vpack.c.bf16 %v5160, %v5159
      %v5193 = vpack.c.bf16 %v5162, %v5161
      %v5194 = vpack.c.bf16 %v5164, %v5163
      %v5195 = vpack.c.bf16 %v5166, %v5165
      %v5196 = vpack.c.bf16 %v5168, %v5167
      %v5197 = vpack.c.bf16 %v5170, %v5169
      %v5198 = vpack.c.bf16 %v5172, %v5171
      %v5199 = vpack.c.bf16 %v5174, %v5173
      %v5200 = vpack.c.bf16 %v5176, %v5175
      %v5201 = vpack.c.bf16 %v5178, %v5177
      %v5202 = vpack.c.bf16 %v5180, %v5179
      %v5203 = vpack.c.bf16 %v5182, %v5181
      %v5204 = vpack.c.bf16 %v5184, %v5183
      %v5205 = vpack.c.bf16 %v5186, %v5185
      %v5206 = vpack.c.bf16 %v5188, %v5187
      %s5207 = scalar_lea.vmem %s3, 64
      %v5208 = vld [vmem:[%s5207] sm:$0xf]
      %v5209 = vld [vmem:[%s5207 + $0x4] sm:$0xf]
      %v5210 = vld [vmem:[%s5207 + $0x8] sm:$0xf]
      %v5211 = vld [vmem:[%s5207 + $0xc] sm:$0xf]
      %v5216 = vunpack.c.l.b16 %v5208
      %v5217 = vunpack.c.l.b16 %v5209
      %v5218 = vunpack.c.l.b16 %v5210
      %v5219 = vunpack.c.l.b16 %v5211
      %v5220 = vpack.c.b16 %v5217, %v5216
      %v5221 = vpack.c.b16 %v5219, %v5218
      %v5225 = vsel %vm364, %v5189, 0
      %v5228 = vsel %vm364, %v5190, 0
      %v5231 = vsel %vm364, %v5191, 0
      %v5234 = vsel %vm364, %v5192, 0
      %v5237 = vsel %vm364, %v5193, 0
      %v5240 = vsel %vm364, %v5194, 0
      %v5243 = vsel %vm364, %v5195, 0
      %v5246 = vsel %vm364, %v5196, 0
      %v5249 = vsel %vm364, %v5197, 0
      %v5252 = vsel %vm364, %v5198, 0
      %v5255 = vsel %vm364, %v5199, 0
      %v5258 = vsel %vm364, %v5200, 0
      %v5261 = vsel %vm364, %v5201, 0
      %v5264 = vsel %vm364, %v5202, 0
      %v5267 = vsel %vm364, %v5203, 0
      %v5270 = vsel %vm364, %v5204, 0
      %v5273 = vsel %vm364, %v5205, 0
      %v5276 = vsel %vm364, %v5206, 0
      %5278 = vmatprep.subr.bf16.mxu0 0
      %5279 = vmatpush1.bf16.msra.mxu0 %v5220
      %5280 = vmatprep.subr.bf16.mxu0 0
      %5281 = vmatpush1.bf16.msra.mxu0 %v5221
      %5282 = vmatprep.subr.bf16.mxu0 0
      %5283 = vmatpush1.bf16.msra.mxu0 0
      %5284 = vmatprep.subr.bf16.mxu0 0
      %5285 = vmatpush1.bf16.msra.mxu0 0
      %5286 = vmatprep.subr.bf16.mxu0 0
      %5287 = vmatpush1.bf16.msra.mxu0 0
      %5288 = vmatprep.subr.bf16.mxu0 0
      %5289 = vmatpush1.bf16.msra.mxu0 0
      %5290 = vmatprep.subr.bf16.mxu0 0
      %5291 = vmatpush1.bf16.msra.mxu0 0
      %5292 = vmatprep.subr.bf16.mxu0 0
      %5293 = vmatpush1.bf16.msra.mxu0 0
      %5294 = vmatprep.subr.bf16.mxu0 0
      %5295 = vmatpush1.bf16.msra.mxu0 0
      %5296 = vmatprep.subr.bf16.mxu0 0
      %5297 = vmatpush1.bf16.msra.mxu0 0
      %5298 = vmatprep.subr.bf16.mxu0 0
      %5299 = vmatpush1.bf16.msra.mxu0 0
      %5300 = vmatprep.subr.bf16.mxu0 0
      %5301 = vmatpush1.bf16.msra.mxu0 0
      %5302 = vmatprep.subr.bf16.mxu0 0
      %5303 = vmatpush1.bf16.msra.mxu0 0
      %5304 = vmatprep.subr.bf16.mxu0 0
      %5305 = vmatpush1.bf16.msra.mxu0 0
      %5306 = vmatprep.subr.bf16.mxu0 0
      %5307 = vmatpush1.bf16.msra.mxu0 0
      %5308 = vmatprep.subr.bf16.mxu0 0
      %5309 = vmatpush1.bf16.msra.mxu0 0
      %5310 = vmatprep.mubr.bf16.mxu0 0
      %5311 = vmatmul.mubr.bf16.gmra.mrb[0].mxu0 %v5225
      %v5312 = vpop.f32.mrb[0].mxu0
      %v5313 = vadd.f32 0.0, %v5312
      %v5314 = vpop.f32.mrb[0].mxu0
      %v5315 = vpop.f32.mrb[0].mxu0
      %v5316 = vadd.f32 0.0, %v5315
      %v5317 = vpop.f32.mrb[0].mxu0
      %5318 = vmatprep.mubr.bf16.mxu0 0
      %5319 = vmatmul.mubr.bf16.gmra.mrb[0].mxu0 %v5228
      %v5320 = vpop.f32.mrb[0].mxu0
      %v5321 = vadd.f32 0.0, %v5320
      %v5322 = vpop.f32.mrb[0].mxu0
      %v5323 = vpop.f32.mrb[0].mxu0
      %v5324 = vadd.f32 0.0, %v5323
      %v5325 = vpop.f32.mrb[0].mxu0
      %5326 = vmatprep.mubr.bf16.mxu0 0
      %5327 = vmatmul.mubr.bf16.gmra.mrb[0].mxu0 %v5231
      %v5328 = vpop.f32.mrb[0].mxu0
      %v5329 = vadd.f32 0.0, %v5328
      %v5330 = vpop.f32.mrb[0].mxu0
      %v5331 = vpop.f32.mrb[0].mxu0
      %v5332 = vadd.f32 0.0, %v5331
      %v5333 = vpop.f32.mrb[0].mxu0
      %5334 = vmatprep.mubr.bf16.mxu0 0
      %5335 = vmatmul.mubr.bf16.gmra.mrb[0].mxu0 %v5234
      %v5336 = vpop.f32.mrb[0].mxu0
      %v5337 = vadd.f32 0.0, %v5336
      %v5338 = vpop.f32.mrb[0].mxu0
      %v5339 = vpop.f32.mrb[0].mxu0
      %v5340 = vadd.f32 0.0, %v5339
      %v5341 = vpop.f32.mrb[0].mxu0
      %5342 = vmatprep.mubr.bf16.mxu0 0
      %5343 = vmatmul.mubr.bf16.gmra.mrb[0].mxu0 %v5237
      %v5344 = vpop.f32.mrb[0].mxu0
      %v5345 = vadd.f32 0.0, %v5344
      %v5346 = vpop.f32.mrb[0].mxu0
      %v5347 = vpop.f32.mrb[0].mxu0
      %v5348 = vadd.f32 0.0, %v5347
      %v5349 = vpop.f32.mrb[0].mxu0
      %5350 = vmatprep.mubr.bf16.mxu0 0
      %5351 = vmatmul.mubr.bf16.gmra.mrb[0].mxu0 %v5240
      %v5352 = vpop.f32.mrb[0].mxu0
      %v5353 = vadd.f32 0.0, %v5352
      %v5354 = vpop.f32.mrb[0].mxu0
      %v5355 = vpop.f32.mrb[0].mxu0
      %v5356 = vadd.f32 0.0, %v5355
      %v5357 = vpop.f32.mrb[0].mxu0
      %5358 = vmatprep.mubr.bf16.mxu0 0
      %5359 = vmatmul.mubr.bf16.gmra.mrb[0].mxu0 %v5243
      %v5360 = vpop.f32.mrb[0].mxu0
      %v5361 = vadd.f32 0.0, %v5360
      %v5362 = vpop.f32.mrb[0].mxu0
      %v5363 = vpop.f32.mrb[0].mxu0
      %v5364 = vadd.f32 0.0, %v5363
      %v5365 = vpop.f32.mrb[0].mxu0
      %5366 = vmatprep.mubr.bf16.mxu0 0
      %5367 = vmatmul.mubr.bf16.gmra.mrb[0].mxu0 %v5246
      %v5368 = vpop.f32.mrb[0].mxu0
      %v5369 = vadd.f32 0.0, %v5368
      %v5370 = vpop.f32.mrb[0].mxu0
      %v5371 = vpop.f32.mrb[0].mxu0
      %v5372 = vadd.f32 0.0, %v5371
      %v5373 = vpop.f32.mrb[0].mxu0
      %5374 = vmatprep.mubr.bf16.mxu0 0
      %5375 = vmatmul.mubr.bf16.gmra.mrb[0].mxu0 %v5249
      %v5376 = vpop.f32.mrb[0].mxu0
      %v5377 = vadd.f32 0.0, %v5376
      %v5378 = vpop.f32.mrb[0].mxu0
      %v5379 = vpop.f32.mrb[0].mxu0
      %v5380 = vadd.f32 0.0, %v5379
      %v5381 = vpop.f32.mrb[0].mxu0
      %5382 = vmatprep.mubr.bf16.mxu0 0
      %5383 = vmatmul.mubr.bf16.gmra.mrb[0].mxu0 %v5252
      %v5384 = vpop.f32.mrb[0].mxu0
      %v5385 = vadd.f32 0.0, %v5384
      %v5386 = vpop.f32.mrb[0].mxu0
      %v5387 = vpop.f32.mrb[0].mxu0
      %v5388 = vadd.f32 0.0, %v5387
      %v5389 = vpop.f32.mrb[0].mxu0
      %5390 = vmatprep.mubr.bf16.mxu0 0
      %5391 = vmatmul.mubr.bf16.gmra.mrb[0].mxu0 %v5255
      %v5392 = vpop.f32.mrb[0].mxu0
      %v5393 = vadd.f32 0.0, %v5392
      %v5394 = vpop.f32.mrb[0].mxu0
      %v5395 = vpop.f32.mrb[0].mxu0
      %v5396 = vadd.f32 0.0, %v5395
      %v5397 = vpop.f32.mrb[0].mxu0
      %5398 = vmatprep.mubr.bf16.mxu0 0
      %5399 = vmatmul.mubr.bf16.gmra.mrb[0].mxu0 %v5258
      %v5400 = vpop.f32.mrb[0].mxu0
      %v5401 = vadd.f32 0.0, %v5400
      %v5402 = vpop.f32.mrb[0].mxu0
      %v5403 = vpop.f32.mrb[0].mxu0
      %v5404 = vadd.f32 0.0, %v5403
      %v5405 = vpop.f32.mrb[0].mxu0
      %5406 = vmatprep.mubr.bf16.mxu0 0
      %5407 = vmatmul.mubr.bf16.gmra.mrb[0].mxu0 %v5261
      %v5408 = vpop.f32.mrb[0].mxu0
      %v5409 = vadd.f32 0.0, %v5408
      %v5410 = vpop.f32.mrb[0].mxu0
      %v5411 = vpop.f32.mrb[0].mxu0
      %v5412 = vadd.f32 0.0, %v5411
      %v5413 = vpop.f32.mrb[0].mxu0
      %5414 = vmatprep.mubr.bf16.mxu0 0
      %5415 = vmatmul.mubr.bf16.gmra.mrb[0].mxu0 %v5264
      %v5416 = vpop.f32.mrb[0].mxu0
      %v5417 = vadd.f32 0.0, %v5416
      %v5418 = vpop.f32.mrb[0].mxu0
      %v5419 = vpop.f32.mrb[0].mxu0
      %v5420 = vadd.f32 0.0, %v5419
      %v5421 = vpop.f32.mrb[0].mxu0
      %5422 = vmatprep.mubr.bf16.mxu0 0
      %5423 = vmatmul.mubr.bf16.gmra.mrb[0].mxu0 %v5267
      %v5424 = vpop.f32.mrb[0].mxu0
      %v5425 = vadd.f32 0.0, %v5424
      %v5426 = vpop.f32.mrb[0].mxu0
      %v5427 = vpop.f32.mrb[0].mxu0
      %v5428 = vadd.f32 0.0, %v5427
      %v5429 = vpop.f32.mrb[0].mxu0
      %5430 = vmatprep.mubr.bf16.mxu0 0
      %5431 = vmatmul.mubr.bf16.gmra.mrb[0].mxu0 %v5270
      %v5432 = vpop.f32.mrb[0].mxu0
      %v5433 = vadd.f32 0.0, %v5432
      %v5434 = vpop.f32.mrb[0].mxu0
      %v5435 = vpop.f32.mrb[0].mxu0
      %v5436 = vadd.f32 0.0, %v5435
      %v5437 = vpop.f32.mrb[0].mxu0
      %5438 = vmatprep.mubr.bf16.mxu0 0
      %5439 = vmatmul.mubr.bf16.gmra.mrb[0].mxu0 %v5273
      %v5440 = vpop.f32.mrb[0].mxu0
      %v5441 = vadd.f32 0.0, %v5440
      %v5442 = vpop.f32.mrb[0].mxu0
      %v5443 = vpop.f32.mrb[0].mxu0
      %v5444 = vadd.f32 0.0, %v5443
      %v5445 = vpop.f32.mrb[0].mxu0
      %5446 = vmatprep.mubr.bf16.mxu0 0
      %5447 = vmatmul.mubr.bf16.gmra.mrb[0].mxu0 %v5276
      %v5448 = vpop.f32.mrb[0].mxu0
      %v5449 = vadd.f32 0.0, %v5448
      %v5450 = vpop.f32.mrb[0].mxu0
      %v5451 = vpop.f32.mrb[0].mxu0
      %v5452 = vadd.f32 0.0, %v5451
      %v5453 = vpop.f32.mrb[0].mxu0
      %5454 = vdwg.mxu0
      %v5455 = vadd.f32 %v5117, %v5313
      %v5456 = vadd.f32 %v5118, %v5316
      %v5457 = vadd.f32 %v5119, %v5321
      %v5458 = vadd.f32 %v5120, %v5324
      %v5459 = vadd.f32 %v5121, %v5329
      %v5460 = vadd.f32 %v5122, %v5332
      %v5461 = vadd.f32 %v5123, %v5337
      %v5462 = vadd.f32 %v5124, %v5340
      %v5463 = vadd.f32 %v5125, %v5345
      %v5464 = vadd.f32 %v5126, %v5348
      %v5465 = vadd.f32 %v5127, %v5353
      %v5466 = vadd.f32 %v5128, %v5356
      %v5467 = vadd.f32 %v5129, %v5361
      %v5468 = vadd.f32 %v5130, %v5364
      %v5469 = vadd.f32 %v5131, %v5369
      %v5470 = vadd.f32 %v5132, %v5372
      %v5471 = vadd.f32 %v5133, %v5377
      %v5472 = vadd.f32 %v5134, %v5380
      %v5473 = vadd.f32 %v5135, %v5385
      %v5474 = vadd.f32 %v5136, %v5388
      %v5475 = vadd.f32 %v5137, %v5393
      %v5476 = vadd.f32 %v5138, %v5396
      %v5477 = vadd.f32 %v5139, %v5401
      %v5478 = vadd.f32 %v5140, %v5404
      %v5479 = vadd.f32 %v5141, %v5409
      %v5480 = vadd.f32 %v5142, %v5412
      %v5481 = vadd.f32 %v5143, %v5417
      %v5482 = vadd.f32 %v5144, %v5420
      %v5483 = vadd.f32 %v5145, %v5425
      %v5484 = vadd.f32 %v5146, %v5428
      %v5485 = vadd.f32 %v5147, %v5433
      %v5486 = vadd.f32 %v5148, %v5436
      %v5487 = vadd.f32 %v5149, %v5441
      %v5488 = vadd.f32 %v5150, %v5444
      %v5489 = vadd.f32 %v5151, %v5449
      %v5490 = vadd.f32 %v5152, %v5452
      %v5491 = vld [vmem:[#allocation2 + $0x14] sm:$0xff]
      %v5492 = vld [vmem:[#allocation2 + $0x1c] sm:$0xff]
      %v5493 = vld [vmem:[#allocation2 + $0x24] sm:$0xff]
      %v5494 = vld [vmem:[#allocation2 + $0x2c] sm:$0xff]
      %v5495 = vld [vmem:[#allocation2 + $0x34] sm:$0xff]
      %v5496 = vld [vmem:[#allocation2 + $0x3c] sm:$0xff]
      %v5497 = vld [vmem:[#allocation2 + $0x44] sm:$0xff]
      %v5498 = vld [vmem:[#allocation2 + $0x4c] sm:$0xff]
      %v5499 = vld [vmem:[#allocation2 + $0x54] sm:$0xff]
      %v5500 = vld [vmem:[#allocation2 + $0x5c] sm:$0xff]
      %v5501 = vld [vmem:[#allocation2 + $0x64] sm:$0xff]
      %v5502 = vld [vmem:[#allocation2 + $0x6c] sm:$0xff]
      %v5503 = vld [vmem:[#allocation2 + $0x74] sm:$0xff]
      %v5504 = vld [vmem:[#allocation2 + $0x7c] sm:$0xff]
      %v5505 = vld [vmem:[#allocation2 + $0x84] sm:$0xff]
      %v5506 = vld [vmem:[#allocation2 + $0x8c] sm:$0xff]
      %v5507 = vld [vmem:[#allocation2 + $0x94] sm:$0xff]
      %v5508 = vld [vmem:[#allocation2 + $0x9c] sm:$0xff]
      %v5509 = vld [vmem:[#allocation2 + $0xa4] sm:$0xff]
      %v5510 = vld [vmem:[#allocation2 + $0xac] sm:$0xff]
      %v5511 = vld [vmem:[#allocation2 + $0xb4] sm:$0xff]
      %v5512 = vld [vmem:[#allocation2 + $0xbc] sm:$0xff]
      %v5513 = vld [vmem:[#allocation2 + $0xc4] sm:$0xff]
      %v5514 = vld [vmem:[#allocation2 + $0xcc] sm:$0xff]
      %v5515 = vld [vmem:[#allocation2 + $0xd4] sm:$0xff]
      %v5516 = vld [vmem:[#allocation2 + $0xdc] sm:$0xff]
      %v5517 = vld [vmem:[#allocation2 + $0xe4] sm:$0xff]
      %v5518 = vld [vmem:[#allocation2 + $0xec] sm:$0xff]
      %v5519 = vld [vmem:[#allocation2 + $0xf4] sm:$0xff]
      %v5520 = vld [vmem:[#allocation2 + $0xfc] sm:$0xff]
      %v5521 = vld [vmem:[#allocation2 + $0x104] sm:$0xff]
      %v5522 = vld [vmem:[#allocation2 + $0x10c] sm:$0xff]
      %v5523 = vld [vmem:[#allocation2 + $0x114] sm:$0xff]
      %v5524 = vld [vmem:[#allocation2 + $0x11c] sm:$0xff]
      %v5525 = vld [vmem:[#allocation2 + $0x124] sm:$0xff]
      %v5526 = vld [vmem:[#allocation2 + $0x12c] sm:$0x3f]
      %v5527 = vpack.c.bf16 %v5492, %v5491
      %v5528 = vpack.c.bf16 %v5494, %v5493
      %v5529 = vpack.c.bf16 %v5496, %v5495
      %v5530 = vpack.c.bf16 %v5498, %v5497
      %v5531 = vpack.c.bf16 %v5500, %v5499
      %v5532 = vpack.c.bf16 %v5502, %v5501
      %v5533 = vpack.c.bf16 %v5504, %v5503
      %v5534 = vpack.c.bf16 %v5506, %v5505
      %v5535 = vpack.c.bf16 %v5508, %v5507
      %v5536 = vpack.c.bf16 %v5510, %v5509
      %v5537 = vpack.c.bf16 %v5512, %v5511
      %v5538 = vpack.c.bf16 %v5514, %v5513
      %v5539 = vpack.c.bf16 %v5516, %v5515
      %v5540 = vpack.c.bf16 %v5518, %v5517
      %v5541 = vpack.c.bf16 %v5520, %v5519
      %v5542 = vpack.c.bf16 %v5522, %v5521
      %v5543 = vpack.c.bf16 %v5524, %v5523
      %v5544 = vpack.c.bf16 %v5526, %v5525
      %s5545 = scalar_lea.vmem %s3, 80
      %v5546 = vld [vmem:[%s5545] sm:$0xf]
      %v5547 = vld [vmem:[%s5545 + $0x4] sm:$0xf]
      %v5548 = vld [vmem:[%s5545 + $0x8] sm:$0xf]
      %v5549 = vld [vmem:[%s5545 + $0xc] sm:$0xf]
      %v5554 = vunpack.c.l.b16 %v5546
      %v5555 = vunpack.c.l.b16 %v5547
      %v5556 = vunpack.c.l.b16 %v5548
      %v5557 = vunpack.c.l.b16 %v5549
      %v5558 = vpack.c.b16 %v5555, %v5554
      %v5559 = vpack.c.b16 %v5557, %v5556
      %v5563 = vsel %vm364, %v5527, 0
      %v5566 = vsel %vm364, %v5528, 0
      %v5569 = vsel %vm364, %v5529, 0
      %v5572 = vsel %vm364, %v5530, 0
      %v5575 = vsel %vm364, %v5531, 0
      %v5578 = vsel %vm364, %v5532, 0
      %v5581 = vsel %vm364, %v5533, 0
      %v5584 = vsel %vm364, %v5534, 0
      %v5587 = vsel %vm364, %v5535, 0
      %v5590 = vsel %vm364, %v5536, 0
      %v5593 = vsel %vm364, %v5537, 0
      %v5596 = vsel %vm364, %v5538, 0
      %v5599 = vsel %vm364, %v5539, 0
      %v5602 = vsel %vm364, %v5540, 0
      %v5605 = vsel %vm364, %v5541, 0
      %v5608 = vsel %vm364, %v5542, 0
      %v5611 = vsel %vm364, %v5543, 0
      %v5614 = vsel %vm364, %v5544, 0
      %5616 = vmatprep.subr.bf16.mxu0 0
      %5617 = vmatpush1.bf16.msra.mxu0 %v5558
      %5618 = vmatprep.subr.bf16.mxu0 0
      %5619 = vmatpush1.bf16.msra.mxu0 %v5559
      %5620 = vmatprep.subr.bf16.mxu0 0
      %5621 = vmatpush1.bf16.msra.mxu0 0
      %5622 = vmatprep.subr.bf16.mxu0 0
      %5623 = vmatpush1.bf16.msra.mxu0 0
      %5624 = vmatprep.subr.bf16.mxu0 0
      %5625 = vmatpush1.bf16.msra.mxu0 0
      %5626 = vmatprep.subr.bf16.mxu0 0
      %5627 = vmatpush1.bf16.msra.mxu0 0
      %5628 = vmatprep.subr.bf16.mxu0 0
      %5629 = vmatpush1.bf16.msra.mxu0 0
      %5630 = vmatprep.subr.bf16.mxu0 0
      %5631 = vmatpush1.bf16.msra.mxu0 0
      %5632 = vmatprep.subr.bf16.mxu0 0
      %5633 = vmatpush1.bf16.msra.mxu0 0
      %5634 = vmatprep.subr.bf16.mxu0 0
      %5635 = vmatpush1.bf16.msra.mxu0 0
      %5636 = vmatprep.subr.bf16.mxu0 0
      %5637 = vmatpush1.bf16.msra.mxu0 0
      %5638 = vmatprep.subr.bf16.mxu0 0
      %5639 = vmatpush1.bf16.msra.mxu0 0
      %5640 = vmatprep.subr.bf16.mxu0 0
      %5641 = vmatpush1.bf16.msra.mxu0 0
      %5642 = vmatprep.subr.bf16.mxu0 0
      %5643 = vmatpush1.bf16.msra.mxu0 0
      %5644 = vmatprep.subr.bf16.mxu0 0
      %5645 = vmatpush1.bf16.msra.mxu0 0
      %5646 = vmatprep.subr.bf16.mxu0 0
      %5647 = vmatpush1.bf16.msra.mxu0 0
      %5648 = vmatprep.mubr.bf16.mxu0 0
      %5649 = vmatmul.mubr.bf16.gmra.mrb[0].mxu0 %v5563
      %v5650 = vpop.f32.mrb[0].mxu0
      %v5651 = vadd.f32 0.0, %v5650
      %v5652 = vpop.f32.mrb[0].mxu0
      %v5653 = vpop.f32.mrb[0].mxu0
      %v5654 = vadd.f32 0.0, %v5653
      %v5655 = vpop.f32.mrb[0].mxu0
      %5656 = vmatprep.mubr.bf16.mxu0 0
      %5657 = vmatmul.mubr.bf16.gmra.mrb[0].mxu0 %v5566
      %v5658 = vpop.f32.mrb[0].mxu0
      %v5659 = vadd.f32 0.0, %v5658
      %v5660 = vpop.f32.mrb[0].mxu0
      %v5661 = vpop.f32.mrb[0].mxu0
      %v5662 = vadd.f32 0.0, %v5661
      %v5663 = vpop.f32.mrb[0].mxu0
      %5664 = vmatprep.mubr.bf16.mxu0 0
      %5665 = vmatmul.mubr.bf16.gmra.mrb[0].mxu0 %v5569
      %v5666 = vpop.f32.mrb[0].mxu0
      %v5667 = vadd.f32 0.0, %v5666
      %v5668 = vpop.f32.mrb[0].mxu0
      %v5669 = vpop.f32.mrb[0].mxu0
      %v5670 = vadd.f32 0.0, %v5669
      %v5671 = vpop.f32.mrb[0].mxu0
      %5672 = vmatprep.mubr.bf16.mxu0 0
      %5673 = vmatmul.mubr.bf16.gmra.mrb[0].mxu0 %v5572
      %v5674 = vpop.f32.mrb[0].mxu0
      %v5675 = vadd.f32 0.0, %v5674
      %v5676 = vpop.f32.mrb[0].mxu0
      %v5677 = vpop.f32.mrb[0].mxu0
      %v5678 = vadd.f32 0.0, %v5677
      %v5679 = vpop.f32.mrb[0].mxu0
      %5680 = vmatprep.mubr.bf16.mxu0 0
      %5681 = vmatmul.mubr.bf16.gmra.mrb[0].mxu0 %v5575
      %v5682 = vpop.f32.mrb[0].mxu0
      %v5683 = vadd.f32 0.0, %v5682
      %v5684 = vpop.f32.mrb[0].mxu0
      %v5685 = vpop.f32.mrb[0].mxu0
      %v5686 = vadd.f32 0.0, %v5685
      %v5687 = vpop.f32.mrb[0].mxu0
      %5688 = vmatprep.mubr.bf16.mxu0 0
      %5689 = vmatmul.mubr.bf16.gmra.mrb[0].mxu0 %v5578
      %v5690 = vpop.f32.mrb[0].mxu0
      %v5691 = vadd.f32 0.0, %v5690
      %v5692 = vpop.f32.mrb[0].mxu0
      %v5693 = vpop.f32.mrb[0].mxu0
      %v5694 = vadd.f32 0.0, %v5693
      %v5695 = vpop.f32.mrb[0].mxu0
      %5696 = vmatprep.mubr.bf16.mxu0 0
      %5697 = vmatmul.mubr.bf16.gmra.mrb[0].mxu0 %v5581
      %v5698 = vpop.f32.mrb[0].mxu0
      %v5699 = vadd.f32 0.0, %v5698
      %v5700 = vpop.f32.mrb[0].mxu0
      %v5701 = vpop.f32.mrb[0].mxu0
      %v5702 = vadd.f32 0.0, %v5701
      %v5703 = vpop.f32.mrb[0].mxu0
      %5704 = vmatprep.mubr.bf16.mxu0 0
      %5705 = vmatmul.mubr.bf16.gmra.mrb[0].mxu0 %v5584
      %v5706 = vpop.f32.mrb[0].mxu0
      %v5707 = vadd.f32 0.0, %v5706
      %v5708 = vpop.f32.mrb[0].mxu0
      %v5709 = vpop.f32.mrb[0].mxu0
      %v5710 = vadd.f32 0.0, %v5709
      %v5711 = vpop.f32.mrb[0].mxu0
      %5712 = vmatprep.mubr.bf16.mxu0 0
      %5713 = vmatmul.mubr.bf16.gmra.mrb[0].mxu0 %v5587
      %v5714 = vpop.f32.mrb[0].mxu0
      %v5715 = vadd.f32 0.0, %v5714
      %v5716 = vpop.f32.mrb[0].mxu0
      %v5717 = vpop.f32.mrb[0].mxu0
      %v5718 = vadd.f32 0.0, %v5717
      %v5719 = vpop.f32.mrb[0].mxu0
      %5720 = vmatprep.mubr.bf16.mxu0 0
      %5721 = vmatmul.mubr.bf16.gmra.mrb[0].mxu0 %v5590
      %v5722 = vpop.f32.mrb[0].mxu0
      %v5723 = vadd.f32 0.0, %v5722
      %v5724 = vpop.f32.mrb[0].mxu0
      %v5725 = vpop.f32.mrb[0].mxu0
      %v5726 = vadd.f32 0.0, %v5725
      %v5727 = vpop.f32.mrb[0].mxu0
      %5728 = vmatprep.mubr.bf16.mxu0 0
      %5729 = vmatmul.mubr.bf16.gmra.mrb[0].mxu0 %v5593
      %v5730 = vpop.f32.mrb[0].mxu0
      %v5731 = vadd.f32 0.0, %v5730
      %v5732 = vpop.f32.mrb[0].mxu0
      %v5733 = vpop.f32.mrb[0].mxu0
      %v5734 = vadd.f32 0.0, %v5733
      %v5735 = vpop.f32.mrb[0].mxu0
      %5736 = vmatprep.mubr.bf16.mxu0 0
      %5737 = vmatmul.mubr.bf16.gmra.mrb[0].mxu0 %v5596
      %v5738 = vpop.f32.mrb[0].mxu0
      %v5739 = vadd.f32 0.0, %v5738
      %v5740 = vpop.f32.mrb[0].mxu0
      %v5741 = vpop.f32.mrb[0].mxu0
      %v5742 = vadd.f32 0.0, %v5741
      %v5743 = vpop.f32.mrb[0].mxu0
      %5744 = vmatprep.mubr.bf16.mxu0 0
      %5745 = vmatmul.mubr.bf16.gmra.mrb[0].mxu0 %v5599
      %v5746 = vpop.f32.mrb[0].mxu0
      %v5747 = vadd.f32 0.0, %v5746
      %v5748 = vpop.f32.mrb[0].mxu0
      %v5749 = vpop.f32.mrb[0].mxu0
      %v5750 = vadd.f32 0.0, %v5749
      %v5751 = vpop.f32.mrb[0].mxu0
      %5752 = vmatprep.mubr.bf16.mxu0 0
      %5753 = vmatmul.mubr.bf16.gmra.mrb[0].mxu0 %v5602
      %v5754 = vpop.f32.mrb[0].mxu0
      %v5755 = vadd.f32 0.0, %v5754
      %v5756 = vpop.f32.mrb[0].mxu0
      %v5757 = vpop.f32.mrb[0].mxu0
      %v5758 = vadd.f32 0.0, %v5757
      %v5759 = vpop.f32.mrb[0].mxu0
      %5760 = vmatprep.mubr.bf16.mxu0 0
      %5761 = vmatmul.mubr.bf16.gmra.mrb[0].mxu0 %v5605
      %v5762 = vpop.f32.mrb[0].mxu0
      %v5763 = vadd.f32 0.0, %v5762
      %v5764 = vpop.f32.mrb[0].mxu0
      %v5765 = vpop.f32.mrb[0].mxu0
      %v5766 = vadd.f32 0.0, %v5765
      %v5767 = vpop.f32.mrb[0].mxu0
      %5768 = vmatprep.mubr.bf16.mxu0 0
      %5769 = vmatmul.mubr.bf16.gmra.mrb[0].mxu0 %v5608
      %v5770 = vpop.f32.mrb[0].mxu0
      %v5771 = vadd.f32 0.0, %v5770
      %v5772 = vpop.f32.mrb[0].mxu0
      %v5773 = vpop.f32.mrb[0].mxu0
      %v5774 = vadd.f32 0.0, %v5773
      %v5775 = vpop.f32.mrb[0].mxu0
      %5776 = vmatprep.mubr.bf16.mxu0 0
      %5777 = vmatmul.mubr.bf16.gmra.mrb[0].mxu0 %v5611
      %v5778 = vpop.f32.mrb[0].mxu0
      %v5779 = vadd.f32 0.0, %v5778
      %v5780 = vpop.f32.mrb[0].mxu0
      %v5781 = vpop.f32.mrb[0].mxu0
      %v5782 = vadd.f32 0.0, %v5781
      %v5783 = vpop.f32.mrb[0].mxu0
      %5784 = vmatprep.mubr.bf16.mxu0 0
      %5785 = vmatmul.mubr.bf16.gmra.mrb[0].mxu0 %v5614
      %v5786 = vpop.f32.mrb[0].mxu0
      %v5787 = vadd.f32 0.0, %v5786
      %v5788 = vpop.f32.mrb[0].mxu0
      %v5789 = vpop.f32.mrb[0].mxu0
      %v5790 = vadd.f32 0.0, %v5789
      %v5791 = vpop.f32.mrb[0].mxu0
      %5792 = vdwg.mxu0
      %v5793 = vadd.f32 %v5455, %v5651
      %v5794 = vadd.f32 %v5456, %v5654
      %v5795 = vadd.f32 %v5457, %v5659
      %v5796 = vadd.f32 %v5458, %v5662
      %v5797 = vadd.f32 %v5459, %v5667
      %v5798 = vadd.f32 %v5460, %v5670
      %v5799 = vadd.f32 %v5461, %v5675
      %v5800 = vadd.f32 %v5462, %v5678
      %v5801 = vadd.f32 %v5463, %v5683
      %v5802 = vadd.f32 %v5464, %v5686
      %v5803 = vadd.f32 %v5465, %v5691
      %v5804 = vadd.f32 %v5466, %v5694
      %v5805 = vadd.f32 %v5467, %v5699
      %v5806 = vadd.f32 %v5468, %v5702
      %v5807 = vadd.f32 %v5469, %v5707
      %v5808 = vadd.f32 %v5470, %v5710
      %v5809 = vadd.f32 %v5471, %v5715
      %v5810 = vadd.f32 %v5472, %v5718
      %v5811 = vadd.f32 %v5473, %v5723
      %v5812 = vadd.f32 %v5474, %v5726
      %v5813 = vadd.f32 %v5475, %v5731
      %v5814 = vadd.f32 %v5476, %v5734
      %v5815 = vadd.f32 %v5477, %v5739
      %v5816 = vadd.f32 %v5478, %v5742
      %v5817 = vadd.f32 %v5479, %v5747
      %v5818 = vadd.f32 %v5480, %v5750
      %v5819 = vadd.f32 %v5481, %v5755
      %v5820 = vadd.f32 %v5482, %v5758
      %v5821 = vadd.f32 %v5483, %v5763
      %v5822 = vadd.f32 %v5484, %v5766
      %v5823 = vadd.f32 %v5485, %v5771
      %v5824 = vadd.f32 %v5486, %v5774
      %v5825 = vadd.f32 %v5487, %v5779
      %v5826 = vadd.f32 %v5488, %v5782
      %v5827 = vadd.f32 %v5489, %v5787
      %v5828 = vadd.f32 %v5490, %v5790
      %v5829 = vld [vmem:[#allocation2 + $0x24] sm:$0xff]
      %v5830 = vld [vmem:[#allocation2 + $0x2c] sm:$0xff]
      %v5831 = vld [vmem:[#allocation2 + $0x34] sm:$0xff]
      %v5832 = vld [vmem:[#allocation2 + $0x3c] sm:$0xff]
      %v5833 = vld [vmem:[#allocation2 + $0x44] sm:$0xff]
      %v5834 = vld [vmem:[#allocation2 + $0x4c] sm:$0xff]
      %v5835 = vld [vmem:[#allocation2 + $0x54] sm:$0xff]
      %v5836 = vld [vmem:[#allocation2 + $0x5c] sm:$0xff]
      %v5837 = vld [vmem:[#allocation2 + $0x64] sm:$0xff]
      %v5838 = vld [vmem:[#allocation2 + $0x6c] sm:$0xff]
      %v5839 = vld [vmem:[#allocation2 + $0x74] sm:$0xff]
      %v5840 = vld [vmem:[#allocation2 + $0x7c] sm:$0xff]
      %v5841 = vld [vmem:[#allocation2 + $0x84] sm:$0xff]
      %v5842 = vld [vmem:[#allocation2 + $0x8c] sm:$0xff]
      %v5843 = vld [vmem:[#allocation2 + $0x94] sm:$0xff]
      %v5844 = vld [vmem:[#allocation2 + $0x9c] sm:$0xff]
      %v5845 = vld [vmem:[#allocation2 + $0xa4] sm:$0xff]
      %v5846 = vld [vmem:[#allocation2 + $0xac] sm:$0xff]
      %v5847 = vld [vmem:[#allocation2 + $0xb4] sm:$0xff]
      %v5848 = vld [vmem:[#allocation2 + $0xbc] sm:$0xff]
      %v5849 = vld [vmem:[#allocation2 + $0xc4] sm:$0xff]
      %v5850 = vld [vmem:[#allocation2 + $0xcc] sm:$0xff]
      %v5851 = vld [vmem:[#allocation2 + $0xd4] sm:$0xff]
      %v5852 = vld [vmem:[#allocation2 + $0xdc] sm:$0xff]
      %v5853 = vld [vmem:[#allocation2 + $0xe4] sm:$0xff]
      %v5854 = vld [vmem:[#allocation2 + $0xec] sm:$0xff]
      %v5855 = vld [vmem:[#allocation2 + $0xf4] sm:$0xff]
      %v5856 = vld [vmem:[#allocation2 + $0xfc] sm:$0xff]
      %v5857 = vld [vmem:[#allocation2 + $0x104] sm:$0xff]
      %v5858 = vld [vmem:[#allocation2 + $0x10c] sm:$0xff]
      %v5859 = vld [vmem:[#allocation2 + $0x114] sm:$0xff]
      %v5860 = vld [vmem:[#allocation2 + $0x11c] sm:$0xff]
      %v5861 = vld [vmem:[#allocation2 + $0x124] sm:$0xff]
      %v5862 = vld [vmem:[#allocation2 + $0x12c] sm:$0xff]
      %v5863 = vld [vmem:[#allocation2 + $0x134] sm:$0xff]
      %v5864 = vld [vmem:[#allocation2 + $0x13c] sm:$0x3f]
      %v5865 = vpack.c.bf16 %v5830, %v5829
      %v5866 = vpack.c.bf16 %v5832, %v5831
      %v5867 = vpack.c.bf16 %v5834, %v5833
      %v5868 = vpack.c.bf16 %v5836, %v5835
      %v5869 = vpack.c.bf16 %v5838, %v5837
      %v5870 = vpack.c.bf16 %v5840, %v5839
      %v5871 = vpack.c.bf16 %v5842, %v5841
      %v5872 = vpack.c.bf16 %v5844, %v5843
      %v5873 = vpack.c.bf16 %v5846, %v5845
      %v5874 = vpack.c.bf16 %v5848, %v5847
      %v5875 = vpack.c.bf16 %v5850, %v5849
      %v5876 = vpack.c.bf16 %v5852, %v5851
      %v5877 = vpack.c.bf16 %v5854, %v5853
      %v5878 = vpack.c.bf16 %v5856, %v5855
      %v5879 = vpack.c.bf16 %v5858, %v5857
      %v5880 = vpack.c.bf16 %v5860, %v5859
      %v5881 = vpack.c.bf16 %v5862, %v5861
      %v5882 = vpack.c.bf16 %v5864, %v5863
      %s5883 = scalar_lea.vmem %s3, 96
      %v5884 = vld [vmem:[%s5883] sm:$0xf]
      %v5885 = vld [vmem:[%s5883 + $0x4] sm:$0xf]
      %v5886 = vld [vmem:[%s5883 + $0x8] sm:$0xf]
      %v5887 = vld [vmem:[%s5883 + $0xc] sm:$0xf]
      %v5892 = vunpack.c.l.b16 %v5884
      %v5893 = vunpack.c.l.b16 %v5885
      %v5894 = vunpack.c.l.b16 %v5886
      %v5895 = vunpack.c.l.b16 %v5887
      %v5896 = vpack.c.b16 %v5893, %v5892
      %v5897 = vpack.c.b16 %v5895, %v5894
      %v5901 = vsel %vm364, %v5865, 0
      %v5904 = vsel %vm364, %v5866, 0
      %v5907 = vsel %vm364, %v5867, 0
      %v5910 = vsel %vm364, %v5868, 0
      %v5913 = vsel %vm364, %v5869, 0
      %v5916 = vsel %vm364, %v5870, 0
      %v5919 = vsel %vm364, %v5871, 0
      %v5922 = vsel %vm364, %v5872, 0
      %v5925 = vsel %vm364, %v5873, 0
      %v5928 = vsel %vm364, %v5874, 0
      %v5931 = vsel %vm364, %v5875, 0
      %v5934 = vsel %vm364, %v5876, 0
      %v5937 = vsel %vm364, %v5877, 0
      %v5940 = vsel %vm364, %v5878, 0
      %v5943 = vsel %vm364, %v5879, 0
      %v5946 = vsel %vm364, %v5880, 0
      %v5949 = vsel %vm364, %v5881, 0
      %v5952 = vsel %vm364, %v5882, 0
      %5954 = vmatprep.subr.bf16.mxu0 0
      %5955 = vmatpush1.bf16.msra.mxu0 %v5896
      %5956 = vmatprep.subr.bf16.mxu0 0
      %5957 = vmatpush1.bf16.msra.mxu0 %v5897
      %5958 = vmatprep.subr.bf16.mxu0 0
      %5959 = vmatpush1.bf16.msra.mxu0 0
      %5960 = vmatprep.subr.bf16.mxu0 0
      %5961 = vmatpush1.bf16.msra.mxu0 0
      %5962 = vmatprep.subr.bf16.mxu0 0
      %5963 = vmatpush1.bf16.msra.mxu0 0
      %5964 = vmatprep.subr.bf16.mxu0 0
      %5965 = vmatpush1.bf16.msra.mxu0 0
      %5966 = vmatprep.subr.bf16.mxu0 0
      %5967 = vmatpush1.bf16.msra.mxu0 0
      %5968 = vmatprep.subr.bf16.mxu0 0
      %5969 = vmatpush1.bf16.msra.mxu0 0
      %5970 = vmatprep.subr.bf16.mxu0 0
      %5971 = vmatpush1.bf16.msra.mxu0 0
      %5972 = vmatprep.subr.bf16.mxu0 0
      %5973 = vmatpush1.bf16.msra.mxu0 0
      %5974 = vmatprep.subr.bf16.mxu0 0
      %5975 = vmatpush1.bf16.msra.mxu0 0
      %5976 = vmatprep.subr.bf16.mxu0 0
      %5977 = vmatpush1.bf16.msra.mxu0 0
      %5978 = vmatprep.subr.bf16.mxu0 0
      %5979 = vmatpush1.bf16.msra.mxu0 0
      %5980 = vmatprep.subr.bf16.mxu0 0
      %5981 = vmatpush1.bf16.msra.mxu0 0
      %5982 = vmatprep.subr.bf16.mxu0 0
      %5983 = vmatpush1.bf16.msra.mxu0 0
      %5984 = vmatprep.subr.bf16.mxu0 0
      %5985 = vmatpush1.bf16.msra.mxu0 0
      %5986 = vmatprep.mubr.bf16.mxu0 0
      %5987 = vmatmul.mubr.bf16.gmra.mrb[0].mxu0 %v5901
      %v5988 = vpop.f32.mrb[0].mxu0
      %v5989 = vadd.f32 0.0, %v5988
      %v5990 = vpop.f32.mrb[0].mxu0
      %v5991 = vpop.f32.mrb[0].mxu0
      %v5992 = vadd.f32 0.0, %v5991
      %v5993 = vpop.f32.mrb[0].mxu0
      %5994 = vmatprep.mubr.bf16.mxu0 0
      %5995 = vmatmul.mubr.bf16.gmra.mrb[0].mxu0 %v5904
      %v5996 = vpop.f32.mrb[0].mxu0
      %v5997 = vadd.f32 0.0, %v5996
      %v5998 = vpop.f32.mrb[0].mxu0
      %v5999 = vpop.f32.mrb[0].mxu0
      %v6000 = vadd.f32 0.0, %v5999
      %v6001 = vpop.f32.mrb[0].mxu0
      %6002 = vmatprep.mubr.bf16.mxu0 0
      %6003 = vmatmul.mubr.bf16.gmra.mrb[0].mxu0 %v5907
      %v6004 = vpop.f32.mrb[0].mxu0
      %v6005 = vadd.f32 0.0, %v6004
      %v6006 = vpop.f32.mrb[0].mxu0
      %v6007 = vpop.f32.mrb[0].mxu0
      %v6008 = vadd.f32 0.0, %v6007
      %v6009 = vpop.f32.mrb[0].mxu0
      %6010 = vmatprep.mubr.bf16.mxu0 0
      %6011 = vmatmul.mubr.bf16.gmra.mrb[0].mxu0 %v5910
      %v6012 = vpop.f32.mrb[0].mxu0
      %v6013 = vadd.f32 0.0, %v6012
      %v6014 = vpop.f32.mrb[0].mxu0
      %v6015 = vpop.f32.mrb[0].mxu0
      %v6016 = vadd.f32 0.0, %v6015
      %v6017 = vpop.f32.mrb[0].mxu0
      %6018 = vmatprep.mubr.bf16.mxu0 0
      %6019 = vmatmul.mubr.bf16.gmra.mrb[0].mxu0 %v5913
      %v6020 = vpop.f32.mrb[0].mxu0
      %v6021 = vadd.f32 0.0, %v6020
      %v6022 = vpop.f32.mrb[0].mxu0
      %v6023 = vpop.f32.mrb[0].mxu0
      %v6024 = vadd.f32 0.0, %v6023
      %v6025 = vpop.f32.mrb[0].mxu0
      %6026 = vmatprep.mubr.bf16.mxu0 0
      %6027 = vmatmul.mubr.bf16.gmra.mrb[0].mxu0 %v5916
      %v6028 = vpop.f32.mrb[0].mxu0
      %v6029 = vadd.f32 0.0, %v6028
      %v6030 = vpop.f32.mrb[0].mxu0
      %v6031 = vpop.f32.mrb[0].mxu0
      %v6032 = vadd.f32 0.0, %v6031
      %v6033 = vpop.f32.mrb[0].mxu0
      %6034 = vmatprep.mubr.bf16.mxu0 0
      %6035 = vmatmul.mubr.bf16.gmra.mrb[0].mxu0 %v5919
      %v6036 = vpop.f32.mrb[0].mxu0
      %v6037 = vadd.f32 0.0, %v6036
      %v6038 = vpop.f32.mrb[0].mxu0
      %v6039 = vpop.f32.mrb[0].mxu0
      %v6040 = vadd.f32 0.0, %v6039
      %v6041 = vpop.f32.mrb[0].mxu0
      %6042 = vmatprep.mubr.bf16.mxu0 0
      %6043 = vmatmul.mubr.bf16.gmra.mrb[0].mxu0 %v5922
      %v6044 = vpop.f32.mrb[0].mxu0
      %v6045 = vadd.f32 0.0, %v6044
      %v6046 = vpop.f32.mrb[0].mxu0
      %v6047 = vpop.f32.mrb[0].mxu0
      %v6048 = vadd.f32 0.0, %v6047
      %v6049 = vpop.f32.mrb[0].mxu0
      %6050 = vmatprep.mubr.bf16.mxu0 0
      %6051 = vmatmul.mubr.bf16.gmra.mrb[0].mxu0 %v5925
      %v6052 = vpop.f32.mrb[0].mxu0
      %v6053 = vadd.f32 0.0, %v6052
      %v6054 = vpop.f32.mrb[0].mxu0
      %v6055 = vpop.f32.mrb[0].mxu0
      %v6056 = vadd.f32 0.0, %v6055
      %v6057 = vpop.f32.mrb[0].mxu0
      %6058 = vmatprep.mubr.bf16.mxu0 0
      %6059 = vmatmul.mubr.bf16.gmra.mrb[0].mxu0 %v5928
      %v6060 = vpop.f32.mrb[0].mxu0
      %v6061 = vadd.f32 0.0, %v6060
      %v6062 = vpop.f32.mrb[0].mxu0
      %v6063 = vpop.f32.mrb[0].mxu0
      %v6064 = vadd.f32 0.0, %v6063
      %v6065 = vpop.f32.mrb[0].mxu0
      %6066 = vmatprep.mubr.bf16.mxu0 0
      %6067 = vmatmul.mubr.bf16.gmra.mrb[0].mxu0 %v5931
      %v6068 = vpop.f32.mrb[0].mxu0
      %v6069 = vadd.f32 0.0, %v6068
      %v6070 = vpop.f32.mrb[0].mxu0
      %v6071 = vpop.f32.mrb[0].mxu0
      %v6072 = vadd.f32 0.0, %v6071
      %v6073 = vpop.f32.mrb[0].mxu0
      %6074 = vmatprep.mubr.bf16.mxu0 0
      %6075 = vmatmul.mubr.bf16.gmra.mrb[0].mxu0 %v5934
      %v6076 = vpop.f32.mrb[0].mxu0
      %v6077 = vadd.f32 0.0, %v6076
      %v6078 = vpop.f32.mrb[0].mxu0
      %v6079 = vpop.f32.mrb[0].mxu0
      %v6080 = vadd.f32 0.0, %v6079
      %v6081 = vpop.f32.mrb[0].mxu0
      %6082 = vmatprep.mubr.bf16.mxu0 0
      %6083 = vmatmul.mubr.bf16.gmra.mrb[0].mxu0 %v5937
      %v6084 = vpop.f32.mrb[0].mxu0
      %v6085 = vadd.f32 0.0, %v6084
      %v6086 = vpop.f32.mrb[0].mxu0
      %v6087 = vpop.f32.mrb[0].mxu0
      %v6088 = vadd.f32 0.0, %v6087
      %v6089 = vpop.f32.mrb[0].mxu0
      %6090 = vmatprep.mubr.bf16.mxu0 0
      %6091 = vmatmul.mubr.bf16.gmra.mrb[0].mxu0 %v5940
      %v6092 = vpop.f32.mrb[0].mxu0
      %v6093 = vadd.f32 0.0, %v6092
      %v6094 = vpop.f32.mrb[0].mxu0
      %v6095 = vpop.f32.mrb[0].mxu0
      %v6096 = vadd.f32 0.0, %v6095
      %v6097 = vpop.f32.mrb[0].mxu0
      %6098 = vmatprep.mubr.bf16.mxu0 0
      %6099 = vmatmul.mubr.bf16.gmra.mrb[0].mxu0 %v5943
      %v6100 = vpop.f32.mrb[0].mxu0
      %v6101 = vadd.f32 0.0, %v6100
      %v6102 = vpop.f32.mrb[0].mxu0
      %v6103 = vpop.f32.mrb[0].mxu0
      %v6104 = vadd.f32 0.0, %v6103
      %v6105 = vpop.f32.mrb[0].mxu0
      %6106 = vmatprep.mubr.bf16.mxu0 0
      %6107 = vmatmul.mubr.bf16.gmra.mrb[0].mxu0 %v5946
      %v6108 = vpop.f32.mrb[0].mxu0
      %v6109 = vadd.f32 0.0, %v6108
      %v6110 = vpop.f32.mrb[0].mxu0
      %v6111 = vpop.f32.mrb[0].mxu0
      %v6112 = vadd.f32 0.0, %v6111
      %v6113 = vpop.f32.mrb[0].mxu0
      %6114 = vmatprep.mubr.bf16.mxu0 0
      %6115 = vmatmul.mubr.bf16.gmra.mrb[0].mxu0 %v5949
      %v6116 = vpop.f32.mrb[0].mxu0
      %v6117 = vadd.f32 0.0, %v6116
      %v6118 = vpop.f32.mrb[0].mxu0
      %v6119 = vpop.f32.mrb[0].mxu0
      %v6120 = vadd.f32 0.0, %v6119
      %v6121 = vpop.f32.mrb[0].mxu0
      %6122 = vmatprep.mubr.bf16.mxu0 0
      %6123 = vmatmul.mubr.bf16.gmra.mrb[0].mxu0 %v5952
      %v6124 = vpop.f32.mrb[0].mxu0
      %v6125 = vadd.f32 0.0, %v6124
      %v6126 = vpop.f32.mrb[0].mxu0
      %v6127 = vpop.f32.mrb[0].mxu0
      %v6128 = vadd.f32 0.0, %v6127
      %v6129 = vpop.f32.mrb[0].mxu0
      %6130 = vdwg.mxu0
      %v6131 = vadd.f32 %v5793, %v5989
      %v6132 = vadd.f32 %v5794, %v5992
      %v6133 = vadd.f32 %v5795, %v5997
      %v6134 = vadd.f32 %v5796, %v6000
      %v6135 = vadd.f32 %v5797, %v6005
      %v6136 = vadd.f32 %v5798, %v6008
      %v6137 = vadd.f32 %v5799, %v6013
      %v6138 = vadd.f32 %v5800, %v6016
      %v6139 = vadd.f32 %v5801, %v6021
      %v6140 = vadd.f32 %v5802, %v6024
      %v6141 = vadd.f32 %v5803, %v6029
      %v6142 = vadd.f32 %v5804, %v6032
      %v6143 = vadd.f32 %v5805, %v6037
      %v6144 = vadd.f32 %v5806, %v6040
      %v6145 = vadd.f32 %v5807, %v6045
      %v6146 = vadd.f32 %v5808, %v6048
      %v6147 = vadd.f32 %v5809, %v6053
      %v6148 = vadd.f32 %v5810, %v6056
      %v6149 = vadd.f32 %v5811, %v6061
      %v6150 = vadd.f32 %v5812, %v6064
      %v6151 = vadd.f32 %v5813, %v6069
      %v6152 = vadd.f32 %v5814, %v6072
      %v6153 = vadd.f32 %v5815, %v6077
      %v6154 = vadd.f32 %v5816, %v6080
      %v6155 = vadd.f32 %v5817, %v6085
      %v6156 = vadd.f32 %v5818, %v6088
      %v6157 = vadd.f32 %v5819, %v6093
      %v6158 = vadd.f32 %v5820, %v6096
      %v6159 = vadd.f32 %v5821, %v6101
      %v6160 = vadd.f32 %v5822, %v6104
      %v6161 = vadd.f32 %v5823, %v6109
      %v6162 = vadd.f32 %v5824, %v6112
      %v6163 = vadd.f32 %v5825, %v6117
      %v6164 = vadd.f32 %v5826, %v6120
      %v6165 = vadd.f32 %v5827, %v6125
      %v6166 = vadd.f32 %v5828, %v6128
      %v6167 = vld [vmem:[#allocation2 + $0x25] sm:$0xff]
      %v6168 = vld [vmem:[#allocation2 + $0x2d] sm:$0xff]
      %v6169 = vld [vmem:[#allocation2 + $0x35] sm:$0xff]
      %v6170 = vld [vmem:[#allocation2 + $0x3d] sm:$0xff]
      %v6171 = vld [vmem:[#allocation2 + $0x45] sm:$0xff]
      %v6172 = vld [vmem:[#allocation2 + $0x4d] sm:$0xff]
      %v6173 = vld [vmem:[#allocation2 + $0x55] sm:$0xff]
      %v6174 = vld [vmem:[#allocation2 + $0x5d] sm:$0xff]
      %v6175 = vld [vmem:[#allocation2 + $0x65] sm:$0xff]
      %v6176 = vld [vmem:[#allocation2 + $0x6d] sm:$0xff]
      %v6177 = vld [vmem:[#allocation2 + $0x75] sm:$0xff]
      %v6178 = vld [vmem:[#allocation2 + $0x7d] sm:$0xff]
      %v6179 = vld [vmem:[#allocation2 + $0x85] sm:$0xff]
      %v6180 = vld [vmem:[#allocation2 + $0x8d] sm:$0xff]
      %v6181 = vld [vmem:[#allocation2 + $0x95] sm:$0xff]
      %v6182 = vld [vmem:[#allocation2 + $0x9d] sm:$0xff]
      %v6183 = vld [vmem:[#allocation2 + $0xa5] sm:$0xff]
      %v6184 = vld [vmem:[#allocation2 + $0xad] sm:$0xff]
      %v6185 = vld [vmem:[#allocation2 + $0xb5] sm:$0xff]
      %v6186 = vld [vmem:[#allocation2 + $0xbd] sm:$0xff]
      %v6187 = vld [vmem:[#allocation2 + $0xc5] sm:$0xff]
      %v6188 = vld [vmem:[#allocation2 + $0xcd] sm:$0xff]
      %v6189 = vld [vmem:[#allocation2 + $0xd5] sm:$0xff]
      %v6190 = vld [vmem:[#allocation2 + $0xdd] sm:$0xff]
      %v6191 = vld [vmem:[#allocation2 + $0xe5] sm:$0xff]
      %v6192 = vld [vmem:[#allocation2 + $0xed] sm:$0xff]
      %v6193 = vld [vmem:[#allocation2 + $0xf5] sm:$0xff]
      %v6194 = vld [vmem:[#allocation2 + $0xfd] sm:$0xff]
      %v6195 = vld [vmem:[#allocation2 + $0x105] sm:$0xff]
      %v6196 = vld [vmem:[#allocation2 + $0x10d] sm:$0xff]
      %v6197 = vld [vmem:[#allocation2 + $0x115] sm:$0xff]
      %v6198 = vld [vmem:[#allocation2 + $0x11d] sm:$0xff]
      %v6199 = vld [vmem:[#allocation2 + $0x125] sm:$0xff]
      %v6200 = vld [vmem:[#allocation2 + $0x12d] sm:$0xff]
      %v6201 = vld [vmem:[#allocation2 + $0x135] sm:$0xff]
      %v6202 = vld [vmem:[#allocation2 + $0x13d] sm:$0x3f]
      %v6203 = vpack.c.bf16 %v6168, %v6167
      %v6204 = vpack.c.bf16 %v6170, %v6169
      %v6205 = vpack.c.bf16 %v6172, %v6171
      %v6206 = vpack.c.bf16 %v6174, %v6173
      %v6207 = vpack.c.bf16 %v6176, %v6175
      %v6208 = vpack.c.bf16 %v6178, %v6177
      %v6209 = vpack.c.bf16 %v6180, %v6179
      %v6210 = vpack.c.bf16 %v6182, %v6181
      %v6211 = vpack.c.bf16 %v6184, %v6183
      %v6212 = vpack.c.bf16 %v6186, %v6185
      %v6213 = vpack.c.bf16 %v6188, %v6187
      %v6214 = vpack.c.bf16 %v6190, %v6189
      %v6215 = vpack.c.bf16 %v6192, %v6191
      %v6216 = vpack.c.bf16 %v6194, %v6193
      %v6217 = vpack.c.bf16 %v6196, %v6195
      %v6218 = vpack.c.bf16 %v6198, %v6197
      %v6219 = vpack.c.bf16 %v6200, %v6199
      %v6220 = vpack.c.bf16 %v6202, %v6201
      %s6221 = scalar_lea.vmem %s3, 112
      %v6222 = vld [vmem:[%s6221] sm:$0xf]
      %v6223 = vld [vmem:[%s6221 + $0x4] sm:$0xf]
      %v6224 = vld [vmem:[%s6221 + $0x8] sm:$0xf]
      %v6225 = vld [vmem:[%s6221 + $0xc] sm:$0xf]
      %v6230 = vunpack.c.l.b16 %v6222
      %v6231 = vunpack.c.l.b16 %v6223
      %v6232 = vunpack.c.l.b16 %v6224
      %v6233 = vunpack.c.l.b16 %v6225
      %v6234 = vpack.c.b16 %v6231, %v6230
      %v6235 = vpack.c.b16 %v6233, %v6232
      %v6239 = vsel %vm364, %v6203, 0
      %v6242 = vsel %vm364, %v6204, 0
      %v6245 = vsel %vm364, %v6205, 0
      %v6248 = vsel %vm364, %v6206, 0
      %v6251 = vsel %vm364, %v6207, 0
      %v6254 = vsel %vm364, %v6208, 0
      %v6257 = vsel %vm364, %v6209, 0
      %v6260 = vsel %vm364, %v6210, 0
      %v6263 = vsel %vm364, %v6211, 0
      %v6266 = vsel %vm364, %v6212, 0
      %v6269 = vsel %vm364, %v6213, 0
      %v6272 = vsel %vm364, %v6214, 0
      %v6275 = vsel %vm364, %v6215, 0
      %v6278 = vsel %vm364, %v6216, 0
      %v6281 = vsel %vm364, %v6217, 0
      %v6284 = vsel %vm364, %v6218, 0
      %v6287 = vsel %vm364, %v6219, 0
      %v6290 = vsel %vm364, %v6220, 0
      %6292 = vmatprep.subr.bf16.mxu0 0
      %6293 = vmatpush1.bf16.msra.mxu0 %v6234
      %6294 = vmatprep.subr.bf16.mxu0 0
      %6295 = vmatpush1.bf16.msra.mxu0 %v6235
      %6296 = vmatprep.subr.bf16.mxu0 0
      %6297 = vmatpush1.bf16.msra.mxu0 0
      %6298 = vmatprep.subr.bf16.mxu0 0
      %6299 = vmatpush1.bf16.msra.mxu0 0
      %6300 = vmatprep.subr.bf16.mxu0 0
      %6301 = vmatpush1.bf16.msra.mxu0 0
      %6302 = vmatprep.subr.bf16.mxu0 0
      %6303 = vmatpush1.bf16.msra.mxu0 0
      %6304 = vmatprep.subr.bf16.mxu0 0
      %6305 = vmatpush1.bf16.msra.mxu0 0
      %6306 = vmatprep.subr.bf16.mxu0 0
      %6307 = vmatpush1.bf16.msra.mxu0 0
      %6308 = vmatprep.subr.bf16.mxu0 0
      %6309 = vmatpush1.bf16.msra.mxu0 0
      %6310 = vmatprep.subr.bf16.mxu0 0
      %6311 = vmatpush1.bf16.msra.mxu0 0
      %6312 = vmatprep.subr.bf16.mxu0 0
      %6313 = vmatpush1.bf16.msra.mxu0 0
      %6314 = vmatprep.subr.bf16.mxu0 0
      %6315 = vmatpush1.bf16.msra.mxu0 0
      %6316 = vmatprep.subr.bf16.mxu0 0
      %6317 = vmatpush1.bf16.msra.mxu0 0
      %6318 = vmatprep.subr.bf16.mxu0 0
      %6319 = vmatpush1.bf16.msra.mxu0 0
      %6320 = vmatprep.subr.bf16.mxu0 0
      %6321 = vmatpush1.bf16.msra.mxu0 0
      %6322 = vmatprep.subr.bf16.mxu0 0
      %6323 = vmatpush1.bf16.msra.mxu0 0
      %6324 = vmatprep.mubr.bf16.mxu0 0
      %6325 = vmatmul.mubr.bf16.gmra.mrb[0].mxu0 %v6239
      %v6326 = vpop.f32.mrb[0].mxu0
      %v6327 = vadd.f32 0.0, %v6326
      %v6328 = vpop.f32.mrb[0].mxu0
      %v6329 = vpop.f32.mrb[0].mxu0
      %v6330 = vadd.f32 0.0, %v6329
      %v6331 = vpop.f32.mrb[0].mxu0
      %6332 = vmatprep.mubr.bf16.mxu0 0
      %6333 = vmatmul.mubr.bf16.gmra.mrb[0].mxu0 %v6242
      %v6334 = vpop.f32.mrb[0].mxu0
      %v6335 = vadd.f32 0.0, %v6334
      %v6336 = vpop.f32.mrb[0].mxu0
      %v6337 = vpop.f32.mrb[0].mxu0
      %v6338 = vadd.f32 0.0, %v6337
      %v6339 = vpop.f32.mrb[0].mxu0
      %6340 = vmatprep.mubr.bf16.mxu0 0
      %6341 = vmatmul.mubr.bf16.gmra.mrb[0].mxu0 %v6245
      %v6342 = vpop.f32.mrb[0].mxu0
      %v6343 = vadd.f32 0.0, %v6342
      %v6344 = vpop.f32.mrb[0].mxu0
      %v6345 = vpop.f32.mrb[0].mxu0
      %v6346 = vadd.f32 0.0, %v6345
      %v6347 = vpop.f32.mrb[0].mxu0
      %6348 = vmatprep.mubr.bf16.mxu0 0
      %6349 = vmatmul.mubr.bf16.gmra.mrb[0].mxu0 %v6248
      %v6350 = vpop.f32.mrb[0].mxu0
      %v6351 = vadd.f32 0.0, %v6350
      %v6352 = vpop.f32.mrb[0].mxu0
      %v6353 = vpop.f32.mrb[0].mxu0
      %v6354 = vadd.f32 0.0, %v6353
      %v6355 = vpop.f32.mrb[0].mxu0
      %6356 = vmatprep.mubr.bf16.mxu0 0
      %6357 = vmatmul.mubr.bf16.gmra.mrb[0].mxu0 %v6251
      %v6358 = vpop.f32.mrb[0].mxu0
      %v6359 = vadd.f32 0.0, %v6358
      %v6360 = vpop.f32.mrb[0].mxu0
      %v6361 = vpop.f32.mrb[0].mxu0
      %v6362 = vadd.f32 0.0, %v6361
      %v6363 = vpop.f32.mrb[0].mxu0
      %6364 = vmatprep.mubr.bf16.mxu0 0
      %6365 = vmatmul.mubr.bf16.gmra.mrb[0].mxu0 %v6254
      %v6366 = vpop.f32.mrb[0].mxu0
      %v6367 = vadd.f32 0.0, %v6366
      %v6368 = vpop.f32.mrb[0].mxu0
      %v6369 = vpop.f32.mrb[0].mxu0
      %v6370 = vadd.f32 0.0, %v6369
      %v6371 = vpop.f32.mrb[0].mxu0
      %6372 = vmatprep.mubr.bf16.mxu0 0
      %6373 = vmatmul.mubr.bf16.gmra.mrb[0].mxu0 %v6257
      %v6374 = vpop.f32.mrb[0].mxu0
      %v6375 = vadd.f32 0.0, %v6374
      %v6376 = vpop.f32.mrb[0].mxu0
      %v6377 = vpop.f32.mrb[0].mxu0
      %v6378 = vadd.f32 0.0, %v6377
      %v6379 = vpop.f32.mrb[0].mxu0
      %6380 = vmatprep.mubr.bf16.mxu0 0
      %6381 = vmatmul.mubr.bf16.gmra.mrb[0].mxu0 %v6260
      %v6382 = vpop.f32.mrb[0].mxu0
      %v6383 = vadd.f32 0.0, %v6382
      %v6384 = vpop.f32.mrb[0].mxu0
      %v6385 = vpop.f32.mrb[0].mxu0
      %v6386 = vadd.f32 0.0, %v6385
      %v6387 = vpop.f32.mrb[0].mxu0
      %6388 = vmatprep.mubr.bf16.mxu0 0
      %6389 = vmatmul.mubr.bf16.gmra.mrb[0].mxu0 %v6263
      %v6390 = vpop.f32.mrb[0].mxu0
      %v6391 = vadd.f32 0.0, %v6390
      %v6392 = vpop.f32.mrb[0].mxu0
      %v6393 = vpop.f32.mrb[0].mxu0
      %v6394 = vadd.f32 0.0, %v6393
      %v6395 = vpop.f32.mrb[0].mxu0
      %6396 = vmatprep.mubr.bf16.mxu0 0
      %6397 = vmatmul.mubr.bf16.gmra.mrb[0].mxu0 %v6266
      %v6398 = vpop.f32.mrb[0].mxu0
      %v6399 = vadd.f32 0.0, %v6398
      %v6400 = vpop.f32.mrb[0].mxu0
      %v6401 = vpop.f32.mrb[0].mxu0
      %v6402 = vadd.f32 0.0, %v6401
      %v6403 = vpop.f32.mrb[0].mxu0
      %6404 = vmatprep.mubr.bf16.mxu0 0
      %6405 = vmatmul.mubr.bf16.gmra.mrb[0].mxu0 %v6269
      %v6406 = vpop.f32.mrb[0].mxu0
      %v6407 = vadd.f32 0.0, %v6406
      %v6408 = vpop.f32.mrb[0].mxu0
      %v6409 = vpop.f32.mrb[0].mxu0
      %v6410 = vadd.f32 0.0, %v6409
      %v6411 = vpop.f32.mrb[0].mxu0
      %6412 = vmatprep.mubr.bf16.mxu0 0
      %6413 = vmatmul.mubr.bf16.gmra.mrb[0].mxu0 %v6272
      %v6414 = vpop.f32.mrb[0].mxu0
      %v6415 = vadd.f32 0.0, %v6414
      %v6416 = vpop.f32.mrb[0].mxu0
      %v6417 = vpop.f32.mrb[0].mxu0
      %v6418 = vadd.f32 0.0, %v6417
      %v6419 = vpop.f32.mrb[0].mxu0
      %6420 = vmatprep.mubr.bf16.mxu0 0
      %6421 = vmatmul.mubr.bf16.gmra.mrb[0].mxu0 %v6275
      %v6422 = vpop.f32.mrb[0].mxu0
      %v6423 = vadd.f32 0.0, %v6422
      %v6424 = vpop.f32.mrb[0].mxu0
      %v6425 = vpop.f32.mrb[0].mxu0
      %v6426 = vadd.f32 0.0, %v6425
      %v6427 = vpop.f32.mrb[0].mxu0
      %6428 = vmatprep.mubr.bf16.mxu0 0
      %6429 = vmatmul.mubr.bf16.gmra.mrb[0].mxu0 %v6278
      %v6430 = vpop.f32.mrb[0].mxu0
      %v6431 = vadd.f32 0.0, %v6430
      %v6432 = vpop.f32.mrb[0].mxu0
      %v6433 = vpop.f32.mrb[0].mxu0
      %v6434 = vadd.f32 0.0, %v6433
      %v6435 = vpop.f32.mrb[0].mxu0
      %6436 = vmatprep.mubr.bf16.mxu0 0
      %6437 = vmatmul.mubr.bf16.gmra.mrb[0].mxu0 %v6281
      %v6438 = vpop.f32.mrb[0].mxu0
      %v6439 = vadd.f32 0.0, %v6438
      %v6440 = vpop.f32.mrb[0].mxu0
      %v6441 = vpop.f32.mrb[0].mxu0
      %v6442 = vadd.f32 0.0, %v6441
      %v6443 = vpop.f32.mrb[0].mxu0
      %6444 = vmatprep.mubr.bf16.mxu0 0
      %6445 = vmatmul.mubr.bf16.gmra.mrb[0].mxu0 %v6284
      %v6446 = vpop.f32.mrb[0].mxu0
      %v6447 = vadd.f32 0.0, %v6446
      %v6448 = vpop.f32.mrb[0].mxu0
      %v6449 = vpop.f32.mrb[0].mxu0
      %v6450 = vadd.f32 0.0, %v6449
      %v6451 = vpop.f32.mrb[0].mxu0
      %6452 = vmatprep.mubr.bf16.mxu0 0
      %6453 = vmatmul.mubr.bf16.gmra.mrb[0].mxu0 %v6287
      %v6454 = vpop.f32.mrb[0].mxu0
      %v6455 = vadd.f32 0.0, %v6454
      %v6456 = vpop.f32.mrb[0].mxu0
      %v6457 = vpop.f32.mrb[0].mxu0
      %v6458 = vadd.f32 0.0, %v6457
      %v6459 = vpop.f32.mrb[0].mxu0
      %6460 = vmatprep.mubr.bf16.mxu0 0
      %6461 = vmatmul.mubr.bf16.gmra.mrb[0].mxu0 %v6290
      %v6462 = vpop.f32.mrb[0].mxu0
      %v6463 = vadd.f32 0.0, %v6462
      %v6464 = vpop.f32.mrb[0].mxu0
      %v6465 = vpop.f32.mrb[0].mxu0
      %v6466 = vadd.f32 0.0, %v6465
      %v6467 = vpop.f32.mrb[0].mxu0
      %6468 = vdwg.mxu0
      %v6469 = vadd.f32 %v6131, %v6327
      %v6470 = vadd.f32 %v6132, %v6330
      %v6471 = vadd.f32 %v6133, %v6335
      %v6472 = vadd.f32 %v6134, %v6338
      %v6473 = vadd.f32 %v6135, %v6343
      %v6474 = vadd.f32 %v6136, %v6346
      %v6475 = vadd.f32 %v6137, %v6351
      %v6476 = vadd.f32 %v6138, %v6354
      %v6477 = vadd.f32 %v6139, %v6359
      %v6478 = vadd.f32 %v6140, %v6362
      %v6479 = vadd.f32 %v6141, %v6367
      %v6480 = vadd.f32 %v6142, %v6370
      %v6481 = vadd.f32 %v6143, %v6375
      %v6482 = vadd.f32 %v6144, %v6378
      %v6483 = vadd.f32 %v6145, %v6383
      %v6484 = vadd.f32 %v6146, %v6386
      %v6485 = vadd.f32 %v6147, %v6391
      %v6486 = vadd.f32 %v6148, %v6394
      %v6487 = vadd.f32 %v6149, %v6399
      %v6488 = vadd.f32 %v6150, %v6402
      %v6489 = vadd.f32 %v6151, %v6407
      %v6490 = vadd.f32 %v6152, %v6410
      %v6491 = vadd.f32 %v6153, %v6415
      %v6492 = vadd.f32 %v6154, %v6418
      %v6493 = vadd.f32 %v6155, %v6423
      %v6494 = vadd.f32 %v6156, %v6426
      %v6495 = vadd.f32 %v6157, %v6431
      %v6496 = vadd.f32 %v6158, %v6434
      %v6497 = vadd.f32 %v6159, %v6439
      %v6498 = vadd.f32 %v6160, %v6442
      %v6499 = vadd.f32 %v6161, %v6447
      %v6500 = vadd.f32 %v6162, %v6450
      %v6501 = vadd.f32 %v6163, %v6455
      %v6502 = vadd.f32 %v6164, %v6458
      %v6503 = vadd.f32 %v6165, %v6463
      %v6504 = vadd.f32 %v6166, %v6466
      %v6505 = vld [vmem:[#allocation2 + $0x26] sm:$0xff]
      %v6506 = vld [vmem:[#allocation2 + $0x2e] sm:$0xff]
      %v6507 = vld [vmem:[#allocation2 + $0x36] sm:$0xff]
      %v6508 = vld [vmem:[#allocation2 + $0x3e] sm:$0xff]
      %v6509 = vld [vmem:[#allocation2 + $0x46] sm:$0xff]
      %v6510 = vld [vmem:[#allocation2 + $0x4e] sm:$0xff]
      %v6511 = vld [vmem:[#allocation2 + $0x56] sm:$0xff]
      %v6512 = vld [vmem:[#allocation2 + $0x5e] sm:$0xff]
      %v6513 = vld [vmem:[#allocation2 + $0x66] sm:$0xff]
      %v6514 = vld [vmem:[#allocation2 + $0x6e] sm:$0xff]
      %v6515 = vld [vmem:[#allocation2 + $0x76] sm:$0xff]
      %v6516 = vld [vmem:[#allocation2 + $0x7e] sm:$0xff]
      %v6517 = vld [vmem:[#allocation2 + $0x86] sm:$0xff]
      %v6518 = vld [vmem:[#allocation2 + $0x8e] sm:$0xff]
      %v6519 = vld [vmem:[#allocation2 + $0x96] sm:$0xff]
      %v6520 = vld [vmem:[#allocation2 + $0x9e] sm:$0xff]
      %v6521 = vld [vmem:[#allocation2 + $0xa6] sm:$0xff]
      %v6522 = vld [vmem:[#allocation2 + $0xae] sm:$0xff]
      %v6523 = vld [vmem:[#allocation2 + $0xb6] sm:$0xff]
      %v6524 = vld [vmem:[#allocation2 + $0xbe] sm:$0xff]
      %v6525 = vld [vmem:[#allocation2 + $0xc6] sm:$0xff]
      %v6526 = vld [vmem:[#allocation2 + $0xce] sm:$0xff]
      %v6527 = vld [vmem:[#allocation2 + $0xd6] sm:$0xff]
      %v6528 = vld [vmem:[#allocation2 + $0xde] sm:$0xff]
      %v6529 = vld [vmem:[#allocation2 + $0xe6] sm:$0xff]
      %v6530 = vld [vmem:[#allocation2 + $0xee] sm:$0xff]
      %v6531 = vld [vmem:[#allocation2 + $0xf6] sm:$0xff]
      %v6532 = vld [vmem:[#allocation2 + $0xfe] sm:$0xff]
      %v6533 = vld [vmem:[#allocation2 + $0x106] sm:$0xff]
      %v6534 = vld [vmem:[#allocation2 + $0x10e] sm:$0xff]
      %v6535 = vld [vmem:[#allocation2 + $0x116] sm:$0xff]
      %v6536 = vld [vmem:[#allocation2 + $0x11e] sm:$0xff]
      %v6537 = vld [vmem:[#allocation2 + $0x126] sm:$0xff]
      %v6538 = vld [vmem:[#allocation2 + $0x12e] sm:$0xff]
      %v6539 = vld [vmem:[#allocation2 + $0x136] sm:$0xff]
      %v6540 = vld [vmem:[#allocation2 + $0x13e] sm:$0x3f]
      %v6541 = vpack.c.bf16 %v6506, %v6505
      %v6542 = vpack.c.bf16 %v6508, %v6507
      %v6543 = vpack.c.bf16 %v6510, %v6509
      %v6544 = vpack.c.bf16 %v6512, %v6511
      %v6545 = vpack.c.bf16 %v6514, %v6513
      %v6546 = vpack.c.bf16 %v6516, %v6515
      %v6547 = vpack.c.bf16 %v6518, %v6517
      %v6548 = vpack.c.bf16 %v6520, %v6519
      %v6549 = vpack.c.bf16 %v6522, %v6521
      %v6550 = vpack.c.bf16 %v6524, %v6523
      %v6551 = vpack.c.bf16 %v6526, %v6525
      %v6552 = vpack.c.bf16 %v6528, %v6527
      %v6553 = vpack.c.bf16 %v6530, %v6529
      %v6554 = vpack.c.bf16 %v6532, %v6531
      %v6555 = vpack.c.bf16 %v6534, %v6533
      %v6556 = vpack.c.bf16 %v6536, %v6535
      %v6557 = vpack.c.bf16 %v6538, %v6537
      %v6558 = vpack.c.bf16 %v6540, %v6539
      %s6559 = scalar_lea.vmem %s3, 128
      %v6560 = vld [vmem:[%s6559] sm:$0xf]
      %v6561 = vld [vmem:[%s6559 + $0x4] sm:$0xf]
      %v6562 = vld [vmem:[%s6559 + $0x8] sm:$0xf]
      %v6563 = vld [vmem:[%s6559 + $0xc] sm:$0xf]
      %v6568 = vunpack.c.l.b16 %v6560
      %v6569 = vunpack.c.l.b16 %v6561
      %v6570 = vunpack.c.l.b16 %v6562
      %v6571 = vunpack.c.l.b16 %v6563
      %v6572 = vpack.c.b16 %v6569, %v6568
      %v6573 = vpack.c.b16 %v6571, %v6570
      %v6577 = vsel %vm364, %v6541, 0
      %v6580 = vsel %vm364, %v6542, 0
      %v6583 = vsel %vm364, %v6543, 0
      %v6586 = vsel %vm364, %v6544, 0
      %v6589 = vsel %vm364, %v6545, 0
      %v6592 = vsel %vm364, %v6546, 0
      %v6595 = vsel %vm364, %v6547, 0
      %v6598 = vsel %vm364, %v6548, 0
      %v6601 = vsel %vm364, %v6549, 0
      %v6604 = vsel %vm364, %v6550, 0
      %v6607 = vsel %vm364, %v6551, 0
      %v6610 = vsel %vm364, %v6552, 0
      %v6613 = vsel %vm364, %v6553, 0
      %v6616 = vsel %vm364, %v6554, 0
      %v6619 = vsel %vm364, %v6555, 0
      %v6622 = vsel %vm364, %v6556, 0
      %v6625 = vsel %vm364, %v6557, 0
      %v6628 = vsel %vm364, %v6558, 0
      %6630 = vmatprep.subr.bf16.mxu0 0
      %6631 = vmatpush1.bf16.msra.mxu0 %v6572
      %6632 = vmatprep.subr.bf16.mxu0 0
      %6633 = vmatpush1.bf16.msra.mxu0 %v6573
      %6634 = vmatprep.subr.bf16.mxu0 0
      %6635 = vmatpush1.bf16.msra.mxu0 0
      %6636 = vmatprep.subr.bf16.mxu0 0
      %6637 = vmatpush1.bf16.msra.mxu0 0
      %6638 = vmatprep.subr.bf16.mxu0 0
      %6639 = vmatpush1.bf16.msra.mxu0 0
      %6640 = vmatprep.subr.bf16.mxu0 0
      %6641 = vmatpush1.bf16.msra.mxu0 0
      %6642 = vmatprep.subr.bf16.mxu0 0
      %6643 = vmatpush1.bf16.msra.mxu0 0
      %6644 = vmatprep.subr.bf16.mxu0 0
      %6645 = vmatpush1.bf16.msra.mxu0 0
      %6646 = vmatprep.subr.bf16.mxu0 0
      %6647 = vmatpush1.bf16.msra.mxu0 0
      %6648 = vmatprep.subr.bf16.mxu0 0
      %6649 = vmatpush1.bf16.msra.mxu0 0
      %6650 = vmatprep.subr.bf16.mxu0 0
      %6651 = vmatpush1.bf16.msra.mxu0 0
      %6652 = vmatprep.subr.bf16.mxu0 0
      %6653 = vmatpush1.bf16.msra.mxu0 0
      %6654 = vmatprep.subr.bf16.mxu0 0
      %6655 = vmatpush1.bf16.msra.mxu0 0
      %6656 = vmatprep.subr.bf16.mxu0 0
      %6657 = vmatpush1.bf16.msra.mxu0 0
      %6658 = vmatprep.subr.bf16.mxu0 0
      %6659 = vmatpush1.bf16.msra.mxu0 0
      %6660 = vmatprep.subr.bf16.mxu0 0
      %6661 = vmatpush1.bf16.msra.mxu0 0
      %6662 = vmatprep.mubr.bf16.mxu0 0
      %6663 = vmatmul.mubr.bf16.gmra.mrb[0].mxu0 %v6577
      %v6664 = vpop.f32.mrb[0].mxu0
      %v6665 = vadd.f32 0.0, %v6664
      %v6666 = vpop.f32.mrb[0].mxu0
      %v6667 = vpop.f32.mrb[0].mxu0
      %v6668 = vadd.f32 0.0, %v6667
      %v6669 = vpop.f32.mrb[0].mxu0
      %6670 = vmatprep.mubr.bf16.mxu0 0
      %6671 = vmatmul.mubr.bf16.gmra.mrb[0].mxu0 %v6580
      %v6672 = vpop.f32.mrb[0].mxu0
      %v6673 = vadd.f32 0.0, %v6672
      %v6674 = vpop.f32.mrb[0].mxu0
      %v6675 = vpop.f32.mrb[0].mxu0
      %v6676 = vadd.f32 0.0, %v6675
      %v6677 = vpop.f32.mrb[0].mxu0
      %6678 = vmatprep.mubr.bf16.mxu0 0
      %6679 = vmatmul.mubr.bf16.gmra.mrb[0].mxu0 %v6583
      %v6680 = vpop.f32.mrb[0].mxu0
      %v6681 = vadd.f32 0.0, %v6680
      %v6682 = vpop.f32.mrb[0].mxu0
      %v6683 = vpop.f32.mrb[0].mxu0
      %v6684 = vadd.f32 0.0, %v6683
      %v6685 = vpop.f32.mrb[0].mxu0
      %6686 = vmatprep.mubr.bf16.mxu0 0
      %6687 = vmatmul.mubr.bf16.gmra.mrb[0].mxu0 %v6586
      %v6688 = vpop.f32.mrb[0].mxu0
      %v6689 = vadd.f32 0.0, %v6688
      %v6690 = vpop.f32.mrb[0].mxu0
      %v6691 = vpop.f32.mrb[0].mxu0
      %v6692 = vadd.f32 0.0, %v6691
      %v6693 = vpop.f32.mrb[0].mxu0
      %6694 = vmatprep.mubr.bf16.mxu0 0
      %6695 = vmatmul.mubr.bf16.gmra.mrb[0].mxu0 %v6589
      %v6696 = vpop.f32.mrb[0].mxu0
      %v6697 = vadd.f32 0.0, %v6696
      %v6698 = vpop.f32.mrb[0].mxu0
      %v6699 = vpop.f32.mrb[0].mxu0
      %v6700 = vadd.f32 0.0, %v6699
      %v6701 = vpop.f32.mrb[0].mxu0
      %6702 = vmatprep.mubr.bf16.mxu0 0
      %6703 = vmatmul.mubr.bf16.gmra.mrb[0].mxu0 %v6592
      %v6704 = vpop.f32.mrb[0].mxu0
      %v6705 = vadd.f32 0.0, %v6704
      %v6706 = vpop.f32.mrb[0].mxu0
      %v6707 = vpop.f32.mrb[0].mxu0
      %v6708 = vadd.f32 0.0, %v6707
      %v6709 = vpop.f32.mrb[0].mxu0
      %6710 = vmatprep.mubr.bf16.mxu0 0
      %6711 = vmatmul.mubr.bf16.gmra.mrb[0].mxu0 %v6595
      %v6712 = vpop.f32.mrb[0].mxu0
      %v6713 = vadd.f32 0.0, %v6712
      %v6714 = vpop.f32.mrb[0].mxu0
      %v6715 = vpop.f32.mrb[0].mxu0
      %v6716 = vadd.f32 0.0, %v6715
      %v6717 = vpop.f32.mrb[0].mxu0
      %6718 = vmatprep.mubr.bf16.mxu0 0
      %6719 = vmatmul.mubr.bf16.gmra.mrb[0].mxu0 %v6598
      %v6720 = vpop.f32.mrb[0].mxu0
      %v6721 = vadd.f32 0.0, %v6720
      %v6722 = vpop.f32.mrb[0].mxu0
      %v6723 = vpop.f32.mrb[0].mxu0
      %v6724 = vadd.f32 0.0, %v6723
      %v6725 = vpop.f32.mrb[0].mxu0
      %6726 = vmatprep.mubr.bf16.mxu0 0
      %6727 = vmatmul.mubr.bf16.gmra.mrb[0].mxu0 %v6601
      %v6728 = vpop.f32.mrb[0].mxu0
      %v6729 = vadd.f32 0.0, %v6728
      %v6730 = vpop.f32.mrb[0].mxu0
      %v6731 = vpop.f32.mrb[0].mxu0
      %v6732 = vadd.f32 0.0, %v6731
      %v6733 = vpop.f32.mrb[0].mxu0
      %6734 = vmatprep.mubr.bf16.mxu0 0
      %6735 = vmatmul.mubr.bf16.gmra.mrb[0].mxu0 %v6604
      %v6736 = vpop.f32.mrb[0].mxu0
      %v6737 = vadd.f32 0.0, %v6736
      %v6738 = vpop.f32.mrb[0].mxu0
      %v6739 = vpop.f32.mrb[0].mxu0
      %v6740 = vadd.f32 0.0, %v6739
      %v6741 = vpop.f32.mrb[0].mxu0
      %6742 = vmatprep.mubr.bf16.mxu0 0
      %6743 = vmatmul.mubr.bf16.gmra.mrb[0].mxu0 %v6607
      %v6744 = vpop.f32.mrb[0].mxu0
      %v6745 = vadd.f32 0.0, %v6744
      %v6746 = vpop.f32.mrb[0].mxu0
      %v6747 = vpop.f32.mrb[0].mxu0
      %v6748 = vadd.f32 0.0, %v6747
      %v6749 = vpop.f32.mrb[0].mxu0
      %6750 = vmatprep.mubr.bf16.mxu0 0
      %6751 = vmatmul.mubr.bf16.gmra.mrb[0].mxu0 %v6610
      %v6752 = vpop.f32.mrb[0].mxu0
      %v6753 = vadd.f32 0.0, %v6752
      %v6754 = vpop.f32.mrb[0].mxu0
      %v6755 = vpop.f32.mrb[0].mxu0
      %v6756 = vadd.f32 0.0, %v6755
      %v6757 = vpop.f32.mrb[0].mxu0
      %6758 = vmatprep.mubr.bf16.mxu0 0
      %6759 = vmatmul.mubr.bf16.gmra.mrb[0].mxu0 %v6613
      %v6760 = vpop.f32.mrb[0].mxu0
      %v6761 = vadd.f32 0.0, %v6760
      %v6762 = vpop.f32.mrb[0].mxu0
      %v6763 = vpop.f32.mrb[0].mxu0
      %v6764 = vadd.f32 0.0, %v6763
      %v6765 = vpop.f32.mrb[0].mxu0
      %6766 = vmatprep.mubr.bf16.mxu0 0
      %6767 = vmatmul.mubr.bf16.gmra.mrb[0].mxu0 %v6616
      %v6768 = vpop.f32.mrb[0].mxu0
      %v6769 = vadd.f32 0.0, %v6768
      %v6770 = vpop.f32.mrb[0].mxu0
      %v6771 = vpop.f32.mrb[0].mxu0
      %v6772 = vadd.f32 0.0, %v6771
      %v6773 = vpop.f32.mrb[0].mxu0
      %6774 = vmatprep.mubr.bf16.mxu0 0
      %6775 = vmatmul.mubr.bf16.gmra.mrb[0].mxu0 %v6619
      %v6776 = vpop.f32.mrb[0].mxu0
      %v6777 = vadd.f32 0.0, %v6776
      %v6778 = vpop.f32.mrb[0].mxu0
      %v6779 = vpop.f32.mrb[0].mxu0
      %v6780 = vadd.f32 0.0, %v6779
      %v6781 = vpop.f32.mrb[0].mxu0
      %6782 = vmatprep.mubr.bf16.mxu0 0
      %6783 = vmatmul.mubr.bf16.gmra.mrb[0].mxu0 %v6622
      %v6784 = vpop.f32.mrb[0].mxu0
      %v6785 = vadd.f32 0.0, %v6784
      %v6786 = vpop.f32.mrb[0].mxu0
      %v6787 = vpop.f32.mrb[0].mxu0
      %v6788 = vadd.f32 0.0, %v6787
      %v6789 = vpop.f32.mrb[0].mxu0
      %6790 = vmatprep.mubr.bf16.mxu0 0
      %6791 = vmatmul.mubr.bf16.gmra.mrb[0].mxu0 %v6625
      %v6792 = vpop.f32.mrb[0].mxu0
      %v6793 = vadd.f32 0.0, %v6792
      %v6794 = vpop.f32.mrb[0].mxu0
      %v6795 = vpop.f32.mrb[0].mxu0
      %v6796 = vadd.f32 0.0, %v6795
      %v6797 = vpop.f32.mrb[0].mxu0
      %6798 = vmatprep.mubr.bf16.mxu0 0
      %6799 = vmatmul.mubr.bf16.gmra.mrb[0].mxu0 %v6628
      %v6800 = vpop.f32.mrb[0].mxu0
      %v6801 = vadd.f32 0.0, %v6800
      %v6802 = vpop.f32.mrb[0].mxu0
      %v6803 = vpop.f32.mrb[0].mxu0
      %v6804 = vadd.f32 0.0, %v6803
      %v6805 = vpop.f32.mrb[0].mxu0
      %6806 = vdwg.mxu0
      %v6807 = vadd.f32 %v6469, %v6665
      %v6808 = vadd.f32 %v6470, %v6668
      %v6809 = vadd.f32 %v6471, %v6673
      %v6810 = vadd.f32 %v6472, %v6676
      %v6811 = vadd.f32 %v6473, %v6681
      %v6812 = vadd.f32 %v6474, %v6684
      %v6813 = vadd.f32 %v6475, %v6689
      %v6814 = vadd.f32 %v6476, %v6692
      %v6815 = vadd.f32 %v6477, %v6697
      %v6816 = vadd.f32 %v6478, %v6700
      %v6817 = vadd.f32 %v6479, %v6705
      %v6818 = vadd.f32 %v6480, %v6708
      %v6819 = vadd.f32 %v6481, %v6713
      %v6820 = vadd.f32 %v6482, %v6716
      %v6821 = vadd.f32 %v6483, %v6721
      %v6822 = vadd.f32 %v6484, %v6724
      %v6823 = vadd.f32 %v6485, %v6729
      %v6824 = vadd.f32 %v6486, %v6732
      %v6825 = vadd.f32 %v6487, %v6737
      %v6826 = vadd.f32 %v6488, %v6740
      %v6827 = vadd.f32 %v6489, %v6745
      %v6828 = vadd.f32 %v6490, %v6748
      %v6829 = vadd.f32 %v6491, %v6753
      %v6830 = vadd.f32 %v6492, %v6756
      %v6831 = vadd.f32 %v6493, %v6761
      %v6832 = vadd.f32 %v6494, %v6764
      %v6833 = vadd.f32 %v6495, %v6769
      %v6834 = vadd.f32 %v6496, %v6772
      %v6835 = vadd.f32 %v6497, %v6777
      %v6836 = vadd.f32 %v6498, %v6780
      %v6837 = vadd.f32 %v6499, %v6785
      %v6838 = vadd.f32 %v6500, %v6788
      %v6839 = vadd.f32 %v6501, %v6793
      %v6840 = vadd.f32 %v6502, %v6796
      %v6841 = vadd.f32 %v6503, %v6801
      %v6842 = vadd.f32 %v6504, %v6804
      %v6843 = vmul.f32 %v6807, %v3208
      %v6844 = vmul.f32 %v6808, %v3213
      %v6845 = vmul.f32 %v6809, %v3218
      %v6846 = vmul.f32 %v6810, %v3223
      %v6847 = vmul.f32 %v6811, %v3228
      %v6848 = vmul.f32 %v6812, %v3233
      %v6849 = vmul.f32 %v6813, %v3238
      %v6850 = vmul.f32 %v6814, %v3243
      %v6851 = vmul.f32 %v6815, %v3248
      %v6852 = vmul.f32 %v6816, %v3253
      %v6853 = vmul.f32 %v6817, %v3258
      %v6854 = vmul.f32 %v6818, %v3263
      %v6855 = vmul.f32 %v6819, %v3268
      %v6856 = vmul.f32 %v6820, %v3273
      %v6857 = vmul.f32 %v6821, %v3278
      %v6858 = vmul.f32 %v6822, %v3283
      %v6859 = vmul.f32 %v6823, %v3288
      %v6860 = vmul.f32 %v6824, %v3293
      %v6861 = vmul.f32 %v6825, %v3298
      %v6862 = vmul.f32 %v6826, %v3303
      %v6863 = vmul.f32 %v6827, %v3308
      %v6864 = vmul.f32 %v6828, %v3313
      %v6865 = vmul.f32 %v6829, %v3318
      %v6866 = vmul.f32 %v6830, %v3323
      %v6867 = vmul.f32 %v6831, %v3328
      %v6868 = vmul.f32 %v6832, %v3333
      %v6869 = vmul.f32 %v6833, %v3338
      %v6870 = vmul.f32 %v6834, %v3343
      %v6871 = vmul.f32 %v6835, %v3348
      %v6872 = vmul.f32 %v6836, %v3353
      %v6873 = vmul.f32 %v6837, %v3358
      %v6874 = vmul.f32 %v6838, %v3363
      %v6875 = vmul.f32 %v6839, %v3368
      %v6876 = vmul.f32 %v6840, %v3373
      %v6877 = vmul.f32 %v6841, %v3378
      %v6878 = vmul.f32 %v6842, %v3383
      %v6879 = vsel %vm364, %v6843, 0.0
      %v6880 = vsel %vm364, %v6844, 0.0
      %v6881 = vadd.f32 %v6879, %v6880
      %v6882 = vsel %vm364, %v6845, 0.0
      %v6883 = vadd.f32 %v6881, %v6882
      %v6884 = vsel %vm364, %v6846, 0.0
      %v6885 = vadd.f32 %v6883, %v6884
      %v6886 = vsel %vm364, %v6847, 0.0
      %v6887 = vadd.f32 %v6885, %v6886
      %v6888 = vsel %vm364, %v6848, 0.0
      %v6889 = vadd.f32 %v6887, %v6888
      %v6890 = vsel %vm364, %v6849, 0.0
      %v6891 = vadd.f32 %v6889, %v6890
      %v6892 = vsel %vm364, %v6850, 0.0
      %v6893 = vadd.f32 %v6891, %v6892
      %v6894 = vsel %vm364, %v6851, 0.0
      %v6895 = vadd.f32 %v6893, %v6894
      %v6896 = vsel %vm364, %v6852, 0.0
      %v6897 = vadd.f32 %v6895, %v6896
      %v6898 = vsel %vm364, %v6853, 0.0
      %v6899 = vadd.f32 %v6897, %v6898
      %v6900 = vsel %vm364, %v6854, 0.0
      %v6901 = vadd.f32 %v6899, %v6900
      %v6902 = vsel %vm364, %v6855, 0.0
      %v6903 = vadd.f32 %v6901, %v6902
      %v6904 = vsel %vm364, %v6856, 0.0
      %v6905 = vadd.f32 %v6903, %v6904
      %v6906 = vsel %vm364, %v6857, 0.0
      %v6907 = vadd.f32 %v6905, %v6906
      %v6908 = vsel %vm364, %v6858, 0.0
      %v6909 = vadd.f32 %v6907, %v6908
      %v6910 = vsel %vm364, %v6859, 0.0
      %v6911 = vadd.f32 %v6909, %v6910
      %v6912 = vsel %vm364, %v6860, 0.0
      %v6913 = vadd.f32 %v6911, %v6912
      %v6914 = vsel %vm364, %v6861, 0.0
      %v6915 = vadd.f32 %v6913, %v6914
      %v6916 = vsel %vm364, %v6862, 0.0
      %v6917 = vadd.f32 %v6915, %v6916
      %v6918 = vsel %vm364, %v6863, 0.0
      %v6919 = vadd.f32 %v6917, %v6918
      %v6920 = vsel %vm364, %v6864, 0.0
      %v6921 = vadd.f32 %v6919, %v6920
      %v6922 = vsel %vm364, %v6865, 0.0
      %v6923 = vadd.f32 %v6921, %v6922
      %v6924 = vsel %vm364, %v6866, 0.0
      %v6925 = vadd.f32 %v6923, %v6924
      %v6926 = vsel %vm364, %v6867, 0.0
      %v6927 = vadd.f32 %v6925, %v6926
      %v6928 = vsel %vm364, %v6868, 0.0
      %v6929 = vadd.f32 %v6927, %v6928
      %v6930 = vsel %vm364, %v6869, 0.0
      %v6931 = vadd.f32 %v6929, %v6930
      %v6932 = vsel %vm364, %v6870, 0.0
      %v6933 = vadd.f32 %v6931, %v6932
      %v6934 = vsel %vm364, %v6871, 0.0
      %v6935 = vadd.f32 %v6933, %v6934
      %v6936 = vsel %vm364, %v6872, 0.0
      %v6937 = vadd.f32 %v6935, %v6936
      %v6938 = vsel %vm364, %v6873, 0.0
      %v6939 = vadd.f32 %v6937, %v6938
      %v6940 = vsel %vm364, %v6874, 0.0
      %v6941 = vadd.f32 %v6939, %v6940
      %v6942 = vsel %vm364, %v6875, 0.0
      %v6943 = vadd.f32 %v6941, %v6942
      %v6944 = vsel %vm364, %v6876, 0.0
      %v6945 = vadd.f32 %v6943, %v6944
      %v6946 = vsel %vm364, %v6877, 0.0
      %v6947 = vadd.f32 %v6945, %v6946
      %v6948 = vsel %vm3490, %v6878, 0.0
      %v6949 = vadd.f32 %v6947, %v6948
      %v6950 = vrot.slane %v6949, 4
      %v6951 = vadd.f32 %v6949, %v6950
      %v6952 = vrot.slane %v6951, 2
      %v6953 = vadd.f32 %v6951, %v6952
      %v6954 = vrot.slane %v6953, 1
      %v6955 = vadd.f32 %v6953, %v6954
      %v6956 = vmul.f32 %v6955, 0.00390625
      %v6957 = vsub.f32 %v6807, %v6956
      %v6958 = vsub.f32 %v6808, %v6956
      %v6959 = vsub.f32 %v6809, %v6956
      %v6960 = vsub.f32 %v6810, %v6956
      %v6961 = vsub.f32 %v6811, %v6956
      %v6962 = vsub.f32 %v6812, %v6956
      %v6963 = vsub.f32 %v6813, %v6956
      %v6964 = vsub.f32 %v6814, %v6956
      %v6965 = vsub.f32 %v6815, %v6956
      %v6966 = vsub.f32 %v6816, %v6956
      %v6967 = vsub.f32 %v6817, %v6956
      %v6968 = vsub.f32 %v6818, %v6956
      %v6969 = vsub.f32 %v6819, %v6956
      %v6970 = vsub.f32 %v6820, %v6956
      %v6971 = vsub.f32 %v6821, %v6956
      %v6972 = vsub.f32 %v6822, %v6956
      %v6973 = vsub.f32 %v6823, %v6956
      %v6974 = vsub.f32 %v6824, %v6956
      %v6975 = vsub.f32 %v6825, %v6956
      %v6976 = vsub.f32 %v6826, %v6956
      %v6977 = vsub.f32 %v6827, %v6956
      %v6978 = vsub.f32 %v6828, %v6956
      %v6979 = vsub.f32 %v6829, %v6956
      %v6980 = vsub.f32 %v6830, %v6956
      %v6981 = vsub.f32 %v6831, %v6956
      %v6982 = vsub.f32 %v6832, %v6956
      %v6983 = vsub.f32 %v6833, %v6956
      %v6984 = vsub.f32 %v6834, %v6956
      %v6985 = vsub.f32 %v6835, %v6956
      %v6986 = vsub.f32 %v6836, %v6956
      %v6987 = vsub.f32 %v6837, %v6956
      %v6988 = vsub.f32 %v6838, %v6956
      %v6989 = vsub.f32 %v6839, %v6956
      %v6990 = vsub.f32 %v6840, %v6956
      %v6991 = vsub.f32 %v6841, %v6956
      %v6992 = vsub.f32 %v6842, %v6956
      %v6993 = vmul.f32 %v6957, %v3208
      %v6994 = vmul.f32 %v6958, %v3213
      %v6995 = vmul.f32 %v6959, %v3218
      %v6996 = vmul.f32 %v6960, %v3223
      %v6997 = vmul.f32 %v6961, %v3228
      %v6998 = vmul.f32 %v6962, %v3233
      %v6999 = vmul.f32 %v6963, %v3238
      %v7000 = vmul.f32 %v6964, %v3243
      %v7001 = vmul.f32 %v6965, %v3248
      %v7002 = vmul.f32 %v6966, %v3253
      %v7003 = vmul.f32 %v6967, %v3258
      %v7004 = vmul.f32 %v6968, %v3263
      %v7005 = vmul.f32 %v6969, %v3268
      %v7006 = vmul.f32 %v6970, %v3273
      %v7007 = vmul.f32 %v6971, %v3278
      %v7008 = vmul.f32 %v6972, %v3283
      %v7009 = vmul.f32 %v6973, %v3288
      %v7010 = vmul.f32 %v6974, %v3293
      %v7011 = vmul.f32 %v6975, %v3298
      %v7012 = vmul.f32 %v6976, %v3303
      %v7013 = vmul.f32 %v6977, %v3308
      %v7014 = vmul.f32 %v6978, %v3313
      %v7015 = vmul.f32 %v6979, %v3318
      %v7016 = vmul.f32 %v6980, %v3323
      %v7017 = vmul.f32 %v6981, %v3328
      %v7018 = vmul.f32 %v6982, %v3333
      %v7019 = vmul.f32 %v6983, %v3338
      %v7020 = vmul.f32 %v6984, %v3343
      %v7021 = vmul.f32 %v6985, %v3348
      %v7022 = vmul.f32 %v6986, %v3353
      %v7023 = vmul.f32 %v6987, %v3358
      %v7024 = vmul.f32 %v6988, %v3363
      %v7025 = vmul.f32 %v6989, %v3368
      %v7026 = vmul.f32 %v6990, %v3373
      %v7027 = vmul.f32 %v6991, %v3378
      %v7028 = vmul.f32 %v6992, %v3383
      %v7029 = vmul.f32 %v6993, %v6993
      %v7030 = vmul.f32 %v6994, %v6994
      %v7031 = vmul.f32 %v6995, %v6995
      %v7032 = vmul.f32 %v6996, %v6996
      %v7033 = vmul.f32 %v6997, %v6997
      %v7034 = vmul.f32 %v6998, %v6998
      %v7035 = vmul.f32 %v6999, %v6999
      %v7036 = vmul.f32 %v7000, %v7000
      %v7037 = vmul.f32 %v7001, %v7001
      %v7038 = vmul.f32 %v7002, %v7002
      %v7039 = vmul.f32 %v7003, %v7003
      %v7040 = vmul.f32 %v7004, %v7004
      %v7041 = vmul.f32 %v7005, %v7005
      %v7042 = vmul.f32 %v7006, %v7006
      %v7043 = vmul.f32 %v7007, %v7007
      %v7044 = vmul.f32 %v7008, %v7008
      %v7045 = vmul.f32 %v7009, %v7009
      %v7046 = vmul.f32 %v7010, %v7010
      %v7047 = vmul.f32 %v7011, %v7011
      %v7048 = vmul.f32 %v7012, %v7012
      %v7049 = vmul.f32 %v7013, %v7013
      %v7050 = vmul.f32 %v7014, %v7014
      %v7051 = vmul.f32 %v7015, %v7015
      %v7052 = vmul.f32 %v7016, %v7016
      %v7053 = vmul.f32 %v7017, %v7017
      %v7054 = vmul.f32 %v7018, %v7018
      %v7055 = vmul.f32 %v7019, %v7019
      %v7056 = vmul.f32 %v7020, %v7020
      %v7057 = vmul.f32 %v7021, %v7021
      %v7058 = vmul.f32 %v7022, %v7022
      %v7059 = vmul.f32 %v7023, %v7023
      %v7060 = vmul.f32 %v7024, %v7024
      %v7061 = vmul.f32 %v7025, %v7025
      %v7062 = vmul.f32 %v7026, %v7026
      %v7063 = vmul.f32 %v7027, %v7027
      %v7064 = vmul.f32 %v7028, %v7028
      %v7065 = vsel %vm364, %v7029, 0.0
      %v7066 = vsel %vm364, %v7030, 0.0
      %v7067 = vadd.f32 %v7065, %v7066
      %v7068 = vsel %vm364, %v7031, 0.0
      %v7069 = vadd.f32 %v7067, %v7068
      %v7070 = vsel %vm364, %v7032, 0.0
      %v7071 = vadd.f32 %v7069, %v7070
      %v7072 = vsel %vm364, %v7033, 0.0
      %v7073 = vadd.f32 %v7071, %v7072
      %v7074 = vsel %vm364, %v7034, 0.0
      %v7075 = vadd.f32 %v7073, %v7074
      %v7076 = vsel %vm364, %v7035, 0.0
      %v7077 = vadd.f32 %v7075, %v7076
      %v7078 = vsel %vm364, %v7036, 0.0
      %v7079 = vadd.f32 %v7077, %v7078
      %v7080 = vsel %vm364, %v7037, 0.0
      %v7081 = vadd.f32 %v7079, %v7080
      %v7082 = vsel %vm364, %v7038, 0.0
      %v7083 = vadd.f32 %v7081, %v7082
      %v7084 = vsel %vm364, %v7039, 0.0
      %v7085 = vadd.f32 %v7083, %v7084
      %v7086 = vsel %vm364, %v7040, 0.0
      %v7087 = vadd.f32 %v7085, %v7086
      %v7088 = vsel %vm364, %v7041, 0.0
      %v7089 = vadd.f32 %v7087, %v7088
      %v7090 = vsel %vm364, %v7042, 0.0
      %v7091 = vadd.f32 %v7089, %v7090
      %v7092 = vsel %vm364, %v7043, 0.0
      %v7093 = vadd.f32 %v7091, %v7092
      %v7094 = vsel %vm364, %v7044, 0.0
      %v7095 = vadd.f32 %v7093, %v7094
      %v7096 = vsel %vm364, %v7045, 0.0
      %v7097 = vadd.f32 %v7095, %v7096
      %v7098 = vsel %vm364, %v7046, 0.0
      %v7099 = vadd.f32 %v7097, %v7098
      %v7100 = vsel %vm364, %v7047, 0.0
      %v7101 = vadd.f32 %v7099, %v7100
      %v7102 = vsel %vm364, %v7048, 0.0
      %v7103 = vadd.f32 %v7101, %v7102
      %v7104 = vsel %vm364, %v7049, 0.0
      %v7105 = vadd.f32 %v7103, %v7104
      %v7106 = vsel %vm364, %v7050, 0.0
      %v7107 = vadd.f32 %v7105, %v7106
      %v7108 = vsel %vm364, %v7051, 0.0
      %v7109 = vadd.f32 %v7107, %v7108
      %v7110 = vsel %vm364, %v7052, 0.0
      %v7111 = vadd.f32 %v7109, %v7110
      %v7112 = vsel %vm364, %v7053, 0.0
      %v7113 = vadd.f32 %v7111, %v7112
      %v7114 = vsel %vm364, %v7054, 0.0
      %v7115 = vadd.f32 %v7113, %v7114
      %v7116 = vsel %vm364, %v7055, 0.0
      %v7117 = vadd.f32 %v7115, %v7116
      %v7118 = vsel %vm364, %v7056, 0.0
      %v7119 = vadd.f32 %v7117, %v7118
      %v7120 = vsel %vm364, %v7057, 0.0
      %v7121 = vadd.f32 %v7119, %v7120
      %v7122 = vsel %vm364, %v7058, 0.0
      %v7123 = vadd.f32 %v7121, %v7122
      %v7124 = vsel %vm364, %v7059, 0.0
      %v7125 = vadd.f32 %v7123, %v7124
      %v7126 = vsel %vm364, %v7060, 0.0
      %v7127 = vadd.f32 %v7125, %v7126
      %v7128 = vsel %vm364, %v7061, 0.0
      %v7129 = vadd.f32 %v7127, %v7128
      %v7130 = vsel %vm364, %v7062, 0.0
      %v7131 = vadd.f32 %v7129, %v7130
      %v7132 = vsel %vm364, %v7063, 0.0
      %v7133 = vadd.f32 %v7131, %v7132
      %v7134 = vsel %vm3490, %v7064, 0.0
      %v7135 = vadd.f32 %v7133, %v7134
      %v7136 = vrot.slane %v7135, 4
      %v7137 = vadd.f32 %v7135, %v7136
      %v7138 = vrot.slane %v7137, 2
      %v7139 = vadd.f32 %v7137, %v7138
      %v7140 = vrot.slane %v7139, 1
      %v7141 = vadd.f32 %v7139, %v7140
      %v7142 = vmul.f32 %v7141, 0.00390625
      %v7143 = vadd.f32 %v7142, 1e-05
      %v7144 = vrsqrt.pop %v7143
      %v7145 = vmul.f32 %v6957, %v7144
      %v7146 = vmul.f32 %v6958, %v7144
      %v7147 = vmul.f32 %v6959, %v7144
      %v7148 = vmul.f32 %v6960, %v7144
      %v7149 = vmul.f32 %v6961, %v7144
      %v7150 = vmul.f32 %v6962, %v7144
      %v7151 = vmul.f32 %v6963, %v7144
      %v7152 = vmul.f32 %v6964, %v7144
      %v7153 = vmul.f32 %v6965, %v7144
      %v7154 = vmul.f32 %v6966, %v7144
      %v7155 = vmul.f32 %v6967, %v7144
      %v7156 = vmul.f32 %v6968, %v7144
      %v7157 = vmul.f32 %v6969, %v7144
      %v7158 = vmul.f32 %v6970, %v7144
      %v7159 = vmul.f32 %v6971, %v7144
      %v7160 = vmul.f32 %v6972, %v7144
      %v7161 = vmul.f32 %v6973, %v7144
      %v7162 = vmul.f32 %v6974, %v7144
      %v7163 = vmul.f32 %v6975, %v7144
      %v7164 = vmul.f32 %v6976, %v7144
      %v7165 = vmul.f32 %v6977, %v7144
      %v7166 = vmul.f32 %v6978, %v7144
      %v7167 = vmul.f32 %v6979, %v7144
      %v7168 = vmul.f32 %v6980, %v7144
      %v7169 = vmul.f32 %v6981, %v7144
      %v7170 = vmul.f32 %v6982, %v7144
      %v7171 = vmul.f32 %v6983, %v7144
      %v7172 = vmul.f32 %v6984, %v7144
      %v7173 = vmul.f32 %v6985, %v7144
      %v7174 = vmul.f32 %v6986, %v7144
      %v7175 = vmul.f32 %v6987, %v7144
      %v7176 = vmul.f32 %v6988, %v7144
      %v7177 = vmul.f32 %v6989, %v7144
      %v7178 = vmul.f32 %v6990, %v7144
      %v7179 = vmul.f32 %v6991, %v7144
      %v7180 = vmul.f32 %v6992, %v7144
      %v7181 = vld [vmem:[%s192 + $0x13] sm:$0xff]
      %v7182 = vld [vmem:[%s192 + $0x1b] sm:$0xff]
      %v7183 = vld [vmem:[%s192 + $0x23] sm:$0xff]
      %v7184 = vld [vmem:[%s192 + $0x2b] sm:$0xff]
      %v7185 = vld [vmem:[%s192 + $0x33] sm:$0xff]
      %v7186 = vld [vmem:[%s192 + $0x3b] sm:$0xff]
      %v7187 = vld [vmem:[%s192 + $0x43] sm:$0xff]
      %v7188 = vld [vmem:[%s192 + $0x4b] sm:$0xff]
      %v7189 = vld [vmem:[%s192 + $0x53] sm:$0xff]
      %v7190 = vld [vmem:[%s192 + $0x5b] sm:$0xff]
      %v7191 = vld [vmem:[%s192 + $0x63] sm:$0xff]
      %v7192 = vld [vmem:[%s192 + $0x6b] sm:$0xff]
      %v7193 = vld [vmem:[%s192 + $0x73] sm:$0xff]
      %v7194 = vld [vmem:[%s192 + $0x7b] sm:$0xff]
      %v7195 = vld [vmem:[%s192 + $0x83] sm:$0xff]
      %v7196 = vld [vmem:[%s192 + $0x8b] sm:$0xff]
      %v7197 = vld [vmem:[%s192 + $0x93] sm:$0xff]
      %v7198 = vld [vmem:[%s192 + $0x9b] sm:$0xff]
      %v7199 = vld [vmem:[%s192 + $0xa3] sm:$0xff]
      %v7200 = vld [vmem:[%s192 + $0xab] sm:$0xff]
      %v7201 = vld [vmem:[%s192 + $0xb3] sm:$0xff]
      %v7202 = vld [vmem:[%s192 + $0xbb] sm:$0xff]
      %v7203 = vld [vmem:[%s192 + $0xc3] sm:$0xff]
      %v7204 = vld [vmem:[%s192 + $0xcb] sm:$0xff]
      %v7205 = vld [vmem:[%s192 + $0xd3] sm:$0xff]
      %v7206 = vld [vmem:[%s192 + $0xdb] sm:$0xff]
      %v7207 = vld [vmem:[%s192 + $0xe3] sm:$0xff]
      %v7208 = vld [vmem:[%s192 + $0xeb] sm:$0xff]
      %v7209 = vld [vmem:[%s192 + $0xf3] sm:$0xff]
      %v7210 = vld [vmem:[%s192 + $0xfb] sm:$0xff]
      %v7211 = vld [vmem:[%s192 + $0x103] sm:$0xff]
      %v7212 = vld [vmem:[%s192 + $0x10b] sm:$0xff]
      %v7213 = vld [vmem:[%s192 + $0x113] sm:$0xff]
      %v7214 = vld [vmem:[%s192 + $0x11b] sm:$0xff]
      %v7215 = vld [vmem:[%s192 + $0x123] sm:$0xff]
      %v7216 = vld [vmem:[%s192 + $0x12b] sm:$0x3f]
      %v7217 = vadd.f32 %v7145, %v7181
      %v7218 = vadd.f32 %v7146, %v7182
      %v7219 = vadd.f32 %v7147, %v7183
      %v7220 = vadd.f32 %v7148, %v7184
      %v7221 = vadd.f32 %v7149, %v7185
      %v7222 = vadd.f32 %v7150, %v7186
      %v7223 = vadd.f32 %v7151, %v7187
      %v7224 = vadd.f32 %v7152, %v7188
      %v7225 = vadd.f32 %v7153, %v7189
      %v7226 = vadd.f32 %v7154, %v7190
      %v7227 = vadd.f32 %v7155, %v7191
      %v7228 = vadd.f32 %v7156, %v7192
      %v7229 = vadd.f32 %v7157, %v7193
      %v7230 = vadd.f32 %v7158, %v7194
      %v7231 = vadd.f32 %v7159, %v7195
      %v7232 = vadd.f32 %v7160, %v7196
      %v7233 = vadd.f32 %v7161, %v7197
      %v7234 = vadd.f32 %v7162, %v7198
      %v7235 = vadd.f32 %v7163, %v7199
      %v7236 = vadd.f32 %v7164, %v7200
      %v7237 = vadd.f32 %v7165, %v7201
      %v7238 = vadd.f32 %v7166, %v7202
      %v7239 = vadd.f32 %v7167, %v7203
      %v7240 = vadd.f32 %v7168, %v7204
      %v7241 = vadd.f32 %v7169, %v7205
      %v7242 = vadd.f32 %v7170, %v7206
      %v7243 = vadd.f32 %v7171, %v7207
      %v7244 = vadd.f32 %v7172, %v7208
      %v7245 = vadd.f32 %v7173, %v7209
      %v7246 = vadd.f32 %v7174, %v7210
      %v7247 = vadd.f32 %v7175, %v7211
      %v7248 = vadd.f32 %v7176, %v7212
      %v7249 = vadd.f32 %v7177, %v7213
      %v7250 = vadd.f32 %v7178, %v7214
      %v7251 = vadd.f32 %v7179, %v7215
      %v7252 = vadd.f32 %v7180, %v7216
      %7253 = vst.msk [vmem:[%s197 + $0x13] sm:$0xff] %vm364, %v7217
      %7254 = vst.msk [vmem:[%s197 + $0x1b] sm:$0xff] %vm364, %v7218
      %7255 = vst.msk [vmem:[%s197 + $0x23] sm:$0xff] %vm364, %v7219
      %7256 = vst.msk [vmem:[%s197 + $0x2b] sm:$0xff] %vm364, %v7220
      %7257 = vst.msk [vmem:[%s197 + $0x33] sm:$0xff] %vm364, %v7221
      %7258 = vst.msk [vmem:[%s197 + $0x3b] sm:$0xff] %vm364, %v7222
      %7259 = vst.msk [vmem:[%s197 + $0x43] sm:$0xff] %vm364, %v7223
      %7260 = vst.msk [vmem:[%s197 + $0x4b] sm:$0xff] %vm364, %v7224
      %7261 = vst.msk [vmem:[%s197 + $0x53] sm:$0xff] %vm364, %v7225
      %7262 = vst.msk [vmem:[%s197 + $0x5b] sm:$0xff] %vm364, %v7226
      %7263 = vst.msk [vmem:[%s197 + $0x63] sm:$0xff] %vm364, %v7227
      %7264 = vst.msk [vmem:[%s197 + $0x6b] sm:$0xff] %vm364, %v7228
      %7265 = vst.msk [vmem:[%s197 + $0x73] sm:$0xff] %vm364, %v7229
      %7266 = vst.msk [vmem:[%s197 + $0x7b] sm:$0xff] %vm364, %v7230
      %7267 = vst.msk [vmem:[%s197 + $0x83] sm:$0xff] %vm364, %v7231
      %7268 = vst.msk [vmem:[%s197 + $0x8b] sm:$0xff] %vm364, %v7232
      %7269 = vst.msk [vmem:[%s197 + $0x93] sm:$0xff] %vm364, %v7233
      %7270 = vst.msk [vmem:[%s197 + $0x9b] sm:$0xff] %vm364, %v7234
      %7271 = vst.msk [vmem:[%s197 + $0xa3] sm:$0xff] %vm364, %v7235
      %7272 = vst.msk [vmem:[%s197 + $0xab] sm:$0xff] %vm364, %v7236
      %7273 = vst.msk [vmem:[%s197 + $0xb3] sm:$0xff] %vm364, %v7237
      %7274 = vst.msk [vmem:[%s197 + $0xbb] sm:$0xff] %vm364, %v7238
      %7275 = vst.msk [vmem:[%s197 + $0xc3] sm:$0xff] %vm364, %v7239
      %7276 = vst.msk [vmem:[%s197 + $0xcb] sm:$0xff] %vm364, %v7240
      %7277 = vst.msk [vmem:[%s197 + $0xd3] sm:$0xff] %vm364, %v7241
      %7278 = vst.msk [vmem:[%s197 + $0xdb] sm:$0xff] %vm364, %v7242
      %7279 = vst.msk [vmem:[%s197 + $0xe3] sm:$0xff] %vm364, %v7243
      %7280 = vst.msk [vmem:[%s197 + $0xeb] sm:$0xff] %vm364, %v7244
      %7281 = vst.msk [vmem:[%s197 + $0xf3] sm:$0xff] %vm364, %v7245
      %7282 = vst.msk [vmem:[%s197 + $0xfb] sm:$0xff] %vm364, %v7246
      %7283 = vst.msk [vmem:[%s197 + $0x103] sm:$0xff] %vm364, %v7247
      %7284 = vst.msk [vmem:[%s197 + $0x10b] sm:$0xff] %vm364, %v7248
      %7285 = vst.msk [vmem:[%s197 + $0x113] sm:$0xff] %vm364, %v7249
      %7286 = vst.msk [vmem:[%s197 + $0x11b] sm:$0xff] %vm364, %v7250
      %7287 = vst.msk [vmem:[%s197 + $0x123] sm:$0xff] %vm364, %v7251
      %7288 = vst.msk [vmem:[%s197 + $0x12b] sm:$0x3f] %vm3490, %v7252
      %p7289 = scmp.lt.s32.totalorder %s15, 1
      %s7290 = scalar_select %p7289, %s15, 1
      %s7291 = smul.addr %s7290, 41
      %s7292 = smul.addr %s7291, 8
      %s7293 = scalar_lea.vmem %s4, %s7292
      // Predicated region
      $region37: #{resnet_block_forward.1} parent=35 // pred_check
        %p7294 = pneg %p122
      $region38: #{resnet_block_forward.1} parent=35 // pred_check_branch
        %7296 = sbr.rel (%p7294) target = $region40
      $region39: #{resnet_block_forward.1} parent=35 // pred_region
        _
      $region40: #{resnet_block_forward.1} parent=35 // pred_fallthru
        _
    $region36: #{resnet_block_forward.1} parent=5 // pred_fallthru
      _
    %p7297 = scmp.le.s32.totalorder 2, %s10
    // Predicated region
    $region41: #{resnet_block_forward.1} parent=5 // pred_check
      %p7298 = pneg %p7297
    $region42: #{resnet_block_forward.1} parent=5 // pred_check_branch
      %7300 = sbr.rel (%p7298) target = $region44
    $region43: #{resnet_block_forward.1} parent=5 // pred_region
      %s7301 = ssub.s32 %s10, 2
      // Predicated region
      $region45: #{resnet_block_forward.1} parent=43 // pred_check
        %p7302 = pneg %p128
      $region46: #{resnet_block_forward.1} parent=43 // pred_check_branch
        %7304 = sbr.rel (%p7302) target = $region48
      $region47: #{resnet_block_forward.1} parent=43 // pred_region
        %p7305 = scmp.lt.s32.totalorder %s16, 1
        %s7306 = scalar_select %p7305, %s16, 1
        %s7307 = smul.addr %s7306, 41
        %s7308 = smul.addr %s7307, 8
        %s7309 = scalar_lea.vmem %s4, %s7308
      $region48: #{resnet_block_forward.1} parent=43 // pred_fallthru
        _
    $region44: #{resnet_block_forward.1} parent=5 // pred_fallthru
      _
  $region6: #{resnet_block_forward.1} parent=0 // loop_footer
    %s14 = sadd.s32 1, %s10
  $region7: #{resnet_block_forward.1} parent=0 // loop_footer_branch
    %9 = sbr.rel target = $region3
  $region8: #{resnet_block_forward.1} parent=0 // loop_exit
    _

</llo_original>
